<compile_context>
chip_gen: v7x
topology: tpu7x:2x2x1
jax: 0.10.0
libtpu: 0.0.40
codegen_flags: <defaults>
</compile_context>

<pallas_src>
import functools
import math

import jax
import jax.numpy as jnp
from jax import lax
from jax.experimental import pallas as pl
from jax.experimental.pallas import tpu as pltpu

EXPANSION = 4
_VMEM_LIMIT = 32 * 1024 * 1024       # scoped VMEM limit (safe on v5e/v6e/v7x)
_VMEM_BUDGET = 24 * 1024 * 1024      # per-call working-set target (v7x-safe)


# ----------------------------------------------------------------------------
# Tile selection helpers
# ----------------------------------------------------------------------------
def _round_up(x, m):
    return ((x + m - 1) // m) * m


def _choose_tile_n(n):
    if n % 128 == 0:
        for tn in (512, 384, 256, 128):
            if n % tn == 0:
                return tn
    return n   # full extent (allowed for the minor dim)


def _choose_tile_m(m, k, n, tn):
    def vmem(tm):
        # double-buffered bf16 A/B/residual + output, f32 scale/shift
        return 2 * (2 * tm * k + 2 * k * tn + 4 * tm * tn) + 16 * tn

    for tm in (1024, 512, 256, 128, 64, 32, 16, 8):
        if tm <= m and m % tm == 0 and vmem(tm) <= _VMEM_BUDGET:
            return tm, m
    mp = _round_up(max(m, 8), 8)       # ragged fallback: pad rows to a multiple of 8
    return 8, mp


def _choose_tile_h(ho, hp, wpf, cch, cin, wo, cout):
    fixed = 2 * (hp * wpf * cch + 9 * cin * cout) * 2 + 16 * cout
    for th in (128, 64, 32, 16, 8, 4, 2, 1):
        if th <= ho and ho % th == 0:
            if fixed + 2 * th * wo * cout * 2 + 4 * th * wo * cout <= _VMEM_BUDGET:
                return th
    return 1


# ----------------------------------------------------------------------------
# Pallas kernel: GEMM (full K per block) + fused BN scale/shift (+ residual,+ReLU)
# ----------------------------------------------------------------------------
def _gemm_bn_kernel(*refs, relu, has_res):
    if has_res:
        a_ref, b_ref, scale_ref, shift_ref, res_ref, o_ref = refs
    else:
        a_ref, b_ref, scale_ref, shift_ref, o_ref = refs
        res_ref = None
    acc = jnp.dot(a_ref[...], b_ref[...], preferred_element_type=jnp.float32)
    r = acc * scale_ref[...] + shift_ref[...]
    if res_ref is not None:
        r = r + res_ref[...].astype(jnp.float32)
    if relu:
        r = jnp.maximum(r, 0.0)
    o_ref[...] = r.astype(o_ref.dtype)


def conv1x1_bn(x, w_kc, scale, shift, *, stride=1, relu=False, residual=None,
               out_dtype=jnp.bfloat16):
    """1x1 conv on NHWC bf16 `x` with folded-BN epilogue, optional fused residual."""
    if stride > 1:
        x = x[:, ::stride, ::stride, :]
    n, h, w, k = x.shape
    cout = w_kc.shape[1]
    m = n * h * w
    a = x.reshape(m, k)
    res = residual.reshape(m, cout) if residual is not None else None

    tn = _choose_tile_n(cout)
    tm, mp = _choose_tile_m(m, k, cout, tn)
    if mp != m:
        a = jnp.pad(a, ((0, mp - m), (0, 0)))
        if res is not None:
            res = jnp.pad(res, ((0, mp - m), (0, 0)))

    in_specs = [
        pl.BlockSpec((tm, k), lambda i, j: (i, 0)),
        pl.BlockSpec((k, tn), lambda i, j: (0, j)),
        pl.BlockSpec((1, tn), lambda i, j: (0, j)),
        pl.BlockSpec((1, tn), lambda i, j: (0, j)),
    ]
    args = [a, w_kc, scale, shift]
    if res is not None:
        in_specs.append(pl.BlockSpec((tm, tn), lambda i, j: (i, j)))
        args.append(res)

    out_bytes = 2 if out_dtype == jnp.bfloat16 else 4
    bytes_accessed = (mp * k + k * cout) * 2 + mp * cout * out_bytes \
        + (mp * cout * 2 if res is not None else 0) + 2 * cout * 4

    out = pl.pallas_call(
        functools.partial(_gemm_bn_kernel, relu=relu, has_res=res is not None),
        out_shape=jax.ShapeDtypeStruct((mp, cout), out_dtype),
        grid=(mp // tm, cout // tn),
        in_specs=in_specs,
        out_specs=pl.BlockSpec((tm, tn), lambda i, j: (i, j)),
        compiler_params=pltpu.CompilerParams(
            dimension_semantics=("parallel", "parallel"),
            vmem_limit_bytes=_VMEM_LIMIT),
        cost_estimate=pl.CostEstimate(flops=2 * mp * k * cout, transcendentals=0,
                                      bytes_accessed=bytes_accessed),
    )(*args)
    if mp != m:
        out = out[:m]
    return out.reshape(n, h, w, cout)


# ----------------------------------------------------------------------------
# Pallas kernel: direct 3x3 conv (stride 1 or 2) + fused BN scale/shift (+ReLU)
# ----------------------------------------------------------------------------
def _conv3x3_bn_kernel(x_ref, w_ref, scale_ref, shift_ref, o_ref, *,
                       stride, th, cin, relu):
    # x_ref: (1, Hp, Wpf, stride*cin)  padded image, W-phase folded into channels
    # w_ref: (3, 3, cin, cout); scale/shift: (1, cout); o_ref: (1, th, Wo, cout)
    wo = o_ref.shape[2]
    cout = o_ref.shape[3]
    h0 = pl.multiple_of(pl.program_id(1) * (th * stride), th * stride)

    acc = jnp.zeros((th * wo, cout), jnp.float32)
    for dy in range(3):
        rows = x_ref[0, pl.ds(h0 + dy, th * stride), :, :]       # (th*stride, Wpf, s*cin)
        if stride > 1:
            rows = rows.reshape(th, stride, rows.shape[1], rows.shape[2])[:, 0]
        for dx in range(3):
            off, ph = dx // stride, dx % stride
            cols = rows[:, off:off + wo, ph * cin:(ph + 1) * cin]  # (th, wo, cin)
            a = cols.reshape(th * wo, cin)
            acc = acc + jnp.dot(a, w_ref[dy, dx],
                                preferred_element_type=jnp.float32)

    r = acc * scale_ref[...] + shift_ref[...]
    if relu:
        r = jnp.maximum(r, 0.0)
    o_ref[...] = r.reshape(1, th, wo, cout).astype(o_ref.dtype)


def conv3x3_bn(x, w_hwio, scale, shift, *, stride=1, relu=True,
               out_dtype=jnp.bfloat16):
    """3x3 conv (pad=1) on NHWC bf16 `x`, folded-BN epilogue, no HBM im2col."""
    n, h, w, cin = x.shape
    cout = w_hwio.shape[3]
    assert h % stride == 0 and w % stride == 0, "spatial dims must divide stride"

    xp = jnp.pad(x, ((0, 0), (1, 1), (1, 1), (0, 0)))
    hp, wp = h + 2, w + 2
    ho = (h + 2 - 3) // stride + 1
    wo = (w + 2 - 3) // stride + 1
    if stride > 1:
        # fold W phase into channels: contiguous (free) reshape -> stride-1 accesses
        xp = xp.reshape(n, hp, wp // stride, stride * cin)
    wpf, cch = xp.shape[2], xp.shape[3]

    th = _choose_tile_h(ho, hp, wpf, cch, cin, wo, cout)
    bytes_accessed = (n * hp * wpf * cch + 9 * cin * cout + n * ho * wo * cout) * 2

    return pl.pallas_call(
        functools.partial(_conv3x3_bn_kernel, stride=stride, th=th, cin=cin,
                          relu=relu),
        out_shape=jax.ShapeDtypeStruct((n, ho, wo, cout), out_dtype),
        grid=(n, ho // th),
        in_specs=[
            pl.BlockSpec((1, hp, wpf, cch), lambda b, hb: (b, 0, 0, 0)),
            pl.BlockSpec((3, 3, cin, cout), lambda b, hb: (0, 0, 0, 0)),
            pl.BlockSpec((1, cout), lambda b, hb: (0, 0)),
            pl.BlockSpec((1, cout), lambda b, hb: (0, 0)),
        ],
        out_specs=pl.BlockSpec((1, th, wo, cout), lambda b, hb: (b, hb, 0, 0)),
        compiler_params=pltpu.CompilerParams(
            dimension_semantics=("parallel", "parallel"),
            vmem_limit_bytes=_VMEM_LIMIT),
        cost_estimate=pl.CostEstimate(flops=2 * n * ho * wo * 9 * cin * cout,
                                      transcendentals=0,
                                      bytes_accessed=bytes_accessed),
    )(xp, w_hwio, scale, shift)


# ----------------------------------------------------------------------------
# Bottleneck parameters (PyTorch-style raw params) and Pallas forward
# ----------------------------------------------------------------------------
def init_bottleneck_params(key, in_planes, planes, stride):
    ks = jax.random.split(key, 8)

    def conv_w(k, o, i, kh, kw):
        return jax.random.normal(k, (o, i, kh, kw), jnp.float32) / math.sqrt(i * kh * kw)

    def bn(k, c):
        k1, k2, k3, k4 = jax.random.split(k, 4)
        return {'gamma': 1.0 + 0.1 * jax.random.normal(k1, (c,), jnp.float32),
                'beta': 0.05 * jax.random.normal(k2, (c,), jnp.float32),
                'mean': 0.05 * jax.random.normal(k3, (c,), jnp.float32),
                'var': 1.0 + 0.1 * jax.random.uniform(k4, (c,), jnp.float32)}

    out_planes = EXPANSION * planes
    p = {'stride': stride,
         'conv1_w': conv_w(ks[0], planes, in_planes, 1, 1), 'bn1': bn(ks[1], planes),
         'conv2_w': conv_w(ks[2], planes, planes, 3, 3), 'bn2': bn(ks[3], planes),
         'conv3_w': conv_w(ks[4], out_planes, planes, 1, 1), 'bn3': bn(ks[5], out_planes),
         'downsample': None}
    if stride != 1 or in_planes != out_planes:
        p['downsample'] = {'conv_w': conv_w(ks[6], out_planes, in_planes, 1, 1),
                           'bn': bn(ks[7], out_planes)}
    return p


def _fold_bn(bn, eps=1e-5):
    scale = bn['gamma'] / jnp.sqrt(bn['var'] + eps)
    shift = bn['beta'] - bn['mean'] * scale
    return (scale.reshape(1, -1).astype(jnp.float32),
            shift.reshape(1, -1).astype(jnp.float32))


def bottleneck_forward(p, x_nchw):
    """Pallas forward of the Bottleneck module (inference-mode BN)."""
    stride = p['stride']
    # weight prep (constant-folded under jit): NHWC-friendly layouts, bf16
    w1 = p['conv1_w'][:, :, 0, 0].T.astype(jnp.bfloat16)               # (Cin, Cp)
    w2 = jnp.transpose(p['conv2_w'], (2, 3, 1, 0)).astype(jnp.bfloat16)  # (3,3,Cp,Cp)
    w3 = p['conv3_w'][:, :, 0, 0].T.astype(jnp.bfloat16)               # (Cp, 4Cp)
    s1, t1 = _fold_bn(p['bn1'])
    s2, t2 = _fold_bn(p['bn2'])
    s3, t3 = _fold_bn(p['bn3'])

    x = jnp.transpose(x_nchw, (0, 2, 3, 1)).astype(jnp.bfloat16)       # NHWC bf16

    out = conv1x1_bn(x, w1, s1, t1, relu=True)
    out = conv3x3_bn(out, w2, s2, t2, stride=stride, relu=True)

    if p['downsample'] is not None:
        wd = p['downsample']['conv_w'][:, :, 0, 0].T.astype(jnp.bfloat16)
        sd, td = _fold_bn(p['downsample']['bn'])
        sc = conv1x1_bn(x, wd, sd, td, stride=stride, relu=False)
    else:
        sc = x

    # conv3 with BN + residual add + final ReLU fused into the GEMM epilogue
    out = conv1x1_bn(out, w3, s3, t3, relu=True, residual=sc,
                     out_dtype=jnp.float32)
    return jnp.transpose(out, (0, 3, 1, 2))                            # NCHW f32


# ----------------------------------------------------------------------------
# Pure-JAX f32 reference (validation only; the forward path above is all-Pallas)
# ----------------------------------------------------------------------------
def _ref_conv(x, w, stride=1, padding=0):
    return lax.conv_general_dilated(
        x, w, window_strides=(stride, stride),
        padding=[(padding, padding), (padding, padding)],
        dimension_numbers=('NCHW', 'OIHW', 'NCHW'))


def _ref_bn(x, bn, eps=1e-5):
    s = bn['gamma'] / jnp.sqrt(bn['var'] + eps)
    b = bn['beta'] - bn['mean'] * s
    return x * s[None, :, None, None] + b[None, :, None, None]


def reference_bottleneck(p, x):
    out = jax.nn.relu(_ref_bn(_ref_conv(x, p['conv1_w']), p['bn1']))
    out = jax.nn.relu(_ref_bn(_ref_conv(out, p['conv2_w'], stride=p['stride'],
                                        padding=1), p['bn2']))
    out = _ref_bn(_ref_conv(out, p['conv3_w']), p['bn3'])
    if p['downsample'] is not None:
        sc = _ref_bn(_ref_conv(x, p['downsample']['conv_w'], stride=p['stride']),
                     p['downsample']['bn'])
    else:
        sc = x
    return jax.nn.relu(out + sc)


if __name__ == "__main__":
    key = jax.random.PRNGKey(0)
    ka, kb, kx = jax.random.split(key, 3)
    x = jax.random.normal(kx, (2, 64, 16, 16), jnp.float32)

    # Block A: identity shortcut (in_planes == expansion*planes, stride=1)
    pa = init_bottleneck_params(ka, in_planes=64, planes=16, stride=1)
    # Block B: strided downsample shortcut
    pb = init_bottleneck_params(kb, in_planes=64, planes=32, stride=2)

    fwd_a = jax.jit(lambda inp: bottleneck_forward(pa, inp))
    fwd_b = jax.jit(lambda inp: bottleneck_forward(pb, inp))

    ya = fwd_a(x)
    yb = fwd_b(x)
    ya, yb = jax.block_until_ready((ya, yb))

    ra = reference_bottleneck(pa, x)
    rb = reference_bottleneck(pb, x)

    assert ya.shape == (2, 64, 16, 16), ya.shape
    assert yb.shape == (2, 128, 8, 8), yb.shape
    for y, r in ((ya, ra), (yb, rb)):
        assert bool(jnp.all(jnp.isfinite(y)))
        err = float(jnp.max(jnp.abs(y - r)))
        scale = float(jnp.max(jnp.abs(r))) + 1e-6
        # bf16 activations/weights vs f32 reference -> small drift is expected
        assert err <= 0.05 * scale + 0.05, (err, scale)

    print("KERNEL_OK")
</pallas_src>

<mosaic_0001>
module attributes {stable_mosaic.version = 11 : i64} {
  func.func @_gemm_bn_kernel(%arg0: i32, %arg1: i32, %arg2: memref<512x64xbf16, #tpu.memory_space<vmem>>, %arg3: memref<64x16xbf16, #tpu.memory_space<vmem>>, %arg4: memref<1x16xf32, #tpu.memory_space<vmem>>, %arg5: memref<1x16xf32, #tpu.memory_space<vmem>>, %arg6: memref<512x16xbf16, #tpu.memory_space<vmem>>) attributes {dimension_semantics = [#tpu.dimension_semantics<parallel>, #tpu.dimension_semantics<parallel>], iteration_bounds = array<i64: 1, 1>, scalar_prefetch = 0 : i64, scratch_operands = 0 : i64, tpu.core_type = #tpu.core_type<tc>, window_params = [{transform_indices = @transform_0, window_bounds = array<i64: 512, 64>}, {transform_indices = @transform_1, window_bounds = array<i64: 64, 16>}, {transform_indices = @transform_2, window_bounds = array<i64: 1, 16>}, {transform_indices = @transform_3, window_bounds = array<i64: 1, 16>}, {transform_indices = @transform_4, window_bounds = array<i64: 512, 16>}]} {
    %c0 = arith.constant 0 : index
    %c0_0 = arith.constant 0 : index
    %0 = vector.load %arg2[%c0, %c0_0] : memref<512x64xbf16, #tpu.memory_space<vmem>>, vector<512x64xbf16>
    %c0_1 = arith.constant 0 : index
    %c0_2 = arith.constant 0 : index
    %1 = vector.load %arg3[%c0_1, %c0_2] : memref<64x16xbf16, #tpu.memory_space<vmem>>, vector<64x16xbf16>
    %cst = arith.constant dense<0.000000e+00> : vector<512x16xf32>
    %2 = tpu.matmul %0, %1, %cst {dimension_numbers = #tpu.dot_dimension_numbers<[1], [0], [0], [1], [0, 0, 1, 1], [], []>} : vector<512x64xbf16>, vector<64x16xbf16>, vector<512x16xf32> -> vector<512x16xf32>
    %c0_3 = arith.constant 0 : index
    %c0_4 = arith.constant 0 : index
    %3 = vector.load %arg4[%c0_3, %c0_4] : memref<1x16xf32, #tpu.memory_space<vmem>>, vector<1x16xf32>
    %4 = vector.broadcast %3 : vector<1x16xf32> to vector<512x16xf32>
    %5 = arith.mulf %2, %4 : vector<512x16xf32>
    %c0_5 = arith.constant 0 : index
    %c0_6 = arith.constant 0 : index
    %6 = vector.load %arg5[%c0_5, %c0_6] : memref<1x16xf32, #tpu.memory_space<vmem>>, vector<1x16xf32>
    %7 = vector.broadcast %6 : vector<1x16xf32> to vector<512x16xf32>
    %8 = arith.addf %5, %7 : vector<512x16xf32>
    %cst_7 = arith.constant 0.000000e+00 : f32
    %9 = vector.broadcast %cst_7 : f32 to vector<512x16xf32>
    %10 = arith.maximumf %8, %9 : vector<512x16xf32>
    %11 = arith.truncf %10 : vector<512x16xf32> to vector<512x16xbf16>
    %c0_8 = arith.constant 0 : index
    %c0_9 = arith.constant 0 : index
    %12 = vector.load %arg6[%c0_8, %c0_9] : memref<512x16xbf16, #tpu.memory_space<vmem>>, vector<512x16xbf16>
    tpu.vector_store %arg6[%c0_8, %c0_9], %11 {strides = array<i32>} : memref<512x16xbf16, #tpu.memory_space<vmem>>, vector<512x16xbf16>,
    return
  }
  func.func @transform_0(%arg0: i32, %arg1: i32) -> (i32, i32) {
    %c0_i32 = arith.constant 0 : i32
    %c0_i32_0 = arith.constant 0 : i32
    return %arg0, %c0_i32 : i32, i32
  }
  func.func @transform_1(%arg0: i32, %arg1: i32) -> (i32, i32) {
    %c0_i32 = arith.constant 0 : i32
    %c0_i32_0 = arith.constant 0 : i32
    return %c0_i32, %arg1 : i32, i32
  }
  func.func @transform_2(%arg0: i32, %arg1: i32) -> (i32, i32) {
    %c0_i32 = arith.constant 0 : i32
    %c0_i32_0 = arith.constant 0 : i32
    return %c0_i32, %arg1 : i32, i32
  }
  func.func @transform_3(%arg0: i32, %arg1: i32) -> (i32, i32) {
    %c0_i32 = arith.constant 0 : i32
    %c0_i32_0 = arith.constant 0 : i32
    return %c0_i32, %arg1 : i32, i32
  }
  func.func @transform_4(%arg0: i32, %arg1: i32) -> (i32, i32) {
    %c0_i32 = arith.constant 0 : i32
    return %arg0, %arg1 : i32, i32
  }
}

module attributes {stable_mosaic.version = 11 : i64} {
  func.func @_conv3x3_bn_kernel(%arg0: i32, %arg1: i32, %arg2: memref<1x18x18x16xbf16, #tpu.memory_space<vmem>>, %arg3: memref<3x3x16x16xbf16, #tpu.memory_space<vmem>>, %arg4: memref<1x16xf32, #tpu.memory_space<vmem>>, %arg5: memref<1x16xf32, #tpu.memory_space<vmem>>, %arg6: memref<1x16x16x16xbf16, #tpu.memory_space<vmem>>) attributes {dimension_semantics = [#tpu.dimension_semantics<parallel>, #tpu.dimension_semantics<parallel>], iteration_bounds = array<i64: 2, 1>, scalar_prefetch = 0 : i64, scratch_operands = 0 : i64, tpu.core_type = #tpu.core_type<tc>, window_params = [{transform_indices = @transform_0, window_bounds = array<i64: 1, 18, 18, 16>}, {pipeline_mode = #tpu.pipeline_mode<synchronous>, transform_indices = @transform_1, window_bounds = array<i64: 3, 3, 16, 16>}, {pipeline_mode = #tpu.pipeline_mode<synchronous>, transform_indices = @transform_2, window_bounds = array<i64: 1, 16>}, {pipeline_mode = #tpu.pipeline_mode<synchronous>, transform_indices = @transform_3, window_bounds = array<i64: 1, 16>}, {transform_indices = @transform_4, window_bounds = array<i64: 1, 16, 16, 16>}]} {
    %c16_i32 = arith.constant 16 : i32
    %0 = arith.muli %arg1, %c16_i32 : i32
    %1 = tpu.assume_multiple %0, 16 : i32
    %cst = arith.constant 0.000000e+00 : f32
    %2 = vector.broadcast %cst : f32 to vector<256x16xf32>
    %c0_i32 = arith.constant 0 : i32
    %3 = arith.addi %1, %c0_i32 : i32
    %c0 = arith.constant 0 : index
    %4 = arith.index_cast %3 : i32 to index
    %c0_0 = arith.constant 0 : index
    %c0_1 = arith.constant 0 : index
    %5 = vector.load %arg2[%c0, %4, %c0_0, %c0_1] : memref<1x18x18x16xbf16, #tpu.memory_space<vmem>>, vector<1x16x18x16xbf16>
    %6 = vector.shape_cast %5 : vector<1x16x18x16xbf16> to vector<16x18x16xbf16>
    %7 = vector.extract_strided_slice %6 {offsets = [0, 0, 0], sizes = [16, 16, 16], strides = [1, 1, 1]} : vector<16x18x16xbf16> to vector<16x16x16xbf16>
    %8 = vector.shape_cast %7 : vector<16x16x16xbf16> to vector<256x16xbf16>
    %c0_2 = arith.constant 0 : index
    %c0_3 = arith.constant 0 : index
    %c0_4 = arith.constant 0 : index
    %c0_5 = arith.constant 0 : index
    %9 = vector.load %arg3[%c0_2, %c0_3, %c0_4, %c0_5] : memref<3x3x16x16xbf16, #tpu.memory_space<vmem>>, vector<1x1x16x16xbf16>
    %10 = vector.shape_cast %9 : vector<1x1x16x16xbf16> to vector<16x16xbf16>
    %cst_6 = arith.constant dense<0.000000e+00> : vector<256x16xf32>
    %11 = tpu.matmul %8, %10, %cst_6 {dimension_numbers = #tpu.dot_dimension_numbers<[1], [0], [0], [1], [0, 0, 1, 1], [], []>} : vector<256x16xbf16>, vector<16x16xbf16>, vector<256x16xf32> -> vector<256x16xf32>
    %12 = arith.addf %2, %11 : vector<256x16xf32>
    %13 = vector.extract_strided_slice %6 {offsets = [0, 1, 0], sizes = [16, 16, 16], strides = [1, 1, 1]} : vector<16x18x16xbf16> to vector<16x16x16xbf16>
    %14 = vector.shape_cast %13 : vector<16x16x16xbf16> to vector<256x16xbf16>
    %c0_7 = arith.constant 0 : index
    %c1 = arith.constant 1 : index
    %c0_8 = arith.constant 0 : index
    %c0_9 = arith.constant 0 : index
    %15 = vector.load %arg3[%c0_7, %c1, %c0_8, %c0_9] : memref<3x3x16x16xbf16, #tpu.memory_space<vmem>>, vector<1x1x16x16xbf16>
    %16 = vector.shape_cast %15 : vector<1x1x16x16xbf16> to vector<16x16xbf16>
    %cst_10 = arith.constant dense<0.000000e+00> : vector<256x16xf32>
    %17 = tpu.matmul %14, %16, %cst_10 {dimension_numbers = #tpu.dot_dimension_numbers<[1], [0], [0], [1], [0, 0, 1, 1], [], []>} : vector<256x16xbf16>, vector<16x16xbf16>, vector<256x16xf32> -> vector<256x16xf32>
    %18 = arith.addf %12, %17 : vector<256x16xf32>
    %19 = vector.extract_strided_slice %6 {offsets = [0, 2, 0], sizes = [16, 16, 16], strides = [1, 1, 1]} : vector<16x18x16xbf16> to vector<16x16x16xbf16>
    %20 = vector.shape_cast %19 : vector<16x16x16xbf16> to vector<256x16xbf16>
    %c0_11 = arith.constant 0 : index
    %c2 = arith.constant 2 : index
    %c0_12 = arith.constant 0 : index
    %c0_13 = arith.constant 0 : index
    %21 = vector.load %arg3[%c0_11, %c2, %c0_12, %c0_13] : memref<3x3x16x16xbf16, #tpu.memory_space<vmem>>, vector<1x1x16x16xbf16>
    %22 = vector.shape_cast %21 : vector<1x1x16x16xbf16> to vector<16x16xbf16>
    %cst_14 = arith.constant dense<0.000000e+00> : vector<256x16xf32>
    %23 = tpu.matmul %20, %22, %cst_14 {dimension_numbers = #tpu.dot_dimension_numbers<[1], [0], [0], [1], [0, 0, 1, 1], [], []>} : vector<256x16xbf16>, vector<16x16xbf16>, vector<256x16xf32> -> vector<256x16xf32>
    %24 = arith.addf %18, %23 : vector<256x16xf32>
    %c1_i32 = arith.constant 1 : i32
    %25 = arith.addi %1, %c1_i32 : i32
    %c0_15 = arith.constant 0 : index
    %26 = arith.index_cast %25 : i32 to index
    %c0_16 = arith.constant 0 : index
    %c0_17 = arith.constant 0 : index
    %27 = vector.load %arg2[%c0_15, %26, %c0_16, %c0_17] : memref<1x18x18x16xbf16, #tpu.memory_space<vmem>>, vector<1x16x18x16xbf16>
    %28 = vector.shape_cast %27 : vector<1x16x18x16xbf16> to vector<16x18x16xbf16>
    %29 = vector.extract_strided_slice %28 {offsets = [0, 0, 0], sizes = [16, 16, 16], strides = [1, 1, 1]} : vector<16x18x16xbf16> to vector<16x16x16xbf16>
    %30 = vector.shape_cast %29 : vector<16x16x16xbf16> to vector<256x16xbf16>
    %c1_18 = arith.constant 1 : index
    %c0_19 = arith.constant 0 : index
    %c0_20 = arith.constant 0 : index
    %c0_21 = arith.constant 0 : index
    %31 = vector.load %arg3[%c1_18, %c0_19, %c0_20, %c0_21] : memref<3x3x16x16xbf16, #tpu.memory_space<vmem>>, vector<1x1x16x16xbf16>
    %32 = vector.shape_cast %31 : vector<1x1x16x16xbf16> to vector<16x16xbf16>
    %cst_22 = arith.constant dense<0.000000e+00> : vector<256x16xf32>
    %33 = tpu.matmul %30, %32, %cst_22 {dimension_numbers = #tpu.dot_dimension_numbers<[1], [0], [0], [1], [0, 0, 1, 1], [], []>} : vector<256x16xbf16>, vector<16x16xbf16>, vector<256x16xf32> -> vector<256x16xf32>
    %34 = arith.addf %24, %33 : vector<256x16xf32>
    %35 = vector.extract_strided_slice %28 {offsets = [0, 1, 0], sizes = [16, 16, 16], strides = [1, 1, 1]} : vector<16x18x16xbf16> to vector<16x16x16xbf16>
    %36 = vector.shape_cast %35 : vector<16x16x16xbf16> to vector<256x16xbf16>
    %c1_23 = arith.constant 1 : index
    %c1_24 = arith.constant 1 : index
    %c0_25 = arith.constant 0 : index
    %c0_26 = arith.constant 0 : index
    %37 = vector.load %arg3[%c1_23, %c1_24, %c0_25, %c0_26] : memref<3x3x16x16xbf16, #tpu.memory_space<vmem>>, vector<1x1x16x16xbf16>
    %38 = vector.shape_cast %37 : vector<1x1x16x16xbf16> to vector<16x16xbf16>
    %cst_27 = arith.constant dense<0.000000e+00> : vector<256x16xf32>
    %39 = tpu.matmul %36, %38, %cst_27 {dimension_numbers = #tpu.dot_dimension_numbers<[1], [0], [0], [1], [0, 0, 1, 1], [], []>} : vector<256x16xbf16>, vector<16x16xbf16>, vector<256x16xf32> -> vector<256x16xf32>
    %40 = arith.addf %34, %39 : vector<256x16xf32>
    %41 = vector.extract_strided_slice %28 {offsets = [0, 2, 0], sizes = [16, 16, 16], strides = [1, 1, 1]} : vector<16x18x16xbf16> to vector<16x16x16xbf16>
    %42 = vector.shape_cast %41 : vector<16x16x16xbf16> to vector<256x16xbf16>
    %c1_28 = arith.constant 1 : index
    %c2_29 = arith.constant 2 : index
    %c0_30 = arith.constant 0 : index
    %c0_31 = arith.constant 0 : index
    %43 = vector.load %arg3[%c1_28, %c2_29, %c0_30, %c0_31] : memref<3x3x16x16xbf16, #tpu.memory_space<vmem>>, vector<1x1x16x16xbf16>
    %44 = vector.shape_cast %43 : vector<1x1x16x16xbf16> to vector<16x16xbf16>
    %cst_32 = arith.constant dense<0.000000e+00> : vector<256x16xf32>
    %45 = tpu.matmul %42, %44, %cst_32 {dimension_numbers = #tpu.dot_dimension_numbers<[1], [0], [0], [1], [0, 0, 1, 1], [], []>} : vector<256x16xbf16>, vector<16x16xbf16>, vector<256x16xf32> -> vector<256x16xf32>
    %46 = arith.addf %40, %45 : vector<256x16xf32>
    %c2_i32 = arith.constant 2 : i32
    %47 = arith.addi %1, %c2_i32 : i32
    %c0_33 = arith.constant 0 : index
    %48 = arith.index_cast %47 : i32 to index
    %c0_34 = arith.constant 0 : index
    %c0_35 = arith.constant 0 : index
    %49 = vector.load %arg2[%c0_33, %48, %c0_34, %c0_35] : memref<1x18x18x16xbf16, #tpu.memory_space<vmem>>, vector<1x16x18x16xbf16>
    %50 = vector.shape_cast %49 : vector<1x16x18x16xbf16> to vector<16x18x16xbf16>
    %51 = vector.extract_strided_slice %50 {offsets = [0, 0, 0], sizes = [16, 16, 16], strides = [1, 1, 1]} : vector<16x18x16xbf16> to vector<16x16x16xbf16>
    %52 = vector.shape_cast %51 : vector<16x16x16xbf16> to vector<256x16xbf16>
    %c2_36 = arith.constant 2 : index
    %c0_37 = arith.constant 0 : index
    %c0_38 = arith.constant 0 : index
    %c0_39 = arith.constant 0 : index
    %53 = vector.load %arg3[%c2_36, %c0_37, %c0_38, %c0_39] : memref<3x3x16x16xbf16, #tpu.memory_space<vmem>>, vector<1x1x16x16xbf16>
    %54 = vector.shape_cast %53 : vector<1x1x16x16xbf16> to vector<16x16xbf16>
    %cst_40 = arith.constant dense<0.000000e+00> : vector<256x16xf32>
    %55 = tpu.matmul %52, %54, %cst_40 {dimension_numbers = #tpu.dot_dimension_numbers<[1], [0], [0], [1], [0, 0, 1, 1], [], []>} : vector<256x16xbf16>, vector<16x16xbf16>, vector<256x16xf32> -> vector<256x16xf32>
    %56 = arith.addf %46, %55 : vector<256x16xf32>
    %57 = vector.extract_strided_slice %50 {offsets = [0, 1, 0], sizes = [16, 16, 16], strides = [1, 1, 1]} : vector<16x18x16xbf16> to vector<16x16x16xbf16>
    %58 = vector.shape_cast %57 : vector<16x16x16xbf16> to vector<256x16xbf16>
    %c2_41 = arith.constant 2 : index
    %c1_42 = arith.constant 1 : index
    %c0_43 = arith.constant 0 : index
    %c0_44 = arith.constant 0 : index
    %59 = vector.load %arg3[%c2_41, %c1_42, %c0_43, %c0_44] : memref<3x3x16x16xbf16, #tpu.memory_space<vmem>>, vector<1x1x16x16xbf16>
    %60 = vector.shape_cast %59 : vector<1x1x16x16xbf16> to vector<16x16xbf16>
    %cst_45 = arith.constant dense<0.000000e+00> : vector<256x16xf32>
    %61 = tpu.matmul %58, %60, %cst_45 {dimension_numbers = #tpu.dot_dimension_numbers<[1], [0], [0], [1], [0, 0, 1, 1], [], []>} : vector<256x16xbf16>, vector<16x16xbf16>, vector<256x16xf32> -> vector<256x16xf32>
    %62 = arith.addf %56, %61 : vector<256x16xf32>
    %63 = vector.extract_strided_slice %50 {offsets = [0, 2, 0], sizes = [16, 16, 16], strides = [1, 1, 1]} : vector<16x18x16xbf16> to vector<16x16x16xbf16>
    %64 = vector.shape_cast %63 : vector<16x16x16xbf16> to vector<256x16xbf16>
    %c2_46 = arith.constant 2 : index
    %c2_47 = arith.constant 2 : index
    %c0_48 = arith.constant 0 : index
    %c0_49 = arith.constant 0 : index
    %65 = vector.load %arg3[%c2_46, %c2_47, %c0_48, %c0_49] : memref<3x3x16x16xbf16, #tpu.memory_space<vmem>>, vector<1x1x16x16xbf16>
    %66 = vector.shape_cast %65 : vector<1x1x16x16xbf16> to vector<16x16xbf16>
    %cst_50 = arith.constant dense<0.000000e+00> : vector<256x16xf32>
    %67 = tpu.matmul %64, %66, %cst_50 {dimension_numbers = #tpu.dot_dimension_numbers<[1], [0], [0], [1], [0, 0, 1, 1], [], []>} : vector<256x16xbf16>, vector<16x16xbf16>, vector<256x16xf32> -> vector<256x16xf32>
    %68 = arith.addf %62, %67 : vector<256x16xf32>
    %c0_51 = arith.constant 0 : index
    %c0_52 = arith.constant 0 : index
    %69 = vector.load %arg4[%c0_51, %c0_52] : memref<1x16xf32, #tpu.memory_space<vmem>>, vector<1x16xf32>
    %70 = vector.broadcast %69 : vector<1x16xf32> to vector<256x16xf32>
    %71 = arith.mulf %68, %70 : vector<256x16xf32>
    %c0_53 = arith.constant 0 : index
    %c0_54 = arith.constant 0 : index
    %72 = vector.load %arg5[%c0_53, %c0_54] : memref<1x16xf32, #tpu.memory_space<vmem>>, vector<1x16xf32>
    %73 = vector.broadcast %72 : vector<1x16xf32> to vector<256x16xf32>
    %74 = arith.addf %71, %73 : vector<256x16xf32>
    %cst_55 = arith.constant 0.000000e+00 : f32
    %75 = vector.broadcast %cst_55 : f32 to vector<256x16xf32>
    %76 = arith.maximumf %74, %75 : vector<256x16xf32>
    %77 = vector.shape_cast %76 : vector<256x16xf32> to vector<1x16x16x16xf32>
    %78 = arith.truncf %77 : vector<1x16x16x16xf32> to vector<1x16x16x16xbf16>
    %c0_56 = arith.constant 0 : index
    %c0_57 = arith.constant 0 : index
    %c0_58 = arith.constant 0 : index
    %c0_59 = arith.constant 0 : index
    %79 = vector.load %arg6[%c0_56, %c0_57, %c0_58, %c0_59] : memref<1x16x16x16xbf16, #tpu.memory_space<vmem>>, vector<1x16x16x16xbf16>
    tpu.vector_store %arg6[%c0_56, %c0_57, %c0_58, %c0_59], %78 {strides = array<i32>} : memref<1x16x16x16xbf16, #tpu.memory_space<vmem>>, vector<1x16x16x16xbf16>,
    return
  }
  func.func @transform_0(%arg0: i32, %arg1: i32) -> (i32, i32, i32, i32) {
    %c0_i32 = arith.constant 0 : i32
    %c0_i32_0 = arith.constant 0 : i32
    %c0_i32_1 = arith.constant 0 : i32
    %c0_i32_2 = arith.constant 0 : i32
    return %arg0, %c0_i32, %c0_i32_0, %c0_i32_1 : i32, i32, i32, i32
  }
  func.func @transform_1(%arg0: i32, %arg1: i32) -> (i32, i32, i32, i32) {
    %c0_i32 = arith.constant 0 : i32
    %c0_i32_0 = arith.constant 0 : i32
    %c0_i32_1 = arith.constant 0 : i32
    %c0_i32_2 = arith.constant 0 : i32
    %c0_i32_3 = arith.constant 0 : i32
    return %c0_i32, %c0_i32_0, %c0_i32_1, %c0_i32_2 : i32, i32, i32, i32
  }
  func.func @transform_2(%arg0: i32, %arg1: i32) -> (i32, i32) {
    %c0_i32 = arith.constant 0 : i32
    %c0_i32_0 = arith.constant 0 : i32
    %c0_i32_1 = arith.constant 0 : i32
    return %c0_i32, %c0_i32_0 : i32, i32
  }
  func.func @transform_3(%arg0: i32, %arg1: i32) -> (i32, i32) {
    %c0_i32 = arith.constant 0 : i32
    %c0_i32_0 = arith.constant 0 : i32
    %c0_i32_1 = arith.constant 0 : i32
    return %c0_i32, %c0_i32_0 : i32, i32
  }
  func.func @transform_4(%arg0: i32, %arg1: i32) -> (i32, i32, i32, i32) {
    %c0_i32 = arith.constant 0 : i32
    %c0_i32_0 = arith.constant 0 : i32
    %c0_i32_1 = arith.constant 0 : i32
    return %arg0, %arg1, %c0_i32, %c0_i32_0 : i32, i32, i32, i32
  }
}

module attributes {stable_mosaic.version = 11 : i64} {
  func.func @_gemm_bn_kernel(%arg0: i32, %arg1: i32, %arg2: memref<512x16xbf16, #tpu.memory_space<vmem>>, %arg3: memref<16x64xbf16, #tpu.memory_space<vmem>>, %arg4: memref<1x64xf32, #tpu.memory_space<vmem>>, %arg5: memref<1x64xf32, #tpu.memory_space<vmem>>, %arg6: memref<512x64xbf16, #tpu.memory_space<vmem>>, %arg7: memref<512x64xf32, #tpu.memory_space<vmem>>) attributes {dimension_semantics = [#tpu.dimension_semantics<parallel>, #tpu.dimension_semantics<parallel>], iteration_bounds = array<i64: 1, 1>, scalar_prefetch = 0 : i64, scratch_operands = 0 : i64, tpu.core_type = #tpu.core_type<tc>, window_params = [{transform_indices = @transform_0, window_bounds = array<i64: 512, 16>}, {transform_indices = @transform_1, window_bounds = array<i64: 16, 64>}, {transform_indices = @transform_2, window_bounds = array<i64: 1, 64>}, {transform_indices = @transform_3, window_bounds = array<i64: 1, 64>}, {transform_indices = @transform_4, window_bounds = array<i64: 512, 64>}, {transform_indices = @transform_5, window_bounds = array<i64: 512, 64>}]} {
    %c0 = arith.constant 0 : index
    %c0_0 = arith.constant 0 : index
    %0 = vector.load %arg2[%c0, %c0_0] : memref<512x16xbf16, #tpu.memory_space<vmem>>, vector<512x16xbf16>
    %c0_1 = arith.constant 0 : index
    %c0_2 = arith.constant 0 : index
    %1 = vector.load %arg3[%c0_1, %c0_2] : memref<16x64xbf16, #tpu.memory_space<vmem>>, vector<16x64xbf16>
    %cst = arith.constant dense<0.000000e+00> : vector<512x64xf32>
    %2 = tpu.matmul %0, %1, %cst {dimension_numbers = #tpu.dot_dimension_numbers<[1], [0], [0], [1], [0, 0, 1, 1], [], []>} : vector<512x16xbf16>, vector<16x64xbf16>, vector<512x64xf32> -> vector<512x64xf32>
    %c0_3 = arith.constant 0 : index
    %c0_4 = arith.constant 0 : index
    %3 = vector.load %arg4[%c0_3, %c0_4] : memref<1x64xf32, #tpu.memory_space<vmem>>, vector<1x64xf32>
    %4 = vector.broadcast %3 : vector<1x64xf32> to vector<512x64xf32>
    %5 = arith.mulf %2, %4 : vector<512x64xf32>
    %c0_5 = arith.constant 0 : index
    %c0_6 = arith.constant 0 : index
    %6 = vector.load %arg5[%c0_5, %c0_6] : memref<1x64xf32, #tpu.memory_space<vmem>>, vector<1x64xf32>
    %7 = vector.broadcast %6 : vector<1x64xf32> to vector<512x64xf32>
    %8 = arith.addf %5, %7 : vector<512x64xf32>
    %c0_7 = arith.constant 0 : index
    %c0_8 = arith.constant 0 : index
    %9 = vector.load %arg6[%c0_7, %c0_8] : memref<512x64xbf16, #tpu.memory_space<vmem>>, vector<512x64xbf16>
    %10 = arith.extf %9 : vector<512x64xbf16> to vector<512x64xf32>
    %11 = arith.addf %8, %10 : vector<512x64xf32>
    %cst_9 = arith.constant 0.000000e+00 : f32
    %12 = vector.broadcast %cst_9 : f32 to vector<512x64xf32>
    %13 = arith.maximumf %11, %12 : vector<512x64xf32>
    %c0_10 = arith.constant 0 : index
    %c0_11 = arith.constant 0 : index
    %14 = vector.load %arg7[%c0_10, %c0_11] : memref<512x64xf32, #tpu.memory_space<vmem>>, vector<512x64xf32>
    tpu.vector_store %arg7[%c0_10, %c0_11], %13 {strides = array<i32>} : memref<512x64xf32, #tpu.memory_space<vmem>>, vector<512x64xf32>,
    return
  }
  func.func @transform_0(%arg0: i32, %arg1: i32) -> (i32, i32) {
    %c0_i32 = arith.constant 0 : i32
    %c0_i32_0 = arith.constant 0 : i32
    return %arg0, %c0_i32 : i32, i32
  }
  func.func @transform_1(%arg0: i32, %arg1: i32) -> (i32, i32) {
    %c0_i32 = arith.constant 0 : i32
    %c0_i32_0 = arith.constant 0 : i32
    return %c0_i32, %arg1 : i32, i32
  }
  func.func @transform_2(%arg0: i32, %arg1: i32) -> (i32, i32) {
    %c0_i32 = arith.constant 0 : i32
    %c0_i32_0 = arith.constant 0 : i32
    return %c0_i32, %arg1 : i32, i32
  }
  func.func @transform_3(%arg0: i32, %arg1: i32) -> (i32, i32) {
    %c0_i32 = arith.constant 0 : i32
    %c0_i32_0 = arith.constant 0 : i32
    return %c0_i32, %arg1 : i32, i32
  }
  func.func @transform_4(%arg0: i32, %arg1: i32) -> (i32, i32) {
    %c0_i32 = arith.constant 0 : i32
    return %arg0, %arg1 : i32, i32
  }
  func.func @transform_5(%arg0: i32, %arg1: i32) -> (i32, i32) {
    %c0_i32 = arith.constant 0 : i32
    return %arg0, %arg1 : i32, i32
  }
}

</mosaic_0001>

<llo_original>
// kernel: _lambda_.3
$region0: #{_lambda_.3}
  #allocation0 [shape = 'u32[]', space=smem, size = 0x4, offset = 0x4, fixed_abs, tag = 'smem constant byte address 0x4 - core index']
  #allocation1 [shape = 'u32[144,128]{1,0:T(1,128)}', space=vmem, size = 0x12000, scoped, tag = 'internal scratch']
  %s0 = inlined_call_operand.vmem [shape: bf16[512,64], index: 0, kind: input, shape index: {}]
  %s1 = inlined_call_operand.vmem [shape: bf16[64,16], index: 1, kind: input, shape index: {}]
  %s2 = inlined_call_operand.vmem [shape: f32[1,16], index: 2, kind: input, shape index: {}]
  %s3 = inlined_call_operand.vmem [shape: f32[1,16], index: 3, kind: input, shape index: {}]
  %s4 = inlined_call_operand.vmem [shape: bf16[512,16], index: 4, kind: output, shape index: {}]
  %s5 = sld [smem:[#allocation0]]
  $region26: #{_lambda_.3} parent=0
    _
  %s7 = ssub.s32 1, %s5
  %s8 = scalar_select 0, %s7, %s5
  // Predicated region
  $region2: #{_lambda_.3} parent=0 // pred_check
    _
  $region3: #{_lambda_.3} parent=0 // pred_check_branch
    %10 = sbr.rel (0) target = $region5
  $region4: #{_lambda_.3} parent=0 // pred_region
    _
  $region5: #{_lambda_.3} parent=0 // pred_fallthru
    _
  // Predicated region
  $region6: #{_lambda_.3} parent=0 // pred_check
    _
  $region7: #{_lambda_.3} parent=0 // pred_check_branch
    %12 = sbr.rel (0) target = $region9
  $region8: #{_lambda_.3} parent=0 // pred_region
    _
  $region9: #{_lambda_.3} parent=0 // pred_fallthru
    _
  // Predicated region
  $region10: #{_lambda_.3} parent=0 // pred_check
    _
  $region11: #{_lambda_.3} parent=0 // pred_check_branch
    %14 = sbr.rel (0) target = $region13
  $region12: #{_lambda_.3} parent=0 // pred_region
    _
  $region13: #{_lambda_.3} parent=0 // pred_fallthru
    _
  // Predicated region
  $region14: #{_lambda_.3} parent=0 // pred_check
    _
  $region15: #{_lambda_.3} parent=0 // pred_check_branch
    %16 = sbr.rel (0) target = $region17
  $region16: #{_lambda_.3} parent=0 // pred_region
    _
  $region17: #{_lambda_.3} parent=0 // pred_fallthru
    _
  %v18 = vld [vmem:[%s0] sm:$0xf]
  %v19 = vld [vmem:[%s0 + $0x4] sm:$0xf]
  %v20 = vld [vmem:[%s0 + $0x8] sm:$0xf]
  %v21 = vld [vmem:[%s0 + $0xc] sm:$0xf]
  %v22 = vld [vmem:[%s0 + $0x10] sm:$0xf]
  %v23 = vld [vmem:[%s0 + $0x14] sm:$0xf]
  %v24 = vld [vmem:[%s0 + $0x18] sm:$0xf]
  %v25 = vld [vmem:[%s0 + $0x1c] sm:$0xf]
  %v26 = vld [vmem:[%s0 + $0x20] sm:$0xf]
  %v27 = vld [vmem:[%s0 + $0x24] sm:$0xf]
  %v28 = vld [vmem:[%s0 + $0x28] sm:$0xf]
  %v29 = vld [vmem:[%s0 + $0x2c] sm:$0xf]
  %v30 = vld [vmem:[%s0 + $0x30] sm:$0xf]
  %v31 = vld [vmem:[%s0 + $0x34] sm:$0xf]
  %v32 = vld [vmem:[%s0 + $0x38] sm:$0xf]
  %v33 = vld [vmem:[%s0 + $0x3c] sm:$0xf]
  %v34 = vld [vmem:[%s0 + $0x40] sm:$0xf]
  %v35 = vld [vmem:[%s0 + $0x44] sm:$0xf]
  %v36 = vld [vmem:[%s0 + $0x48] sm:$0xf]
  %v37 = vld [vmem:[%s0 + $0x4c] sm:$0xf]
  %v38 = vld [vmem:[%s0 + $0x50] sm:$0xf]
  %v39 = vld [vmem:[%s0 + $0x54] sm:$0xf]
  %v40 = vld [vmem:[%s0 + $0x58] sm:$0xf]
  %v41 = vld [vmem:[%s0 + $0x5c] sm:$0xf]
  %v42 = vld [vmem:[%s0 + $0x60] sm:$0xf]
  %v43 = vld [vmem:[%s0 + $0x64] sm:$0xf]
  %v44 = vld [vmem:[%s0 + $0x68] sm:$0xf]
  %v45 = vld [vmem:[%s0 + $0x6c] sm:$0xf]
  %v46 = vld [vmem:[%s0 + $0x70] sm:$0xf]
  %v47 = vld [vmem:[%s0 + $0x74] sm:$0xf]
  %v48 = vld [vmem:[%s0 + $0x78] sm:$0xf]
  %v49 = vld [vmem:[%s0 + $0x7c] sm:$0xf]
  %v50 = vld [vmem:[%s0 + $0x80] sm:$0xf]
  %v51 = vld [vmem:[%s0 + $0x84] sm:$0xf]
  %v52 = vld [vmem:[%s0 + $0x88] sm:$0xf]
  %v53 = vld [vmem:[%s0 + $0x8c] sm:$0xf]
  %v54 = vld [vmem:[%s0 + $0x90] sm:$0xf]
  %v55 = vld [vmem:[%s0 + $0x94] sm:$0xf]
  %v56 = vld [vmem:[%s0 + $0x98] sm:$0xf]
  %v57 = vld [vmem:[%s0 + $0x9c] sm:$0xf]
  %v58 = vld [vmem:[%s0 + $0xa0] sm:$0xf]
  %v59 = vld [vmem:[%s0 + $0xa4] sm:$0xf]
  %v60 = vld [vmem:[%s0 + $0xa8] sm:$0xf]
  %v61 = vld [vmem:[%s0 + $0xac] sm:$0xf]
  %v62 = vld [vmem:[%s0 + $0xb0] sm:$0xf]
  %v63 = vld [vmem:[%s0 + $0xb4] sm:$0xf]
  %v64 = vld [vmem:[%s0 + $0xb8] sm:$0xf]
  %v65 = vld [vmem:[%s0 + $0xbc] sm:$0xf]
  %v66 = vld [vmem:[%s0 + $0xc0] sm:$0xf]
  %v67 = vld [vmem:[%s0 + $0xc4] sm:$0xf]
  %v68 = vld [vmem:[%s0 + $0xc8] sm:$0xf]
  %v69 = vld [vmem:[%s0 + $0xcc] sm:$0xf]
  %v70 = vld [vmem:[%s0 + $0xd0] sm:$0xf]
  %v71 = vld [vmem:[%s0 + $0xd4] sm:$0xf]
  %v72 = vld [vmem:[%s0 + $0xd8] sm:$0xf]
  %v73 = vld [vmem:[%s0 + $0xdc] sm:$0xf]
  %v74 = vld [vmem:[%s0 + $0xe0] sm:$0xf]
  %v75 = vld [vmem:[%s0 + $0xe4] sm:$0xf]
  %v76 = vld [vmem:[%s0 + $0xe8] sm:$0xf]
  %v77 = vld [vmem:[%s0 + $0xec] sm:$0xf]
  %v78 = vld [vmem:[%s0 + $0xf0] sm:$0xf]
  %v79 = vld [vmem:[%s0 + $0xf4] sm:$0xf]
  %v80 = vld [vmem:[%s0 + $0xf8] sm:$0xf]
  %v81 = vld [vmem:[%s0 + $0xfc] sm:$0xf]
  %v82 = vld [vmem:[%s1] sm:$0xf]
  %v83 = vld [vmem:[%s1 + $0x4] sm:$0xf]
  %v84 = vld [vmem:[%s1 + $0x8] sm:$0xf]
  %v85 = vld [vmem:[%s1 + $0xc] sm:$0xf]
  %v86 = vld [vmem:[%s1 + $0x10] sm:$0xf]
  %v87 = vld [vmem:[%s1 + $0x14] sm:$0xf]
  %v88 = vld [vmem:[%s1 + $0x18] sm:$0xf]
  %v89 = vld [vmem:[%s1 + $0x1c] sm:$0xf]
  %v154 = vunpack.c.l.b16 %v18
  %v155 = vunpack.c.l.b16 %v19
  %v156 = vunpack.c.l.b16 %v20
  %v157 = vunpack.c.l.b16 %v21
  %v158 = vunpack.c.l.b16 %v22
  %v159 = vunpack.c.l.b16 %v23
  %v160 = vunpack.c.l.b16 %v24
  %v161 = vunpack.c.l.b16 %v25
  %v162 = vunpack.c.l.b16 %v26
  %v163 = vunpack.c.l.b16 %v27
  %v164 = vunpack.c.l.b16 %v28
  %v165 = vunpack.c.l.b16 %v29
  %v166 = vunpack.c.l.b16 %v30
  %v167 = vunpack.c.l.b16 %v31
  %v168 = vunpack.c.l.b16 %v32
  %v169 = vunpack.c.l.b16 %v33
  %v170 = vunpack.c.l.b16 %v34
  %v171 = vunpack.c.l.b16 %v35
  %v172 = vunpack.c.l.b16 %v36
  %v173 = vunpack.c.l.b16 %v37
  %v174 = vunpack.c.l.b16 %v38
  %v175 = vunpack.c.l.b16 %v39
  %v176 = vunpack.c.l.b16 %v40
  %v177 = vunpack.c.l.b16 %v41
  %v178 = vunpack.c.l.b16 %v42
  %v179 = vunpack.c.l.b16 %v43
  %v180 = vunpack.c.l.b16 %v44
  %v181 = vunpack.c.l.b16 %v45
  %v182 = vunpack.c.l.b16 %v46
  %v183 = vunpack.c.l.b16 %v47
  %v184 = vunpack.c.l.b16 %v48
  %v185 = vunpack.c.l.b16 %v49
  %v186 = vunpack.c.l.b16 %v50
  %v187 = vunpack.c.l.b16 %v51
  %v188 = vunpack.c.l.b16 %v52
  %v189 = vunpack.c.l.b16 %v53
  %v190 = vunpack.c.l.b16 %v54
  %v191 = vunpack.c.l.b16 %v55
  %v192 = vunpack.c.l.b16 %v56
  %v193 = vunpack.c.l.b16 %v57
  %v194 = vunpack.c.l.b16 %v58
  %v195 = vunpack.c.l.b16 %v59
  %v196 = vunpack.c.l.b16 %v60
  %v197 = vunpack.c.l.b16 %v61
  %v198 = vunpack.c.l.b16 %v62
  %v199 = vunpack.c.l.b16 %v63
  %v200 = vunpack.c.l.b16 %v64
  %v201 = vunpack.c.l.b16 %v65
  %v202 = vunpack.c.l.b16 %v66
  %v203 = vunpack.c.l.b16 %v67
  %v204 = vunpack.c.l.b16 %v68
  %v205 = vunpack.c.l.b16 %v69
  %v206 = vunpack.c.l.b16 %v70
  %v207 = vunpack.c.l.b16 %v71
  %v208 = vunpack.c.l.b16 %v72
  %v209 = vunpack.c.l.b16 %v73
  %v210 = vunpack.c.l.b16 %v74
  %v211 = vunpack.c.l.b16 %v75
  %v212 = vunpack.c.l.b16 %v76
  %v213 = vunpack.c.l.b16 %v77
  %v214 = vunpack.c.l.b16 %v78
  %v215 = vunpack.c.l.b16 %v79
  %v216 = vunpack.c.l.b16 %v80
  %v217 = vunpack.c.l.b16 %v81
  %v218 = vpack.c.b16 %v155, %v154
  %v219 = vpack.c.b16 %v157, %v156
  %v220 = vpack.c.b16 %v159, %v158
  %v221 = vpack.c.b16 %v161, %v160
  %v222 = vpack.c.b16 %v163, %v162
  %v223 = vpack.c.b16 %v165, %v164
  %v224 = vpack.c.b16 %v167, %v166
  %v225 = vpack.c.b16 %v169, %v168
  %v226 = vpack.c.b16 %v171, %v170
  %v227 = vpack.c.b16 %v173, %v172
  %v228 = vpack.c.b16 %v175, %v174
  %v229 = vpack.c.b16 %v177, %v176
  %v230 = vpack.c.b16 %v179, %v178
  %v231 = vpack.c.b16 %v181, %v180
  %v232 = vpack.c.b16 %v183, %v182
  %v233 = vpack.c.b16 %v185, %v184
  %v234 = vpack.c.b16 %v187, %v186
  %v235 = vpack.c.b16 %v189, %v188
  %v236 = vpack.c.b16 %v191, %v190
  %v237 = vpack.c.b16 %v193, %v192
  %v238 = vpack.c.b16 %v195, %v194
  %v239 = vpack.c.b16 %v197, %v196
  %v240 = vpack.c.b16 %v199, %v198
  %v241 = vpack.c.b16 %v201, %v200
  %v242 = vpack.c.b16 %v203, %v202
  %v243 = vpack.c.b16 %v205, %v204
  %v244 = vpack.c.b16 %v207, %v206
  %v245 = vpack.c.b16 %v209, %v208
  %v246 = vpack.c.b16 %v211, %v210
  %v247 = vpack.c.b16 %v213, %v212
  %v248 = vpack.c.b16 %v215, %v214
  %v249 = vpack.c.b16 %v217, %v216
  %v258 = vunpack.c.l.b16 %v82
  %v259 = vunpack.c.l.b16 %v83
  %v260 = vunpack.c.l.b16 %v84
  %v261 = vunpack.c.l.b16 %v85
  %v262 = vunpack.c.l.b16 %v86
  %v263 = vunpack.c.l.b16 %v87
  %v264 = vunpack.c.l.b16 %v88
  %v265 = vunpack.c.l.b16 %v89
  %v266 = vpack.c.b16 %v259, %v258
  %v267 = vpack.c.b16 %v261, %v260
  %v268 = vpack.c.b16 %v263, %v262
  %v269 = vpack.c.b16 %v265, %v264
  %vm274 = vcmask 523264
  %v276 = vsel %vm274, %v218, 0
  %v279 = vsel %vm274, %v219, 0
  %v282 = vsel %vm274, %v220, 0
  %v285 = vsel %vm274, %v221, 0
  %v288 = vsel %vm274, %v222, 0
  %v291 = vsel %vm274, %v223, 0
  %v294 = vsel %vm274, %v224, 0
  %v297 = vsel %vm274, %v225, 0
  %v300 = vsel %vm274, %v226, 0
  %v303 = vsel %vm274, %v227, 0
  %v306 = vsel %vm274, %v228, 0
  %v309 = vsel %vm274, %v229, 0
  %v312 = vsel %vm274, %v230, 0
  %v315 = vsel %vm274, %v231, 0
  %v318 = vsel %vm274, %v232, 0
  %v321 = vsel %vm274, %v233, 0
  %v324 = vsel %vm274, %v234, 0
  %v327 = vsel %vm274, %v235, 0
  %v330 = vsel %vm274, %v236, 0
  %v333 = vsel %vm274, %v237, 0
  %v336 = vsel %vm274, %v238, 0
  %v339 = vsel %vm274, %v239, 0
  %v342 = vsel %vm274, %v240, 0
  %v345 = vsel %vm274, %v241, 0
  %v348 = vsel %vm274, %v242, 0
  %v351 = vsel %vm274, %v243, 0
  %v354 = vsel %vm274, %v244, 0
  %v357 = vsel %vm274, %v245, 0
  %v360 = vsel %vm274, %v246, 0
  %v363 = vsel %vm274, %v247, 0
  %v366 = vsel %vm274, %v248, 0
  %v369 = vsel %vm274, %v249, 0
  %371 = vmatprep.subr.bf16.mxu0 0
  %372 = vmatpush1.bf16.msra.mxu0 %v266
  %373 = vmatprep.subr.bf16.mxu0 0
  %374 = vmatpush1.bf16.msra.mxu0 %v267
  %375 = vmatprep.subr.bf16.mxu0 0
  %376 = vmatpush1.bf16.msra.mxu0 %v268
  %377 = vmatprep.subr.bf16.mxu0 0
  %378 = vmatpush1.bf16.msra.mxu0 %v269
  %379 = vmatprep.subr.bf16.mxu0 0
  %380 = vmatpush1.bf16.msra.mxu0 0
  %381 = vmatprep.subr.bf16.mxu0 0
  %382 = vmatpush1.bf16.msra.mxu0 0
  %383 = vmatprep.subr.bf16.mxu0 0
  %384 = vmatpush1.bf16.msra.mxu0 0
  %385 = vmatprep.subr.bf16.mxu0 0
  %386 = vmatpush1.bf16.msra.mxu0 0
  %387 = vmatprep.subr.bf16.mxu0 0
  %388 = vmatpush1.bf16.msra.mxu0 0
  %389 = vmatprep.subr.bf16.mxu0 0
  %390 = vmatpush1.bf16.msra.mxu0 0
  %391 = vmatprep.subr.bf16.mxu0 0
  %392 = vmatpush1.bf16.msra.mxu0 0
  %393 = vmatprep.subr.bf16.mxu0 0
  %394 = vmatpush1.bf16.msra.mxu0 0
  %395 = vmatprep.subr.bf16.mxu0 0
  %396 = vmatpush1.bf16.msra.mxu0 0
  %397 = vmatprep.subr.bf16.mxu0 0
  %398 = vmatpush1.bf16.msra.mxu0 0
  %399 = vmatprep.subr.bf16.mxu0 0
  %400 = vmatpush1.bf16.msra.mxu0 0
  %401 = vmatprep.subr.bf16.mxu0 0
  %402 = vmatpush1.bf16.msra.mxu0 0
  %403 = vmatprep.mubr.bf16.mxu0 0
  %404 = vmatmul.mubr.bf16.gmra.mrb[0].mxu0 %v276
  %v405 = vpop.f32.mrb[0].mxu0
  %v406 = vadd.f32 0.0, %v405
  %v407 = vpop.f32.mrb[0].mxu0
  %v408 = vpop.f32.mrb[0].mxu0
  %v409 = vadd.f32 0.0, %v408
  %v410 = vpop.f32.mrb[0].mxu0
  %411 = vmatprep.mubr.bf16.mxu0 0
  %412 = vmatmul.mubr.bf16.gmra.mrb[0].mxu0 %v279
  %v413 = vpop.f32.mrb[0].mxu0
  %v414 = vadd.f32 0.0, %v413
  %v415 = vpop.f32.mrb[0].mxu0
  %v416 = vpop.f32.mrb[0].mxu0
  %v417 = vadd.f32 0.0, %v416
  %v418 = vpop.f32.mrb[0].mxu0
  %419 = vmatprep.mubr.bf16.mxu0 0
  %420 = vmatmul.mubr.bf16.gmra.mrb[0].mxu0 %v282
  %v421 = vpop.f32.mrb[0].mxu0
  %v422 = vadd.f32 0.0, %v421
  %v423 = vpop.f32.mrb[0].mxu0
  %v424 = vpop.f32.mrb[0].mxu0
  %v425 = vadd.f32 0.0, %v424
  %v426 = vpop.f32.mrb[0].mxu0
  %427 = vmatprep.mubr.bf16.mxu0 0
  %428 = vmatmul.mubr.bf16.gmra.mrb[0].mxu0 %v285
  %v429 = vpop.f32.mrb[0].mxu0
  %v430 = vadd.f32 0.0, %v429
  %v431 = vpop.f32.mrb[0].mxu0
  %v432 = vpop.f32.mrb[0].mxu0
  %v433 = vadd.f32 0.0, %v432
  %v434 = vpop.f32.mrb[0].mxu0
  %435 = vmatprep.mubr.bf16.mxu0 0
  %436 = vmatmul.mubr.bf16.gmra.mrb[0].mxu0 %v288
  %v437 = vpop.f32.mrb[0].mxu0
  %v438 = vadd.f32 0.0, %v437
  %v439 = vpop.f32.mrb[0].mxu0
  %v440 = vpop.f32.mrb[0].mxu0
  %v441 = vadd.f32 0.0, %v440
  %v442 = vpop.f32.mrb[0].mxu0
  %443 = vmatprep.mubr.bf16.mxu0 0
  %444 = vmatmul.mubr.bf16.gmra.mrb[0].mxu0 %v291
  %v445 = vpop.f32.mrb[0].mxu0
  %v446 = vadd.f32 0.0, %v445
  %v447 = vpop.f32.mrb[0].mxu0
  %v448 = vpop.f32.mrb[0].mxu0
  %v449 = vadd.f32 0.0, %v448
  %v450 = vpop.f32.mrb[0].mxu0
  %451 = vmatprep.mubr.bf16.mxu0 0
  %452 = vmatmul.mubr.bf16.gmra.mrb[0].mxu0 %v294
  %v453 = vpop.f32.mrb[0].mxu0
  %v454 = vadd.f32 0.0, %v453
  %v455 = vpop.f32.mrb[0].mxu0
  %v456 = vpop.f32.mrb[0].mxu0
  %v457 = vadd.f32 0.0, %v456
  %v458 = vpop.f32.mrb[0].mxu0
  %459 = vmatprep.mubr.bf16.mxu0 0
  %460 = vmatmul.mubr.bf16.gmra.mrb[0].mxu0 %v297
  %v461 = vpop.f32.mrb[0].mxu0
  %v462 = vadd.f32 0.0, %v461
  %v463 = vpop.f32.mrb[0].mxu0
  %v464 = vpop.f32.mrb[0].mxu0
  %v465 = vadd.f32 0.0, %v464
  %v466 = vpop.f32.mrb[0].mxu0
  %467 = vmatprep.mubr.bf16.mxu0 0
  %468 = vmatmul.mubr.bf16.gmra.mrb[0].mxu0 %v300
  %v469 = vpop.f32.mrb[0].mxu0
  %v470 = vadd.f32 0.0, %v469
  %v471 = vpop.f32.mrb[0].mxu0
  %v472 = vpop.f32.mrb[0].mxu0
  %v473 = vadd.f32 0.0, %v472
  %v474 = vpop.f32.mrb[0].mxu0
  %475 = vmatprep.mubr.bf16.mxu0 0
  %476 = vmatmul.mubr.bf16.gmra.mrb[0].mxu0 %v303
  %v477 = vpop.f32.mrb[0].mxu0
  %v478 = vadd.f32 0.0, %v477
  %v479 = vpop.f32.mrb[0].mxu0
  %v480 = vpop.f32.mrb[0].mxu0
  %v481 = vadd.f32 0.0, %v480
  %v482 = vpop.f32.mrb[0].mxu0
  %483 = vmatprep.mubr.bf16.mxu0 0
  %484 = vmatmul.mubr.bf16.gmra.mrb[0].mxu0 %v306
  %v485 = vpop.f32.mrb[0].mxu0
  %v486 = vadd.f32 0.0, %v485
  %v487 = vpop.f32.mrb[0].mxu0
  %v488 = vpop.f32.mrb[0].mxu0
  %v489 = vadd.f32 0.0, %v488
  %v490 = vpop.f32.mrb[0].mxu0
  %491 = vmatprep.mubr.bf16.mxu0 0
  %492 = vmatmul.mubr.bf16.gmra.mrb[0].mxu0 %v309
  %v493 = vpop.f32.mrb[0].mxu0
  %v494 = vadd.f32 0.0, %v493
  %v495 = vpop.f32.mrb[0].mxu0
  %v496 = vpop.f32.mrb[0].mxu0
  %v497 = vadd.f32 0.0, %v496
  %v498 = vpop.f32.mrb[0].mxu0
  %499 = vmatprep.mubr.bf16.mxu0 0
  %500 = vmatmul.mubr.bf16.gmra.mrb[0].mxu0 %v312
  %v501 = vpop.f32.mrb[0].mxu0
  %v502 = vadd.f32 0.0, %v501
  %v503 = vpop.f32.mrb[0].mxu0
  %v504 = vpop.f32.mrb[0].mxu0
  %v505 = vadd.f32 0.0, %v504
  %v506 = vpop.f32.mrb[0].mxu0
  %507 = vmatprep.mubr.bf16.mxu0 0
  %508 = vmatmul.mubr.bf16.gmra.mrb[0].mxu0 %v315
  %v509 = vpop.f32.mrb[0].mxu0
  %v510 = vadd.f32 0.0, %v509
  %v511 = vpop.f32.mrb[0].mxu0
  %v512 = vpop.f32.mrb[0].mxu0
  %v513 = vadd.f32 0.0, %v512
  %v514 = vpop.f32.mrb[0].mxu0
  %515 = vmatprep.mubr.bf16.mxu0 0
  %516 = vmatmul.mubr.bf16.gmra.mrb[0].mxu0 %v318
  %v517 = vpop.f32.mrb[0].mxu0
  %v518 = vadd.f32 0.0, %v517
  %v519 = vpop.f32.mrb[0].mxu0
  %v520 = vpop.f32.mrb[0].mxu0
  %v521 = vadd.f32 0.0, %v520
  %v522 = vpop.f32.mrb[0].mxu0
  %523 = vmatprep.mubr.bf16.mxu0 0
  %524 = vmatmul.mubr.bf16.gmra.mrb[0].mxu0 %v321
  %v525 = vpop.f32.mrb[0].mxu0
  %v526 = vadd.f32 0.0, %v525
  %v527 = vpop.f32.mrb[0].mxu0
  %v528 = vpop.f32.mrb[0].mxu0
  %v529 = vadd.f32 0.0, %v528
  %v530 = vpop.f32.mrb[0].mxu0
  %531 = vmatprep.mubr.bf16.mxu0 0
  %532 = vmatmul.mubr.bf16.gmra.mrb[0].mxu0 %v324
  %v533 = vpop.f32.mrb[0].mxu0
  %v534 = vadd.f32 0.0, %v533
  %v535 = vpop.f32.mrb[0].mxu0
  %v536 = vpop.f32.mrb[0].mxu0
  %v537 = vadd.f32 0.0, %v536
  %v538 = vpop.f32.mrb[0].mxu0
  %539 = vmatprep.mubr.bf16.mxu0 0
  %540 = vmatmul.mubr.bf16.gmra.mrb[0].mxu0 %v327
  %v541 = vpop.f32.mrb[0].mxu0
  %v542 = vadd.f32 0.0, %v541
  %v543 = vpop.f32.mrb[0].mxu0
  %v544 = vpop.f32.mrb[0].mxu0
  %v545 = vadd.f32 0.0, %v544
  %v546 = vpop.f32.mrb[0].mxu0
  %547 = vmatprep.mubr.bf16.mxu0 0
  %548 = vmatmul.mubr.bf16.gmra.mrb[0].mxu0 %v330
  %v549 = vpop.f32.mrb[0].mxu0
  %v550 = vadd.f32 0.0, %v549
  %v551 = vpop.f32.mrb[0].mxu0
  %v552 = vpop.f32.mrb[0].mxu0
  %v553 = vadd.f32 0.0, %v552
  %v554 = vpop.f32.mrb[0].mxu0
  %555 = vmatprep.mubr.bf16.mxu0 0
  %556 = vmatmul.mubr.bf16.gmra.mrb[0].mxu0 %v333
  %v557 = vpop.f32.mrb[0].mxu0
  %v558 = vadd.f32 0.0, %v557
  %v559 = vpop.f32.mrb[0].mxu0
  %v560 = vpop.f32.mrb[0].mxu0
  %v561 = vadd.f32 0.0, %v560
  %v562 = vpop.f32.mrb[0].mxu0
  %563 = vmatprep.mubr.bf16.mxu0 0
  %564 = vmatmul.mubr.bf16.gmra.mrb[0].mxu0 %v336
  %v565 = vpop.f32.mrb[0].mxu0
  %v566 = vadd.f32 0.0, %v565
  %v567 = vpop.f32.mrb[0].mxu0
  %v568 = vpop.f32.mrb[0].mxu0
  %v569 = vadd.f32 0.0, %v568
  %v570 = vpop.f32.mrb[0].mxu0
  %571 = vmatprep.mubr.bf16.mxu0 0
  %572 = vmatmul.mubr.bf16.gmra.mrb[0].mxu0 %v339
  %v573 = vpop.f32.mrb[0].mxu0
  %v574 = vadd.f32 0.0, %v573
  %v575 = vpop.f32.mrb[0].mxu0
  %v576 = vpop.f32.mrb[0].mxu0
  %v577 = vadd.f32 0.0, %v576
  %v578 = vpop.f32.mrb[0].mxu0
  %579 = vmatprep.mubr.bf16.mxu0 0
  %580 = vmatmul.mubr.bf16.gmra.mrb[0].mxu0 %v342
  %v581 = vpop.f32.mrb[0].mxu0
  %v582 = vadd.f32 0.0, %v581
  %v583 = vpop.f32.mrb[0].mxu0
  %v584 = vpop.f32.mrb[0].mxu0
  %v585 = vadd.f32 0.0, %v584
  %v586 = vpop.f32.mrb[0].mxu0
  %587 = vmatprep.mubr.bf16.mxu0 0
  %588 = vmatmul.mubr.bf16.gmra.mrb[0].mxu0 %v345
  %v589 = vpop.f32.mrb[0].mxu0
  %v590 = vadd.f32 0.0, %v589
  %v591 = vpop.f32.mrb[0].mxu0
  %v592 = vpop.f32.mrb[0].mxu0
  %v593 = vadd.f32 0.0, %v592
  %v594 = vpop.f32.mrb[0].mxu0
  %595 = vmatprep.mubr.bf16.mxu0 0
  %596 = vmatmul.mubr.bf16.gmra.mrb[0].mxu0 %v348
  %v597 = vpop.f32.mrb[0].mxu0
  %v598 = vadd.f32 0.0, %v597
  %v599 = vpop.f32.mrb[0].mxu0
  %v600 = vpop.f32.mrb[0].mxu0
  %v601 = vadd.f32 0.0, %v600
  %v602 = vpop.f32.mrb[0].mxu0
  %603 = vmatprep.mubr.bf16.mxu0 0
  %604 = vmatmul.mubr.bf16.gmra.mrb[0].mxu0 %v351
  %v605 = vpop.f32.mrb[0].mxu0
  %v606 = vadd.f32 0.0, %v605
  %v607 = vpop.f32.mrb[0].mxu0
  %v608 = vpop.f32.mrb[0].mxu0
  %v609 = vadd.f32 0.0, %v608
  %v610 = vpop.f32.mrb[0].mxu0
  %611 = vmatprep.mubr.bf16.mxu0 0
  %612 = vmatmul.mubr.bf16.gmra.mrb[0].mxu0 %v354
  %v613 = vpop.f32.mrb[0].mxu0
  %v614 = vadd.f32 0.0, %v613
  %v615 = vpop.f32.mrb[0].mxu0
  %v616 = vpop.f32.mrb[0].mxu0
  %v617 = vadd.f32 0.0, %v616
  %v618 = vpop.f32.mrb[0].mxu0
  %619 = vmatprep.mubr.bf16.mxu0 0
  %620 = vmatmul.mubr.bf16.gmra.mrb[0].mxu0 %v357
  %v621 = vpop.f32.mrb[0].mxu0
  %v622 = vadd.f32 0.0, %v621
  %v623 = vpop.f32.mrb[0].mxu0
  %v624 = vpop.f32.mrb[0].mxu0
  %v625 = vadd.f32 0.0, %v624
  %v626 = vpop.f32.mrb[0].mxu0
  %627 = vmatprep.mubr.bf16.mxu0 0
  %628 = vmatmul.mubr.bf16.gmra.mrb[0].mxu0 %v360
  %v629 = vpop.f32.mrb[0].mxu0
  %v630 = vadd.f32 0.0, %v629
  %v631 = vpop.f32.mrb[0].mxu0
  %v632 = vpop.f32.mrb[0].mxu0
  %v633 = vadd.f32 0.0, %v632
  %v634 = vpop.f32.mrb[0].mxu0
  %635 = vmatprep.mubr.bf16.mxu0 0
  %636 = vmatmul.mubr.bf16.gmra.mrb[0].mxu0 %v363
  %v637 = vpop.f32.mrb[0].mxu0
  %v638 = vadd.f32 0.0, %v637
  %v639 = vpop.f32.mrb[0].mxu0
  %v640 = vpop.f32.mrb[0].mxu0
  %v641 = vadd.f32 0.0, %v640
  %v642 = vpop.f32.mrb[0].mxu0
  %643 = vmatprep.mubr.bf16.mxu0 0
  %644 = vmatmul.mubr.bf16.gmra.mrb[0].mxu0 %v366
  %v645 = vpop.f32.mrb[0].mxu0
  %v646 = vadd.f32 0.0, %v645
  %v647 = vpop.f32.mrb[0].mxu0
  %v648 = vpop.f32.mrb[0].mxu0
  %v649 = vadd.f32 0.0, %v648
  %v650 = vpop.f32.mrb[0].mxu0
  %651 = vmatprep.mubr.bf16.mxu0 0
  %652 = vmatmul.mubr.bf16.gmra.mrb[0].mxu0 %v369
  %v653 = vpop.f32.mrb[0].mxu0
  %v654 = vadd.f32 0.0, %v653
  %v655 = vpop.f32.mrb[0].mxu0
  %v656 = vpop.f32.mrb[0].mxu0
  %v657 = vadd.f32 0.0, %v656
  %v658 = vpop.f32.mrb[0].mxu0
  %659 = vdwg.mxu0
  %v660 = vld [vmem:[%s2] sm:$0x1]
  %v662 = vlaneseq
  %v663 = vshrl.u32 %v662, 7
  %v664 = vsub.s32 0, %v663
  %v665 = vrot.slane %v660, %v664
  %v667 = vmul.f32 %v406, %v665
  %v668 = vmul.f32 %v409, %v665
  %v669 = vmul.f32 %v414, %v665
  %v670 = vmul.f32 %v417, %v665
  %v671 = vmul.f32 %v422, %v665
  %v672 = vmul.f32 %v425, %v665
  %v673 = vmul.f32 %v430, %v665
  %v674 = vmul.f32 %v433, %v665
  %v675 = vmul.f32 %v438, %v665
  %v676 = vmul.f32 %v441, %v665
  %v677 = vmul.f32 %v446, %v665
  %v678 = vmul.f32 %v449, %v665
  %v679 = vmul.f32 %v454, %v665
  %v680 = vmul.f32 %v457, %v665
  %v681 = vmul.f32 %v462, %v665
  %v682 = vmul.f32 %v465, %v665
  %v683 = vmul.f32 %v470, %v665
  %v684 = vmul.f32 %v473, %v665
  %v685 = vmul.f32 %v478, %v665
  %v686 = vmul.f32 %v481, %v665
  %v687 = vmul.f32 %v486, %v665
  %v688 = vmul.f32 %v489, %v665
  %v689 = vmul.f32 %v494, %v665
  %v690 = vmul.f32 %v497, %v665
  %v691 = vmul.f32 %v502, %v665
  %v692 = vmul.f32 %v505, %v665
  %v693 = vmul.f32 %v510, %v665
  %v694 = vmul.f32 %v513, %v665
  %v695 = vmul.f32 %v518, %v665
  %v696 = vmul.f32 %v521, %v665
  %v697 = vmul.f32 %v526, %v665
  %v698 = vmul.f32 %v529, %v665
  %v699 = vmul.f32 %v534, %v665
  %v700 = vmul.f32 %v537, %v665
  %v701 = vmul.f32 %v542, %v665
  %v702 = vmul.f32 %v545, %v665
  %v703 = vmul.f32 %v550, %v665
  %v704 = vmul.f32 %v553, %v665
  %v705 = vmul.f32 %v558, %v665
  %v706 = vmul.f32 %v561, %v665
  %v707 = vmul.f32 %v566, %v665
  %v708 = vmul.f32 %v569, %v665
  %v709 = vmul.f32 %v574, %v665
  %v710 = vmul.f32 %v577, %v665
  %v711 = vmul.f32 %v582, %v665
  %v712 = vmul.f32 %v585, %v665
  %v713 = vmul.f32 %v590, %v665
  %v714 = vmul.f32 %v593, %v665
  %v715 = vmul.f32 %v598, %v665
  %v716 = vmul.f32 %v601, %v665
  %v717 = vmul.f32 %v606, %v665
  %v718 = vmul.f32 %v609, %v665
  %v719 = vmul.f32 %v614, %v665
  %v720 = vmul.f32 %v617, %v665
  %v721 = vmul.f32 %v622, %v665
  %v722 = vmul.f32 %v625, %v665
  %v723 = vmul.f32 %v630, %v665
  %v724 = vmul.f32 %v633, %v665
  %v725 = vmul.f32 %v638, %v665
  %v726 = vmul.f32 %v641, %v665
  %v727 = vmul.f32 %v646, %v665
  %v728 = vmul.f32 %v649, %v665
  %v729 = vmul.f32 %v654, %v665
  %v730 = vmul.f32 %v657, %v665
  %v731 = vld [vmem:[%s3] sm:$0x1]
  %v733 = vlaneseq
  %v734 = vshrl.u32 %v733, 7
  %v735 = vsub.s32 0, %v734
  %v736 = vrot.slane %v731, %v735
  %v738 = vadd.f32 %v667, %v736
  %v739 = vadd.f32 %v668, %v736
  %v740 = vadd.f32 %v669, %v736
  %v741 = vadd.f32 %v670, %v736
  %v742 = vadd.f32 %v671, %v736
  %v743 = vadd.f32 %v672, %v736
  %v744 = vadd.f32 %v673, %v736
  %v745 = vadd.f32 %v674, %v736
  %v746 = vadd.f32 %v675, %v736
  %v747 = vadd.f32 %v676, %v736
  %v748 = vadd.f32 %v677, %v736
  %v749 = vadd.f32 %v678, %v736
  %v750 = vadd.f32 %v679, %v736
  %v751 = vadd.f32 %v680, %v736
  %v752 = vadd.f32 %v681, %v736
  %v753 = vadd.f32 %v682, %v736
  %v754 = vadd.f32 %v683, %v736
  %v755 = vadd.f32 %v684, %v736
  %v756 = vadd.f32 %v685, %v736
  %v757 = vadd.f32 %v686, %v736
  %v758 = vadd.f32 %v687, %v736
  %v759 = vadd.f32 %v688, %v736
  %v760 = vadd.f32 %v689, %v736
  %v761 = vadd.f32 %v690, %v736
  %v762 = vadd.f32 %v691, %v736
  %v763 = vadd.f32 %v692, %v736
  %v764 = vadd.f32 %v693, %v736
  %v765 = vadd.f32 %v694, %v736
  %v766 = vadd.f32 %v695, %v736
  %v767 = vadd.f32 %v696, %v736
  %v768 = vadd.f32 %v697, %v736
  %v769 = vadd.f32 %v698, %v736
  %v770 = vadd.f32 %v699, %v736
  %v771 = vadd.f32 %v700, %v736
  %v772 = vadd.f32 %v701, %v736
  %v773 = vadd.f32 %v702, %v736
  %v774 = vadd.f32 %v703, %v736
  %v775 = vadd.f32 %v704, %v736
  %v776 = vadd.f32 %v705, %v736
  %v777 = vadd.f32 %v706, %v736
  %v778 = vadd.f32 %v707, %v736
  %v779 = vadd.f32 %v708, %v736
  %v780 = vadd.f32 %v709, %v736
  %v781 = vadd.f32 %v710, %v736
  %v782 = vadd.f32 %v711, %v736
  %v783 = vadd.f32 %v712, %v736
  %v784 = vadd.f32 %v713, %v736
  %v785 = vadd.f32 %v714, %v736
  %v786 = vadd.f32 %v715, %v736
  %v787 = vadd.f32 %v716, %v736
  %v788 = vadd.f32 %v717, %v736
  %v789 = vadd.f32 %v718, %v736
  %v790 = vadd.f32 %v719, %v736
  %v791 = vadd.f32 %v720, %v736
  %v792 = vadd.f32 %v721, %v736
  %v793 = vadd.f32 %v722, %v736
  %v794 = vadd.f32 %v723, %v736
  %v795 = vadd.f32 %v724, %v736
  %v796 = vadd.f32 %v725, %v736
  %v797 = vadd.f32 %v726, %v736
  %v798 = vadd.f32 %v727, %v736
  %v799 = vadd.f32 %v728, %v736
  %v800 = vadd.f32 %v729, %v736
  %v801 = vadd.f32 %v730, %v736
  %v802 = vmax.f32 %v738, 0.0
  %v803 = vmax.f32 %v739, 0.0
  %v804 = vmax.f32 %v740, 0.0
  %v805 = vmax.f32 %v741, 0.0
  %v806 = vmax.f32 %v742, 0.0
  %v807 = vmax.f32 %v743, 0.0
  %v808 = vmax.f32 %v744, 0.0
  %v809 = vmax.f32 %v745, 0.0
  %v810 = vmax.f32 %v746, 0.0
  %v811 = vmax.f32 %v747, 0.0
  %v812 = vmax.f32 %v748, 0.0
  %v813 = vmax.f32 %v749, 0.0
  %v814 = vmax.f32 %v750, 0.0
  %v815 = vmax.f32 %v751, 0.0
  %v816 = vmax.f32 %v752, 0.0
  %v817 = vmax.f32 %v753, 0.0
  %v818 = vmax.f32 %v754, 0.0
  %v819 = vmax.f32 %v755, 0.0
  %v820 = vmax.f32 %v756, 0.0
  %v821 = vmax.f32 %v757, 0.0
  %v822 = vmax.f32 %v758, 0.0
  %v823 = vmax.f32 %v759, 0.0
  %v824 = vmax.f32 %v760, 0.0
  %v825 = vmax.f32 %v761, 0.0
  %v826 = vmax.f32 %v762, 0.0
  %v827 = vmax.f32 %v763, 0.0
  %v828 = vmax.f32 %v764, 0.0
  %v829 = vmax.f32 %v765, 0.0
  %v830 = vmax.f32 %v766, 0.0
  %v831 = vmax.f32 %v767, 0.0
  %v832 = vmax.f32 %v768, 0.0
  %v833 = vmax.f32 %v769, 0.0
  %v834 = vmax.f32 %v770, 0.0
  %v835 = vmax.f32 %v771, 0.0
  %v836 = vmax.f32 %v772, 0.0
  %v837 = vmax.f32 %v773, 0.0
  %v838 = vmax.f32 %v774, 0.0
  %v839 = vmax.f32 %v775, 0.0
  %v840 = vmax.f32 %v776, 0.0
  %v841 = vmax.f32 %v777, 0.0
  %v842 = vmax.f32 %v778, 0.0
  %v843 = vmax.f32 %v779, 0.0
  %v844 = vmax.f32 %v780, 0.0
  %v845 = vmax.f32 %v781, 0.0
  %v846 = vmax.f32 %v782, 0.0
  %v847 = vmax.f32 %v783, 0.0
  %v848 = vmax.f32 %v784, 0.0
  %v849 = vmax.f32 %v785, 0.0
  %v850 = vmax.f32 %v786, 0.0
  %v851 = vmax.f32 %v787, 0.0
  %v852 = vmax.f32 %v788, 0.0
  %v853 = vmax.f32 %v789, 0.0
  %v854 = vmax.f32 %v790, 0.0
  %v855 = vmax.f32 %v791, 0.0
  %v856 = vmax.f32 %v792, 0.0
  %v857 = vmax.f32 %v793, 0.0
  %v858 = vmax.f32 %v794, 0.0
  %v859 = vmax.f32 %v795, 0.0
  %v860 = vmax.f32 %v796, 0.0
  %v861 = vmax.f32 %v797, 0.0
  %v862 = vmax.f32 %v798, 0.0
  %v863 = vmax.f32 %v799, 0.0
  %v864 = vmax.f32 %v800, 0.0
  %v865 = vmax.f32 %v801, 0.0
  %v866 = vpack.c.bf16 %v803, %v802
  %v867 = vpack.c.bf16 %v805, %v804
  %v868 = vpack.c.bf16 %v807, %v806
  %v869 = vpack.c.bf16 %v809, %v808
  %v870 = vpack.c.bf16 %v811, %v810
  %v871 = vpack.c.bf16 %v813, %v812
  %v872 = vpack.c.bf16 %v815, %v814
  %v873 = vpack.c.bf16 %v817, %v816
  %v874 = vpack.c.bf16 %v819, %v818
  %v875 = vpack.c.bf16 %v821, %v820
  %v876 = vpack.c.bf16 %v823, %v822
  %v877 = vpack.c.bf16 %v825, %v824
  %v878 = vpack.c.bf16 %v827, %v826
  %v879 = vpack.c.bf16 %v829, %v828
  %v880 = vpack.c.bf16 %v831, %v830
  %v881 = vpack.c.bf16 %v833, %v832
  %v882 = vpack.c.bf16 %v835, %v834
  %v883 = vpack.c.bf16 %v837, %v836
  %v884 = vpack.c.bf16 %v839, %v838
  %v885 = vpack.c.bf16 %v841, %v840
  %v886 = vpack.c.bf16 %v843, %v842
  %v887 = vpack.c.bf16 %v845, %v844
  %v888 = vpack.c.bf16 %v847, %v846
  %v889 = vpack.c.bf16 %v849, %v848
  %v890 = vpack.c.bf16 %v851, %v850
  %v891 = vpack.c.bf16 %v853, %v852
  %v892 = vpack.c.bf16 %v855, %v854
  %v893 = vpack.c.bf16 %v857, %v856
  %v894 = vpack.c.bf16 %v859, %v858
  %v895 = vpack.c.bf16 %v861, %v860
  %v896 = vpack.c.bf16 %v863, %v862
  %v897 = vpack.c.bf16 %v865, %v864
  %v930 = vunpack.c.l.b16 %v866
  %v931 = vunpack.c.h.b16 %v866
  %v932 = vunpack.c.l.b16 %v867
  %v933 = vunpack.c.h.b16 %v867
  %v934 = vunpack.c.l.b16 %v868
  %v935 = vunpack.c.h.b16 %v868
  %v936 = vunpack.c.l.b16 %v869
  %v937 = vunpack.c.h.b16 %v869
  %v938 = vunpack.c.l.b16 %v870
  %v939 = vunpack.c.h.b16 %v870
  %v940 = vunpack.c.l.b16 %v871
  %v941 = vunpack.c.h.b16 %v871
  %v942 = vunpack.c.l.b16 %v872
  %v943 = vunpack.c.h.b16 %v872
  %v944 = vunpack.c.l.b16 %v873
  %v945 = vunpack.c.h.b16 %v873
  %v946 = vunpack.c.l.b16 %v874
  %v947 = vunpack.c.h.b16 %v874
  %v948 = vunpack.c.l.b16 %v875
  %v949 = vunpack.c.h.b16 %v875
  %v950 = vunpack.c.l.b16 %v876
  %v951 = vunpack.c.h.b16 %v876
  %v952 = vunpack.c.l.b16 %v877
  %v953 = vunpack.c.h.b16 %v877
  %v954 = vunpack.c.l.b16 %v878
  %v955 = vunpack.c.h.b16 %v878
  %v956 = vunpack.c.l.b16 %v879
  %v957 = vunpack.c.h.b16 %v879
  %v958 = vunpack.c.l.b16 %v880
  %v959 = vunpack.c.h.b16 %v880
  %v960 = vunpack.c.l.b16 %v881
  %v961 = vunpack.c.h.b16 %v881
  %v962 = vunpack.c.l.b16 %v882
  %v963 = vunpack.c.h.b16 %v882
  %v964 = vunpack.c.l.b16 %v883
  %v965 = vunpack.c.h.b16 %v883
  %v966 = vunpack.c.l.b16 %v884
  %v967 = vunpack.c.h.b16 %v884
  %v968 = vunpack.c.l.b16 %v885
  %v969 = vunpack.c.h.b16 %v885
  %v970 = vunpack.c.l.b16 %v886
  %v971 = vunpack.c.h.b16 %v886
  %v972 = vunpack.c.l.b16 %v887
  %v973 = vunpack.c.h.b16 %v887
  %v974 = vunpack.c.l.b16 %v888
  %v975 = vunpack.c.h.b16 %v888
  %v976 = vunpack.c.l.b16 %v889
  %v977 = vunpack.c.h.b16 %v889
  %v978 = vunpack.c.l.b16 %v890
  %v979 = vunpack.c.h.b16 %v890
  %v980 = vunpack.c.l.b16 %v891
  %v981 = vunpack.c.h.b16 %v891
  %v982 = vunpack.c.l.b16 %v892
  %v983 = vunpack.c.h.b16 %v892
  %v984 = vunpack.c.l.b16 %v893
  %v985 = vunpack.c.h.b16 %v893
  %v986 = vunpack.c.l.b16 %v894
  %v987 = vunpack.c.h.b16 %v894
  %v988 = vunpack.c.l.b16 %v895
  %v989 = vunpack.c.h.b16 %v895
  %v990 = vunpack.c.l.b16 %v896
  %v991 = vunpack.c.h.b16 %v896
  %v992 = vunpack.c.l.b16 %v897
  %v993 = vunpack.c.h.b16 %v897
  %v994 = vpack.c.b16 %v930, %v930
  %v995 = vpack.c.b16 %v931, %v931
  %v996 = vpack.c.b16 %v932, %v932
  %v997 = vpack.c.b16 %v933, %v933
  %v998 = vpack.c.b16 %v934, %v934
  %v999 = vpack.c.b16 %v935, %v935
  %v1000 = vpack.c.b16 %v936, %v936
  %v1001 = vpack.c.b16 %v937, %v937
  %v1002 = vpack.c.b16 %v938, %v938
  %v1003 = vpack.c.b16 %v939, %v939
  %v1004 = vpack.c.b16 %v940, %v940
  %v1005 = vpack.c.b16 %v941, %v941
  %v1006 = vpack.c.b16 %v942, %v942
  %v1007 = vpack.c.b16 %v943, %v943
  %v1008 = vpack.c.b16 %v944, %v944
  %v1009 = vpack.c.b16 %v945, %v945
  %v1010 = vpack.c.b16 %v946, %v946
  %v1011 = vpack.c.b16 %v947, %v947
  %v1012 = vpack.c.b16 %v948, %v948
  %v1013 = vpack.c.b16 %v949, %v949
  %v1014 = vpack.c.b16 %v950, %v950
  %v1015 = vpack.c.b16 %v951, %v951
  %v1016 = vpack.c.b16 %v952, %v952
  %v1017 = vpack.c.b16 %v953, %v953
  %v1018 = vpack.c.b16 %v954, %v954
  %v1019 = vpack.c.b16 %v955, %v955
  %v1020 = vpack.c.b16 %v956, %v956
  %v1021 = vpack.c.b16 %v957, %v957
  %v1022 = vpack.c.b16 %v958, %v958
  %v1023 = vpack.c.b16 %v959, %v959
  %v1024 = vpack.c.b16 %v960, %v960
  %v1025 = vpack.c.b16 %v961, %v961
  %v1026 = vpack.c.b16 %v962, %v962
  %v1027 = vpack.c.b16 %v963, %v963
  %v1028 = vpack.c.b16 %v964, %v964
  %v1029 = vpack.c.b16 %v965, %v965
  %v1030 = vpack.c.b16 %v966, %v966
  %v1031 = vpack.c.b16 %v967, %v967
  %v1032 = vpack.c.b16 %v968, %v968
  %v1033 = vpack.c.b16 %v969, %v969
  %v1034 = vpack.c.b16 %v970, %v970
  %v1035 = vpack.c.b16 %v971, %v971
  %v1036 = vpack.c.b16 %v972, %v972
  %v1037 = vpack.c.b16 %v973, %v973
  %v1038 = vpack.c.b16 %v974, %v974
  %v1039 = vpack.c.b16 %v975, %v975
  %v1040 = vpack.c.b16 %v976, %v976
  %v1041 = vpack.c.b16 %v977, %v977
  %v1042 = vpack.c.b16 %v978, %v978
  %v1043 = vpack.c.b16 %v979, %v979
  %v1044 = vpack.c.b16 %v980, %v980
  %v1045 = vpack.c.b16 %v981, %v981
  %v1046 = vpack.c.b16 %v982, %v982
  %v1047 = vpack.c.b16 %v983, %v983
  %v1048 = vpack.c.b16 %v984, %v984
  %v1049 = vpack.c.b16 %v985, %v985
  %v1050 = vpack.c.b16 %v986, %v986
  %v1051 = vpack.c.b16 %v987, %v987
  %v1052 = vpack.c.b16 %v988, %v988
  %v1053 = vpack.c.b16 %v989, %v989
  %v1054 = vpack.c.b16 %v990, %v990
  %v1055 = vpack.c.b16 %v991, %v991
  %v1056 = vpack.c.b16 %v992, %v992
  %v1057 = vpack.c.b16 %v993, %v993
  %vm1122 = vcmask 125952
  %1123 = vst.msk [vmem:[%s4] sm:$0xf] %vm1122, %v994
  %1124 = vst.msk [vmem:[%s4 + $0x4] sm:$0xf] %vm1122, %v995
  %1125 = vst.msk [vmem:[%s4 + $0x8] sm:$0xf] %vm1122, %v996
  %1126 = vst.msk [vmem:[%s4 + $0xc] sm:$0xf] %vm1122, %v997
  %1127 = vst.msk [vmem:[%s4 + $0x10] sm:$0xf] %vm1122, %v998
  %1128 = vst.msk [vmem:[%s4 + $0x14] sm:$0xf] %vm1122, %v999
  %1129 = vst.msk [vmem:[%s4 + $0x18] sm:$0xf] %vm1122, %v1000
  %1130 = vst.msk [vmem:[%s4 + $0x1c] sm:$0xf] %vm1122, %v1001
  %1131 = vst.msk [vmem:[%s4 + $0x20] sm:$0xf] %vm1122, %v1002
  %1132 = vst.msk [vmem:[%s4 + $0x24] sm:$0xf] %vm1122, %v1003
  %1133 = vst.msk [vmem:[%s4 + $0x28] sm:$0xf] %vm1122, %v1004
  %1134 = vst.msk [vmem:[%s4 + $0x2c] sm:$0xf] %vm1122, %v1005
  %1135 = vst.msk [vmem:[%s4 + $0x30] sm:$0xf] %vm1122, %v1006
  %1136 = vst.msk [vmem:[%s4 + $0x34] sm:$0xf] %vm1122, %v1007
  %1137 = vst.msk [vmem:[%s4 + $0x38] sm:$0xf] %vm1122, %v1008
  %1138 = vst.msk [vmem:[%s4 + $0x3c] sm:$0xf] %vm1122, %v1009
  %1139 = vst.msk [vmem:[%s4 + $0x40] sm:$0xf] %vm1122, %v1010
  %1140 = vst.msk [vmem:[%s4 + $0x44] sm:$0xf] %vm1122, %v1011
  %1141 = vst.msk [vmem:[%s4 + $0x48] sm:$0xf] %vm1122, %v1012
  %1142 = vst.msk [vmem:[%s4 + $0x4c] sm:$0xf] %vm1122, %v1013
  %1143 = vst.msk [vmem:[%s4 + $0x50] sm:$0xf] %vm1122, %v1014
  %1144 = vst.msk [vmem:[%s4 + $0x54] sm:$0xf] %vm1122, %v1015
  %1145 = vst.msk [vmem:[%s4 + $0x58] sm:$0xf] %vm1122, %v1016
  %1146 = vst.msk [vmem:[%s4 + $0x5c] sm:$0xf] %vm1122, %v1017
  %1147 = vst.msk [vmem:[%s4 + $0x60] sm:$0xf] %vm1122, %v1018
  %1148 = vst.msk [vmem:[%s4 + $0x64] sm:$0xf] %vm1122, %v1019
  %1149 = vst.msk [vmem:[%s4 + $0x68] sm:$0xf] %vm1122, %v1020
  %1150 = vst.msk [vmem:[%s4 + $0x6c] sm:$0xf] %vm1122, %v1021
  %1151 = vst.msk [vmem:[%s4 + $0x70] sm:$0xf] %vm1122, %v1022
  %1152 = vst.msk [vmem:[%s4 + $0x74] sm:$0xf] %vm1122, %v1023
  %1153 = vst.msk [vmem:[%s4 + $0x78] sm:$0xf] %vm1122, %v1024
  %1154 = vst.msk [vmem:[%s4 + $0x7c] sm:$0xf] %vm1122, %v1025
  %1155 = vst.msk [vmem:[%s4 + $0x80] sm:$0xf] %vm1122, %v1026
  %1156 = vst.msk [vmem:[%s4 + $0x84] sm:$0xf] %vm1122, %v1027
  %1157 = vst.msk [vmem:[%s4 + $0x88] sm:$0xf] %vm1122, %v1028
  %1158 = vst.msk [vmem:[%s4 + $0x8c] sm:$0xf] %vm1122, %v1029
  %1159 = vst.msk [vmem:[%s4 + $0x90] sm:$0xf] %vm1122, %v1030
  %1160 = vst.msk [vmem:[%s4 + $0x94] sm:$0xf] %vm1122, %v1031
  %1161 = vst.msk [vmem:[%s4 + $0x98] sm:$0xf] %vm1122, %v1032
  %1162 = vst.msk [vmem:[%s4 + $0x9c] sm:$0xf] %vm1122, %v1033
  %1163 = vst.msk [vmem:[%s4 + $0xa0] sm:$0xf] %vm1122, %v1034
  %1164 = vst.msk [vmem:[%s4 + $0xa4] sm:$0xf] %vm1122, %v1035
  %1165 = vst.msk [vmem:[%s4 + $0xa8] sm:$0xf] %vm1122, %v1036
  %1166 = vst.msk [vmem:[%s4 + $0xac] sm:$0xf] %vm1122, %v1037
  %1167 = vst.msk [vmem:[%s4 + $0xb0] sm:$0xf] %vm1122, %v1038
  %1168 = vst.msk [vmem:[%s4 + $0xb4] sm:$0xf] %vm1122, %v1039
  %1169 = vst.msk [vmem:[%s4 + $0xb8] sm:$0xf] %vm1122, %v1040
  %1170 = vst.msk [vmem:[%s4 + $0xbc] sm:$0xf] %vm1122, %v1041
  %1171 = vst.msk [vmem:[%s4 + $0xc0] sm:$0xf] %vm1122, %v1042
  %1172 = vst.msk [vmem:[%s4 + $0xc4] sm:$0xf] %vm1122, %v1043
  %1173 = vst.msk [vmem:[%s4 + $0xc8] sm:$0xf] %vm1122, %v1044
  %1174 = vst.msk [vmem:[%s4 + $0xcc] sm:$0xf] %vm1122, %v1045
  %1175 = vst.msk [vmem:[%s4 + $0xd0] sm:$0xf] %vm1122, %v1046
  %1176 = vst.msk [vmem:[%s4 + $0xd4] sm:$0xf] %vm1122, %v1047
  %1177 = vst.msk [vmem:[%s4 + $0xd8] sm:$0xf] %vm1122, %v1048
  %1178 = vst.msk [vmem:[%s4 + $0xdc] sm:$0xf] %vm1122, %v1049
  %1179 = vst.msk [vmem:[%s4 + $0xe0] sm:$0xf] %vm1122, %v1050
  %1180 = vst.msk [vmem:[%s4 + $0xe4] sm:$0xf] %vm1122, %v1051
  %1181 = vst.msk [vmem:[%s4 + $0xe8] sm:$0xf] %vm1122, %v1052
  %1182 = vst.msk [vmem:[%s4 + $0xec] sm:$0xf] %vm1122, %v1053
  %1183 = vst.msk [vmem:[%s4 + $0xf0] sm:$0xf] %vm1122, %v1054
  %1184 = vst.msk [vmem:[%s4 + $0xf4] sm:$0xf] %vm1122, %v1055
  %1185 = vst.msk [vmem:[%s4 + $0xf8] sm:$0xf] %vm1122, %v1056
  %1186 = vst.msk [vmem:[%s4 + $0xfc] sm:$0xf] %vm1122, %v1057
  // Predicated region
  $region18: #{_lambda_.3} parent=0 // pred_check
    _
  $region19: #{_lambda_.3} parent=0 // pred_check_branch
    %1188 = sbr.rel (0) target = $region21
  $region20: #{_lambda_.3} parent=0 // pred_region
    _
  $region21: #{_lambda_.3} parent=0 // pred_fallthru
    _
  // Predicated region
  $region22: #{_lambda_.3} parent=0 // pred_check
    _
  $region23: #{_lambda_.3} parent=0 // pred_check_branch
    %1190 = sbr.rel (0) target = $region25
  $region24: #{_lambda_.3} parent=0 // pred_region
    _
  $region25: #{_lambda_.3} parent=0 // pred_fallthru
    _

// kernel: _lambda_.5
$region0: #{_lambda_.5}
  #allocation0 [shape = 'u32[]', space=smem, size = 0x4, offset = 0x4, fixed_abs, tag = 'smem constant byte address 0x4 - core index']
  #allocation1 [shape = 'u32[144,128]{1,0:T(1,128)}', space=vmem, size = 0x12000, scoped, tag = 'internal scratch']
  %s0 = inlined_call_operand.vmem [shape: bf16[512,16], index: 0, kind: input, shape index: {}]
  %s1 = inlined_call_operand.vmem [shape: bf16[16,64], index: 1, kind: input, shape index: {}]
  %s2 = inlined_call_operand.vmem [shape: f32[1,64], index: 2, kind: input, shape index: {}]
  %s3 = inlined_call_operand.vmem [shape: f32[1,64], index: 3, kind: input, shape index: {}]
  %s4 = inlined_call_operand.vmem [shape: bf16[512,64], index: 4, kind: input, shape index: {}]
  %s5 = inlined_call_operand.hbm [shape: f32[512,64], index: 5, kind: output, shape index: {}]
  %s6 = sld [smem:[#allocation0]]
  $region30: #{_lambda_.5} parent=0
    _
  %s8 = ssub.s32 1, %s6
  %s9 = scalar_select 0, %s8, %s6
  $region1: #{_lambda_.5} parent=0
    #allocation2 [shape = 'u8[262144]{0}', space=vmem, size = 0x40000, scoped, tag = 'output window, operand 0, single buffered']
    #allocation3 [shape = 's32[1]{0}', space=sflag, size = 0x4, scoped, tag = 'scoped memory for _lambda_.5']
    %10 = vsyncpa [#allocation3], 0
    // Predicated region
    $region2: #{_lambda_.5} parent=1 // pred_check
      _
    $region3: #{_lambda_.5} parent=1 // pred_check_branch
      %12 = sbr.rel (0) target = $region5
    $region4: #{_lambda_.5} parent=1 // pred_region
      _
    $region5: #{_lambda_.5} parent=1 // pred_fallthru
      _
    // Predicated region
    $region6: #{_lambda_.5} parent=1 // pred_check
      _
    $region7: #{_lambda_.5} parent=1 // pred_check_branch
      %14 = sbr.rel (0) target = $region9
    $region8: #{_lambda_.5} parent=1 // pred_region
      _
    $region9: #{_lambda_.5} parent=1 // pred_fallthru
      _
    // Predicated region
    $region10: #{_lambda_.5} parent=1 // pred_check
      _
    $region11: #{_lambda_.5} parent=1 // pred_check_branch
      %16 = sbr.rel (0) target = $region13
    $region12: #{_lambda_.5} parent=1 // pred_region
      _
    $region13: #{_lambda_.5} parent=1 // pred_fallthru
      _
    // Predicated region
    $region14: #{_lambda_.5} parent=1 // pred_check
      _
    $region15: #{_lambda_.5} parent=1 // pred_check_branch
      %18 = sbr.rel (0) target = $region17
    $region16: #{_lambda_.5} parent=1 // pred_region
      _
    $region17: #{_lambda_.5} parent=1 // pred_fallthru
      _
    // Predicated region
    $region18: #{_lambda_.5} parent=1 // pred_check
      _
    $region19: #{_lambda_.5} parent=1 // pred_check_branch
      %20 = sbr.rel (0) target = $region21
    $region20: #{_lambda_.5} parent=1 // pred_region
      _
    $region21: #{_lambda_.5} parent=1 // pred_fallthru
      _
    %v22 = vld [vmem:[%s0] sm:$0xf]
    %v23 = vld [vmem:[%s0 + $0x4] sm:$0xf]
    %v24 = vld [vmem:[%s0 + $0x8] sm:$0xf]
    %v25 = vld [vmem:[%s0 + $0xc] sm:$0xf]
    %v26 = vld [vmem:[%s0 + $0x10] sm:$0xf]
    %v27 = vld [vmem:[%s0 + $0x14] sm:$0xf]
    %v28 = vld [vmem:[%s0 + $0x18] sm:$0xf]
    %v29 = vld [vmem:[%s0 + $0x1c] sm:$0xf]
    %v30 = vld [vmem:[%s0 + $0x20] sm:$0xf]
    %v31 = vld [vmem:[%s0 + $0x24] sm:$0xf]
    %v32 = vld [vmem:[%s0 + $0x28] sm:$0xf]
    %v33 = vld [vmem:[%s0 + $0x2c] sm:$0xf]
    %v34 = vld [vmem:[%s0 + $0x30] sm:$0xf]
    %v35 = vld [vmem:[%s0 + $0x34] sm:$0xf]
    %v36 = vld [vmem:[%s0 + $0x38] sm:$0xf]
    %v37 = vld [vmem:[%s0 + $0x3c] sm:$0xf]
    %v38 = vld [vmem:[%s0 + $0x40] sm:$0xf]
    %v39 = vld [vmem:[%s0 + $0x44] sm:$0xf]
    %v40 = vld [vmem:[%s0 + $0x48] sm:$0xf]
    %v41 = vld [vmem:[%s0 + $0x4c] sm:$0xf]
    %v42 = vld [vmem:[%s0 + $0x50] sm:$0xf]
    %v43 = vld [vmem:[%s0 + $0x54] sm:$0xf]
    %v44 = vld [vmem:[%s0 + $0x58] sm:$0xf]
    %v45 = vld [vmem:[%s0 + $0x5c] sm:$0xf]
    %v46 = vld [vmem:[%s0 + $0x60] sm:$0xf]
    %v47 = vld [vmem:[%s0 + $0x64] sm:$0xf]
    %v48 = vld [vmem:[%s0 + $0x68] sm:$0xf]
    %v49 = vld [vmem:[%s0 + $0x6c] sm:$0xf]
    %v50 = vld [vmem:[%s0 + $0x70] sm:$0xf]
    %v51 = vld [vmem:[%s0 + $0x74] sm:$0xf]
    %v52 = vld [vmem:[%s0 + $0x78] sm:$0xf]
    %v53 = vld [vmem:[%s0 + $0x7c] sm:$0xf]
    %v54 = vld [vmem:[%s0 + $0x80] sm:$0xf]
    %v55 = vld [vmem:[%s0 + $0x84] sm:$0xf]
    %v56 = vld [vmem:[%s0 + $0x88] sm:$0xf]
    %v57 = vld [vmem:[%s0 + $0x8c] sm:$0xf]
    %v58 = vld [vmem:[%s0 + $0x90] sm:$0xf]
    %v59 = vld [vmem:[%s0 + $0x94] sm:$0xf]
    %v60 = vld [vmem:[%s0 + $0x98] sm:$0xf]
    %v61 = vld [vmem:[%s0 + $0x9c] sm:$0xf]
    %v62 = vld [vmem:[%s0 + $0xa0] sm:$0xf]
    %v63 = vld [vmem:[%s0 + $0xa4] sm:$0xf]
    %v64 = vld [vmem:[%s0 + $0xa8] sm:$0xf]
    %v65 = vld [vmem:[%s0 + $0xac] sm:$0xf]
    %v66 = vld [vmem:[%s0 + $0xb0] sm:$0xf]
    %v67 = vld [vmem:[%s0 + $0xb4] sm:$0xf]
    %v68 = vld [vmem:[%s0 + $0xb8] sm:$0xf]
    %v69 = vld [vmem:[%s0 + $0xbc] sm:$0xf]
    %v70 = vld [vmem:[%s0 + $0xc0] sm:$0xf]
    %v71 = vld [vmem:[%s0 + $0xc4] sm:$0xf]
    %v72 = vld [vmem:[%s0 + $0xc8] sm:$0xf]
    %v73 = vld [vmem:[%s0 + $0xcc] sm:$0xf]
    %v74 = vld [vmem:[%s0 + $0xd0] sm:$0xf]
    %v75 = vld [vmem:[%s0 + $0xd4] sm:$0xf]
    %v76 = vld [vmem:[%s0 + $0xd8] sm:$0xf]
    %v77 = vld [vmem:[%s0 + $0xdc] sm:$0xf]
    %v78 = vld [vmem:[%s0 + $0xe0] sm:$0xf]
    %v79 = vld [vmem:[%s0 + $0xe4] sm:$0xf]
    %v80 = vld [vmem:[%s0 + $0xe8] sm:$0xf]
    %v81 = vld [vmem:[%s0 + $0xec] sm:$0xf]
    %v82 = vld [vmem:[%s0 + $0xf0] sm:$0xf]
    %v83 = vld [vmem:[%s0 + $0xf4] sm:$0xf]
    %v84 = vld [vmem:[%s0 + $0xf8] sm:$0xf]
    %v85 = vld [vmem:[%s0 + $0xfc] sm:$0xf]
    %v86 = vld [vmem:[%s1] sm:$0xf]
    %v87 = vld [vmem:[%s1 + $0x4] sm:$0xf]
    %v152 = vunpack.c.l.b16 %v22
    %v153 = vunpack.c.l.b16 %v23
    %v154 = vunpack.c.l.b16 %v24
    %v155 = vunpack.c.l.b16 %v25
    %v156 = vunpack.c.l.b16 %v26
    %v157 = vunpack.c.l.b16 %v27
    %v158 = vunpack.c.l.b16 %v28
    %v159 = vunpack.c.l.b16 %v29
    %v160 = vunpack.c.l.b16 %v30
    %v161 = vunpack.c.l.b16 %v31
    %v162 = vunpack.c.l.b16 %v32
    %v163 = vunpack.c.l.b16 %v33
    %v164 = vunpack.c.l.b16 %v34
    %v165 = vunpack.c.l.b16 %v35
    %v166 = vunpack.c.l.b16 %v36
    %v167 = vunpack.c.l.b16 %v37
    %v168 = vunpack.c.l.b16 %v38
    %v169 = vunpack.c.l.b16 %v39
    %v170 = vunpack.c.l.b16 %v40
    %v171 = vunpack.c.l.b16 %v41
    %v172 = vunpack.c.l.b16 %v42
    %v173 = vunpack.c.l.b16 %v43
    %v174 = vunpack.c.l.b16 %v44
    %v175 = vunpack.c.l.b16 %v45
    %v176 = vunpack.c.l.b16 %v46
    %v177 = vunpack.c.l.b16 %v47
    %v178 = vunpack.c.l.b16 %v48
    %v179 = vunpack.c.l.b16 %v49
    %v180 = vunpack.c.l.b16 %v50
    %v181 = vunpack.c.l.b16 %v51
    %v182 = vunpack.c.l.b16 %v52
    %v183 = vunpack.c.l.b16 %v53
    %v184 = vunpack.c.l.b16 %v54
    %v185 = vunpack.c.l.b16 %v55
    %v186 = vunpack.c.l.b16 %v56
    %v187 = vunpack.c.l.b16 %v57
    %v188 = vunpack.c.l.b16 %v58
    %v189 = vunpack.c.l.b16 %v59
    %v190 = vunpack.c.l.b16 %v60
    %v191 = vunpack.c.l.b16 %v61
    %v192 = vunpack.c.l.b16 %v62
    %v193 = vunpack.c.l.b16 %v63
    %v194 = vunpack.c.l.b16 %v64
    %v195 = vunpack.c.l.b16 %v65
    %v196 = vunpack.c.l.b16 %v66
    %v197 = vunpack.c.l.b16 %v67
    %v198 = vunpack.c.l.b16 %v68
    %v199 = vunpack.c.l.b16 %v69
    %v200 = vunpack.c.l.b16 %v70
    %v201 = vunpack.c.l.b16 %v71
    %v202 = vunpack.c.l.b16 %v72
    %v203 = vunpack.c.l.b16 %v73
    %v204 = vunpack.c.l.b16 %v74
    %v205 = vunpack.c.l.b16 %v75
    %v206 = vunpack.c.l.b16 %v76
    %v207 = vunpack.c.l.b16 %v77
    %v208 = vunpack.c.l.b16 %v78
    %v209 = vunpack.c.l.b16 %v79
    %v210 = vunpack.c.l.b16 %v80
    %v211 = vunpack.c.l.b16 %v81
    %v212 = vunpack.c.l.b16 %v82
    %v213 = vunpack.c.l.b16 %v83
    %v214 = vunpack.c.l.b16 %v84
    %v215 = vunpack.c.l.b16 %v85
    %v216 = vpack.c.b16 %v153, %v152
    %v217 = vpack.c.b16 %v155, %v154
    %v218 = vpack.c.b16 %v157, %v156
    %v219 = vpack.c.b16 %v159, %v158
    %v220 = vpack.c.b16 %v161, %v160
    %v221 = vpack.c.b16 %v163, %v162
    %v222 = vpack.c.b16 %v165, %v164
    %v223 = vpack.c.b16 %v167, %v166
    %v224 = vpack.c.b16 %v169, %v168
    %v225 = vpack.c.b16 %v171, %v170
    %v226 = vpack.c.b16 %v173, %v172
    %v227 = vpack.c.b16 %v175, %v174
    %v228 = vpack.c.b16 %v177, %v176
    %v229 = vpack.c.b16 %v179, %v178
    %v230 = vpack.c.b16 %v181, %v180
    %v231 = vpack.c.b16 %v183, %v182
    %v232 = vpack.c.b16 %v185, %v184
    %v233 = vpack.c.b16 %v187, %v186
    %v234 = vpack.c.b16 %v189, %v188
    %v235 = vpack.c.b16 %v191, %v190
    %v236 = vpack.c.b16 %v193, %v192
    %v237 = vpack.c.b16 %v195, %v194
    %v238 = vpack.c.b16 %v197, %v196
    %v239 = vpack.c.b16 %v199, %v198
    %v240 = vpack.c.b16 %v201, %v200
    %v241 = vpack.c.b16 %v203, %v202
    %v242 = vpack.c.b16 %v205, %v204
    %v243 = vpack.c.b16 %v207, %v206
    %v244 = vpack.c.b16 %v209, %v208
    %v245 = vpack.c.b16 %v211, %v210
    %v246 = vpack.c.b16 %v213, %v212
    %v247 = vpack.c.b16 %v215, %v214
    %v250 = vunpack.c.l.b16 %v86
    %v251 = vunpack.c.l.b16 %v87
    %v252 = vpack.c.b16 %v251, %v250
    %vm254 = vcmask 130048
    %v256 = vsel %vm254, %v216, 0
    %v259 = vsel %vm254, %v217, 0
    %v262 = vsel %vm254, %v218, 0
    %v265 = vsel %vm254, %v219, 0
    %v268 = vsel %vm254, %v220, 0
    %v271 = vsel %vm254, %v221, 0
    %v274 = vsel %vm254, %v222, 0
    %v277 = vsel %vm254, %v223, 0
    %v280 = vsel %vm254, %v224, 0
    %v283 = vsel %vm254, %v225, 0
    %v286 = vsel %vm254, %v226, 0
    %v289 = vsel %vm254, %v227, 0
    %v292 = vsel %vm254, %v228, 0
    %v295 = vsel %vm254, %v229, 0
    %v298 = vsel %vm254, %v230, 0
    %v301 = vsel %vm254, %v231, 0
    %v304 = vsel %vm254, %v232, 0
    %v307 = vsel %vm254, %v233, 0
    %v310 = vsel %vm254, %v234, 0
    %v313 = vsel %vm254, %v235, 0
    %v316 = vsel %vm254, %v236, 0
    %v319 = vsel %vm254, %v237, 0
    %v322 = vsel %vm254, %v238, 0
    %v325 = vsel %vm254, %v239, 0
    %v328 = vsel %vm254, %v240, 0
    %v331 = vsel %vm254, %v241, 0
    %v334 = vsel %vm254, %v242, 0
    %v337 = vsel %vm254, %v243, 0
    %v340 = vsel %vm254, %v244, 0
    %v343 = vsel %vm254, %v245, 0
    %v346 = vsel %vm254, %v246, 0
    %v349 = vsel %vm254, %v247, 0
    %351 = vmatprep.subr.bf16.mxu0 0
    %352 = vmatpush1.bf16.msra.mxu0 %v252
    %353 = vmatprep.subr.bf16.mxu0 0
    %354 = vmatpush1.bf16.msra.mxu0 0
    %355 = vmatprep.subr.bf16.mxu0 0
    %356 = vmatpush1.bf16.msra.mxu0 0
    %357 = vmatprep.subr.bf16.mxu0 0
    %358 = vmatpush1.bf16.msra.mxu0 0
    %359 = vmatprep.subr.bf16.mxu0 0
    %360 = vmatpush1.bf16.msra.mxu0 0
    %361 = vmatprep.subr.bf16.mxu0 0
    %362 = vmatpush1.bf16.msra.mxu0 0
    %363 = vmatprep.subr.bf16.mxu0 0
    %364 = vmatpush1.bf16.msra.mxu0 0
    %365 = vmatprep.subr.bf16.mxu0 0
    %366 = vmatpush1.bf16.msra.mxu0 0
    %367 = vmatprep.subr.bf16.mxu0 0
    %368 = vmatpush1.bf16.msra.mxu0 0
    %369 = vmatprep.subr.bf16.mxu0 0
    %370 = vmatpush1.bf16.msra.mxu0 0
    %371 = vmatprep.subr.bf16.mxu0 0
    %372 = vmatpush1.bf16.msra.mxu0 0
    %373 = vmatprep.subr.bf16.mxu0 0
    %374 = vmatpush1.bf16.msra.mxu0 0
    %375 = vmatprep.subr.bf16.mxu0 0
    %376 = vmatpush1.bf16.msra.mxu0 0
    %377 = vmatprep.subr.bf16.mxu0 0
    %378 = vmatpush1.bf16.msra.mxu0 0
    %379 = vmatprep.subr.bf16.mxu0 0
    %380 = vmatpush1.bf16.msra.mxu0 0
    %381 = vmatprep.subr.bf16.mxu0 0
    %382 = vmatpush1.bf16.msra.mxu0 0
    %383 = vmatprep.mubr.bf16.mxu0 0
    %384 = vmatmul.mubr.bf16.gmra.mrb[0].mxu0 %v256
    %v385 = vpop.f32.mrb[0].mxu0
    %v386 = vadd.f32 0.0, %v385
    %v387 = vpop.f32.mrb[0].mxu0
    %v388 = vpop.f32.mrb[0].mxu0
    %v389 = vadd.f32 0.0, %v388
    %v390 = vpop.f32.mrb[0].mxu0
    %391 = vmatprep.mubr.bf16.mxu0 0
    %392 = vmatmul.mubr.bf16.gmra.mrb[0].mxu0 %v259
    %v393 = vpop.f32.mrb[0].mxu0
    %v394 = vadd.f32 0.0, %v393
    %v395 = vpop.f32.mrb[0].mxu0
    %v396 = vpop.f32.mrb[0].mxu0
    %v397 = vadd.f32 0.0, %v396
    %v398 = vpop.f32.mrb[0].mxu0
    %399 = vmatprep.mubr.bf16.mxu0 0
    %400 = vmatmul.mubr.bf16.gmra.mrb[0].mxu0 %v262
    %v401 = vpop.f32.mrb[0].mxu0
    %v402 = vadd.f32 0.0, %v401
    %v403 = vpop.f32.mrb[0].mxu0
    %v404 = vpop.f32.mrb[0].mxu0
    %v405 = vadd.f32 0.0, %v404
    %v406 = vpop.f32.mrb[0].mxu0
    %407 = vmatprep.mubr.bf16.mxu0 0
    %408 = vmatmul.mubr.bf16.gmra.mrb[0].mxu0 %v265
    %v409 = vpop.f32.mrb[0].mxu0
    %v410 = vadd.f32 0.0, %v409
    %v411 = vpop.f32.mrb[0].mxu0
    %v412 = vpop.f32.mrb[0].mxu0
    %v413 = vadd.f32 0.0, %v412
    %v414 = vpop.f32.mrb[0].mxu0
    %415 = vmatprep.mubr.bf16.mxu0 0
    %416 = vmatmul.mubr.bf16.gmra.mrb[0].mxu0 %v268
    %v417 = vpop.f32.mrb[0].mxu0
    %v418 = vadd.f32 0.0, %v417
    %v419 = vpop.f32.mrb[0].mxu0
    %v420 = vpop.f32.mrb[0].mxu0
    %v421 = vadd.f32 0.0, %v420
    %v422 = vpop.f32.mrb[0].mxu0
    %423 = vmatprep.mubr.bf16.mxu0 0
    %424 = vmatmul.mubr.bf16.gmra.mrb[0].mxu0 %v271
    %v425 = vpop.f32.mrb[0].mxu0
    %v426 = vadd.f32 0.0, %v425
    %v427 = vpop.f32.mrb[0].mxu0
    %v428 = vpop.f32.mrb[0].mxu0
    %v429 = vadd.f32 0.0, %v428
    %v430 = vpop.f32.mrb[0].mxu0
    %431 = vmatprep.mubr.bf16.mxu0 0
    %432 = vmatmul.mubr.bf16.gmra.mrb[0].mxu0 %v274
    %v433 = vpop.f32.mrb[0].mxu0
    %v434 = vadd.f32 0.0, %v433
    %v435 = vpop.f32.mrb[0].mxu0
    %v436 = vpop.f32.mrb[0].mxu0
    %v437 = vadd.f32 0.0, %v436
    %v438 = vpop.f32.mrb[0].mxu0
    %439 = vmatprep.mubr.bf16.mxu0 0
    %440 = vmatmul.mubr.bf16.gmra.mrb[0].mxu0 %v277
    %v441 = vpop.f32.mrb[0].mxu0
    %v442 = vadd.f32 0.0, %v441
    %v443 = vpop.f32.mrb[0].mxu0
    %v444 = vpop.f32.mrb[0].mxu0
    %v445 = vadd.f32 0.0, %v444
    %v446 = vpop.f32.mrb[0].mxu0
    %447 = vmatprep.mubr.bf16.mxu0 0
    %448 = vmatmul.mubr.bf16.gmra.mrb[0].mxu0 %v280
    %v449 = vpop.f32.mrb[0].mxu0
    %v450 = vadd.f32 0.0, %v449
    %v451 = vpop.f32.mrb[0].mxu0
    %v452 = vpop.f32.mrb[0].mxu0
    %v453 = vadd.f32 0.0, %v452
    %v454 = vpop.f32.mrb[0].mxu0
    %455 = vmatprep.mubr.bf16.mxu0 0
    %456 = vmatmul.mubr.bf16.gmra.mrb[0].mxu0 %v283
    %v457 = vpop.f32.mrb[0].mxu0
    %v458 = vadd.f32 0.0, %v457
    %v459 = vpop.f32.mrb[0].mxu0
    %v460 = vpop.f32.mrb[0].mxu0
    %v461 = vadd.f32 0.0, %v460
    %v462 = vpop.f32.mrb[0].mxu0
    %463 = vmatprep.mubr.bf16.mxu0 0
    %464 = vmatmul.mubr.bf16.gmra.mrb[0].mxu0 %v286
    %v465 = vpop.f32.mrb[0].mxu0
    %v466 = vadd.f32 0.0, %v465
    %v467 = vpop.f32.mrb[0].mxu0
    %v468 = vpop.f32.mrb[0].mxu0
    %v469 = vadd.f32 0.0, %v468
    %v470 = vpop.f32.mrb[0].mxu0
    %471 = vmatprep.mubr.bf16.mxu0 0
    %472 = vmatmul.mubr.bf16.gmra.mrb[0].mxu0 %v289
    %v473 = vpop.f32.mrb[0].mxu0
    %v474 = vadd.f32 0.0, %v473
    %v475 = vpop.f32.mrb[0].mxu0
    %v476 = vpop.f32.mrb[0].mxu0
    %v477 = vadd.f32 0.0, %v476
    %v478 = vpop.f32.mrb[0].mxu0
    %479 = vmatprep.mubr.bf16.mxu0 0
    %480 = vmatmul.mubr.bf16.gmra.mrb[0].mxu0 %v292
    %v481 = vpop.f32.mrb[0].mxu0
    %v482 = vadd.f32 0.0, %v481
    %v483 = vpop.f32.mrb[0].mxu0
    %v484 = vpop.f32.mrb[0].mxu0
    %v485 = vadd.f32 0.0, %v484
    %v486 = vpop.f32.mrb[0].mxu0
    %487 = vmatprep.mubr.bf16.mxu0 0
    %488 = vmatmul.mubr.bf16.gmra.mrb[0].mxu0 %v295
    %v489 = vpop.f32.mrb[0].mxu0
    %v490 = vadd.f32 0.0, %v489
    %v491 = vpop.f32.mrb[0].mxu0
    %v492 = vpop.f32.mrb[0].mxu0
    %v493 = vadd.f32 0.0, %v492
    %v494 = vpop.f32.mrb[0].mxu0
    %495 = vmatprep.mubr.bf16.mxu0 0
    %496 = vmatmul.mubr.bf16.gmra.mrb[0].mxu0 %v298
    %v497 = vpop.f32.mrb[0].mxu0
    %v498 = vadd.f32 0.0, %v497
    %v499 = vpop.f32.mrb[0].mxu0
    %v500 = vpop.f32.mrb[0].mxu0
    %v501 = vadd.f32 0.0, %v500
    %v502 = vpop.f32.mrb[0].mxu0
    %503 = vmatprep.mubr.bf16.mxu0 0
    %504 = vmatmul.mubr.bf16.gmra.mrb[0].mxu0 %v301
    %v505 = vpop.f32.mrb[0].mxu0
    %v506 = vadd.f32 0.0, %v505
    %v507 = vpop.f32.mrb[0].mxu0
    %v508 = vpop.f32.mrb[0].mxu0
    %v509 = vadd.f32 0.0, %v508
    %v510 = vpop.f32.mrb[0].mxu0
    %511 = vmatprep.mubr.bf16.mxu0 0
    %512 = vmatmul.mubr.bf16.gmra.mrb[0].mxu0 %v304
    %v513 = vpop.f32.mrb[0].mxu0
    %v514 = vadd.f32 0.0, %v513
    %v515 = vpop.f32.mrb[0].mxu0
    %v516 = vpop.f32.mrb[0].mxu0
    %v517 = vadd.f32 0.0, %v516
    %v518 = vpop.f32.mrb[0].mxu0
    %519 = vmatprep.mubr.bf16.mxu0 0
    %520 = vmatmul.mubr.bf16.gmra.mrb[0].mxu0 %v307
    %v521 = vpop.f32.mrb[0].mxu0
    %v522 = vadd.f32 0.0, %v521
    %v523 = vpop.f32.mrb[0].mxu0
    %v524 = vpop.f32.mrb[0].mxu0
    %v525 = vadd.f32 0.0, %v524
    %v526 = vpop.f32.mrb[0].mxu0
    %527 = vmatprep.mubr.bf16.mxu0 0
    %528 = vmatmul.mubr.bf16.gmra.mrb[0].mxu0 %v310
    %v529 = vpop.f32.mrb[0].mxu0
    %v530 = vadd.f32 0.0, %v529
    %v531 = vpop.f32.mrb[0].mxu0
    %v532 = vpop.f32.mrb[0].mxu0
    %v533 = vadd.f32 0.0, %v532
    %v534 = vpop.f32.mrb[0].mxu0
    %535 = vmatprep.mubr.bf16.mxu0 0
    %536 = vmatmul.mubr.bf16.gmra.mrb[0].mxu0 %v313
    %v537 = vpop.f32.mrb[0].mxu0
    %v538 = vadd.f32 0.0, %v537
    %v539 = vpop.f32.mrb[0].mxu0
    %v540 = vpop.f32.mrb[0].mxu0
    %v541 = vadd.f32 0.0, %v540
    %v542 = vpop.f32.mrb[0].mxu0
    %543 = vmatprep.mubr.bf16.mxu0 0
    %544 = vmatmul.mubr.bf16.gmra.mrb[0].mxu0 %v316
    %v545 = vpop.f32.mrb[0].mxu0
    %v546 = vadd.f32 0.0, %v545
    %v547 = vpop.f32.mrb[0].mxu0
    %v548 = vpop.f32.mrb[0].mxu0
    %v549 = vadd.f32 0.0, %v548
    %v550 = vpop.f32.mrb[0].mxu0
    %551 = vmatprep.mubr.bf16.mxu0 0
    %552 = vmatmul.mubr.bf16.gmra.mrb[0].mxu0 %v319
    %v553 = vpop.f32.mrb[0].mxu0
    %v554 = vadd.f32 0.0, %v553
    %v555 = vpop.f32.mrb[0].mxu0
    %v556 = vpop.f32.mrb[0].mxu0
    %v557 = vadd.f32 0.0, %v556
    %v558 = vpop.f32.mrb[0].mxu0
    %559 = vmatprep.mubr.bf16.mxu0 0
    %560 = vmatmul.mubr.bf16.gmra.mrb[0].mxu0 %v322
    %v561 = vpop.f32.mrb[0].mxu0
    %v562 = vadd.f32 0.0, %v561
    %v563 = vpop.f32.mrb[0].mxu0
    %v564 = vpop.f32.mrb[0].mxu0
    %v565 = vadd.f32 0.0, %v564
    %v566 = vpop.f32.mrb[0].mxu0
    %567 = vmatprep.mubr.bf16.mxu0 0
    %568 = vmatmul.mubr.bf16.gmra.mrb[0].mxu0 %v325
    %v569 = vpop.f32.mrb[0].mxu0
    %v570 = vadd.f32 0.0, %v569
    %v571 = vpop.f32.mrb[0].mxu0
    %v572 = vpop.f32.mrb[0].mxu0
    %v573 = vadd.f32 0.0, %v572
    %v574 = vpop.f32.mrb[0].mxu0
    %575 = vmatprep.mubr.bf16.mxu0 0
    %576 = vmatmul.mubr.bf16.gmra.mrb[0].mxu0 %v328
    %v577 = vpop.f32.mrb[0].mxu0
    %v578 = vadd.f32 0.0, %v577
    %v579 = vpop.f32.mrb[0].mxu0
    %v580 = vpop.f32.mrb[0].mxu0
    %v581 = vadd.f32 0.0, %v580
    %v582 = vpop.f32.mrb[0].mxu0
    %583 = vmatprep.mubr.bf16.mxu0 0
    %584 = vmatmul.mubr.bf16.gmra.mrb[0].mxu0 %v331
    %v585 = vpop.f32.mrb[0].mxu0
    %v586 = vadd.f32 0.0, %v585
    %v587 = vpop.f32.mrb[0].mxu0
    %v588 = vpop.f32.mrb[0].mxu0
    %v589 = vadd.f32 0.0, %v588
    %v590 = vpop.f32.mrb[0].mxu0
    %591 = vmatprep.mubr.bf16.mxu0 0
    %592 = vmatmul.mubr.bf16.gmra.mrb[0].mxu0 %v334
    %v593 = vpop.f32.mrb[0].mxu0
    %v594 = vadd.f32 0.0, %v593
    %v595 = vpop.f32.mrb[0].mxu0
    %v596 = vpop.f32.mrb[0].mxu0
    %v597 = vadd.f32 0.0, %v596
    %v598 = vpop.f32.mrb[0].mxu0
    %599 = vmatprep.mubr.bf16.mxu0 0
    %600 = vmatmul.mubr.bf16.gmra.mrb[0].mxu0 %v337
    %v601 = vpop.f32.mrb[0].mxu0
    %v602 = vadd.f32 0.0, %v601
    %v603 = vpop.f32.mrb[0].mxu0
    %v604 = vpop.f32.mrb[0].mxu0
    %v605 = vadd.f32 0.0, %v604
    %v606 = vpop.f32.mrb[0].mxu0
    %607 = vmatprep.mubr.bf16.mxu0 0
    %608 = vmatmul.mubr.bf16.gmra.mrb[0].mxu0 %v340
    %v609 = vpop.f32.mrb[0].mxu0
    %v610 = vadd.f32 0.0, %v609
    %v611 = vpop.f32.mrb[0].mxu0
    %v612 = vpop.f32.mrb[0].mxu0
    %v613 = vadd.f32 0.0, %v612
    %v614 = vpop.f32.mrb[0].mxu0
    %615 = vmatprep.mubr.bf16.mxu0 0
    %616 = vmatmul.mubr.bf16.gmra.mrb[0].mxu0 %v343
    %v617 = vpop.f32.mrb[0].mxu0
    %v618 = vadd.f32 0.0, %v617
    %v619 = vpop.f32.mrb[0].mxu0
    %v620 = vpop.f32.mrb[0].mxu0
    %v621 = vadd.f32 0.0, %v620
    %v622 = vpop.f32.mrb[0].mxu0
    %623 = vmatprep.mubr.bf16.mxu0 0
    %624 = vmatmul.mubr.bf16.gmra.mrb[0].mxu0 %v346
    %v625 = vpop.f32.mrb[0].mxu0
    %v626 = vadd.f32 0.0, %v625
    %v627 = vpop.f32.mrb[0].mxu0
    %v628 = vpop.f32.mrb[0].mxu0
    %v629 = vadd.f32 0.0, %v628
    %v630 = vpop.f32.mrb[0].mxu0
    %631 = vmatprep.mubr.bf16.mxu0 0
    %632 = vmatmul.mubr.bf16.gmra.mrb[0].mxu0 %v349
    %v633 = vpop.f32.mrb[0].mxu0
    %v634 = vadd.f32 0.0, %v633
    %v635 = vpop.f32.mrb[0].mxu0
    %v636 = vpop.f32.mrb[0].mxu0
    %v637 = vadd.f32 0.0, %v636
    %v638 = vpop.f32.mrb[0].mxu0
    %639 = vdwg.mxu0
    %v640 = vld [vmem:[%s2] sm:$0x1]
    %v642 = vlaneseq
    %v643 = vshrl.u32 %v642, 7
    %v644 = vsub.s32 0, %v643
    %v645 = vrot.slane %v640, %v644
    %v647 = vmul.f32 %v386, %v645
    %v648 = vmul.f32 %v389, %v645
    %v649 = vmul.f32 %v394, %v645
    %v650 = vmul.f32 %v397, %v645
    %v651 = vmul.f32 %v402, %v645
    %v652 = vmul.f32 %v405, %v645
    %v653 = vmul.f32 %v410, %v645
    %v654 = vmul.f32 %v413, %v645
    %v655 = vmul.f32 %v418, %v645
    %v656 = vmul.f32 %v421, %v645
    %v657 = vmul.f32 %v426, %v645
    %v658 = vmul.f32 %v429, %v645
    %v659 = vmul.f32 %v434, %v645
    %v660 = vmul.f32 %v437, %v645
    %v661 = vmul.f32 %v442, %v645
    %v662 = vmul.f32 %v445, %v645
    %v663 = vmul.f32 %v450, %v645
    %v664 = vmul.f32 %v453, %v645
    %v665 = vmul.f32 %v458, %v645
    %v666 = vmul.f32 %v461, %v645
    %v667 = vmul.f32 %v466, %v645
    %v668 = vmul.f32 %v469, %v645
    %v669 = vmul.f32 %v474, %v645
    %v670 = vmul.f32 %v477, %v645
    %v671 = vmul.f32 %v482, %v645
    %v672 = vmul.f32 %v485, %v645
    %v673 = vmul.f32 %v490, %v645
    %v674 = vmul.f32 %v493, %v645
    %v675 = vmul.f32 %v498, %v645
    %v676 = vmul.f32 %v501, %v645
    %v677 = vmul.f32 %v506, %v645
    %v678 = vmul.f32 %v509, %v645
    %v679 = vmul.f32 %v514, %v645
    %v680 = vmul.f32 %v517, %v645
    %v681 = vmul.f32 %v522, %v645
    %v682 = vmul.f32 %v525, %v645
    %v683 = vmul.f32 %v530, %v645
    %v684 = vmul.f32 %v533, %v645
    %v685 = vmul.f32 %v538, %v645
    %v686 = vmul.f32 %v541, %v645
    %v687 = vmul.f32 %v546, %v645
    %v688 = vmul.f32 %v549, %v645
    %v689 = vmul.f32 %v554, %v645
    %v690 = vmul.f32 %v557, %v645
    %v691 = vmul.f32 %v562, %v645
    %v692 = vmul.f32 %v565, %v645
    %v693 = vmul.f32 %v570, %v645
    %v694 = vmul.f32 %v573, %v645
    %v695 = vmul.f32 %v578, %v645
    %v696 = vmul.f32 %v581, %v645
    %v697 = vmul.f32 %v586, %v645
    %v698 = vmul.f32 %v589, %v645
    %v699 = vmul.f32 %v594, %v645
    %v700 = vmul.f32 %v597, %v645
    %v701 = vmul.f32 %v602, %v645
    %v702 = vmul.f32 %v605, %v645
    %v703 = vmul.f32 %v610, %v645
    %v704 = vmul.f32 %v613, %v645
    %v705 = vmul.f32 %v618, %v645
    %v706 = vmul.f32 %v621, %v645
    %v707 = vmul.f32 %v626, %v645
    %v708 = vmul.f32 %v629, %v645
    %v709 = vmul.f32 %v634, %v645
    %v710 = vmul.f32 %v637, %v645
    %v711 = vld [vmem:[%s3] sm:$0x1]
    %v713 = vlaneseq
    %v714 = vshrl.u32 %v713, 7
    %v715 = vsub.s32 0, %v714
    %v716 = vrot.slane %v711, %v715
    %v718 = vadd.f32 %v647, %v716
    %v719 = vadd.f32 %v648, %v716
    %v720 = vadd.f32 %v649, %v716
    %v721 = vadd.f32 %v650, %v716
    %v722 = vadd.f32 %v651, %v716
    %v723 = vadd.f32 %v652, %v716
    %v724 = vadd.f32 %v653, %v716
    %v725 = vadd.f32 %v654, %v716
    %v726 = vadd.f32 %v655, %v716
    %v727 = vadd.f32 %v656, %v716
    %v728 = vadd.f32 %v657, %v716
    %v729 = vadd.f32 %v658, %v716
    %v730 = vadd.f32 %v659, %v716
    %v731 = vadd.f32 %v660, %v716
    %v732 = vadd.f32 %v661, %v716
    %v733 = vadd.f32 %v662, %v716
    %v734 = vadd.f32 %v663, %v716
    %v735 = vadd.f32 %v664, %v716
    %v736 = vadd.f32 %v665, %v716
    %v737 = vadd.f32 %v666, %v716
    %v738 = vadd.f32 %v667, %v716
    %v739 = vadd.f32 %v668, %v716
    %v740 = vadd.f32 %v669, %v716
    %v741 = vadd.f32 %v670, %v716
    %v742 = vadd.f32 %v671, %v716
    %v743 = vadd.f32 %v672, %v716
    %v744 = vadd.f32 %v673, %v716
    %v745 = vadd.f32 %v674, %v716
    %v746 = vadd.f32 %v675, %v716
    %v747 = vadd.f32 %v676, %v716
    %v748 = vadd.f32 %v677, %v716
    %v749 = vadd.f32 %v678, %v716
    %v750 = vadd.f32 %v679, %v716
    %v751 = vadd.f32 %v680, %v716
    %v752 = vadd.f32 %v681, %v716
    %v753 = vadd.f32 %v682, %v716
    %v754 = vadd.f32 %v683, %v716
    %v755 = vadd.f32 %v684, %v716
    %v756 = vadd.f32 %v685, %v716
    %v757 = vadd.f32 %v686, %v716
    %v758 = vadd.f32 %v687, %v716
    %v759 = vadd.f32 %v688, %v716
    %v760 = vadd.f32 %v689, %v716
    %v761 = vadd.f32 %v690, %v716
    %v762 = vadd.f32 %v691, %v716
    %v763 = vadd.f32 %v692, %v716
    %v764 = vadd.f32 %v693, %v716
    %v765 = vadd.f32 %v694, %v716
    %v766 = vadd.f32 %v695, %v716
    %v767 = vadd.f32 %v696, %v716
    %v768 = vadd.f32 %v697, %v716
    %v769 = vadd.f32 %v698, %v716
    %v770 = vadd.f32 %v699, %v716
    %v771 = vadd.f32 %v700, %v716
    %v772 = vadd.f32 %v701, %v716
    %v773 = vadd.f32 %v702, %v716
    %v774 = vadd.f32 %v703, %v716
    %v775 = vadd.f32 %v704, %v716
    %v776 = vadd.f32 %v705, %v716
    %v777 = vadd.f32 %v706, %v716
    %v778 = vadd.f32 %v707, %v716
    %v779 = vadd.f32 %v708, %v716
    %v780 = vadd.f32 %v709, %v716
    %v781 = vadd.f32 %v710, %v716
    %v782 = vld [vmem:[%s4] sm:$0xf]
    %v783 = vld [vmem:[%s4 + $0x4] sm:$0xf]
    %v784 = vld [vmem:[%s4 + $0x8] sm:$0xf]
    %v785 = vld [vmem:[%s4 + $0xc] sm:$0xf]
    %v786 = vld [vmem:[%s4 + $0x10] sm:$0xf]
    %v787 = vld [vmem:[%s4 + $0x14] sm:$0xf]
    %v788 = vld [vmem:[%s4 + $0x18] sm:$0xf]
    %v789 = vld [vmem:[%s4 + $0x1c] sm:$0xf]
    %v790 = vld [vmem:[%s4 + $0x20] sm:$0xf]
    %v791 = vld [vmem:[%s4 + $0x24] sm:$0xf]
    %v792 = vld [vmem:[%s4 + $0x28] sm:$0xf]
    %v793 = vld [vmem:[%s4 + $0x2c] sm:$0xf]
    %v794 = vld [vmem:[%s4 + $0x30] sm:$0xf]
    %v795 = vld [vmem:[%s4 + $0x34] sm:$0xf]
    %v796 = vld [vmem:[%s4 + $0x38] sm:$0xf]
    %v797 = vld [vmem:[%s4 + $0x3c] sm:$0xf]
    %v798 = vld [vmem:[%s4 + $0x40] sm:$0xf]
    %v799 = vld [vmem:[%s4 + $0x44] sm:$0xf]
    %v800 = vld [vmem:[%s4 + $0x48] sm:$0xf]
    %v801 = vld [vmem:[%s4 + $0x4c] sm:$0xf]
    %v802 = vld [vmem:[%s4 + $0x50] sm:$0xf]
    %v803 = vld [vmem:[%s4 + $0x54] sm:$0xf]
    %v804 = vld [vmem:[%s4 + $0x58] sm:$0xf]
    %v805 = vld [vmem:[%s4 + $0x5c] sm:$0xf]
    %v806 = vld [vmem:[%s4 + $0x60] sm:$0xf]
    %v807 = vld [vmem:[%s4 + $0x64] sm:$0xf]
    %v808 = vld [vmem:[%s4 + $0x68] sm:$0xf]
    %v809 = vld [vmem:[%s4 + $0x6c] sm:$0xf]
    %v810 = vld [vmem:[%s4 + $0x70] sm:$0xf]
    %v811 = vld [vmem:[%s4 + $0x74] sm:$0xf]
    %v812 = vld [vmem:[%s4 + $0x78] sm:$0xf]
    %v813 = vld [vmem:[%s4 + $0x7c] sm:$0xf]
    %v814 = vld [vmem:[%s4 + $0x80] sm:$0xf]
    %v815 = vld [vmem:[%s4 + $0x84] sm:$0xf]
    %v816 = vld [vmem:[%s4 + $0x88] sm:$0xf]
    %v817 = vld [vmem:[%s4 + $0x8c] sm:$0xf]
    %v818 = vld [vmem:[%s4 + $0x90] sm:$0xf]
    %v819 = vld [vmem:[%s4 + $0x94] sm:$0xf]
    %v820 = vld [vmem:[%s4 + $0x98] sm:$0xf]
    %v821 = vld [vmem:[%s4 + $0x9c] sm:$0xf]
    %v822 = vld [vmem:[%s4 + $0xa0] sm:$0xf]
    %v823 = vld [vmem:[%s4 + $0xa4] sm:$0xf]
    %v824 = vld [vmem:[%s4 + $0xa8] sm:$0xf]
    %v825 = vld [vmem:[%s4 + $0xac] sm:$0xf]
    %v826 = vld [vmem:[%s4 + $0xb0] sm:$0xf]
    %v827 = vld [vmem:[%s4 + $0xb4] sm:$0xf]
    %v828 = vld [vmem:[%s4 + $0xb8] sm:$0xf]
    %v829 = vld [vmem:[%s4 + $0xbc] sm:$0xf]
    %v830 = vld [vmem:[%s4 + $0xc0] sm:$0xf]
    %v831 = vld [vmem:[%s4 + $0xc4] sm:$0xf]
    %v832 = vld [vmem:[%s4 + $0xc8] sm:$0xf]
    %v833 = vld [vmem:[%s4 + $0xcc] sm:$0xf]
    %v834 = vld [vmem:[%s4 + $0xd0] sm:$0xf]
    %v835 = vld [vmem:[%s4 + $0xd4] sm:$0xf]
    %v836 = vld [vmem:[%s4 + $0xd8] sm:$0xf]
    %v837 = vld [vmem:[%s4 + $0xdc] sm:$0xf]
    %v838 = vld [vmem:[%s4 + $0xe0] sm:$0xf]
    %v839 = vld [vmem:[%s4 + $0xe4] sm:$0xf]
    %v840 = vld [vmem:[%s4 + $0xe8] sm:$0xf]
    %v841 = vld [vmem:[%s4 + $0xec] sm:$0xf]
    %v842 = vld [vmem:[%s4 + $0xf0] sm:$0xf]
    %v843 = vld [vmem:[%s4 + $0xf4] sm:$0xf]
    %v844 = vld [vmem:[%s4 + $0xf8] sm:$0xf]
    %v845 = vld [vmem:[%s4 + $0xfc] sm:$0xf]
    %v846 = vunpack.c.l.bf16 %v782
    %v847 = vunpack.c.l.bf16 %v783
    %v848 = vunpack.c.l.bf16 %v784
    %v849 = vunpack.c.l.bf16 %v785
    %v850 = vunpack.c.l.bf16 %v786
    %v851 = vunpack.c.l.bf16 %v787
    %v852 = vunpack.c.l.bf16 %v788
    %v853 = vunpack.c.l.bf16 %v789
    %v854 = vunpack.c.l.bf16 %v790
    %v855 = vunpack.c.l.bf16 %v791
    %v856 = vunpack.c.l.bf16 %v792
    %v857 = vunpack.c.l.bf16 %v793
    %v858 = vunpack.c.l.bf16 %v794
    %v859 = vunpack.c.l.bf16 %v795
    %v860 = vunpack.c.l.bf16 %v796
    %v861 = vunpack.c.l.bf16 %v797
    %v862 = vunpack.c.l.bf16 %v798
    %v863 = vunpack.c.l.bf16 %v799
    %v864 = vunpack.c.l.bf16 %v800
    %v865 = vunpack.c.l.bf16 %v801
    %v866 = vunpack.c.l.bf16 %v802
    %v867 = vunpack.c.l.bf16 %v803
    %v868 = vunpack.c.l.bf16 %v804
    %v869 = vunpack.c.l.bf16 %v805
    %v870 = vunpack.c.l.bf16 %v806
    %v871 = vunpack.c.l.bf16 %v807
    %v872 = vunpack.c.l.bf16 %v808
    %v873 = vunpack.c.l.bf16 %v809
    %v874 = vunpack.c.l.bf16 %v810
    %v875 = vunpack.c.l.bf16 %v811
    %v876 = vunpack.c.l.bf16 %v812
    %v877 = vunpack.c.l.bf16 %v813
    %v878 = vunpack.c.l.bf16 %v814
    %v879 = vunpack.c.l.bf16 %v815
    %v880 = vunpack.c.l.bf16 %v816
    %v881 = vunpack.c.l.bf16 %v817
    %v882 = vunpack.c.l.bf16 %v818
    %v883 = vunpack.c.l.bf16 %v819
    %v884 = vunpack.c.l.bf16 %v820
    %v885 = vunpack.c.l.bf16 %v821
    %v886 = vunpack.c.l.bf16 %v822
    %v887 = vunpack.c.l.bf16 %v823
    %v888 = vunpack.c.l.bf16 %v824
    %v889 = vunpack.c.l.bf16 %v825
    %v890 = vunpack.c.l.bf16 %v826
    %v891 = vunpack.c.l.bf16 %v827
    %v892 = vunpack.c.l.bf16 %v828
    %v893 = vunpack.c.l.bf16 %v829
    %v894 = vunpack.c.l.bf16 %v830
    %v895 = vunpack.c.l.bf16 %v831
    %v896 = vunpack.c.l.bf16 %v832
    %v897 = vunpack.c.l.bf16 %v833
    %v898 = vunpack.c.l.bf16 %v834
    %v899 = vunpack.c.l.bf16 %v835
    %v900 = vunpack.c.l.bf16 %v836
    %v901 = vunpack.c.l.bf16 %v837
    %v902 = vunpack.c.l.bf16 %v838
    %v903 = vunpack.c.l.bf16 %v839
    %v904 = vunpack.c.l.bf16 %v840
    %v905 = vunpack.c.l.bf16 %v841
    %v906 = vunpack.c.l.bf16 %v842
    %v907 = vunpack.c.l.bf16 %v843
    %v908 = vunpack.c.l.bf16 %v844
    %v909 = vunpack.c.l.bf16 %v845
    %v910 = vadd.f32 %v718, %v846
    %v911 = vadd.f32 %v719, %v847
    %v912 = vadd.f32 %v720, %v848
    %v913 = vadd.f32 %v721, %v849
    %v914 = vadd.f32 %v722, %v850
    %v915 = vadd.f32 %v723, %v851
    %v916 = vadd.f32 %v724, %v852
    %v917 = vadd.f32 %v725, %v853
    %v918 = vadd.f32 %v726, %v854
    %v919 = vadd.f32 %v727, %v855
    %v920 = vadd.f32 %v728, %v856
    %v921 = vadd.f32 %v729, %v857
    %v922 = vadd.f32 %v730, %v858
    %v923 = vadd.f32 %v731, %v859
    %v924 = vadd.f32 %v732, %v860
    %v925 = vadd.f32 %v733, %v861
    %v926 = vadd.f32 %v734, %v862
    %v927 = vadd.f32 %v735, %v863
    %v928 = vadd.f32 %v736, %v864
    %v929 = vadd.f32 %v737, %v865
    %v930 = vadd.f32 %v738, %v866
    %v931 = vadd.f32 %v739, %v867
    %v932 = vadd.f32 %v740, %v868
    %v933 = vadd.f32 %v741, %v869
    %v934 = vadd.f32 %v742, %v870
    %v935 = vadd.f32 %v743, %v871
    %v936 = vadd.f32 %v744, %v872
    %v937 = vadd.f32 %v745, %v873
    %v938 = vadd.f32 %v746, %v874
    %v939 = vadd.f32 %v747, %v875
    %v940 = vadd.f32 %v748, %v876
    %v941 = vadd.f32 %v749, %v877
    %v942 = vadd.f32 %v750, %v878
    %v943 = vadd.f32 %v751, %v879
    %v944 = vadd.f32 %v752, %v880
    %v945 = vadd.f32 %v753, %v881
    %v946 = vadd.f32 %v754, %v882
    %v947 = vadd.f32 %v755, %v883
    %v948 = vadd.f32 %v756, %v884
    %v949 = vadd.f32 %v757, %v885
    %v950 = vadd.f32 %v758, %v886
    %v951 = vadd.f32 %v759, %v887
    %v952 = vadd.f32 %v760, %v888
    %v953 = vadd.f32 %v761, %v889
    %v954 = vadd.f32 %v762, %v890
    %v955 = vadd.f32 %v763, %v891
    %v956 = vadd.f32 %v764, %v892
    %v957 = vadd.f32 %v765, %v893
    %v958 = vadd.f32 %v766, %v894
    %v959 = vadd.f32 %v767, %v895
    %v960 = vadd.f32 %v768, %v896
    %v961 = vadd.f32 %v769, %v897
    %v962 = vadd.f32 %v770, %v898
    %v963 = vadd.f32 %v771, %v899
    %v964 = vadd.f32 %v772, %v900
    %v965 = vadd.f32 %v773, %v901
    %v966 = vadd.f32 %v774, %v902
    %v967 = vadd.f32 %v775, %v903
    %v968 = vadd.f32 %v776, %v904
    %v969 = vadd.f32 %v777, %v905
    %v970 = vadd.f32 %v778, %v906
    %v971 = vadd.f32 %v779, %v907
    %v972 = vadd.f32 %v780, %v908
    %v973 = vadd.f32 %v781, %v909
    %v974 = vmax.f32 %v910, 0.0
    %v975 = vmax.f32 %v911, 0.0
    %v976 = vmax.f32 %v912, 0.0
    %v977 = vmax.f32 %v913, 0.0
    %v978 = vmax.f32 %v914, 0.0
    %v979 = vmax.f32 %v915, 0.0
    %v980 = vmax.f32 %v916, 0.0
    %v981 = vmax.f32 %v917, 0.0
    %v982 = vmax.f32 %v918, 0.0
    %v983 = vmax.f32 %v919, 0.0
    %v984 = vmax.f32 %v920, 0.0
    %v985 = vmax.f32 %v921, 0.0
    %v986 = vmax.f32 %v922, 0.0
    %v987 = vmax.f32 %v923, 0.0
    %v988 = vmax.f32 %v924, 0.0
    %v989 = vmax.f32 %v925, 0.0
    %v990 = vmax.f32 %v926, 0.0
    %v991 = vmax.f32 %v927, 0.0
    %v992 = vmax.f32 %v928, 0.0
    %v993 = vmax.f32 %v929, 0.0
    %v994 = vmax.f32 %v930, 0.0
    %v995 = vmax.f32 %v931, 0.0
    %v996 = vmax.f32 %v932, 0.0
    %v997 = vmax.f32 %v933, 0.0
    %v998 = vmax.f32 %v934, 0.0
    %v999 = vmax.f32 %v935, 0.0
    %v1000 = vmax.f32 %v936, 0.0
    %v1001 = vmax.f32 %v937, 0.0
    %v1002 = vmax.f32 %v938, 0.0
    %v1003 = vmax.f32 %v939, 0.0
    %v1004 = vmax.f32 %v940, 0.0
    %v1005 = vmax.f32 %v941, 0.0
    %v1006 = vmax.f32 %v942, 0.0
    %v1007 = vmax.f32 %v943, 0.0
    %v1008 = vmax.f32 %v944, 0.0
    %v1009 = vmax.f32 %v945, 0.0
    %v1010 = vmax.f32 %v946, 0.0
    %v1011 = vmax.f32 %v947, 0.0
    %v1012 = vmax.f32 %v948, 0.0
    %v1013 = vmax.f32 %v949, 0.0
    %v1014 = vmax.f32 %v950, 0.0
    %v1015 = vmax.f32 %v951, 0.0
    %v1016 = vmax.f32 %v952, 0.0
    %v1017 = vmax.f32 %v953, 0.0
    %v1018 = vmax.f32 %v954, 0.0
    %v1019 = vmax.f32 %v955, 0.0
    %v1020 = vmax.f32 %v956, 0.0
    %v1021 = vmax.f32 %v957, 0.0
    %v1022 = vmax.f32 %v958, 0.0
    %v1023 = vmax.f32 %v959, 0.0
    %v1024 = vmax.f32 %v960, 0.0
    %v1025 = vmax.f32 %v961, 0.0
    %v1026 = vmax.f32 %v962, 0.0
    %v1027 = vmax.f32 %v963, 0.0
    %v1028 = vmax.f32 %v964, 0.0
    %v1029 = vmax.f32 %v965, 0.0
    %v1030 = vmax.f32 %v966, 0.0
    %v1031 = vmax.f32 %v967, 0.0
    %v1032 = vmax.f32 %v968, 0.0
    %v1033 = vmax.f32 %v969, 0.0
    %v1034 = vmax.f32 %v970, 0.0
    %v1035 = vmax.f32 %v971, 0.0
    %v1036 = vmax.f32 %v972, 0.0
    %v1037 = vmax.f32 %v973, 0.0
    %vm1038 = vcmask 523264
    %1039 = vst.msk [vmem:[#allocation2] sm:$0xff] %vm1038, %v974
    %1040 = vst.msk [vmem:[#allocation2 + $0x8] sm:$0xff] %vm1038, %v975
    %1041 = vst.msk [vmem:[#allocation2 + $0x10] sm:$0xff] %vm1038, %v976
    %1042 = vst.msk [vmem:[#allocation2 + $0x18] sm:$0xff] %vm1038, %v977
    %1043 = vst.msk [vmem:[#allocation2 + $0x20] sm:$0xff] %vm1038, %v978
    %1044 = vst.msk [vmem:[#allocation2 + $0x28] sm:$0xff] %vm1038, %v979
    %1045 = vst.msk [vmem:[#allocation2 + $0x30] sm:$0xff] %vm1038, %v980
    %1046 = vst.msk [vmem:[#allocation2 + $0x38] sm:$0xff] %vm1038, %v981
    %1047 = vst.msk [vmem:[#allocation2 + $0x40] sm:$0xff] %vm1038, %v982
    %1048 = vst.msk [vmem:[#allocation2 + $0x48] sm:$0xff] %vm1038, %v983
    %1049 = vst.msk [vmem:[#allocation2 + $0x50] sm:$0xff] %vm1038, %v984
    %1050 = vst.msk [vmem:[#allocation2 + $0x58] sm:$0xff] %vm1038, %v985
    %1051 = vst.msk [vmem:[#allocation2 + $0x60] sm:$0xff] %vm1038, %v986
    %1052 = vst.msk [vmem:[#allocation2 + $0x68] sm:$0xff] %vm1038, %v987
    %1053 = vst.msk [vmem:[#allocation2 + $0x70] sm:$0xff] %vm1038, %v988
    %1054 = vst.msk [vmem:[#allocation2 + $0x78] sm:$0xff] %vm1038, %v989
    %1055 = vst.msk [vmem:[#allocation2 + $0x80] sm:$0xff] %vm1038, %v990
    %1056 = vst.msk [vmem:[#allocation2 + $0x88] sm:$0xff] %vm1038, %v991
    %1057 = vst.msk [vmem:[#allocation2 + $0x90] sm:$0xff] %vm1038, %v992
    %1058 = vst.msk [vmem:[#allocation2 + $0x98] sm:$0xff] %vm1038, %v993
    %1059 = vst.msk [vmem:[#allocation2 + $0xa0] sm:$0xff] %vm1038, %v994
    %1060 = vst.msk [vmem:[#allocation2 + $0xa8] sm:$0xff] %vm1038, %v995
    %1061 = vst.msk [vmem:[#allocation2 + $0xb0] sm:$0xff] %vm1038, %v996
    %1062 = vst.msk [vmem:[#allocation2 + $0xb8] sm:$0xff] %vm1038, %v997
    %1063 = vst.msk [vmem:[#allocation2 + $0xc0] sm:$0xff] %vm1038, %v998
    %1064 = vst.msk [vmem:[#allocation2 + $0xc8] sm:$0xff] %vm1038, %v999
    %1065 = vst.msk [vmem:[#allocation2 + $0xd0] sm:$0xff] %vm1038, %v1000
    %1066 = vst.msk [vmem:[#allocation2 + $0xd8] sm:$0xff] %vm1038, %v1001
    %1067 = vst.msk [vmem:[#allocation2 + $0xe0] sm:$0xff] %vm1038, %v1002
    %1068 = vst.msk [vmem:[#allocation2 + $0xe8] sm:$0xff] %vm1038, %v1003
    %1069 = vst.msk [vmem:[#allocation2 + $0xf0] sm:$0xff] %vm1038, %v1004
    %1070 = vst.msk [vmem:[#allocation2 + $0xf8] sm:$0xff] %vm1038, %v1005
    %1071 = vst.msk [vmem:[#allocation2 + $0x100] sm:$0xff] %vm1038, %v1006
    %1072 = vst.msk [vmem:[#allocation2 + $0x108] sm:$0xff] %vm1038, %v1007
    %1073 = vst.msk [vmem:[#allocation2 + $0x110] sm:$0xff] %vm1038, %v1008
    %1074 = vst.msk [vmem:[#allocation2 + $0x118] sm:$0xff] %vm1038, %v1009
    %1075 = vst.msk [vmem:[#allocation2 + $0x120] sm:$0xff] %vm1038, %v1010
    %1076 = vst.msk [vmem:[#allocation2 + $0x128] sm:$0xff] %vm1038, %v1011
    %1077 = vst.msk [vmem:[#allocation2 + $0x130] sm:$0xff] %vm1038, %v1012
    %1078 = vst.msk [vmem:[#allocation2 + $0x138] sm:$0xff] %vm1038, %v1013
    %1079 = vst.msk [vmem:[#allocation2 + $0x140] sm:$0xff] %vm1038, %v1014
    %1080 = vst.msk [vmem:[#allocation2 + $0x148] sm:$0xff] %vm1038, %v1015
    %1081 = vst.msk [vmem:[#allocation2 + $0x150] sm:$0xff] %vm1038, %v1016
    %1082 = vst.msk [vmem:[#allocation2 + $0x158] sm:$0xff] %vm1038, %v1017
    %1083 = vst.msk [vmem:[#allocation2 + $0x160] sm:$0xff] %vm1038, %v1018
    %1084 = vst.msk [vmem:[#allocation2 + $0x168] sm:$0xff] %vm1038, %v1019
    %1085 = vst.msk [vmem:[#allocation2 + $0x170] sm:$0xff] %vm1038, %v1020
    %1086 = vst.msk [vmem:[#allocation2 + $0x178] sm:$0xff] %vm1038, %v1021
    %1087 = vst.msk [vmem:[#allocation2 + $0x180] sm:$0xff] %vm1038, %v1022
    %1088 = vst.msk [vmem:[#allocation2 + $0x188] sm:$0xff] %vm1038, %v1023
    %1089 = vst.msk [vmem:[#allocation2 + $0x190] sm:$0xff] %vm1038, %v1024
    %1090 = vst.msk [vmem:[#allocation2 + $0x198] sm:$0xff] %vm1038, %v1025
    %1091 = vst.msk [vmem:[#allocation2 + $0x1a0] sm:$0xff] %vm1038, %v1026
    %1092 = vst.msk [vmem:[#allocation2 + $0x1a8] sm:$0xff] %vm1038, %v1027
    %1093 = vst.msk [vmem:[#allocation2 + $0x1b0] sm:$0xff] %vm1038, %v1028
    %1094 = vst.msk [vmem:[#allocation2 + $0x1b8] sm:$0xff] %vm1038, %v1029
    %1095 = vst.msk [vmem:[#allocation2 + $0x1c0] sm:$0xff] %vm1038, %v1030
    %1096 = vst.msk [vmem:[#allocation2 + $0x1c8] sm:$0xff] %vm1038, %v1031
    %1097 = vst.msk [vmem:[#allocation2 + $0x1d0] sm:$0xff] %vm1038, %v1032
    %1098 = vst.msk [vmem:[#allocation2 + $0x1d8] sm:$0xff] %vm1038, %v1033
    %1099 = vst.msk [vmem:[#allocation2 + $0x1e0] sm:$0xff] %vm1038, %v1034
    %1100 = vst.msk [vmem:[#allocation2 + $0x1e8] sm:$0xff] %vm1038, %v1035
    %1101 = vst.msk [vmem:[#allocation2 + $0x1f0] sm:$0xff] %vm1038, %v1036
    %1102 = vst.msk [vmem:[#allocation2 + $0x1f8] sm:$0xff] %vm1038, %v1037
    // Predicated region
    $region22: #{_lambda_.5} parent=1 // pred_check
      _
    $region23: #{_lambda_.5} parent=1 // pred_check_branch
      %1104 = sbr.rel (0) target = $region25
    $region24: #{_lambda_.5} parent=1 // pred_region
      %s1106 = ssub.s32 8192, 8192
      %1107 = vsyncadd [#allocation3], %s1106
      %s1108 = sshll.u32 [#allocation2], 4
      %s1109 = int_to_ptr.vmem [resolvable:$true] %s1108
      %1114 = dma.vmem_to_hbm [thread:$0]  %s1109, 8192, %s5, [#allocation3], 128, 128, 8
    $region25: #{_lambda_.5} parent=1 // pred_fallthru
      _
    // Predicated region
    $region26: #{_lambda_.5} parent=1 // pred_check
      _
    $region27: #{_lambda_.5} parent=1 // pred_check_branch
      %1116 = sbr.rel (0) target = $region29
    $region28: #{_lambda_.5} parent=1 // pred_region
      %1117 = dma.done [#allocation3], 8192
    $region29: #{_lambda_.5} parent=1 // pred_fallthru
      _
    %1118 = vsyncpa [#allocation3], 1

// kernel: _lambda_.4
$region0: #{_lambda_.4}
  #allocation0 [shape = 'u32[]', space=smem, size = 0x4, offset = 0x4, fixed_abs, tag = 'smem constant byte address 0x4 - core index']
  #allocation1 [shape = 'u32[144,128]{1,0:T(1,128)}', space=vmem, size = 0x12000, scoped, tag = 'internal scratch']
  %s0 = inlined_call_operand.vmem [shape: bf16[2,18,18,16], index: 0, kind: input, shape index: {}]
  %s1 = inlined_call_operand.vmem [shape: bf16[3,3,16,16], index: 1, kind: input, shape index: {}]
  %s2 = inlined_call_operand.vmem [shape: f32[1,16], index: 2, kind: input, shape index: {}]
  %s3 = inlined_call_operand.vmem [shape: f32[1,16], index: 3, kind: input, shape index: {}]
  %s4 = inlined_call_operand.vmem [shape: bf16[2,16,16,16], index: 4, kind: output, shape index: {}]
  %s5 = sld [smem:[#allocation0]]
  $region49: #{_lambda_.4} parent=0
    _
  %s7 = ssub.s32 1, %s5
  %s8 = scalar_select 0, %s7, %s5
  loop: start=0, step=1, limit=4
  $region2: #{_lambda_.4} parent=0 // loop_pre_header
    _
  $region3: #{_lambda_.4} parent=0 // loop_header
    %s10 = sphi 0, %s14
    %p11 = scmp.ge.s32.totalorder %s10, 4
    %s17 = sphi 0, %s29
    %s18 = sphi 0, %s25
    %s19 = sphi 0, %s17
    %s20 = sphi 0, %s18
    %s21 = sphi 0, %s19
    %s22 = sphi 0, %s20
    %s32 = sphi 0, %s34
    %s35 = sphi 0, %s32
    %s36 = sphi 0, %s35
    %s52 = sphi 0, %s36
    %s56 = sphi 0, %s56
    %s58 = sphi 0, %s56
    %s59 = sphi 0, %s58
    %s73 = sphi 0, %s59
    %s77 = sphi 0, %s77
    %s79 = sphi 0, %s77
    %s80 = sphi 0, %s79
    %s94 = sphi 0, %s80
    %s98 = sphi 0, %s98
    %s100 = sphi 0, %s98
    %s101 = sphi 0, %s100
    %s115 = sphi 0, %s101
    %s123 = sphi 0, %s125
    %s126 = sphi 0, %s123
    %s127 = sphi 0, %s126
    %s143 = sphi 0, %s127
  $region4: #{_lambda_.4} parent=0 // loop_header_branch
    %13 = sbr.rel (%p11) target = $region8
  $region5: #{_lambda_.4} parent=0 // loop_body
    %s15 = ssub.s32 %s10, 1
    %s16 = ssub.s32 %s10, 2
    %s23 = sadd.s32 1, %s18
    %p24 = scmp.ge.s32.totalorder %s23, 1
    %s25 = scalar_select %p24, 0, %s23
    %s26 = sadd.s32 1, %s17
    %s27 = scalar_select %p24, %s26, %s17
    %p28 = scmp.ge.s32.totalorder %s27, 2
    %s29 = scalar_select %p28, 0, %s27
    %s30 = ssub.s32 %s17, %s29
    %p31 = scmp.eq.s32.totalorder %s30, 0
    %s33 = sadd.s32 %s32, 1
    %s34 = scalar_select %p31, %s32, %s33
    %p37 = pneg %p31
    %p38 = scmp.eq.s32.totalorder %s10, 1
    %p39 = por %p37, %p38
    %p40 = scmp.ne.s32.totalorder %s32, %s35
    %p41 = scmp.eq.s32.totalorder %s10, 0
    %p42 = por %p40, %p41
    %p43 = scmp.ne.s32.totalorder %s32, %s35
    %p44 = scmp.eq.s32.totalorder %s15, 1
    %p45 = por %p43, %p44
    %p46 = scmp.ne.s32.totalorder %s35, %s36
    %p47 = scmp.eq.s32.totalorder %s15, 0
    %p48 = por %p46, %p47
    %p49 = scmp.ne.s32.totalorder %s35, %s36
    %p50 = scmp.eq.s32.totalorder %s16, 1
    %p51 = por %p49, %p50
    %p53 = scmp.ne.s32.totalorder %s36, %s52
    %p54 = scmp.eq.s32.totalorder %s16, 0
    %p55 = por %p53, %p54
    %s57 = sadd.s32 %s56, 1
    %p60 = scmp.eq.s32.totalorder %s10, 1
    %p61 = scmp.ne.s32.totalorder %s56, %s58
    %p62 = scmp.eq.s32.totalorder %s10, 0
    %p63 = por %p61, %p62
    %p64 = scmp.ne.s32.totalorder %s56, %s58
    %p65 = scmp.eq.s32.totalorder %s15, 1
    %p66 = por %p64, %p65
    %p67 = scmp.ne.s32.totalorder %s58, %s59
    %p68 = scmp.eq.s32.totalorder %s15, 0
    %p69 = por %p67, %p68
    %p70 = scmp.ne.s32.totalorder %s58, %s59
    %p71 = scmp.eq.s32.totalorder %s16, 1
    %p72 = por %p70, %p71
    %p74 = scmp.ne.s32.totalorder %s59, %s73
    %p75 = scmp.eq.s32.totalorder %s16, 0
    %p76 = por %p74, %p75
    %s78 = sadd.s32 %s77, 1
    %p81 = scmp.eq.s32.totalorder %s10, 1
    %p82 = scmp.ne.s32.totalorder %s77, %s79
    %p83 = scmp.eq.s32.totalorder %s10, 0
    %p84 = por %p82, %p83
    %p85 = scmp.ne.s32.totalorder %s77, %s79
    %p86 = scmp.eq.s32.totalorder %s15, 1
    %p87 = por %p85, %p86
    %p88 = scmp.ne.s32.totalorder %s79, %s80
    %p89 = scmp.eq.s32.totalorder %s15, 0
    %p90 = por %p88, %p89
    %p91 = scmp.ne.s32.totalorder %s79, %s80
    %p92 = scmp.eq.s32.totalorder %s16, 1
    %p93 = por %p91, %p92
    %p95 = scmp.ne.s32.totalorder %s80, %s94
    %p96 = scmp.eq.s32.totalorder %s16, 0
    %p97 = por %p95, %p96
    %s99 = sadd.s32 %s98, 1
    %p102 = scmp.eq.s32.totalorder %s10, 1
    %p103 = scmp.ne.s32.totalorder %s98, %s100
    %p104 = scmp.eq.s32.totalorder %s10, 0
    %p105 = por %p103, %p104
    %p106 = scmp.ne.s32.totalorder %s98, %s100
    %p107 = scmp.eq.s32.totalorder %s15, 1
    %p108 = por %p106, %p107
    %p109 = scmp.ne.s32.totalorder %s100, %s101
    %p110 = scmp.eq.s32.totalorder %s15, 0
    %p111 = por %p109, %p110
    %p112 = scmp.ne.s32.totalorder %s100, %s101
    %p113 = scmp.eq.s32.totalorder %s16, 1
    %p114 = por %p112, %p113
    %p116 = scmp.ne.s32.totalorder %s101, %s115
    %p117 = scmp.eq.s32.totalorder %s16, 0
    %p118 = por %p116, %p117
    %s119 = ssub.s32 %s17, %s29
    %s120 = ssub.s32 %s18, %s25
    %s121 = sor.u32 %s119, %s120
    %p122 = scmp.eq.s32.totalorder %s121, 0
    %s124 = sadd.s32 %s123, 1
    %s125 = scalar_select %p122, %s123, %s124
    %p128 = pneg %p122
    %p129 = scmp.eq.s32.totalorder %s10, 1
    %p130 = por %p128, %p129
    %p131 = scmp.ne.s32.totalorder %s123, %s126
    %p132 = scmp.eq.s32.totalorder %s10, 0
    %p133 = por %p131, %p132
    %p134 = scmp.ne.s32.totalorder %s123, %s126
    %p135 = scmp.eq.s32.totalorder %s15, 1
    %p136 = por %p134, %p135
    %p137 = scmp.ne.s32.totalorder %s126, %s127
    %p138 = scmp.eq.s32.totalorder %s15, 0
    %p139 = por %p137, %p138
    %p140 = scmp.ne.s32.totalorder %s126, %s127
    %p141 = scmp.eq.s32.totalorder %s16, 1
    %p142 = por %p140, %p141
    %p144 = scmp.ne.s32.totalorder %s127, %s143
    %p145 = scmp.eq.s32.totalorder %s16, 0
    %p146 = por %p144, %p145
    %p147 = scmp.le.s32.totalorder 1, %s10
    %p148 = scmp.lt.s32.totalorder %s10, 3
    %p149 = pnand %p147, %p148
    %p150 = pneg %p149
    // Predicated region
    $region9: #{_lambda_.4} parent=5 // pred_check
      _
    $region10: #{_lambda_.4} parent=5 // pred_check_branch
      %152 = sbr.rel (%p149) target = $region12
    $region11: #{_lambda_.4} parent=5 // pred_region
      %s153 = ssub.s32 %s10, 1
      // Predicated region
      $region13: #{_lambda_.4} parent=11 // pred_check
        %p154 = pneg %p69
      $region14: #{_lambda_.4} parent=11 // pred_check_branch
        %156 = sbr.rel (%p154) target = $region16
      $region15: #{_lambda_.4} parent=11 // pred_region
        _
      $region16: #{_lambda_.4} parent=11 // pred_fallthru
        _
      // Predicated region
      $region17: #{_lambda_.4} parent=11 // pred_check
        %p157 = pneg %p90
      $region18: #{_lambda_.4} parent=11 // pred_check_branch
        %159 = sbr.rel (%p157) target = $region20
      $region19: #{_lambda_.4} parent=11 // pred_region
        _
      $region20: #{_lambda_.4} parent=11 // pred_fallthru
        _
      // Predicated region
      $region21: #{_lambda_.4} parent=11 // pred_check
        %p160 = pneg %p111
      $region22: #{_lambda_.4} parent=11 // pred_check_branch
        %162 = sbr.rel (%p160) target = $region24
      $region23: #{_lambda_.4} parent=11 // pred_region
        _
      $region24: #{_lambda_.4} parent=11 // pred_fallthru
        _
    $region12: #{_lambda_.4} parent=5 // pred_fallthru
      _
    %p163 = scmp.lt.s32.totalorder %s10, 2
    // Predicated region
    $region25: #{_lambda_.4} parent=5 // pred_check
      %p164 = pneg %p163
    $region26: #{_lambda_.4} parent=5 // pred_check_branch
      %166 = sbr.rel (%p164) target = $region28
    $region27: #{_lambda_.4} parent=5 // pred_region
      // Predicated region
      $region29: #{_lambda_.4} parent=27 // pred_check
        %p167 = pneg %p42
      $region30: #{_lambda_.4} parent=27 // pred_check_branch
        %169 = sbr.rel (%p167) target = $region32
      $region31: #{_lambda_.4} parent=27 // pred_region
        %p170 = scmp.lt.s32.totalorder %s17, 1
        %s171 = scalar_select %p170, %s17, 1
        %s172 = smul.addr %s171, 54
        %s173 = smul.addr %s172, 4
        %s174 = scalar_lea.vmem %s0, %s173
      $region32: #{_lambda_.4} parent=27 // pred_fallthru
        _
    $region28: #{_lambda_.4} parent=5 // pred_fallthru
      _
    %p175 = scmp.le.s32.totalorder 1, %s10
    %p176 = scmp.lt.s32.totalorder %s10, 3
    %p177 = pnand %p175, %p176
    %p178 = pneg %p177
    // Predicated region
    $region33: #{_lambda_.4} parent=5 // pred_check
      _
    $region34: #{_lambda_.4} parent=5 // pred_check_branch
      %180 = sbr.rel (%p177) target = $region36
    $region35: #{_lambda_.4} parent=5 // pred_region
      %s181 = ssub.s32 %s10, 1
      %p182 = scmp.lt.s32.totalorder %s19, 1
      %s183 = scalar_select %p182, %s19, 1
      %s184 = smul.addr %s183, 54
      %s185 = smul.addr %s184, 4
      %s186 = scalar_lea.vmem %s0, %s185
      %p187 = pneg %p48
      %p188 = pneg %p45
      %p189 = pneg %p69
      %p190 = pneg %p66
      %p191 = pneg %p90
      %p192 = pneg %p87
      %p193 = pneg %p111
      %p194 = pneg %p108
      %p195 = pneg %p139
      %p196 = pneg %p136
      %s197 = smul.u32 16, %s20
      %p198 = scmp.lt.s32.totalorder %s19, 1
      %s199 = scalar_select %p198, %s19, 1
      %p200 = scmp.lt.s32.totalorder %s197, 15
      %s201 = scalar_select %p200, %s197, 15
      %s202 = smul.addr %s201, 2
      %s203 = smul.addr %s199, 32
      %s204 = sadd.s32 %s202, %s203
      %s205 = smul.addr %s204, 4
      %s206 = scalar_lea.vmem %s4, %s205
      %p207 = scmp.lt.s32.totalorder %s19, 1
      %s208 = scalar_select %p207, %s19, 1
      %s209 = smul.addr %s208, 54
      %s210 = smul.addr %s209, 4
      %s211 = scalar_lea.vmem %s0, %s210
      %s212 = smul.u32 16, %s20
      %p213 = scmp.lt.s32.totalorder %s19, 1
      %s214 = scalar_select %p213, %s19, 1
      %p215 = scmp.lt.s32.totalorder %s212, 15
      %s216 = scalar_select %p215, %s212, 15
      %s217 = smul.addr %s216, 2
      %s218 = smul.addr %s214, 32
      %s219 = sadd.s32 %s217, %s218
      %s220 = smul.addr %s219, 4
      %s221 = scalar_lea.vmem %s4, %s220
      %s222 = smul.u32 16, %s20
      %s224 = smul.u32 %s20, 16
      %s225 = smul.u32 %s224, 3
      %s226 = smul.addr %s225, 4
      %s227 = scalar_lea.vmem %s211, %s226
      %v228 = vld [vmem:[%s227] sm:$0xf]
      %v229 = vld [vmem:[%s227 + $0x4] sm:$0xf]
      %v230 = vld [vmem:[%s227 + $0x8] sm:$0x1]
      %v231 = vld [vmem:[%s227 + $0xc] sm:$0xf]
      %v232 = vld [vmem:[%s227 + $0x10] sm:$0xf]
      %v233 = vld [vmem:[%s227 + $0x14] sm:$0x1]
      %v234 = vld [vmem:[%s227 + $0x18] sm:$0xf]
      %v235 = vld [vmem:[%s227 + $0x1c] sm:$0xf]
      %v236 = vld [vmem:[%s227 + $0x20] sm:$0x1]
      %v237 = vld [vmem:[%s227 + $0x24] sm:$0xf]
      %v238 = vld [vmem:[%s227 + $0x28] sm:$0xf]
      %v239 = vld [vmem:[%s227 + $0x2c] sm:$0x1]
      %v240 = vld [vmem:[%s227 + $0x30] sm:$0xf]
      %v241 = vld [vmem:[%s227 + $0x34] sm:$0xf]
      %v242 = vld [vmem:[%s227 + $0x38] sm:$0x1]
      %v243 = vld [vmem:[%s227 + $0x3c] sm:$0xf]
      %v244 = vld [vmem:[%s227 + $0x40] sm:$0xf]
      %v245 = vld [vmem:[%s227 + $0x44] sm:$0x1]
      %v246 = vld [vmem:[%s227 + $0x48] sm:$0xf]
      %v247 = vld [vmem:[%s227 + $0x4c] sm:$0xf]
      %v248 = vld [vmem:[%s227 + $0x50] sm:$0x1]
      %v249 = vld [vmem:[%s227 + $0x54] sm:$0xf]
      %v250 = vld [vmem:[%s227 + $0x58] sm:$0xf]
      %v251 = vld [vmem:[%s227 + $0x5c] sm:$0x1]
      %v252 = vld [vmem:[%s227 + $0x60] sm:$0xf]
      %v253 = vld [vmem:[%s227 + $0x64] sm:$0xf]
      %v254 = vld [vmem:[%s227 + $0x68] sm:$0x1]
      %v255 = vld [vmem:[%s227 + $0x6c] sm:$0xf]
      %v256 = vld [vmem:[%s227 + $0x70] sm:$0xf]
      %v257 = vld [vmem:[%s227 + $0x74] sm:$0x1]
      %v258 = vld [vmem:[%s227 + $0x78] sm:$0xf]
      %v259 = vld [vmem:[%s227 + $0x7c] sm:$0xf]
      %v260 = vld [vmem:[%s227 + $0x80] sm:$0x1]
      %v261 = vld [vmem:[%s227 + $0x84] sm:$0xf]
      %v262 = vld [vmem:[%s227 + $0x88] sm:$0xf]
      %v263 = vld [vmem:[%s227 + $0x8c] sm:$0x1]
      %v264 = vld [vmem:[%s227 + $0x90] sm:$0xf]
      %v265 = vld [vmem:[%s227 + $0x94] sm:$0xf]
      %v266 = vld [vmem:[%s227 + $0x98] sm:$0x1]
      %v267 = vld [vmem:[%s227 + $0x9c] sm:$0xf]
      %v268 = vld [vmem:[%s227 + $0xa0] sm:$0xf]
      %v269 = vld [vmem:[%s227 + $0xa4] sm:$0x1]
      %v270 = vld [vmem:[%s227 + $0xa8] sm:$0xf]
      %v271 = vld [vmem:[%s227 + $0xac] sm:$0xf]
      %v272 = vld [vmem:[%s227 + $0xb0] sm:$0x1]
      %v273 = vld [vmem:[%s227 + $0xb4] sm:$0xf]
      %v274 = vld [vmem:[%s227 + $0xb8] sm:$0xf]
      %v275 = vld [vmem:[%s227 + $0xbc] sm:$0x1]
      %v276 = vld [vmem:[%s1] sm:$0xf]
      %v277 = vld [vmem:[%s1 + $0x4] sm:$0xf]
      %vm278 = vsmask.f32 3328
      %vm279 = vsmask.f32 7440
      %vm280 = vmor %vm278, %vm279
      %v282 = vshrl.u32 %v228, 16
      %v284 = vrot.slane %v282, 4
      %v285 = vshll.u32 %v228, 16
      %v287 = vrot.slane %v285, 5
      %v288 = vor.u32 %v284, %v287
      %v289 = vrot.slane %v288, 4
      %v291 = vshll.u32 %v229, 16
      %v293 = vrot.slane %v291, 5
      %v294 = vsel %vm280, %v289, %v293
      %v295 = vshrl.u32 %v229, 16
      %v297 = vrot.slane %v295, 4
      %v298 = vor.u32 %v297, %v293
      %v299 = vrot.slane %v298, 4
      %v301 = vshll.u32 %v230, 16
      %v303 = vrot.slane %v301, 5
      %v304 = vsel %vm280, %v299, %v303
      %v306 = vshrl.u32 %v231, 16
      %v308 = vrot.slane %v306, 4
      %v309 = vshll.u32 %v231, 16
      %v311 = vrot.slane %v309, 5
      %v312 = vor.u32 %v308, %v311
      %v313 = vrot.slane %v312, 4
      %v315 = vshll.u32 %v232, 16
      %v317 = vrot.slane %v315, 5
      %v318 = vsel %vm280, %v313, %v317
      %v319 = vshrl.u32 %v232, 16
      %v321 = vrot.slane %v319, 4
      %v322 = vor.u32 %v321, %v317
      %v323 = vrot.slane %v322, 4
      %v325 = vshll.u32 %v233, 16
      %v327 = vrot.slane %v325, 5
      %v328 = vsel %vm280, %v323, %v327
      %v330 = vshrl.u32 %v234, 16
      %v332 = vrot.slane %v330, 4
      %v333 = vshll.u32 %v234, 16
      %v335 = vrot.slane %v333, 5
      %v336 = vor.u32 %v332, %v335
      %v337 = vrot.slane %v336, 4
      %v339 = vshll.u32 %v235, 16
      %v341 = vrot.slane %v339, 5
      %v342 = vsel %vm280, %v337, %v341
      %v343 = vshrl.u32 %v235, 16
      %v345 = vrot.slane %v343, 4
      %v346 = vor.u32 %v345, %v341
      %v347 = vrot.slane %v346, 4
      %v349 = vshll.u32 %v236, 16
      %v351 = vrot.slane %v349, 5
      %v352 = vsel %vm280, %v347, %v351
      %v354 = vshrl.u32 %v237, 16
      %v356 = vrot.slane %v354, 4
      %v357 = vshll.u32 %v237, 16
      %v359 = vrot.slane %v357, 5
      %v360 = vor.u32 %v356, %v359
      %v361 = vrot.slane %v360, 4
      %v363 = vshll.u32 %v238, 16
      %v365 = vrot.slane %v363, 5
      %v366 = vsel %vm280, %v361, %v365
      %v367 = vshrl.u32 %v238, 16
      %v369 = vrot.slane %v367, 4
      %v370 = vor.u32 %v369, %v365
      %v371 = vrot.slane %v370, 4
      %v373 = vshll.u32 %v239, 16
      %v375 = vrot.slane %v373, 5
      %v376 = vsel %vm280, %v371, %v375
      %v378 = vshrl.u32 %v240, 16
      %v380 = vrot.slane %v378, 4
      %v381 = vshll.u32 %v240, 16
      %v383 = vrot.slane %v381, 5
      %v384 = vor.u32 %v380, %v383
      %v385 = vrot.slane %v384, 4
      %v387 = vshll.u32 %v241, 16
      %v389 = vrot.slane %v387, 5
      %v390 = vsel %vm280, %v385, %v389
      %v391 = vshrl.u32 %v241, 16
      %v393 = vrot.slane %v391, 4
      %v394 = vor.u32 %v393, %v389
      %v395 = vrot.slane %v394, 4
      %v397 = vshll.u32 %v242, 16
      %v399 = vrot.slane %v397, 5
      %v400 = vsel %vm280, %v395, %v399
      %v402 = vshrl.u32 %v243, 16
      %v404 = vrot.slane %v402, 4
      %v405 = vshll.u32 %v243, 16
      %v407 = vrot.slane %v405, 5
      %v408 = vor.u32 %v404, %v407
      %v409 = vrot.slane %v408, 4
      %v411 = vshll.u32 %v244, 16
      %v413 = vrot.slane %v411, 5
      %v414 = vsel %vm280, %v409, %v413
      %v415 = vshrl.u32 %v244, 16
      %v417 = vrot.slane %v415, 4
      %v418 = vor.u32 %v417, %v413
      %v419 = vrot.slane %v418, 4
      %v421 = vshll.u32 %v245, 16
      %v423 = vrot.slane %v421, 5
      %v424 = vsel %vm280, %v419, %v423
      %v426 = vshrl.u32 %v246, 16
      %v428 = vrot.slane %v426, 4
      %v429 = vshll.u32 %v246, 16
      %v431 = vrot.slane %v429, 5
      %v432 = vor.u32 %v428, %v431
      %v433 = vrot.slane %v432, 4
      %v435 = vshll.u32 %v247, 16
      %v437 = vrot.slane %v435, 5
      %v438 = vsel %vm280, %v433, %v437
      %v439 = vshrl.u32 %v247, 16
      %v441 = vrot.slane %v439, 4
      %v442 = vor.u32 %v441, %v437
      %v443 = vrot.slane %v442, 4
      %v445 = vshll.u32 %v248, 16
      %v447 = vrot.slane %v445, 5
      %v448 = vsel %vm280, %v443, %v447
      %v450 = vshrl.u32 %v249, 16
      %v452 = vrot.slane %v450, 4
      %v453 = vshll.u32 %v249, 16
      %v455 = vrot.slane %v453, 5
      %v456 = vor.u32 %v452, %v455
      %v457 = vrot.slane %v456, 4
      %v459 = vshll.u32 %v250, 16
      %v461 = vrot.slane %v459, 5
      %v462 = vsel %vm280, %v457, %v461
      %v463 = vshrl.u32 %v250, 16
      %v465 = vrot.slane %v463, 4
      %v466 = vor.u32 %v465, %v461
      %v467 = vrot.slane %v466, 4
      %v469 = vshll.u32 %v251, 16
      %v471 = vrot.slane %v469, 5
      %v472 = vsel %vm280, %v467, %v471
      %v474 = vshrl.u32 %v252, 16
      %v476 = vrot.slane %v474, 4
      %v477 = vshll.u32 %v252, 16
      %v479 = vrot.slane %v477, 5
      %v480 = vor.u32 %v476, %v479
      %v481 = vrot.slane %v480, 4
      %v483 = vshll.u32 %v253, 16
      %v485 = vrot.slane %v483, 5
      %v486 = vsel %vm280, %v481, %v485
      %v487 = vshrl.u32 %v253, 16
      %v489 = vrot.slane %v487, 4
      %v490 = vor.u32 %v489, %v485
      %v491 = vrot.slane %v490, 4
      %v493 = vshll.u32 %v254, 16
      %v495 = vrot.slane %v493, 5
      %v496 = vsel %vm280, %v491, %v495
      %v498 = vshrl.u32 %v255, 16
      %v500 = vrot.slane %v498, 4
      %v501 = vshll.u32 %v255, 16
      %v503 = vrot.slane %v501, 5
      %v504 = vor.u32 %v500, %v503
      %v505 = vrot.slane %v504, 4
      %v507 = vshll.u32 %v256, 16
      %v509 = vrot.slane %v507, 5
      %v510 = vsel %vm280, %v505, %v509
      %v511 = vshrl.u32 %v256, 16
      %v513 = vrot.slane %v511, 4
      %v514 = vor.u32 %v513, %v509
      %v515 = vrot.slane %v514, 4
      %v517 = vshll.u32 %v257, 16
      %v519 = vrot.slane %v517, 5
      %v520 = vsel %vm280, %v515, %v519
      %v522 = vshrl.u32 %v258, 16
      %v524 = vrot.slane %v522, 4
      %v525 = vshll.u32 %v258, 16
      %v527 = vrot.slane %v525, 5
      %v528 = vor.u32 %v524, %v527
      %v529 = vrot.slane %v528, 4
      %v531 = vshll.u32 %v259, 16
      %v533 = vrot.slane %v531, 5
      %v534 = vsel %vm280, %v529, %v533
      %v535 = vshrl.u32 %v259, 16
      %v537 = vrot.slane %v535, 4
      %v538 = vor.u32 %v537, %v533
      %v539 = vrot.slane %v538, 4
      %v541 = vshll.u32 %v260, 16
      %v543 = vrot.slane %v541, 5
      %v544 = vsel %vm280, %v539, %v543
      %v546 = vshrl.u32 %v261, 16
      %v548 = vrot.slane %v546, 4
      %v549 = vshll.u32 %v261, 16
      %v551 = vrot.slane %v549, 5
      %v552 = vor.u32 %v548, %v551
      %v553 = vrot.slane %v552, 4
      %v555 = vshll.u32 %v262, 16
      %v557 = vrot.slane %v555, 5
      %v558 = vsel %vm280, %v553, %v557
      %v559 = vshrl.u32 %v262, 16
      %v561 = vrot.slane %v559, 4
      %v562 = vor.u32 %v561, %v557
      %v563 = vrot.slane %v562, 4
      %v565 = vshll.u32 %v263, 16
      %v567 = vrot.slane %v565, 5
      %v568 = vsel %vm280, %v563, %v567
      %v570 = vshrl.u32 %v264, 16
      %v572 = vrot.slane %v570, 4
      %v573 = vshll.u32 %v264, 16
      %v575 = vrot.slane %v573, 5
      %v576 = vor.u32 %v572, %v575
      %v577 = vrot.slane %v576, 4
      %v579 = vshll.u32 %v265, 16
      %v581 = vrot.slane %v579, 5
      %v582 = vsel %vm280, %v577, %v581
      %v583 = vshrl.u32 %v265, 16
      %v585 = vrot.slane %v583, 4
      %v586 = vor.u32 %v585, %v581
      %v587 = vrot.slane %v586, 4
      %v589 = vshll.u32 %v266, 16
      %v591 = vrot.slane %v589, 5
      %v592 = vsel %vm280, %v587, %v591
      %v594 = vshrl.u32 %v267, 16
      %v596 = vrot.slane %v594, 4
      %v597 = vshll.u32 %v267, 16
      %v599 = vrot.slane %v597, 5
      %v600 = vor.u32 %v596, %v599
      %v601 = vrot.slane %v600, 4
      %v603 = vshll.u32 %v268, 16
      %v605 = vrot.slane %v603, 5
      %v606 = vsel %vm280, %v601, %v605
      %v607 = vshrl.u32 %v268, 16
      %v609 = vrot.slane %v607, 4
      %v610 = vor.u32 %v609, %v605
      %v611 = vrot.slane %v610, 4
      %v613 = vshll.u32 %v269, 16
      %v615 = vrot.slane %v613, 5
      %v616 = vsel %vm280, %v611, %v615
      %v618 = vshrl.u32 %v270, 16
      %v620 = vrot.slane %v618, 4
      %v621 = vshll.u32 %v270, 16
      %v623 = vrot.slane %v621, 5
      %v624 = vor.u32 %v620, %v623
      %v625 = vrot.slane %v624, 4
      %v627 = vshll.u32 %v271, 16
      %v629 = vrot.slane %v627, 5
      %v630 = vsel %vm280, %v625, %v629
      %v631 = vshrl.u32 %v271, 16
      %v633 = vrot.slane %v631, 4
      %v634 = vor.u32 %v633, %v629
      %v635 = vrot.slane %v634, 4
      %v637 = vshll.u32 %v272, 16
      %v639 = vrot.slane %v637, 5
      %v640 = vsel %vm280, %v635, %v639
      %v642 = vshrl.u32 %v273, 16
      %v644 = vrot.slane %v642, 4
      %v645 = vshll.u32 %v273, 16
      %v647 = vrot.slane %v645, 5
      %v648 = vor.u32 %v644, %v647
      %v649 = vrot.slane %v648, 4
      %v651 = vshll.u32 %v274, 16
      %v653 = vrot.slane %v651, 5
      %v654 = vsel %vm280, %v649, %v653
      %v655 = vshrl.u32 %v274, 16
      %v657 = vrot.slane %v655, 4
      %v658 = vor.u32 %v657, %v653
      %v659 = vrot.slane %v658, 4
      %v661 = vshll.u32 %v275, 16
      %v663 = vrot.slane %v661, 5
      %v664 = vsel %vm280, %v659, %v663
      %s665 = scalar_lea.vmem %s1, 8
      %v666 = vld [vmem:[%s665] sm:$0xf]
      %v667 = vld [vmem:[%s665 + $0x4] sm:$0xf]
      %v668 = vunpack.c.l.b16 %v294
      %v669 = vunpack.c.l.b16 %v304
      %v670 = vunpack.c.l.b16 %v318
      %v671 = vunpack.c.l.b16 %v328
      %v672 = vunpack.c.l.b16 %v342
      %v673 = vunpack.c.l.b16 %v352
      %v674 = vunpack.c.l.b16 %v366
      %v675 = vunpack.c.l.b16 %v376
      %v676 = vunpack.c.l.b16 %v390
      %v677 = vunpack.c.l.b16 %v400
      %v678 = vunpack.c.l.b16 %v414
      %v679 = vunpack.c.l.b16 %v424
      %v680 = vunpack.c.l.b16 %v438
      %v681 = vunpack.c.l.b16 %v448
      %v682 = vunpack.c.l.b16 %v462
      %v683 = vunpack.c.l.b16 %v472
      %v684 = vunpack.c.l.b16 %v486
      %v685 = vunpack.c.l.b16 %v496
      %v686 = vunpack.c.l.b16 %v510
      %v687 = vunpack.c.l.b16 %v520
      %v688 = vunpack.c.l.b16 %v534
      %v689 = vunpack.c.l.b16 %v544
      %v690 = vunpack.c.l.b16 %v558
      %v691 = vunpack.c.l.b16 %v568
      %v692 = vunpack.c.l.b16 %v582
      %v693 = vunpack.c.l.b16 %v592
      %v694 = vunpack.c.l.b16 %v606
      %v695 = vunpack.c.l.b16 %v616
      %v696 = vunpack.c.l.b16 %v630
      %v697 = vunpack.c.l.b16 %v640
      %v698 = vunpack.c.l.b16 %v654
      %v699 = vunpack.c.l.b16 %v664
      %v700 = vpack.c.b16 %v669, %v668
      %v701 = vpack.c.b16 %v671, %v670
      %v702 = vpack.c.b16 %v673, %v672
      %v703 = vpack.c.b16 %v675, %v674
      %v704 = vpack.c.b16 %v677, %v676
      %v705 = vpack.c.b16 %v679, %v678
      %v706 = vpack.c.b16 %v681, %v680
      %v707 = vpack.c.b16 %v683, %v682
      %v708 = vpack.c.b16 %v685, %v684
      %v709 = vpack.c.b16 %v687, %v686
      %v710 = vpack.c.b16 %v689, %v688
      %v711 = vpack.c.b16 %v691, %v690
      %v712 = vpack.c.b16 %v693, %v692
      %v713 = vpack.c.b16 %v695, %v694
      %v714 = vpack.c.b16 %v697, %v696
      %v715 = vpack.c.b16 %v699, %v698
      %v718 = vunpack.c.l.b16 %v666
      %v719 = vunpack.c.l.b16 %v667
      %v720 = vpack.c.b16 %v719, %v718
      %vm722 = vcmask 130048
      %v724 = vsel %vm722, %v700, 0
      %v727 = vsel %vm722, %v701, 0
      %v730 = vsel %vm722, %v702, 0
      %v733 = vsel %vm722, %v703, 0
      %v736 = vsel %vm722, %v704, 0
      %v739 = vsel %vm722, %v705, 0
      %v742 = vsel %vm722, %v706, 0
      %v745 = vsel %vm722, %v707, 0
      %v748 = vsel %vm722, %v708, 0
      %v751 = vsel %vm722, %v709, 0
      %v754 = vsel %vm722, %v710, 0
      %v757 = vsel %vm722, %v711, 0
      %v760 = vsel %vm722, %v712, 0
      %v763 = vsel %vm722, %v713, 0
      %v766 = vsel %vm722, %v714, 0
      %v769 = vsel %vm722, %v715, 0
      %771 = vmatprep.subr.bf16.mxu0 0
      %772 = vmatpush1.bf16.msra.mxu0 %v720
      %773 = vmatprep.subr.bf16.mxu0 0
      %774 = vmatpush1.bf16.msra.mxu0 0
      %775 = vmatprep.subr.bf16.mxu0 0
      %776 = vmatpush1.bf16.msra.mxu0 0
      %777 = vmatprep.subr.bf16.mxu0 0
      %778 = vmatpush1.bf16.msra.mxu0 0
      %779 = vmatprep.subr.bf16.mxu0 0
      %780 = vmatpush1.bf16.msra.mxu0 0
      %781 = vmatprep.subr.bf16.mxu0 0
      %782 = vmatpush1.bf16.msra.mxu0 0
      %783 = vmatprep.subr.bf16.mxu0 0
      %784 = vmatpush1.bf16.msra.mxu0 0
      %785 = vmatprep.subr.bf16.mxu0 0
      %786 = vmatpush1.bf16.msra.mxu0 0
      %787 = vmatprep.subr.bf16.mxu0 0
      %788 = vmatpush1.bf16.msra.mxu0 0
      %789 = vmatprep.subr.bf16.mxu0 0
      %790 = vmatpush1.bf16.msra.mxu0 0
      %791 = vmatprep.subr.bf16.mxu0 0
      %792 = vmatpush1.bf16.msra.mxu0 0
      %793 = vmatprep.subr.bf16.mxu0 0
      %794 = vmatpush1.bf16.msra.mxu0 0
      %795 = vmatprep.subr.bf16.mxu0 0
      %796 = vmatpush1.bf16.msra.mxu0 0
      %797 = vmatprep.subr.bf16.mxu0 0
      %798 = vmatpush1.bf16.msra.mxu0 0
      %799 = vmatprep.subr.bf16.mxu0 0
      %800 = vmatpush1.bf16.msra.mxu0 0
      %801 = vmatprep.subr.bf16.mxu0 0
      %802 = vmatpush1.bf16.msra.mxu0 0
      %803 = vmatprep.mubr.bf16.mxu0 0
      %804 = vmatmul.mubr.bf16.gmra.mrb[0].mxu0 %v724
      %v805 = vpop.f32.mrb[0].mxu0
      %v806 = vadd.f32 0.0, %v805
      %v807 = vpop.f32.mrb[0].mxu0
      %v808 = vpop.f32.mrb[0].mxu0
      %v809 = vadd.f32 0.0, %v808
      %v810 = vpop.f32.mrb[0].mxu0
      %811 = vmatprep.mubr.bf16.mxu0 0
      %812 = vmatmul.mubr.bf16.gmra.mrb[0].mxu0 %v727
      %v813 = vpop.f32.mrb[0].mxu0
      %v814 = vadd.f32 0.0, %v813
      %v815 = vpop.f32.mrb[0].mxu0
      %v816 = vpop.f32.mrb[0].mxu0
      %v817 = vadd.f32 0.0, %v816
      %v818 = vpop.f32.mrb[0].mxu0
      %819 = vmatprep.mubr.bf16.mxu0 0
      %820 = vmatmul.mubr.bf16.gmra.mrb[0].mxu0 %v730
      %v821 = vpop.f32.mrb[0].mxu0
      %v822 = vadd.f32 0.0, %v821
      %v823 = vpop.f32.mrb[0].mxu0
      %v824 = vpop.f32.mrb[0].mxu0
      %v825 = vadd.f32 0.0, %v824
      %v826 = vpop.f32.mrb[0].mxu0
      %827 = vmatprep.mubr.bf16.mxu0 0
      %828 = vmatmul.mubr.bf16.gmra.mrb[0].mxu0 %v733
      %v829 = vpop.f32.mrb[0].mxu0
      %v830 = vadd.f32 0.0, %v829
      %v831 = vpop.f32.mrb[0].mxu0
      %v832 = vpop.f32.mrb[0].mxu0
      %v833 = vadd.f32 0.0, %v832
      %v834 = vpop.f32.mrb[0].mxu0
      %835 = vmatprep.mubr.bf16.mxu0 0
      %836 = vmatmul.mubr.bf16.gmra.mrb[0].mxu0 %v736
      %v837 = vpop.f32.mrb[0].mxu0
      %v838 = vadd.f32 0.0, %v837
      %v839 = vpop.f32.mrb[0].mxu0
      %v840 = vpop.f32.mrb[0].mxu0
      %v841 = vadd.f32 0.0, %v840
      %v842 = vpop.f32.mrb[0].mxu0
      %843 = vmatprep.mubr.bf16.mxu0 0
      %844 = vmatmul.mubr.bf16.gmra.mrb[0].mxu0 %v739
      %v845 = vpop.f32.mrb[0].mxu0
      %v846 = vadd.f32 0.0, %v845
      %v847 = vpop.f32.mrb[0].mxu0
      %v848 = vpop.f32.mrb[0].mxu0
      %v849 = vadd.f32 0.0, %v848
      %v850 = vpop.f32.mrb[0].mxu0
      %851 = vmatprep.mubr.bf16.mxu0 0
      %852 = vmatmul.mubr.bf16.gmra.mrb[0].mxu0 %v742
      %v853 = vpop.f32.mrb[0].mxu0
      %v854 = vadd.f32 0.0, %v853
      %v855 = vpop.f32.mrb[0].mxu0
      %v856 = vpop.f32.mrb[0].mxu0
      %v857 = vadd.f32 0.0, %v856
      %v858 = vpop.f32.mrb[0].mxu0
      %859 = vmatprep.mubr.bf16.mxu0 0
      %860 = vmatmul.mubr.bf16.gmra.mrb[0].mxu0 %v745
      %v861 = vpop.f32.mrb[0].mxu0
      %v862 = vadd.f32 0.0, %v861
      %v863 = vpop.f32.mrb[0].mxu0
      %v864 = vpop.f32.mrb[0].mxu0
      %v865 = vadd.f32 0.0, %v864
      %v866 = vpop.f32.mrb[0].mxu0
      %867 = vmatprep.mubr.bf16.mxu0 0
      %868 = vmatmul.mubr.bf16.gmra.mrb[0].mxu0 %v748
      %v869 = vpop.f32.mrb[0].mxu0
      %v870 = vadd.f32 0.0, %v869
      %v871 = vpop.f32.mrb[0].mxu0
      %v872 = vpop.f32.mrb[0].mxu0
      %v873 = vadd.f32 0.0, %v872
      %v874 = vpop.f32.mrb[0].mxu0
      %875 = vmatprep.mubr.bf16.mxu0 0
      %876 = vmatmul.mubr.bf16.gmra.mrb[0].mxu0 %v751
      %v877 = vpop.f32.mrb[0].mxu0
      %v878 = vadd.f32 0.0, %v877
      %v879 = vpop.f32.mrb[0].mxu0
      %v880 = vpop.f32.mrb[0].mxu0
      %v881 = vadd.f32 0.0, %v880
      %v882 = vpop.f32.mrb[0].mxu0
      %883 = vmatprep.mubr.bf16.mxu0 0
      %884 = vmatmul.mubr.bf16.gmra.mrb[0].mxu0 %v754
      %v885 = vpop.f32.mrb[0].mxu0
      %v886 = vadd.f32 0.0, %v885
      %v887 = vpop.f32.mrb[0].mxu0
      %v888 = vpop.f32.mrb[0].mxu0
      %v889 = vadd.f32 0.0, %v888
      %v890 = vpop.f32.mrb[0].mxu0
      %891 = vmatprep.mubr.bf16.mxu0 0
      %892 = vmatmul.mubr.bf16.gmra.mrb[0].mxu0 %v757
      %v893 = vpop.f32.mrb[0].mxu0
      %v894 = vadd.f32 0.0, %v893
      %v895 = vpop.f32.mrb[0].mxu0
      %v896 = vpop.f32.mrb[0].mxu0
      %v897 = vadd.f32 0.0, %v896
      %v898 = vpop.f32.mrb[0].mxu0
      %899 = vmatprep.mubr.bf16.mxu0 0
      %900 = vmatmul.mubr.bf16.gmra.mrb[0].mxu0 %v760
      %v901 = vpop.f32.mrb[0].mxu0
      %v902 = vadd.f32 0.0, %v901
      %v903 = vpop.f32.mrb[0].mxu0
      %v904 = vpop.f32.mrb[0].mxu0
      %v905 = vadd.f32 0.0, %v904
      %v906 = vpop.f32.mrb[0].mxu0
      %907 = vmatprep.mubr.bf16.mxu0 0
      %908 = vmatmul.mubr.bf16.gmra.mrb[0].mxu0 %v763
      %v909 = vpop.f32.mrb[0].mxu0
      %v910 = vadd.f32 0.0, %v909
      %v911 = vpop.f32.mrb[0].mxu0
      %v912 = vpop.f32.mrb[0].mxu0
      %v913 = vadd.f32 0.0, %v912
      %v914 = vpop.f32.mrb[0].mxu0
      %915 = vmatprep.mubr.bf16.mxu0 0
      %916 = vmatmul.mubr.bf16.gmra.mrb[0].mxu0 %v766
      %v917 = vpop.f32.mrb[0].mxu0
      %v918 = vadd.f32 0.0, %v917
      %v919 = vpop.f32.mrb[0].mxu0
      %v920 = vpop.f32.mrb[0].mxu0
      %v921 = vadd.f32 0.0, %v920
      %v922 = vpop.f32.mrb[0].mxu0
      %923 = vmatprep.mubr.bf16.mxu0 0
      %924 = vmatmul.mubr.bf16.gmra.mrb[0].mxu0 %v769
      %v925 = vpop.f32.mrb[0].mxu0
      %v926 = vadd.f32 0.0, %v925
      %v927 = vpop.f32.mrb[0].mxu0
      %v928 = vpop.f32.mrb[0].mxu0
      %v929 = vadd.f32 0.0, %v928
      %v930 = vpop.f32.mrb[0].mxu0
      %931 = vdwg.mxu0
      %v964 = vunpack.c.l.b16 %v228
      %v965 = vunpack.c.l.b16 %v229
      %v966 = vunpack.c.l.b16 %v231
      %v967 = vunpack.c.l.b16 %v232
      %v968 = vunpack.c.l.b16 %v234
      %v969 = vunpack.c.l.b16 %v235
      %v970 = vunpack.c.l.b16 %v237
      %v971 = vunpack.c.l.b16 %v238
      %v972 = vunpack.c.l.b16 %v240
      %v973 = vunpack.c.l.b16 %v241
      %v974 = vunpack.c.l.b16 %v243
      %v975 = vunpack.c.l.b16 %v244
      %v976 = vunpack.c.l.b16 %v246
      %v977 = vunpack.c.l.b16 %v247
      %v978 = vunpack.c.l.b16 %v249
      %v979 = vunpack.c.l.b16 %v250
      %v980 = vunpack.c.l.b16 %v252
      %v981 = vunpack.c.l.b16 %v253
      %v982 = vunpack.c.l.b16 %v255
      %v983 = vunpack.c.l.b16 %v256
      %v984 = vunpack.c.l.b16 %v258
      %v985 = vunpack.c.l.b16 %v259
      %v986 = vunpack.c.l.b16 %v261
      %v987 = vunpack.c.l.b16 %v262
      %v988 = vunpack.c.l.b16 %v264
      %v989 = vunpack.c.l.b16 %v265
      %v990 = vunpack.c.l.b16 %v267
      %v991 = vunpack.c.l.b16 %v268
      %v992 = vunpack.c.l.b16 %v270
      %v993 = vunpack.c.l.b16 %v271
      %v994 = vunpack.c.l.b16 %v273
      %v995 = vunpack.c.l.b16 %v274
      %v996 = vpack.c.b16 %v965, %v964
      %v997 = vpack.c.b16 %v967, %v966
      %v998 = vpack.c.b16 %v969, %v968
      %v999 = vpack.c.b16 %v971, %v970
      %v1000 = vpack.c.b16 %v973, %v972
      %v1001 = vpack.c.b16 %v975, %v974
      %v1002 = vpack.c.b16 %v977, %v976
      %v1003 = vpack.c.b16 %v979, %v978
      %v1004 = vpack.c.b16 %v981, %v980
      %v1005 = vpack.c.b16 %v983, %v982
      %v1006 = vpack.c.b16 %v985, %v984
      %v1007 = vpack.c.b16 %v987, %v986
      %v1008 = vpack.c.b16 %v989, %v988
      %v1009 = vpack.c.b16 %v991, %v990
      %v1010 = vpack.c.b16 %v993, %v992
      %v1011 = vpack.c.b16 %v995, %v994
      %v1014 = vunpack.c.l.b16 %v276
      %v1015 = vunpack.c.l.b16 %v277
      %v1016 = vpack.c.b16 %v1015, %v1014
      %v1019 = vsel %vm722, %v996, 0
      %v1022 = vsel %vm722, %v997, 0
      %v1025 = vsel %vm722, %v998, 0
      %v1028 = vsel %vm722, %v999, 0
      %v1031 = vsel %vm722, %v1000, 0
      %v1034 = vsel %vm722, %v1001, 0
      %v1037 = vsel %vm722, %v1002, 0
      %v1040 = vsel %vm722, %v1003, 0
      %v1043 = vsel %vm722, %v1004, 0
      %v1046 = vsel %vm722, %v1005, 0
      %v1049 = vsel %vm722, %v1006, 0
      %v1052 = vsel %vm722, %v1007, 0
      %v1055 = vsel %vm722, %v1008, 0
      %v1058 = vsel %vm722, %v1009, 0
      %v1061 = vsel %vm722, %v1010, 0
      %v1064 = vsel %vm722, %v1011, 0
      %1066 = vmatprep.subr.bf16.mxu0 0
      %1067 = vmatpush1.bf16.msra.mxu0 %v1016
      %1068 = vmatprep.subr.bf16.mxu0 0
      %1069 = vmatpush1.bf16.msra.mxu0 0
      %1070 = vmatprep.subr.bf16.mxu0 0
      %1071 = vmatpush1.bf16.msra.mxu0 0
      %1072 = vmatprep.subr.bf16.mxu0 0
      %1073 = vmatpush1.bf16.msra.mxu0 0
      %1074 = vmatprep.subr.bf16.mxu0 0
      %1075 = vmatpush1.bf16.msra.mxu0 0
      %1076 = vmatprep.subr.bf16.mxu0 0
      %1077 = vmatpush1.bf16.msra.mxu0 0
      %1078 = vmatprep.subr.bf16.mxu0 0
      %1079 = vmatpush1.bf16.msra.mxu0 0
      %1080 = vmatprep.subr.bf16.mxu0 0
      %1081 = vmatpush1.bf16.msra.mxu0 0
      %1082 = vmatprep.subr.bf16.mxu0 0
      %1083 = vmatpush1.bf16.msra.mxu0 0
      %1084 = vmatprep.subr.bf16.mxu0 0
      %1085 = vmatpush1.bf16.msra.mxu0 0
      %1086 = vmatprep.subr.bf16.mxu0 0
      %1087 = vmatpush1.bf16.msra.mxu0 0
      %1088 = vmatprep.subr.bf16.mxu0 0
      %1089 = vmatpush1.bf16.msra.mxu0 0
      %1090 = vmatprep.subr.bf16.mxu0 0
      %1091 = vmatpush1.bf16.msra.mxu0 0
      %1092 = vmatprep.subr.bf16.mxu0 0
      %1093 = vmatpush1.bf16.msra.mxu0 0
      %1094 = vmatprep.subr.bf16.mxu0 0
      %1095 = vmatpush1.bf16.msra.mxu0 0
      %1096 = vmatprep.subr.bf16.mxu0 0
      %1097 = vmatpush1.bf16.msra.mxu0 0
      %1098 = vmatprep.mubr.bf16.mxu0 0
      %1099 = vmatmul.mubr.bf16.gmra.mrb[0].mxu0 %v1019
      %v1100 = vpop.f32.mrb[0].mxu0
      %v1101 = vadd.f32 %v806, %v1100
      %v1102 = vpop.f32.mrb[0].mxu0
      %v1103 = vpop.f32.mrb[0].mxu0
      %v1104 = vadd.f32 %v809, %v1103
      %v1105 = vpop.f32.mrb[0].mxu0
      %1106 = vmatprep.mubr.bf16.mxu0 0
      %1107 = vmatmul.mubr.bf16.gmra.mrb[0].mxu0 %v1022
      %v1108 = vpop.f32.mrb[0].mxu0
      %v1109 = vadd.f32 %v814, %v1108
      %v1110 = vpop.f32.mrb[0].mxu0
      %v1111 = vpop.f32.mrb[0].mxu0
      %v1112 = vadd.f32 %v817, %v1111
      %v1113 = vpop.f32.mrb[0].mxu0
      %1114 = vmatprep.mubr.bf16.mxu0 0
      %1115 = vmatmul.mubr.bf16.gmra.mrb[0].mxu0 %v1025
      %v1116 = vpop.f32.mrb[0].mxu0
      %v1117 = vadd.f32 %v822, %v1116
      %v1118 = vpop.f32.mrb[0].mxu0
      %v1119 = vpop.f32.mrb[0].mxu0
      %v1120 = vadd.f32 %v825, %v1119
      %v1121 = vpop.f32.mrb[0].mxu0
      %1122 = vmatprep.mubr.bf16.mxu0 0
      %1123 = vmatmul.mubr.bf16.gmra.mrb[0].mxu0 %v1028
      %v1124 = vpop.f32.mrb[0].mxu0
      %v1125 = vadd.f32 %v830, %v1124
      %v1126 = vpop.f32.mrb[0].mxu0
      %v1127 = vpop.f32.mrb[0].mxu0
      %v1128 = vadd.f32 %v833, %v1127
      %v1129 = vpop.f32.mrb[0].mxu0
      %1130 = vmatprep.mubr.bf16.mxu0 0
      %1131 = vmatmul.mubr.bf16.gmra.mrb[0].mxu0 %v1031
      %v1132 = vpop.f32.mrb[0].mxu0
      %v1133 = vadd.f32 %v838, %v1132
      %v1134 = vpop.f32.mrb[0].mxu0
      %v1135 = vpop.f32.mrb[0].mxu0
      %v1136 = vadd.f32 %v841, %v1135
      %v1137 = vpop.f32.mrb[0].mxu0
      %1138 = vmatprep.mubr.bf16.mxu0 0
      %1139 = vmatmul.mubr.bf16.gmra.mrb[0].mxu0 %v1034
      %v1140 = vpop.f32.mrb[0].mxu0
      %v1141 = vadd.f32 %v846, %v1140
      %v1142 = vpop.f32.mrb[0].mxu0
      %v1143 = vpop.f32.mrb[0].mxu0
      %v1144 = vadd.f32 %v849, %v1143
      %v1145 = vpop.f32.mrb[0].mxu0
      %1146 = vmatprep.mubr.bf16.mxu0 0
      %1147 = vmatmul.mubr.bf16.gmra.mrb[0].mxu0 %v1037
      %v1148 = vpop.f32.mrb[0].mxu0
      %v1149 = vadd.f32 %v854, %v1148
      %v1150 = vpop.f32.mrb[0].mxu0
      %v1151 = vpop.f32.mrb[0].mxu0
      %v1152 = vadd.f32 %v857, %v1151
      %v1153 = vpop.f32.mrb[0].mxu0
      %1154 = vmatprep.mubr.bf16.mxu0 0
      %1155 = vmatmul.mubr.bf16.gmra.mrb[0].mxu0 %v1040
      %v1156 = vpop.f32.mrb[0].mxu0
      %v1157 = vadd.f32 %v862, %v1156
      %v1158 = vpop.f32.mrb[0].mxu0
      %v1159 = vpop.f32.mrb[0].mxu0
      %v1160 = vadd.f32 %v865, %v1159
      %v1161 = vpop.f32.mrb[0].mxu0
      %1162 = vmatprep.mubr.bf16.mxu0 0
      %1163 = vmatmul.mubr.bf16.gmra.mrb[0].mxu0 %v1043
      %v1164 = vpop.f32.mrb[0].mxu0
      %v1165 = vadd.f32 %v870, %v1164
      %v1166 = vpop.f32.mrb[0].mxu0
      %v1167 = vpop.f32.mrb[0].mxu0
      %v1168 = vadd.f32 %v873, %v1167
      %v1169 = vpop.f32.mrb[0].mxu0
      %1170 = vmatprep.mubr.bf16.mxu0 0
      %1171 = vmatmul.mubr.bf16.gmra.mrb[0].mxu0 %v1046
      %v1172 = vpop.f32.mrb[0].mxu0
      %v1173 = vadd.f32 %v878, %v1172
      %v1174 = vpop.f32.mrb[0].mxu0
      %v1175 = vpop.f32.mrb[0].mxu0
      %v1176 = vadd.f32 %v881, %v1175
      %v1177 = vpop.f32.mrb[0].mxu0
      %1178 = vmatprep.mubr.bf16.mxu0 0
      %1179 = vmatmul.mubr.bf16.gmra.mrb[0].mxu0 %v1049
      %v1180 = vpop.f32.mrb[0].mxu0
      %v1181 = vadd.f32 %v886, %v1180
      %v1182 = vpop.f32.mrb[0].mxu0
      %v1183 = vpop.f32.mrb[0].mxu0
      %v1184 = vadd.f32 %v889, %v1183
      %v1185 = vpop.f32.mrb[0].mxu0
      %1186 = vmatprep.mubr.bf16.mxu0 0
      %1187 = vmatmul.mubr.bf16.gmra.mrb[0].mxu0 %v1052
      %v1188 = vpop.f32.mrb[0].mxu0
      %v1189 = vadd.f32 %v894, %v1188
      %v1190 = vpop.f32.mrb[0].mxu0
      %v1191 = vpop.f32.mrb[0].mxu0
      %v1192 = vadd.f32 %v897, %v1191
      %v1193 = vpop.f32.mrb[0].mxu0
      %1194 = vmatprep.mubr.bf16.mxu0 0
      %1195 = vmatmul.mubr.bf16.gmra.mrb[0].mxu0 %v1055
      %v1196 = vpop.f32.mrb[0].mxu0
      %v1197 = vadd.f32 %v902, %v1196
      %v1198 = vpop.f32.mrb[0].mxu0
      %v1199 = vpop.f32.mrb[0].mxu0
      %v1200 = vadd.f32 %v905, %v1199
      %v1201 = vpop.f32.mrb[0].mxu0
      %1202 = vmatprep.mubr.bf16.mxu0 0
      %1203 = vmatmul.mubr.bf16.gmra.mrb[0].mxu0 %v1058
      %v1204 = vpop.f32.mrb[0].mxu0
      %v1205 = vadd.f32 %v910, %v1204
      %v1206 = vpop.f32.mrb[0].mxu0
      %v1207 = vpop.f32.mrb[0].mxu0
      %v1208 = vadd.f32 %v913, %v1207
      %v1209 = vpop.f32.mrb[0].mxu0
      %1210 = vmatprep.mubr.bf16.mxu0 0
      %1211 = vmatmul.mubr.bf16.gmra.mrb[0].mxu0 %v1061
      %v1212 = vpop.f32.mrb[0].mxu0
      %v1213 = vadd.f32 %v918, %v1212
      %v1214 = vpop.f32.mrb[0].mxu0
      %v1215 = vpop.f32.mrb[0].mxu0
      %v1216 = vadd.f32 %v921, %v1215
      %v1217 = vpop.f32.mrb[0].mxu0
      %1218 = vmatprep.mubr.bf16.mxu0 0
      %1219 = vmatmul.mubr.bf16.gmra.mrb[0].mxu0 %v1064
      %v1220 = vpop.f32.mrb[0].mxu0
      %v1221 = vadd.f32 %v926, %v1220
      %v1222 = vpop.f32.mrb[0].mxu0
      %v1223 = vpop.f32.mrb[0].mxu0
      %v1224 = vadd.f32 %v929, %v1223
      %v1225 = vpop.f32.mrb[0].mxu0
      %1226 = vdwg.mxu0
      %vm1243 = vcmask 1042432
      %vm1244 = vcmask 1046532
      %vm1245 = vmor %vm1243, %vm1244
      %v1246 = vrot.slane %v228, 5
      %v1247 = vrot.slane %v1246, 4
      %v1248 = vrot.slane %v229, 5
      %v1249 = vsel %vm1245, %v1247, %v1248
      %v1250 = vrot.slane %v1248, 4
      %v1251 = vrot.slane %v230, 5
      %v1252 = vsel %vm1245, %v1250, %v1251
      %v1253 = vrot.slane %v231, 5
      %v1254 = vrot.slane %v1253, 4
      %v1255 = vrot.slane %v232, 5
      %v1256 = vsel %vm1245, %v1254, %v1255
      %v1257 = vrot.slane %v1255, 4
      %v1258 = vrot.slane %v233, 5
      %v1259 = vsel %vm1245, %v1257, %v1258
      %v1260 = vrot.slane %v234, 5
      %v1261 = vrot.slane %v1260, 4
      %v1262 = vrot.slane %v235, 5
      %v1263 = vsel %vm1245, %v1261, %v1262
      %v1264 = vrot.slane %v1262, 4
      %v1265 = vrot.slane %v236, 5
      %v1266 = vsel %vm1245, %v1264, %v1265
      %v1267 = vrot.slane %v237, 5
      %v1268 = vrot.slane %v1267, 4
      %v1269 = vrot.slane %v238, 5
      %v1270 = vsel %vm1245, %v1268, %v1269
      %v1271 = vrot.slane %v1269, 4
      %v1272 = vrot.slane %v239, 5
      %v1273 = vsel %vm1245, %v1271, %v1272
      %v1274 = vrot.slane %v240, 5
      %v1275 = vrot.slane %v1274, 4
      %v1276 = vrot.slane %v241, 5
      %v1277 = vsel %vm1245, %v1275, %v1276
      %v1278 = vrot.slane %v1276, 4
      %v1279 = vrot.slane %v242, 5
      %v1280 = vsel %vm1245, %v1278, %v1279
      %v1281 = vrot.slane %v243, 5
      %v1282 = vrot.slane %v1281, 4
      %v1283 = vrot.slane %v244, 5
      %v1284 = vsel %vm1245, %v1282, %v1283
      %v1285 = vrot.slane %v1283, 4
      %v1286 = vrot.slane %v245, 5
      %v1287 = vsel %vm1245, %v1285, %v1286
      %v1288 = vrot.slane %v246, 5
      %v1289 = vrot.slane %v1288, 4
      %v1290 = vrot.slane %v247, 5
      %v1291 = vsel %vm1245, %v1289, %v1290
      %v1292 = vrot.slane %v1290, 4
      %v1293 = vrot.slane %v248, 5
      %v1294 = vsel %vm1245, %v1292, %v1293
      %v1295 = vrot.slane %v249, 5
      %v1296 = vrot.slane %v1295, 4
      %v1297 = vrot.slane %v250, 5
      %v1298 = vsel %vm1245, %v1296, %v1297
      %v1299 = vrot.slane %v1297, 4
      %v1300 = vrot.slane %v251, 5
      %v1301 = vsel %vm1245, %v1299, %v1300
      %v1302 = vrot.slane %v252, 5
      %v1303 = vrot.slane %v1302, 4
      %v1304 = vrot.slane %v253, 5
      %v1305 = vsel %vm1245, %v1303, %v1304
      %v1306 = vrot.slane %v1304, 4
      %v1307 = vrot.slane %v254, 5
      %v1308 = vsel %vm1245, %v1306, %v1307
      %v1309 = vrot.slane %v255, 5
      %v1310 = vrot.slane %v1309, 4
      %v1311 = vrot.slane %v256, 5
      %v1312 = vsel %vm1245, %v1310, %v1311
      %v1313 = vrot.slane %v1311, 4
      %v1314 = vrot.slane %v257, 5
      %v1315 = vsel %vm1245, %v1313, %v1314
      %v1316 = vrot.slane %v258, 5
      %v1317 = vrot.slane %v1316, 4
      %v1318 = vrot.slane %v259, 5
      %v1319 = vsel %vm1245, %v1317, %v1318
      %v1320 = vrot.slane %v1318, 4
      %v1321 = vrot.slane %v260, 5
      %v1322 = vsel %vm1245, %v1320, %v1321
      %v1323 = vrot.slane %v261, 5
      %v1324 = vrot.slane %v1323, 4
      %v1325 = vrot.slane %v262, 5
      %v1326 = vsel %vm1245, %v1324, %v1325
      %v1327 = vrot.slane %v1325, 4
      %v1328 = vrot.slane %v263, 5
      %v1329 = vsel %vm1245, %v1327, %v1328
      %v1330 = vrot.slane %v264, 5
      %v1331 = vrot.slane %v1330, 4
      %v1332 = vrot.slane %v265, 5
      %v1333 = vsel %vm1245, %v1331, %v1332
      %v1334 = vrot.slane %v1332, 4
      %v1335 = vrot.slane %v266, 5
      %v1336 = vsel %vm1245, %v1334, %v1335
      %v1337 = vrot.slane %v267, 5
      %v1338 = vrot.slane %v1337, 4
      %v1339 = vrot.slane %v268, 5
      %v1340 = vsel %vm1245, %v1338, %v1339
      %v1341 = vrot.slane %v1339, 4
      %v1342 = vrot.slane %v269, 5
      %v1343 = vsel %vm1245, %v1341, %v1342
      %v1344 = vrot.slane %v270, 5
      %v1345 = vrot.slane %v1344, 4
      %v1346 = vrot.slane %v271, 5
      %v1347 = vsel %vm1245, %v1345, %v1346
      %v1348 = vrot.slane %v1346, 4
      %v1349 = vrot.slane %v272, 5
      %v1350 = vsel %vm1245, %v1348, %v1349
      %v1351 = vrot.slane %v273, 5
      %v1352 = vrot.slane %v1351, 4
      %v1353 = vrot.slane %v274, 5
      %v1354 = vsel %vm1245, %v1352, %v1353
      %v1355 = vrot.slane %v1353, 4
      %v1356 = vrot.slane %v275, 5
      %v1357 = vsel %vm1245, %v1355, %v1356
      %s1358 = scalar_lea.vmem %s1, 16
      %v1359 = vld [vmem:[%s1358] sm:$0xf]
      %v1360 = vld [vmem:[%s1358 + $0x4] sm:$0xf]
      %v1361 = vunpack.c.l.b16 %v1249
      %v1362 = vunpack.c.l.b16 %v1252
      %v1363 = vunpack.c.l.b16 %v1256
      %v1364 = vunpack.c.l.b16 %v1259
      %v1365 = vunpack.c.l.b16 %v1263
      %v1366 = vunpack.c.l.b16 %v1266
      %v1367 = vunpack.c.l.b16 %v1270
      %v1368 = vunpack.c.l.b16 %v1273
      %v1369 = vunpack.c.l.b16 %v1277
      %v1370 = vunpack.c.l.b16 %v1280
      %v1371 = vunpack.c.l.b16 %v1284
      %v1372 = vunpack.c.l.b16 %v1287
      %v1373 = vunpack.c.l.b16 %v1291
      %v1374 = vunpack.c.l.b16 %v1294
      %v1375 = vunpack.c.l.b16 %v1298
      %v1376 = vunpack.c.l.b16 %v1301
      %v1377 = vunpack.c.l.b16 %v1305
      %v1378 = vunpack.c.l.b16 %v1308
      %v1379 = vunpack.c.l.b16 %v1312
      %v1380 = vunpack.c.l.b16 %v1315
      %v1381 = vunpack.c.l.b16 %v1319
      %v1382 = vunpack.c.l.b16 %v1322
      %v1383 = vunpack.c.l.b16 %v1326
      %v1384 = vunpack.c.l.b16 %v1329
      %v1385 = vunpack.c.l.b16 %v1333
      %v1386 = vunpack.c.l.b16 %v1336
      %v1387 = vunpack.c.l.b16 %v1340
      %v1388 = vunpack.c.l.b16 %v1343
      %v1389 = vunpack.c.l.b16 %v1347
      %v1390 = vunpack.c.l.b16 %v1350
      %v1391 = vunpack.c.l.b16 %v1354
      %v1392 = vunpack.c.l.b16 %v1357
      %v1393 = vpack.c.b16 %v1362, %v1361
      %v1394 = vpack.c.b16 %v1364, %v1363
      %v1395 = vpack.c.b16 %v1366, %v1365
      %v1396 = vpack.c.b16 %v1368, %v1367
      %v1397 = vpack.c.b16 %v1370, %v1369
      %v1398 = vpack.c.b16 %v1372, %v1371
      %v1399 = vpack.c.b16 %v1374, %v1373
      %v1400 = vpack.c.b16 %v1376, %v1375
      %v1401 = vpack.c.b16 %v1378, %v1377
      %v1402 = vpack.c.b16 %v1380, %v1379
      %v1403 = vpack.c.b16 %v1382, %v1381
      %v1404 = vpack.c.b16 %v1384, %v1383
      %v1405 = vpack.c.b16 %v1386, %v1385
      %v1406 = vpack.c.b16 %v1388, %v1387
      %v1407 = vpack.c.b16 %v1390, %v1389
      %v1408 = vpack.c.b16 %v1392, %v1391
      %v1411 = vunpack.c.l.b16 %v1359
      %v1412 = vunpack.c.l.b16 %v1360
      %v1413 = vpack.c.b16 %v1412, %v1411
      %v1416 = vsel %vm722, %v1393, 0
      %v1419 = vsel %vm722, %v1394, 0
      %v1422 = vsel %vm722, %v1395, 0
      %v1425 = vsel %vm722, %v1396, 0
      %v1428 = vsel %vm722, %v1397, 0
      %v1431 = vsel %vm722, %v1398, 0
      %v1434 = vsel %vm722, %v1399, 0
      %v1437 = vsel %vm722, %v1400, 0
      %v1440 = vsel %vm722, %v1401, 0
      %v1443 = vsel %vm722, %v1402, 0
      %v1446 = vsel %vm722, %v1403, 0
      %v1449 = vsel %vm722, %v1404, 0
      %v1452 = vsel %vm722, %v1405, 0
      %v1455 = vsel %vm722, %v1406, 0
      %v1458 = vsel %vm722, %v1407, 0
      %v1461 = vsel %vm722, %v1408, 0
      %1463 = vmatprep.subr.bf16.mxu0 0
      %1464 = vmatpush1.bf16.msra.mxu0 %v1413
      %1465 = vmatprep.subr.bf16.mxu0 0
      %1466 = vmatpush1.bf16.msra.mxu0 0
      %1467 = vmatprep.subr.bf16.mxu0 0
      %1468 = vmatpush1.bf16.msra.mxu0 0
      %1469 = vmatprep.subr.bf16.mxu0 0
      %1470 = vmatpush1.bf16.msra.mxu0 0
      %1471 = vmatprep.subr.bf16.mxu0 0
      %1472 = vmatpush1.bf16.msra.mxu0 0
      %1473 = vmatprep.subr.bf16.mxu0 0
      %1474 = vmatpush1.bf16.msra.mxu0 0
      %1475 = vmatprep.subr.bf16.mxu0 0
      %1476 = vmatpush1.bf16.msra.mxu0 0
      %1477 = vmatprep.subr.bf16.mxu0 0
      %1478 = vmatpush1.bf16.msra.mxu0 0
      %1479 = vmatprep.subr.bf16.mxu0 0
      %1480 = vmatpush1.bf16.msra.mxu0 0
      %1481 = vmatprep.subr.bf16.mxu0 0
      %1482 = vmatpush1.bf16.msra.mxu0 0
      %1483 = vmatprep.subr.bf16.mxu0 0
      %1484 = vmatpush1.bf16.msra.mxu0 0
      %1485 = vmatprep.subr.bf16.mxu0 0
      %1486 = vmatpush1.bf16.msra.mxu0 0
      %1487 = vmatprep.subr.bf16.mxu0 0
      %1488 = vmatpush1.bf16.msra.mxu0 0
      %1489 = vmatprep.subr.bf16.mxu0 0
      %1490 = vmatpush1.bf16.msra.mxu0 0
      %1491 = vmatprep.subr.bf16.mxu0 0
      %1492 = vmatpush1.bf16.msra.mxu0 0
      %1493 = vmatprep.subr.bf16.mxu0 0
      %1494 = vmatpush1.bf16.msra.mxu0 0
      %1495 = vmatprep.mubr.bf16.mxu0 0
      %1496 = vmatmul.mubr.bf16.gmra.mrb[0].mxu0 %v1416
      %v1497 = vpop.f32.mrb[0].mxu0
      %v1498 = vadd.f32 0.0, %v1497
      %v1499 = vpop.f32.mrb[0].mxu0
      %v1500 = vpop.f32.mrb[0].mxu0
      %v1501 = vadd.f32 0.0, %v1500
      %v1502 = vpop.f32.mrb[0].mxu0
      %1503 = vmatprep.mubr.bf16.mxu0 0
      %1504 = vmatmul.mubr.bf16.gmra.mrb[0].mxu0 %v1419
      %v1505 = vpop.f32.mrb[0].mxu0
      %v1506 = vadd.f32 0.0, %v1505
      %v1507 = vpop.f32.mrb[0].mxu0
      %v1508 = vpop.f32.mrb[0].mxu0
      %v1509 = vadd.f32 0.0, %v1508
      %v1510 = vpop.f32.mrb[0].mxu0
      %1511 = vmatprep.mubr.bf16.mxu0 0
      %1512 = vmatmul.mubr.bf16.gmra.mrb[0].mxu0 %v1422
      %v1513 = vpop.f32.mrb[0].mxu0
      %v1514 = vadd.f32 0.0, %v1513
      %v1515 = vpop.f32.mrb[0].mxu0
      %v1516 = vpop.f32.mrb[0].mxu0
      %v1517 = vadd.f32 0.0, %v1516
      %v1518 = vpop.f32.mrb[0].mxu0
      %1519 = vmatprep.mubr.bf16.mxu0 0
      %1520 = vmatmul.mubr.bf16.gmra.mrb[0].mxu0 %v1425
      %v1521 = vpop.f32.mrb[0].mxu0
      %v1522 = vadd.f32 0.0, %v1521
      %v1523 = vpop.f32.mrb[0].mxu0
      %v1524 = vpop.f32.mrb[0].mxu0
      %v1525 = vadd.f32 0.0, %v1524
      %v1526 = vpop.f32.mrb[0].mxu0
      %1527 = vmatprep.mubr.bf16.mxu0 0
      %1528 = vmatmul.mubr.bf16.gmra.mrb[0].mxu0 %v1428
      %v1529 = vpop.f32.mrb[0].mxu0
      %v1530 = vadd.f32 0.0, %v1529
      %v1531 = vpop.f32.mrb[0].mxu0
      %v1532 = vpop.f32.mrb[0].mxu0
      %v1533 = vadd.f32 0.0, %v1532
      %v1534 = vpop.f32.mrb[0].mxu0
      %1535 = vmatprep.mubr.bf16.mxu0 0
      %1536 = vmatmul.mubr.bf16.gmra.mrb[0].mxu0 %v1431
      %v1537 = vpop.f32.mrb[0].mxu0
      %v1538 = vadd.f32 0.0, %v1537
      %v1539 = vpop.f32.mrb[0].mxu0
      %v1540 = vpop.f32.mrb[0].mxu0
      %v1541 = vadd.f32 0.0, %v1540
      %v1542 = vpop.f32.mrb[0].mxu0
      %1543 = vmatprep.mubr.bf16.mxu0 0
      %1544 = vmatmul.mubr.bf16.gmra.mrb[0].mxu0 %v1434
      %v1545 = vpop.f32.mrb[0].mxu0
      %v1546 = vadd.f32 0.0, %v1545
      %v1547 = vpop.f32.mrb[0].mxu0
      %v1548 = vpop.f32.mrb[0].mxu0
      %v1549 = vadd.f32 0.0, %v1548
      %v1550 = vpop.f32.mrb[0].mxu0
      %1551 = vmatprep.mubr.bf16.mxu0 0
      %1552 = vmatmul.mubr.bf16.gmra.mrb[0].mxu0 %v1437
      %v1553 = vpop.f32.mrb[0].mxu0
      %v1554 = vadd.f32 0.0, %v1553
      %v1555 = vpop.f32.mrb[0].mxu0
      %v1556 = vpop.f32.mrb[0].mxu0
      %v1557 = vadd.f32 0.0, %v1556
      %v1558 = vpop.f32.mrb[0].mxu0
      %1559 = vmatprep.mubr.bf16.mxu0 0
      %1560 = vmatmul.mubr.bf16.gmra.mrb[0].mxu0 %v1440
      %v1561 = vpop.f32.mrb[0].mxu0
      %v1562 = vadd.f32 0.0, %v1561
      %v1563 = vpop.f32.mrb[0].mxu0
      %v1564 = vpop.f32.mrb[0].mxu0
      %v1565 = vadd.f32 0.0, %v1564
      %v1566 = vpop.f32.mrb[0].mxu0
      %1567 = vmatprep.mubr.bf16.mxu0 0
      %1568 = vmatmul.mubr.bf16.gmra.mrb[0].mxu0 %v1443
      %v1569 = vpop.f32.mrb[0].mxu0
      %v1570 = vadd.f32 0.0, %v1569
      %v1571 = vpop.f32.mrb[0].mxu0
      %v1572 = vpop.f32.mrb[0].mxu0
      %v1573 = vadd.f32 0.0, %v1572
      %v1574 = vpop.f32.mrb[0].mxu0
      %1575 = vmatprep.mubr.bf16.mxu0 0
      %1576 = vmatmul.mubr.bf16.gmra.mrb[0].mxu0 %v1446
      %v1577 = vpop.f32.mrb[0].mxu0
      %v1578 = vadd.f32 0.0, %v1577
      %v1579 = vpop.f32.mrb[0].mxu0
      %v1580 = vpop.f32.mrb[0].mxu0
      %v1581 = vadd.f32 0.0, %v1580
      %v1582 = vpop.f32.mrb[0].mxu0
      %1583 = vmatprep.mubr.bf16.mxu0 0
      %1584 = vmatmul.mubr.bf16.gmra.mrb[0].mxu0 %v1449
      %v1585 = vpop.f32.mrb[0].mxu0
      %v1586 = vadd.f32 0.0, %v1585
      %v1587 = vpop.f32.mrb[0].mxu0
      %v1588 = vpop.f32.mrb[0].mxu0
      %v1589 = vadd.f32 0.0, %v1588
      %v1590 = vpop.f32.mrb[0].mxu0
      %1591 = vmatprep.mubr.bf16.mxu0 0
      %1592 = vmatmul.mubr.bf16.gmra.mrb[0].mxu0 %v1452
      %v1593 = vpop.f32.mrb[0].mxu0
      %v1594 = vadd.f32 0.0, %v1593
      %v1595 = vpop.f32.mrb[0].mxu0
      %v1596 = vpop.f32.mrb[0].mxu0
      %v1597 = vadd.f32 0.0, %v1596
      %v1598 = vpop.f32.mrb[0].mxu0
      %1599 = vmatprep.mubr.bf16.mxu0 0
      %1600 = vmatmul.mubr.bf16.gmra.mrb[0].mxu0 %v1455
      %v1601 = vpop.f32.mrb[0].mxu0
      %v1602 = vadd.f32 0.0, %v1601
      %v1603 = vpop.f32.mrb[0].mxu0
      %v1604 = vpop.f32.mrb[0].mxu0
      %v1605 = vadd.f32 0.0, %v1604
      %v1606 = vpop.f32.mrb[0].mxu0
      %1607 = vmatprep.mubr.bf16.mxu0 0
      %1608 = vmatmul.mubr.bf16.gmra.mrb[0].mxu0 %v1458
      %v1609 = vpop.f32.mrb[0].mxu0
      %v1610 = vadd.f32 0.0, %v1609
      %v1611 = vpop.f32.mrb[0].mxu0
      %v1612 = vpop.f32.mrb[0].mxu0
      %v1613 = vadd.f32 0.0, %v1612
      %v1614 = vpop.f32.mrb[0].mxu0
      %1615 = vmatprep.mubr.bf16.mxu0 0
      %1616 = vmatmul.mubr.bf16.gmra.mrb[0].mxu0 %v1461
      %v1617 = vpop.f32.mrb[0].mxu0
      %v1618 = vadd.f32 0.0, %v1617
      %v1619 = vpop.f32.mrb[0].mxu0
      %v1620 = vpop.f32.mrb[0].mxu0
      %v1621 = vadd.f32 0.0, %v1620
      %v1622 = vpop.f32.mrb[0].mxu0
      %1623 = vdwg.mxu0
      %v1624 = vadd.f32 %v1101, %v1498
      %v1625 = vadd.f32 %v1104, %v1501
      %v1626 = vadd.f32 %v1109, %v1506
      %v1627 = vadd.f32 %v1112, %v1509
      %v1628 = vadd.f32 %v1117, %v1514
      %v1629 = vadd.f32 %v1120, %v1517
      %v1630 = vadd.f32 %v1125, %v1522
      %v1631 = vadd.f32 %v1128, %v1525
      %v1632 = vadd.f32 %v1133, %v1530
      %v1633 = vadd.f32 %v1136, %v1533
      %v1634 = vadd.f32 %v1141, %v1538
      %v1635 = vadd.f32 %v1144, %v1541
      %v1636 = vadd.f32 %v1149, %v1546
      %v1637 = vadd.f32 %v1152, %v1549
      %v1638 = vadd.f32 %v1157, %v1554
      %v1639 = vadd.f32 %v1160, %v1557
      %v1640 = vadd.f32 %v1165, %v1562
      %v1641 = vadd.f32 %v1168, %v1565
      %v1642 = vadd.f32 %v1173, %v1570
      %v1643 = vadd.f32 %v1176, %v1573
      %v1644 = vadd.f32 %v1181, %v1578
      %v1645 = vadd.f32 %v1184, %v1581
      %v1646 = vadd.f32 %v1189, %v1586
      %v1647 = vadd.f32 %v1192, %v1589
      %v1648 = vadd.f32 %v1197, %v1594
      %v1649 = vadd.f32 %v1200, %v1597
      %v1650 = vadd.f32 %v1205, %v1602
      %v1651 = vadd.f32 %v1208, %v1605
      %v1652 = vadd.f32 %v1213, %v1610
      %v1653 = vadd.f32 %v1216, %v1613
      %v1654 = vadd.f32 %v1221, %v1618
      %v1655 = vadd.f32 %v1224, %v1621
      %s1656 = sadd.s32 %s224, 1
      %s1657 = smul.u32 %s1656, 3
      %s1658 = smul.addr %s1657, 4
      %s1659 = scalar_lea.vmem %s211, %s1658
      %v1660 = vld [vmem:[%s1659] sm:$0xf]
      %v1661 = vld [vmem:[%s1659 + $0x4] sm:$0xf]
      %v1662 = vld [vmem:[%s1659 + $0x8] sm:$0x1]
      %v1663 = vld [vmem:[%s1659 + $0xc] sm:$0xf]
      %v1664 = vld [vmem:[%s1659 + $0x10] sm:$0xf]
      %v1665 = vld [vmem:[%s1659 + $0x14] sm:$0x1]
      %v1666 = vld [vmem:[%s1659 + $0x18] sm:$0xf]
      %v1667 = vld [vmem:[%s1659 + $0x1c] sm:$0xf]
      %v1668 = vld [vmem:[%s1659 + $0x20] sm:$0x1]
      %v1669 = vld [vmem:[%s1659 + $0x24] sm:$0xf]
      %v1670 = vld [vmem:[%s1659 + $0x28] sm:$0xf]
      %v1671 = vld [vmem:[%s1659 + $0x2c] sm:$0x1]
      %v1672 = vld [vmem:[%s1659 + $0x30] sm:$0xf]
      %v1673 = vld [vmem:[%s1659 + $0x34] sm:$0xf]
      %v1674 = vld [vmem:[%s1659 + $0x38] sm:$0x1]
      %v1675 = vld [vmem:[%s1659 + $0x3c] sm:$0xf]
      %v1676 = vld [vmem:[%s1659 + $0x40] sm:$0xf]
      %v1677 = vld [vmem:[%s1659 + $0x44] sm:$0x1]
      %v1678 = vld [vmem:[%s1659 + $0x48] sm:$0xf]
      %v1679 = vld [vmem:[%s1659 + $0x4c] sm:$0xf]
      %v1680 = vld [vmem:[%s1659 + $0x50] sm:$0x1]
      %v1681 = vld [vmem:[%s1659 + $0x54] sm:$0xf]
      %v1682 = vld [vmem:[%s1659 + $0x58] sm:$0xf]
      %v1683 = vld [vmem:[%s1659 + $0x5c] sm:$0x1]
      %v1684 = vld [vmem:[%s1659 + $0x60] sm:$0xf]
      %v1685 = vld [vmem:[%s1659 + $0x64] sm:$0xf]
      %v1686 = vld [vmem:[%s1659 + $0x68] sm:$0x1]
      %v1687 = vld [vmem:[%s1659 + $0x6c] sm:$0xf]
      %v1688 = vld [vmem:[%s1659 + $0x70] sm:$0xf]
      %v1689 = vld [vmem:[%s1659 + $0x74] sm:$0x1]
      %v1690 = vld [vmem:[%s1659 + $0x78] sm:$0xf]
      %v1691 = vld [vmem:[%s1659 + $0x7c] sm:$0xf]
      %v1692 = vld [vmem:[%s1659 + $0x80] sm:$0x1]
      %v1693 = vld [vmem:[%s1659 + $0x84] sm:$0xf]
      %v1694 = vld [vmem:[%s1659 + $0x88] sm:$0xf]
      %v1695 = vld [vmem:[%s1659 + $0x8c] sm:$0x1]
      %v1696 = vld [vmem:[%s1659 + $0x90] sm:$0xf]
      %v1697 = vld [vmem:[%s1659 + $0x94] sm:$0xf]
      %v1698 = vld [vmem:[%s1659 + $0x98] sm:$0x1]
      %v1699 = vld [vmem:[%s1659 + $0x9c] sm:$0xf]
      %v1700 = vld [vmem:[%s1659 + $0xa0] sm:$0xf]
      %v1701 = vld [vmem:[%s1659 + $0xa4] sm:$0x1]
      %v1702 = vld [vmem:[%s1659 + $0xa8] sm:$0xf]
      %v1703 = vld [vmem:[%s1659 + $0xac] sm:$0xf]
      %v1704 = vld [vmem:[%s1659 + $0xb0] sm:$0x1]
      %v1705 = vld [vmem:[%s1659 + $0xb4] sm:$0xf]
      %v1706 = vld [vmem:[%s1659 + $0xb8] sm:$0xf]
      %v1707 = vld [vmem:[%s1659 + $0xbc] sm:$0x1]
      %s1708 = scalar_lea.vmem %s1, 24
      %v1709 = vld [vmem:[%s1708] sm:$0xf]
      %v1710 = vld [vmem:[%s1708 + $0x4] sm:$0xf]
      %v1743 = vunpack.c.l.b16 %v1660
      %v1744 = vunpack.c.l.b16 %v1661
      %v1745 = vunpack.c.l.b16 %v1663
      %v1746 = vunpack.c.l.b16 %v1664
      %v1747 = vunpack.c.l.b16 %v1666
      %v1748 = vunpack.c.l.b16 %v1667
      %v1749 = vunpack.c.l.b16 %v1669
      %v1750 = vunpack.c.l.b16 %v1670
      %v1751 = vunpack.c.l.b16 %v1672
      %v1752 = vunpack.c.l.b16 %v1673
      %v1753 = vunpack.c.l.b16 %v1675
      %v1754 = vunpack.c.l.b16 %v1676
      %v1755 = vunpack.c.l.b16 %v1678
      %v1756 = vunpack.c.l.b16 %v1679
      %v1757 = vunpack.c.l.b16 %v1681
      %v1758 = vunpack.c.l.b16 %v1682
      %v1759 = vunpack.c.l.b16 %v1684
      %v1760 = vunpack.c.l.b16 %v1685
      %v1761 = vunpack.c.l.b16 %v1687
      %v1762 = vunpack.c.l.b16 %v1688
      %v1763 = vunpack.c.l.b16 %v1690
      %v1764 = vunpack.c.l.b16 %v1691
      %v1765 = vunpack.c.l.b16 %v1693
      %v1766 = vunpack.c.l.b16 %v1694
      %v1767 = vunpack.c.l.b16 %v1696
      %v1768 = vunpack.c.l.b16 %v1697
      %v1769 = vunpack.c.l.b16 %v1699
      %v1770 = vunpack.c.l.b16 %v1700
      %v1771 = vunpack.c.l.b16 %v1702
      %v1772 = vunpack.c.l.b16 %v1703
      %v1773 = vunpack.c.l.b16 %v1705
      %v1774 = vunpack.c.l.b16 %v1706
      %v1775 = vpack.c.b16 %v1744, %v1743
      %v1776 = vpack.c.b16 %v1746, %v1745
      %v1777 = vpack.c.b16 %v1748, %v1747
      %v1778 = vpack.c.b16 %v1750, %v1749
      %v1779 = vpack.c.b16 %v1752, %v1751
      %v1780 = vpack.c.b16 %v1754, %v1753
      %v1781 = vpack.c.b16 %v1756, %v1755
      %v1782 = vpack.c.b16 %v1758, %v1757
      %v1783 = vpack.c.b16 %v1760, %v1759
      %v1784 = vpack.c.b16 %v1762, %v1761
      %v1785 = vpack.c.b16 %v1764, %v1763
      %v1786 = vpack.c.b16 %v1766, %v1765
      %v1787 = vpack.c.b16 %v1768, %v1767
      %v1788 = vpack.c.b16 %v1770, %v1769
      %v1789 = vpack.c.b16 %v1772, %v1771
      %v1790 = vpack.c.b16 %v1774, %v1773
      %v1793 = vunpack.c.l.b16 %v1709
      %v1794 = vunpack.c.l.b16 %v1710
      %v1795 = vpack.c.b16 %v1794, %v1793
      %v1798 = vsel %vm722, %v1775, 0
      %v1801 = vsel %vm722, %v1776, 0
      %v1804 = vsel %vm722, %v1777, 0
      %v1807 = vsel %vm722, %v1778, 0
      %v1810 = vsel %vm722, %v1779, 0
      %v1813 = vsel %vm722, %v1780, 0
      %v1816 = vsel %vm722, %v1781, 0
      %v1819 = vsel %vm722, %v1782, 0
      %v1822 = vsel %vm722, %v1783, 0
      %v1825 = vsel %vm722, %v1784, 0
      %v1828 = vsel %vm722, %v1785, 0
      %v1831 = vsel %vm722, %v1786, 0
      %v1834 = vsel %vm722, %v1787, 0
      %v1837 = vsel %vm722, %v1788, 0
      %v1840 = vsel %vm722, %v1789, 0
      %v1843 = vsel %vm722, %v1790, 0
      %1845 = vmatprep.subr.bf16.mxu0 0
      %1846 = vmatpush1.bf16.msra.mxu0 %v1795
      %1847 = vmatprep.subr.bf16.mxu0 0
      %1848 = vmatpush1.bf16.msra.mxu0 0
      %1849 = vmatprep.subr.bf16.mxu0 0
      %1850 = vmatpush1.bf16.msra.mxu0 0
      %1851 = vmatprep.subr.bf16.mxu0 0
      %1852 = vmatpush1.bf16.msra.mxu0 0
      %1853 = vmatprep.subr.bf16.mxu0 0
      %1854 = vmatpush1.bf16.msra.mxu0 0
      %1855 = vmatprep.subr.bf16.mxu0 0
      %1856 = vmatpush1.bf16.msra.mxu0 0
      %1857 = vmatprep.subr.bf16.mxu0 0
      %1858 = vmatpush1.bf16.msra.mxu0 0
      %1859 = vmatprep.subr.bf16.mxu0 0
      %1860 = vmatpush1.bf16.msra.mxu0 0
      %1861 = vmatprep.subr.bf16.mxu0 0
      %1862 = vmatpush1.bf16.msra.mxu0 0
      %1863 = vmatprep.subr.bf16.mxu0 0
      %1864 = vmatpush1.bf16.msra.mxu0 0
      %1865 = vmatprep.subr.bf16.mxu0 0
      %1866 = vmatpush1.bf16.msra.mxu0 0
      %1867 = vmatprep.subr.bf16.mxu0 0
      %1868 = vmatpush1.bf16.msra.mxu0 0
      %1869 = vmatprep.subr.bf16.mxu0 0
      %1870 = vmatpush1.bf16.msra.mxu0 0
      %1871 = vmatprep.subr.bf16.mxu0 0
      %1872 = vmatpush1.bf16.msra.mxu0 0
      %1873 = vmatprep.subr.bf16.mxu0 0
      %1874 = vmatpush1.bf16.msra.mxu0 0
      %1875 = vmatprep.subr.bf16.mxu0 0
      %1876 = vmatpush1.bf16.msra.mxu0 0
      %1877 = vmatprep.mubr.bf16.mxu0 0
      %1878 = vmatmul.mubr.bf16.gmra.mrb[0].mxu0 %v1798
      %v1879 = vpop.f32.mrb[0].mxu0
      %v1880 = vadd.f32 0.0, %v1879
      %v1881 = vpop.f32.mrb[0].mxu0
      %v1882 = vpop.f32.mrb[0].mxu0
      %v1883 = vadd.f32 0.0, %v1882
      %v1884 = vpop.f32.mrb[0].mxu0
      %1885 = vmatprep.mubr.bf16.mxu0 0
      %1886 = vmatmul.mubr.bf16.gmra.mrb[0].mxu0 %v1801
      %v1887 = vpop.f32.mrb[0].mxu0
      %v1888 = vadd.f32 0.0, %v1887
      %v1889 = vpop.f32.mrb[0].mxu0
      %v1890 = vpop.f32.mrb[0].mxu0
      %v1891 = vadd.f32 0.0, %v1890
      %v1892 = vpop.f32.mrb[0].mxu0
      %1893 = vmatprep.mubr.bf16.mxu0 0
      %1894 = vmatmul.mubr.bf16.gmra.mrb[0].mxu0 %v1804
      %v1895 = vpop.f32.mrb[0].mxu0
      %v1896 = vadd.f32 0.0, %v1895
      %v1897 = vpop.f32.mrb[0].mxu0
      %v1898 = vpop.f32.mrb[0].mxu0
      %v1899 = vadd.f32 0.0, %v1898
      %v1900 = vpop.f32.mrb[0].mxu0
      %1901 = vmatprep.mubr.bf16.mxu0 0
      %1902 = vmatmul.mubr.bf16.gmra.mrb[0].mxu0 %v1807
      %v1903 = vpop.f32.mrb[0].mxu0
      %v1904 = vadd.f32 0.0, %v1903
      %v1905 = vpop.f32.mrb[0].mxu0
      %v1906 = vpop.f32.mrb[0].mxu0
      %v1907 = vadd.f32 0.0, %v1906
      %v1908 = vpop.f32.mrb[0].mxu0
      %1909 = vmatprep.mubr.bf16.mxu0 0
      %1910 = vmatmul.mubr.bf16.gmra.mrb[0].mxu0 %v1810
      %v1911 = vpop.f32.mrb[0].mxu0
      %v1912 = vadd.f32 0.0, %v1911
      %v1913 = vpop.f32.mrb[0].mxu0
      %v1914 = vpop.f32.mrb[0].mxu0
      %v1915 = vadd.f32 0.0, %v1914
      %v1916 = vpop.f32.mrb[0].mxu0
      %1917 = vmatprep.mubr.bf16.mxu0 0
      %1918 = vmatmul.mubr.bf16.gmra.mrb[0].mxu0 %v1813
      %v1919 = vpop.f32.mrb[0].mxu0
      %v1920 = vadd.f32 0.0, %v1919
      %v1921 = vpop.f32.mrb[0].mxu0
      %v1922 = vpop.f32.mrb[0].mxu0
      %v1923 = vadd.f32 0.0, %v1922
      %v1924 = vpop.f32.mrb[0].mxu0
      %1925 = vmatprep.mubr.bf16.mxu0 0
      %1926 = vmatmul.mubr.bf16.gmra.mrb[0].mxu0 %v1816
      %v1927 = vpop.f32.mrb[0].mxu0
      %v1928 = vadd.f32 0.0, %v1927
      %v1929 = vpop.f32.mrb[0].mxu0
      %v1930 = vpop.f32.mrb[0].mxu0
      %v1931 = vadd.f32 0.0, %v1930
      %v1932 = vpop.f32.mrb[0].mxu0
      %1933 = vmatprep.mubr.bf16.mxu0 0
      %1934 = vmatmul.mubr.bf16.gmra.mrb[0].mxu0 %v1819
      %v1935 = vpop.f32.mrb[0].mxu0
      %v1936 = vadd.f32 0.0, %v1935
      %v1937 = vpop.f32.mrb[0].mxu0
      %v1938 = vpop.f32.mrb[0].mxu0
      %v1939 = vadd.f32 0.0, %v1938
      %v1940 = vpop.f32.mrb[0].mxu0
      %1941 = vmatprep.mubr.bf16.mxu0 0
      %1942 = vmatmul.mubr.bf16.gmra.mrb[0].mxu0 %v1822
      %v1943 = vpop.f32.mrb[0].mxu0
      %v1944 = vadd.f32 0.0, %v1943
      %v1945 = vpop.f32.mrb[0].mxu0
      %v1946 = vpop.f32.mrb[0].mxu0
      %v1947 = vadd.f32 0.0, %v1946
      %v1948 = vpop.f32.mrb[0].mxu0
      %1949 = vmatprep.mubr.bf16.mxu0 0
      %1950 = vmatmul.mubr.bf16.gmra.mrb[0].mxu0 %v1825
      %v1951 = vpop.f32.mrb[0].mxu0
      %v1952 = vadd.f32 0.0, %v1951
      %v1953 = vpop.f32.mrb[0].mxu0
      %v1954 = vpop.f32.mrb[0].mxu0
      %v1955 = vadd.f32 0.0, %v1954
      %v1956 = vpop.f32.mrb[0].mxu0
      %1957 = vmatprep.mubr.bf16.mxu0 0
      %1958 = vmatmul.mubr.bf16.gmra.mrb[0].mxu0 %v1828
      %v1959 = vpop.f32.mrb[0].mxu0
      %v1960 = vadd.f32 0.0, %v1959
      %v1961 = vpop.f32.mrb[0].mxu0
      %v1962 = vpop.f32.mrb[0].mxu0
      %v1963 = vadd.f32 0.0, %v1962
      %v1964 = vpop.f32.mrb[0].mxu0
      %1965 = vmatprep.mubr.bf16.mxu0 0
      %1966 = vmatmul.mubr.bf16.gmra.mrb[0].mxu0 %v1831
      %v1967 = vpop.f32.mrb[0].mxu0
      %v1968 = vadd.f32 0.0, %v1967
      %v1969 = vpop.f32.mrb[0].mxu0
      %v1970 = vpop.f32.mrb[0].mxu0
      %v1971 = vadd.f32 0.0, %v1970
      %v1972 = vpop.f32.mrb[0].mxu0
      %1973 = vmatprep.mubr.bf16.mxu0 0
      %1974 = vmatmul.mubr.bf16.gmra.mrb[0].mxu0 %v1834
      %v1975 = vpop.f32.mrb[0].mxu0
      %v1976 = vadd.f32 0.0, %v1975
      %v1977 = vpop.f32.mrb[0].mxu0
      %v1978 = vpop.f32.mrb[0].mxu0
      %v1979 = vadd.f32 0.0, %v1978
      %v1980 = vpop.f32.mrb[0].mxu0
      %1981 = vmatprep.mubr.bf16.mxu0 0
      %1982 = vmatmul.mubr.bf16.gmra.mrb[0].mxu0 %v1837
      %v1983 = vpop.f32.mrb[0].mxu0
      %v1984 = vadd.f32 0.0, %v1983
      %v1985 = vpop.f32.mrb[0].mxu0
      %v1986 = vpop.f32.mrb[0].mxu0
      %v1987 = vadd.f32 0.0, %v1986
      %v1988 = vpop.f32.mrb[0].mxu0
      %1989 = vmatprep.mubr.bf16.mxu0 0
      %1990 = vmatmul.mubr.bf16.gmra.mrb[0].mxu0 %v1840
      %v1991 = vpop.f32.mrb[0].mxu0
      %v1992 = vadd.f32 0.0, %v1991
      %v1993 = vpop.f32.mrb[0].mxu0
      %v1994 = vpop.f32.mrb[0].mxu0
      %v1995 = vadd.f32 0.0, %v1994
      %v1996 = vpop.f32.mrb[0].mxu0
      %1997 = vmatprep.mubr.bf16.mxu0 0
      %1998 = vmatmul.mubr.bf16.gmra.mrb[0].mxu0 %v1843
      %v1999 = vpop.f32.mrb[0].mxu0
      %v2000 = vadd.f32 0.0, %v1999
      %v2001 = vpop.f32.mrb[0].mxu0
      %v2002 = vpop.f32.mrb[0].mxu0
      %v2003 = vadd.f32 0.0, %v2002
      %v2004 = vpop.f32.mrb[0].mxu0
      %2005 = vdwg.mxu0
      %v2006 = vadd.f32 %v1624, %v1880
      %v2007 = vadd.f32 %v1625, %v1883
      %v2008 = vadd.f32 %v1626, %v1888
      %v2009 = vadd.f32 %v1627, %v1891
      %v2010 = vadd.f32 %v1628, %v1896
      %v2011 = vadd.f32 %v1629, %v1899
      %v2012 = vadd.f32 %v1630, %v1904
      %v2013 = vadd.f32 %v1631, %v1907
      %v2014 = vadd.f32 %v1632, %v1912
      %v2015 = vadd.f32 %v1633, %v1915
      %v2016 = vadd.f32 %v1634, %v1920
      %v2017 = vadd.f32 %v1635, %v1923
      %v2018 = vadd.f32 %v1636, %v1928
      %v2019 = vadd.f32 %v1637, %v1931
      %v2020 = vadd.f32 %v1638, %v1936
      %v2021 = vadd.f32 %v1639, %v1939
      %v2022 = vadd.f32 %v1640, %v1944
      %v2023 = vadd.f32 %v1641, %v1947
      %v2024 = vadd.f32 %v1642, %v1952
      %v2025 = vadd.f32 %v1643, %v1955
      %v2026 = vadd.f32 %v1644, %v1960
      %v2027 = vadd.f32 %v1645, %v1963
      %v2028 = vadd.f32 %v1646, %v1968
      %v2029 = vadd.f32 %v1647, %v1971
      %v2030 = vadd.f32 %v1648, %v1976
      %v2031 = vadd.f32 %v1649, %v1979
      %v2032 = vadd.f32 %v1650, %v1984
      %v2033 = vadd.f32 %v1651, %v1987
      %v2034 = vadd.f32 %v1652, %v1992
      %v2035 = vadd.f32 %v1653, %v1995
      %v2036 = vadd.f32 %v1654, %v2000
      %v2037 = vadd.f32 %v1655, %v2003
      %v2039 = vshrl.u32 %v1660, 16
      %v2041 = vrot.slane %v2039, 4
      %v2042 = vshll.u32 %v1660, 16
      %v2044 = vrot.slane %v2042, 5
      %v2045 = vor.u32 %v2041, %v2044
      %v2046 = vrot.slane %v2045, 4
      %v2048 = vshll.u32 %v1661, 16
      %v2050 = vrot.slane %v2048, 5
      %v2051 = vsel %vm280, %v2046, %v2050
      %v2052 = vshrl.u32 %v1661, 16
      %v2054 = vrot.slane %v2052, 4
      %v2055 = vor.u32 %v2054, %v2050
      %v2056 = vrot.slane %v2055, 4
      %v2058 = vshll.u32 %v1662, 16
      %v2060 = vrot.slane %v2058, 5
      %v2061 = vsel %vm280, %v2056, %v2060
      %v2063 = vshrl.u32 %v1663, 16
      %v2065 = vrot.slane %v2063, 4
      %v2066 = vshll.u32 %v1663, 16
      %v2068 = vrot.slane %v2066, 5
      %v2069 = vor.u32 %v2065, %v2068
      %v2070 = vrot.slane %v2069, 4
      %v2072 = vshll.u32 %v1664, 16
      %v2074 = vrot.slane %v2072, 5
      %v2075 = vsel %vm280, %v2070, %v2074
      %v2076 = vshrl.u32 %v1664, 16
      %v2078 = vrot.slane %v2076, 4
      %v2079 = vor.u32 %v2078, %v2074
      %v2080 = vrot.slane %v2079, 4
      %v2082 = vshll.u32 %v1665, 16
      %v2084 = vrot.slane %v2082, 5
      %v2085 = vsel %vm280, %v2080, %v2084
      %v2087 = vshrl.u32 %v1666, 16
      %v2089 = vrot.slane %v2087, 4
      %v2090 = vshll.u32 %v1666, 16
      %v2092 = vrot.slane %v2090, 5
      %v2093 = vor.u32 %v2089, %v2092
      %v2094 = vrot.slane %v2093, 4
      %v2096 = vshll.u32 %v1667, 16
      %v2098 = vrot.slane %v2096, 5
      %v2099 = vsel %vm280, %v2094, %v2098
      %v2100 = vshrl.u32 %v1667, 16
      %v2102 = vrot.slane %v2100, 4
      %v2103 = vor.u32 %v2102, %v2098
      %v2104 = vrot.slane %v2103, 4
      %v2106 = vshll.u32 %v1668, 16
      %v2108 = vrot.slane %v2106, 5
      %v2109 = vsel %vm280, %v2104, %v2108
      %v2111 = vshrl.u32 %v1669, 16
      %v2113 = vrot.slane %v2111, 4
      %v2114 = vshll.u32 %v1669, 16
      %v2116 = vrot.slane %v2114, 5
      %v2117 = vor.u32 %v2113, %v2116
      %v2118 = vrot.slane %v2117, 4
      %v2120 = vshll.u32 %v1670, 16
      %v2122 = vrot.slane %v2120, 5
      %v2123 = vsel %vm280, %v2118, %v2122
      %v2124 = vshrl.u32 %v1670, 16
      %v2126 = vrot.slane %v2124, 4
      %v2127 = vor.u32 %v2126, %v2122
      %v2128 = vrot.slane %v2127, 4
      %v2130 = vshll.u32 %v1671, 16
      %v2132 = vrot.slane %v2130, 5
      %v2133 = vsel %vm280, %v2128, %v2132
      %v2135 = vshrl.u32 %v1672, 16
      %v2137 = vrot.slane %v2135, 4
      %v2138 = vshll.u32 %v1672, 16
      %v2140 = vrot.slane %v2138, 5
      %v2141 = vor.u32 %v2137, %v2140
      %v2142 = vrot.slane %v2141, 4
      %v2144 = vshll.u32 %v1673, 16
      %v2146 = vrot.slane %v2144, 5
      %v2147 = vsel %vm280, %v2142, %v2146
      %v2148 = vshrl.u32 %v1673, 16
      %v2150 = vrot.slane %v2148, 4
      %v2151 = vor.u32 %v2150, %v2146
      %v2152 = vrot.slane %v2151, 4
      %v2154 = vshll.u32 %v1674, 16
      %v2156 = vrot.slane %v2154, 5
      %v2157 = vsel %vm280, %v2152, %v2156
      %v2159 = vshrl.u32 %v1675, 16
      %v2161 = vrot.slane %v2159, 4
      %v2162 = vshll.u32 %v1675, 16
      %v2164 = vrot.slane %v2162, 5
      %v2165 = vor.u32 %v2161, %v2164
      %v2166 = vrot.slane %v2165, 4
      %v2168 = vshll.u32 %v1676, 16
      %v2170 = vrot.slane %v2168, 5
      %v2171 = vsel %vm280, %v2166, %v2170
      %v2172 = vshrl.u32 %v1676, 16
      %v2174 = vrot.slane %v2172, 4
      %v2175 = vor.u32 %v2174, %v2170
      %v2176 = vrot.slane %v2175, 4
      %v2178 = vshll.u32 %v1677, 16
      %v2180 = vrot.slane %v2178, 5
      %v2181 = vsel %vm280, %v2176, %v2180
      %v2183 = vshrl.u32 %v1678, 16
      %v2185 = vrot.slane %v2183, 4
      %v2186 = vshll.u32 %v1678, 16
      %v2188 = vrot.slane %v2186, 5
      %v2189 = vor.u32 %v2185, %v2188
      %v2190 = vrot.slane %v2189, 4
      %v2192 = vshll.u32 %v1679, 16
      %v2194 = vrot.slane %v2192, 5
      %v2195 = vsel %vm280, %v2190, %v2194
      %v2196 = vshrl.u32 %v1679, 16
      %v2198 = vrot.slane %v2196, 4
      %v2199 = vor.u32 %v2198, %v2194
      %v2200 = vrot.slane %v2199, 4
      %v2202 = vshll.u32 %v1680, 16
      %v2204 = vrot.slane %v2202, 5
      %v2205 = vsel %vm280, %v2200, %v2204
      %v2207 = vshrl.u32 %v1681, 16
      %v2209 = vrot.slane %v2207, 4
      %v2210 = vshll.u32 %v1681, 16
      %v2212 = vrot.slane %v2210, 5
      %v2213 = vor.u32 %v2209, %v2212
      %v2214 = vrot.slane %v2213, 4
      %v2216 = vshll.u32 %v1682, 16
      %v2218 = vrot.slane %v2216, 5
      %v2219 = vsel %vm280, %v2214, %v2218
      %v2220 = vshrl.u32 %v1682, 16
      %v2222 = vrot.slane %v2220, 4
      %v2223 = vor.u32 %v2222, %v2218
      %v2224 = vrot.slane %v2223, 4
      %v2226 = vshll.u32 %v1683, 16
      %v2228 = vrot.slane %v2226, 5
      %v2229 = vsel %vm280, %v2224, %v2228
      %v2231 = vshrl.u32 %v1684, 16
      %v2233 = vrot.slane %v2231, 4
      %v2234 = vshll.u32 %v1684, 16
      %v2236 = vrot.slane %v2234, 5
      %v2237 = vor.u32 %v2233, %v2236
      %v2238 = vrot.slane %v2237, 4
      %v2240 = vshll.u32 %v1685, 16
      %v2242 = vrot.slane %v2240, 5
      %v2243 = vsel %vm280, %v2238, %v2242
      %v2244 = vshrl.u32 %v1685, 16
      %v2246 = vrot.slane %v2244, 4
      %v2247 = vor.u32 %v2246, %v2242
      %v2248 = vrot.slane %v2247, 4
      %v2250 = vshll.u32 %v1686, 16
      %v2252 = vrot.slane %v2250, 5
      %v2253 = vsel %vm280, %v2248, %v2252
      %v2255 = vshrl.u32 %v1687, 16
      %v2257 = vrot.slane %v2255, 4
      %v2258 = vshll.u32 %v1687, 16
      %v2260 = vrot.slane %v2258, 5
      %v2261 = vor.u32 %v2257, %v2260
      %v2262 = vrot.slane %v2261, 4
      %v2264 = vshll.u32 %v1688, 16
      %v2266 = vrot.slane %v2264, 5
      %v2267 = vsel %vm280, %v2262, %v2266
      %v2268 = vshrl.u32 %v1688, 16
      %v2270 = vrot.slane %v2268, 4
      %v2271 = vor.u32 %v2270, %v2266
      %v2272 = vrot.slane %v2271, 4
      %v2274 = vshll.u32 %v1689, 16
      %v2276 = vrot.slane %v2274, 5
      %v2277 = vsel %vm280, %v2272, %v2276
      %v2279 = vshrl.u32 %v1690, 16
      %v2281 = vrot.slane %v2279, 4
      %v2282 = vshll.u32 %v1690, 16
      %v2284 = vrot.slane %v2282, 5
      %v2285 = vor.u32 %v2281, %v2284
      %v2286 = vrot.slane %v2285, 4
      %v2288 = vshll.u32 %v1691, 16
      %v2290 = vrot.slane %v2288, 5
      %v2291 = vsel %vm280, %v2286, %v2290
      %v2292 = vshrl.u32 %v1691, 16
      %v2294 = vrot.slane %v2292, 4
      %v2295 = vor.u32 %v2294, %v2290
      %v2296 = vrot.slane %v2295, 4
      %v2298 = vshll.u32 %v1692, 16
      %v2300 = vrot.slane %v2298, 5
      %v2301 = vsel %vm280, %v2296, %v2300
      %v2303 = vshrl.u32 %v1693, 16
      %v2305 = vrot.slane %v2303, 4
      %v2306 = vshll.u32 %v1693, 16
      %v2308 = vrot.slane %v2306, 5
      %v2309 = vor.u32 %v2305, %v2308
      %v2310 = vrot.slane %v2309, 4
      %v2312 = vshll.u32 %v1694, 16
      %v2314 = vrot.slane %v2312, 5
      %v2315 = vsel %vm280, %v2310, %v2314
      %v2316 = vshrl.u32 %v1694, 16
      %v2318 = vrot.slane %v2316, 4
      %v2319 = vor.u32 %v2318, %v2314
      %v2320 = vrot.slane %v2319, 4
      %v2322 = vshll.u32 %v1695, 16
      %v2324 = vrot.slane %v2322, 5
      %v2325 = vsel %vm280, %v2320, %v2324
      %v2327 = vshrl.u32 %v1696, 16
      %v2329 = vrot.slane %v2327, 4
      %v2330 = vshll.u32 %v1696, 16
      %v2332 = vrot.slane %v2330, 5
      %v2333 = vor.u32 %v2329, %v2332
      %v2334 = vrot.slane %v2333, 4
      %v2336 = vshll.u32 %v1697, 16
      %v2338 = vrot.slane %v2336, 5
      %v2339 = vsel %vm280, %v2334, %v2338
      %v2340 = vshrl.u32 %v1697, 16
      %v2342 = vrot.slane %v2340, 4
      %v2343 = vor.u32 %v2342, %v2338
      %v2344 = vrot.slane %v2343, 4
      %v2346 = vshll.u32 %v1698, 16
      %v2348 = vrot.slane %v2346, 5
      %v2349 = vsel %vm280, %v2344, %v2348
      %v2351 = vshrl.u32 %v1699, 16
      %v2353 = vrot.slane %v2351, 4
      %v2354 = vshll.u32 %v1699, 16
      %v2356 = vrot.slane %v2354, 5
      %v2357 = vor.u32 %v2353, %v2356
      %v2358 = vrot.slane %v2357, 4
      %v2360 = vshll.u32 %v1700, 16
      %v2362 = vrot.slane %v2360, 5
      %v2363 = vsel %vm280, %v2358, %v2362
      %v2364 = vshrl.u32 %v1700, 16
      %v2366 = vrot.slane %v2364, 4
      %v2367 = vor.u32 %v2366, %v2362
      %v2368 = vrot.slane %v2367, 4
      %v2370 = vshll.u32 %v1701, 16
      %v2372 = vrot.slane %v2370, 5
      %v2373 = vsel %vm280, %v2368, %v2372
      %v2375 = vshrl.u32 %v1702, 16
      %v2377 = vrot.slane %v2375, 4
      %v2378 = vshll.u32 %v1702, 16
      %v2380 = vrot.slane %v2378, 5
      %v2381 = vor.u32 %v2377, %v2380
      %v2382 = vrot.slane %v2381, 4
      %v2384 = vshll.u32 %v1703, 16
      %v2386 = vrot.slane %v2384, 5
      %v2387 = vsel %vm280, %v2382, %v2386
      %v2388 = vshrl.u32 %v1703, 16
      %v2390 = vrot.slane %v2388, 4
      %v2391 = vor.u32 %v2390, %v2386
      %v2392 = vrot.slane %v2391, 4
      %v2394 = vshll.u32 %v1704, 16
      %v2396 = vrot.slane %v2394, 5
      %v2397 = vsel %vm280, %v2392, %v2396
      %v2399 = vshrl.u32 %v1705, 16
      %v2401 = vrot.slane %v2399, 4
      %v2402 = vshll.u32 %v1705, 16
      %v2404 = vrot.slane %v2402, 5
      %v2405 = vor.u32 %v2401, %v2404
      %v2406 = vrot.slane %v2405, 4
      %v2408 = vshll.u32 %v1706, 16
      %v2410 = vrot.slane %v2408, 5
      %v2411 = vsel %vm280, %v2406, %v2410
      %v2412 = vshrl.u32 %v1706, 16
      %v2414 = vrot.slane %v2412, 4
      %v2415 = vor.u32 %v2414, %v2410
      %v2416 = vrot.slane %v2415, 4
      %v2418 = vshll.u32 %v1707, 16
      %v2420 = vrot.slane %v2418, 5
      %v2421 = vsel %vm280, %v2416, %v2420
      %s2422 = scalar_lea.vmem %s1, 32
      %v2423 = vld [vmem:[%s2422] sm:$0xf]
      %v2424 = vld [vmem:[%s2422 + $0x4] sm:$0xf]
      %v2425 = vunpack.c.l.b16 %v2051
      %v2426 = vunpack.c.l.b16 %v2061
      %v2427 = vunpack.c.l.b16 %v2075
      %v2428 = vunpack.c.l.b16 %v2085
      %v2429 = vunpack.c.l.b16 %v2099
      %v2430 = vunpack.c.l.b16 %v2109
      %v2431 = vunpack.c.l.b16 %v2123
      %v2432 = vunpack.c.l.b16 %v2133
      %v2433 = vunpack.c.l.b16 %v2147
      %v2434 = vunpack.c.l.b16 %v2157
      %v2435 = vunpack.c.l.b16 %v2171
      %v2436 = vunpack.c.l.b16 %v2181
      %v2437 = vunpack.c.l.b16 %v2195
      %v2438 = vunpack.c.l.b16 %v2205
      %v2439 = vunpack.c.l.b16 %v2219
      %v2440 = vunpack.c.l.b16 %v2229
      %v2441 = vunpack.c.l.b16 %v2243
      %v2442 = vunpack.c.l.b16 %v2253
      %v2443 = vunpack.c.l.b16 %v2267
      %v2444 = vunpack.c.l.b16 %v2277
      %v2445 = vunpack.c.l.b16 %v2291
      %v2446 = vunpack.c.l.b16 %v2301
      %v2447 = vunpack.c.l.b16 %v2315
      %v2448 = vunpack.c.l.b16 %v2325
      %v2449 = vunpack.c.l.b16 %v2339
      %v2450 = vunpack.c.l.b16 %v2349
      %v2451 = vunpack.c.l.b16 %v2363
      %v2452 = vunpack.c.l.b16 %v2373
      %v2453 = vunpack.c.l.b16 %v2387
      %v2454 = vunpack.c.l.b16 %v2397
      %v2455 = vunpack.c.l.b16 %v2411
      %v2456 = vunpack.c.l.b16 %v2421
      %v2457 = vpack.c.b16 %v2426, %v2425
      %v2458 = vpack.c.b16 %v2428, %v2427
      %v2459 = vpack.c.b16 %v2430, %v2429
      %v2460 = vpack.c.b16 %v2432, %v2431
      %v2461 = vpack.c.b16 %v2434, %v2433
      %v2462 = vpack.c.b16 %v2436, %v2435
      %v2463 = vpack.c.b16 %v2438, %v2437
      %v2464 = vpack.c.b16 %v2440, %v2439
      %v2465 = vpack.c.b16 %v2442, %v2441
      %v2466 = vpack.c.b16 %v2444, %v2443
      %v2467 = vpack.c.b16 %v2446, %v2445
      %v2468 = vpack.c.b16 %v2448, %v2447
      %v2469 = vpack.c.b16 %v2450, %v2449
      %v2470 = vpack.c.b16 %v2452, %v2451
      %v2471 = vpack.c.b16 %v2454, %v2453
      %v2472 = vpack.c.b16 %v2456, %v2455
      %v2475 = vunpack.c.l.b16 %v2423
      %v2476 = vunpack.c.l.b16 %v2424
      %v2477 = vpack.c.b16 %v2476, %v2475
      %v2480 = vsel %vm722, %v2457, 0
      %v2483 = vsel %vm722, %v2458, 0
      %v2486 = vsel %vm722, %v2459, 0
      %v2489 = vsel %vm722, %v2460, 0
      %v2492 = vsel %vm722, %v2461, 0
      %v2495 = vsel %vm722, %v2462, 0
      %v2498 = vsel %vm722, %v2463, 0
      %v2501 = vsel %vm722, %v2464, 0
      %v2504 = vsel %vm722, %v2465, 0
      %v2507 = vsel %vm722, %v2466, 0
      %v2510 = vsel %vm722, %v2467, 0
      %v2513 = vsel %vm722, %v2468, 0
      %v2516 = vsel %vm722, %v2469, 0
      %v2519 = vsel %vm722, %v2470, 0
      %v2522 = vsel %vm722, %v2471, 0
      %v2525 = vsel %vm722, %v2472, 0
      %2527 = vmatprep.subr.bf16.mxu0 0
      %2528 = vmatpush1.bf16.msra.mxu0 %v2477
      %2529 = vmatprep.subr.bf16.mxu0 0
      %2530 = vmatpush1.bf16.msra.mxu0 0
      %2531 = vmatprep.subr.bf16.mxu0 0
      %2532 = vmatpush1.bf16.msra.mxu0 0
      %2533 = vmatprep.subr.bf16.mxu0 0
      %2534 = vmatpush1.bf16.msra.mxu0 0
      %2535 = vmatprep.subr.bf16.mxu0 0
      %2536 = vmatpush1.bf16.msra.mxu0 0
      %2537 = vmatprep.subr.bf16.mxu0 0
      %2538 = vmatpush1.bf16.msra.mxu0 0
      %2539 = vmatprep.subr.bf16.mxu0 0
      %2540 = vmatpush1.bf16.msra.mxu0 0
      %2541 = vmatprep.subr.bf16.mxu0 0
      %2542 = vmatpush1.bf16.msra.mxu0 0
      %2543 = vmatprep.subr.bf16.mxu0 0
      %2544 = vmatpush1.bf16.msra.mxu0 0
      %2545 = vmatprep.subr.bf16.mxu0 0
      %2546 = vmatpush1.bf16.msra.mxu0 0
      %2547 = vmatprep.subr.bf16.mxu0 0
      %2548 = vmatpush1.bf16.msra.mxu0 0
      %2549 = vmatprep.subr.bf16.mxu0 0
      %2550 = vmatpush1.bf16.msra.mxu0 0
      %2551 = vmatprep.subr.bf16.mxu0 0
      %2552 = vmatpush1.bf16.msra.mxu0 0
      %2553 = vmatprep.subr.bf16.mxu0 0
      %2554 = vmatpush1.bf16.msra.mxu0 0
      %2555 = vmatprep.subr.bf16.mxu0 0
      %2556 = vmatpush1.bf16.msra.mxu0 0
      %2557 = vmatprep.subr.bf16.mxu0 0
      %2558 = vmatpush1.bf16.msra.mxu0 0
      %2559 = vmatprep.mubr.bf16.mxu0 0
      %2560 = vmatmul.mubr.bf16.gmra.mrb[0].mxu0 %v2480
      %v2561 = vpop.f32.mrb[0].mxu0
      %v2562 = vadd.f32 0.0, %v2561
      %v2563 = vpop.f32.mrb[0].mxu0
      %v2564 = vpop.f32.mrb[0].mxu0
      %v2565 = vadd.f32 0.0, %v2564
      %v2566 = vpop.f32.mrb[0].mxu0
      %2567 = vmatprep.mubr.bf16.mxu0 0
      %2568 = vmatmul.mubr.bf16.gmra.mrb[0].mxu0 %v2483
      %v2569 = vpop.f32.mrb[0].mxu0
      %v2570 = vadd.f32 0.0, %v2569
      %v2571 = vpop.f32.mrb[0].mxu0
      %v2572 = vpop.f32.mrb[0].mxu0
      %v2573 = vadd.f32 0.0, %v2572
      %v2574 = vpop.f32.mrb[0].mxu0
      %2575 = vmatprep.mubr.bf16.mxu0 0
      %2576 = vmatmul.mubr.bf16.gmra.mrb[0].mxu0 %v2486
      %v2577 = vpop.f32.mrb[0].mxu0
      %v2578 = vadd.f32 0.0, %v2577
      %v2579 = vpop.f32.mrb[0].mxu0
      %v2580 = vpop.f32.mrb[0].mxu0
      %v2581 = vadd.f32 0.0, %v2580
      %v2582 = vpop.f32.mrb[0].mxu0
      %2583 = vmatprep.mubr.bf16.mxu0 0
      %2584 = vmatmul.mubr.bf16.gmra.mrb[0].mxu0 %v2489
      %v2585 = vpop.f32.mrb[0].mxu0
      %v2586 = vadd.f32 0.0, %v2585
      %v2587 = vpop.f32.mrb[0].mxu0
      %v2588 = vpop.f32.mrb[0].mxu0
      %v2589 = vadd.f32 0.0, %v2588
      %v2590 = vpop.f32.mrb[0].mxu0
      %2591 = vmatprep.mubr.bf16.mxu0 0
      %2592 = vmatmul.mubr.bf16.gmra.mrb[0].mxu0 %v2492
      %v2593 = vpop.f32.mrb[0].mxu0
      %v2594 = vadd.f32 0.0, %v2593
      %v2595 = vpop.f32.mrb[0].mxu0
      %v2596 = vpop.f32.mrb[0].mxu0
      %v2597 = vadd.f32 0.0, %v2596
      %v2598 = vpop.f32.mrb[0].mxu0
      %2599 = vmatprep.mubr.bf16.mxu0 0
      %2600 = vmatmul.mubr.bf16.gmra.mrb[0].mxu0 %v2495
      %v2601 = vpop.f32.mrb[0].mxu0
      %v2602 = vadd.f32 0.0, %v2601
      %v2603 = vpop.f32.mrb[0].mxu0
      %v2604 = vpop.f32.mrb[0].mxu0
      %v2605 = vadd.f32 0.0, %v2604
      %v2606 = vpop.f32.mrb[0].mxu0
      %2607 = vmatprep.mubr.bf16.mxu0 0
      %2608 = vmatmul.mubr.bf16.gmra.mrb[0].mxu0 %v2498
      %v2609 = vpop.f32.mrb[0].mxu0
      %v2610 = vadd.f32 0.0, %v2609
      %v2611 = vpop.f32.mrb[0].mxu0
      %v2612 = vpop.f32.mrb[0].mxu0
      %v2613 = vadd.f32 0.0, %v2612
      %v2614 = vpop.f32.mrb[0].mxu0
      %2615 = vmatprep.mubr.bf16.mxu0 0
      %2616 = vmatmul.mubr.bf16.gmra.mrb[0].mxu0 %v2501
      %v2617 = vpop.f32.mrb[0].mxu0
      %v2618 = vadd.f32 0.0, %v2617
      %v2619 = vpop.f32.mrb[0].mxu0
      %v2620 = vpop.f32.mrb[0].mxu0
      %v2621 = vadd.f32 0.0, %v2620
      %v2622 = vpop.f32.mrb[0].mxu0
      %2623 = vmatprep.mubr.bf16.mxu0 0
      %2624 = vmatmul.mubr.bf16.gmra.mrb[0].mxu0 %v2504
      %v2625 = vpop.f32.mrb[0].mxu0
      %v2626 = vadd.f32 0.0, %v2625
      %v2627 = vpop.f32.mrb[0].mxu0
      %v2628 = vpop.f32.mrb[0].mxu0
      %v2629 = vadd.f32 0.0, %v2628
      %v2630 = vpop.f32.mrb[0].mxu0
      %2631 = vmatprep.mubr.bf16.mxu0 0
      %2632 = vmatmul.mubr.bf16.gmra.mrb[0].mxu0 %v2507
      %v2633 = vpop.f32.mrb[0].mxu0
      %v2634 = vadd.f32 0.0, %v2633
      %v2635 = vpop.f32.mrb[0].mxu0
      %v2636 = vpop.f32.mrb[0].mxu0
      %v2637 = vadd.f32 0.0, %v2636
      %v2638 = vpop.f32.mrb[0].mxu0
      %2639 = vmatprep.mubr.bf16.mxu0 0
      %2640 = vmatmul.mubr.bf16.gmra.mrb[0].mxu0 %v2510
      %v2641 = vpop.f32.mrb[0].mxu0
      %v2642 = vadd.f32 0.0, %v2641
      %v2643 = vpop.f32.mrb[0].mxu0
      %v2644 = vpop.f32.mrb[0].mxu0
      %v2645 = vadd.f32 0.0, %v2644
      %v2646 = vpop.f32.mrb[0].mxu0
      %2647 = vmatprep.mubr.bf16.mxu0 0
      %2648 = vmatmul.mubr.bf16.gmra.mrb[0].mxu0 %v2513
      %v2649 = vpop.f32.mrb[0].mxu0
      %v2650 = vadd.f32 0.0, %v2649
      %v2651 = vpop.f32.mrb[0].mxu0
      %v2652 = vpop.f32.mrb[0].mxu0
      %v2653 = vadd.f32 0.0, %v2652
      %v2654 = vpop.f32.mrb[0].mxu0
      %2655 = vmatprep.mubr.bf16.mxu0 0
      %2656 = vmatmul.mubr.bf16.gmra.mrb[0].mxu0 %v2516
      %v2657 = vpop.f32.mrb[0].mxu0
      %v2658 = vadd.f32 0.0, %v2657
      %v2659 = vpop.f32.mrb[0].mxu0
      %v2660 = vpop.f32.mrb[0].mxu0
      %v2661 = vadd.f32 0.0, %v2660
      %v2662 = vpop.f32.mrb[0].mxu0
      %2663 = vmatprep.mubr.bf16.mxu0 0
      %2664 = vmatmul.mubr.bf16.gmra.mrb[0].mxu0 %v2519
      %v2665 = vpop.f32.mrb[0].mxu0
      %v2666 = vadd.f32 0.0, %v2665
      %v2667 = vpop.f32.mrb[0].mxu0
      %v2668 = vpop.f32.mrb[0].mxu0
      %v2669 = vadd.f32 0.0, %v2668
      %v2670 = vpop.f32.mrb[0].mxu0
      %2671 = vmatprep.mubr.bf16.mxu0 0
      %2672 = vmatmul.mubr.bf16.gmra.mrb[0].mxu0 %v2522
      %v2673 = vpop.f32.mrb[0].mxu0
      %v2674 = vadd.f32 0.0, %v2673
      %v2675 = vpop.f32.mrb[0].mxu0
      %v2676 = vpop.f32.mrb[0].mxu0
      %v2677 = vadd.f32 0.0, %v2676
      %v2678 = vpop.f32.mrb[0].mxu0
      %2679 = vmatprep.mubr.bf16.mxu0 0
      %2680 = vmatmul.mubr.bf16.gmra.mrb[0].mxu0 %v2525
      %v2681 = vpop.f32.mrb[0].mxu0
      %v2682 = vadd.f32 0.0, %v2681
      %v2683 = vpop.f32.mrb[0].mxu0
      %v2684 = vpop.f32.mrb[0].mxu0
      %v2685 = vadd.f32 0.0, %v2684
      %v2686 = vpop.f32.mrb[0].mxu0
      %2687 = vdwg.mxu0
      %v2688 = vadd.f32 %v2006, %v2562
      %v2689 = vadd.f32 %v2007, %v2565
      %v2690 = vadd.f32 %v2008, %v2570
      %v2691 = vadd.f32 %v2009, %v2573
      %v2692 = vadd.f32 %v2010, %v2578
      %v2693 = vadd.f32 %v2011, %v2581
      %v2694 = vadd.f32 %v2012, %v2586
      %v2695 = vadd.f32 %v2013, %v2589
      %v2696 = vadd.f32 %v2014, %v2594
      %v2697 = vadd.f32 %v2015, %v2597
      %v2698 = vadd.f32 %v2016, %v2602
      %v2699 = vadd.f32 %v2017, %v2605
      %v2700 = vadd.f32 %v2018, %v2610
      %v2701 = vadd.f32 %v2019, %v2613
      %v2702 = vadd.f32 %v2020, %v2618
      %v2703 = vadd.f32 %v2021, %v2621
      %v2704 = vadd.f32 %v2022, %v2626
      %v2705 = vadd.f32 %v2023, %v2629
      %v2706 = vadd.f32 %v2024, %v2634
      %v2707 = vadd.f32 %v2025, %v2637
      %v2708 = vadd.f32 %v2026, %v2642
      %v2709 = vadd.f32 %v2027, %v2645
      %v2710 = vadd.f32 %v2028, %v2650
      %v2711 = vadd.f32 %v2029, %v2653
      %v2712 = vadd.f32 %v2030, %v2658
      %v2713 = vadd.f32 %v2031, %v2661
      %v2714 = vadd.f32 %v2032, %v2666
      %v2715 = vadd.f32 %v2033, %v2669
      %v2716 = vadd.f32 %v2034, %v2674
      %v2717 = vadd.f32 %v2035, %v2677
      %v2718 = vadd.f32 %v2036, %v2682
      %v2719 = vadd.f32 %v2037, %v2685
      %v2736 = vrot.slane %v1660, 5
      %v2737 = vrot.slane %v2736, 4
      %v2738 = vrot.slane %v1661, 5
      %v2739 = vsel %vm1245, %v2737, %v2738
      %v2740 = vrot.slane %v2738, 4
      %v2741 = vrot.slane %v1662, 5
      %v2742 = vsel %vm1245, %v2740, %v2741
      %v2743 = vrot.slane %v1663, 5
      %v2744 = vrot.slane %v2743, 4
      %v2745 = vrot.slane %v1664, 5
      %v2746 = vsel %vm1245, %v2744, %v2745
      %v2747 = vrot.slane %v2745, 4
      %v2748 = vrot.slane %v1665, 5
      %v2749 = vsel %vm1245, %v2747, %v2748
      %v2750 = vrot.slane %v1666, 5
      %v2751 = vrot.slane %v2750, 4
      %v2752 = vrot.slane %v1667, 5
      %v2753 = vsel %vm1245, %v2751, %v2752
      %v2754 = vrot.slane %v2752, 4
      %v2755 = vrot.slane %v1668, 5
      %v2756 = vsel %vm1245, %v2754, %v2755
      %v2757 = vrot.slane %v1669, 5
      %v2758 = vrot.slane %v2757, 4
      %v2759 = vrot.slane %v1670, 5
      %v2760 = vsel %vm1245, %v2758, %v2759
      %v2761 = vrot.slane %v2759, 4
      %v2762 = vrot.slane %v1671, 5
      %v2763 = vsel %vm1245, %v2761, %v2762
      %v2764 = vrot.slane %v1672, 5
      %v2765 = vrot.slane %v2764, 4
      %v2766 = vrot.slane %v1673, 5
      %v2767 = vsel %vm1245, %v2765, %v2766
      %v2768 = vrot.slane %v2766, 4
      %v2769 = vrot.slane %v1674, 5
      %v2770 = vsel %vm1245, %v2768, %v2769
      %v2771 = vrot.slane %v1675, 5
      %v2772 = vrot.slane %v2771, 4
      %v2773 = vrot.slane %v1676, 5
      %v2774 = vsel %vm1245, %v2772, %v2773
      %v2775 = vrot.slane %v2773, 4
      %v2776 = vrot.slane %v1677, 5
      %v2777 = vsel %vm1245, %v2775, %v2776
      %v2778 = vrot.slane %v1678, 5
      %v2779 = vrot.slane %v2778, 4
      %v2780 = vrot.slane %v1679, 5
      %v2781 = vsel %vm1245, %v2779, %v2780
      %v2782 = vrot.slane %v2780, 4
      %v2783 = vrot.slane %v1680, 5
      %v2784 = vsel %vm1245, %v2782, %v2783
      %v2785 = vrot.slane %v1681, 5
      %v2786 = vrot.slane %v2785, 4
      %v2787 = vrot.slane %v1682, 5
      %v2788 = vsel %vm1245, %v2786, %v2787
      %v2789 = vrot.slane %v2787, 4
      %v2790 = vrot.slane %v1683, 5
      %v2791 = vsel %vm1245, %v2789, %v2790
      %v2792 = vrot.slane %v1684, 5
      %v2793 = vrot.slane %v2792, 4
      %v2794 = vrot.slane %v1685, 5
      %v2795 = vsel %vm1245, %v2793, %v2794
      %v2796 = vrot.slane %v2794, 4
      %v2797 = vrot.slane %v1686, 5
      %v2798 = vsel %vm1245, %v2796, %v2797
      %v2799 = vrot.slane %v1687, 5
      %v2800 = vrot.slane %v2799, 4
      %v2801 = vrot.slane %v1688, 5
      %v2802 = vsel %vm1245, %v2800, %v2801
      %v2803 = vrot.slane %v2801, 4
      %v2804 = vrot.slane %v1689, 5
      %v2805 = vsel %vm1245, %v2803, %v2804
      %v2806 = vrot.slane %v1690, 5
      %v2807 = vrot.slane %v2806, 4
      %v2808 = vrot.slane %v1691, 5
      %v2809 = vsel %vm1245, %v2807, %v2808
      %v2810 = vrot.slane %v2808, 4
      %v2811 = vrot.slane %v1692, 5
      %v2812 = vsel %vm1245, %v2810, %v2811
      %v2813 = vrot.slane %v1693, 5
      %v2814 = vrot.slane %v2813, 4
      %v2815 = vrot.slane %v1694, 5
      %v2816 = vsel %vm1245, %v2814, %v2815
      %v2817 = vrot.slane %v2815, 4
      %v2818 = vrot.slane %v1695, 5
      %v2819 = vsel %vm1245, %v2817, %v2818
      %v2820 = vrot.slane %v1696, 5
      %v2821 = vrot.slane %v2820, 4
      %v2822 = vrot.slane %v1697, 5
      %v2823 = vsel %vm1245, %v2821, %v2822
      %v2824 = vrot.slane %v2822, 4
      %v2825 = vrot.slane %v1698, 5
      %v2826 = vsel %vm1245, %v2824, %v2825
      %v2827 = vrot.slane %v1699, 5
      %v2828 = vrot.slane %v2827, 4
      %v2829 = vrot.slane %v1700, 5
      %v2830 = vsel %vm1245, %v2828, %v2829
      %v2831 = vrot.slane %v2829, 4
      %v2832 = vrot.slane %v1701, 5
      %v2833 = vsel %vm1245, %v2831, %v2832
      %v2834 = vrot.slane %v1702, 5
      %v2835 = vrot.slane %v2834, 4
      %v2836 = vrot.slane %v1703, 5
      %v2837 = vsel %vm1245, %v2835, %v2836
      %v2838 = vrot.slane %v2836, 4
      %v2839 = vrot.slane %v1704, 5
      %v2840 = vsel %vm1245, %v2838, %v2839
      %v2841 = vrot.slane %v1705, 5
      %v2842 = vrot.slane %v2841, 4
      %v2843 = vrot.slane %v1706, 5
      %v2844 = vsel %vm1245, %v2842, %v2843
      %v2845 = vrot.slane %v2843, 4
      %v2846 = vrot.slane %v1707, 5
      %v2847 = vsel %vm1245, %v2845, %v2846
      %s2848 = scalar_lea.vmem %s1, 40
      %v2849 = vld [vmem:[%s2848] sm:$0xf]
      %v2850 = vld [vmem:[%s2848 + $0x4] sm:$0xf]
      %v2851 = vunpack.c.l.b16 %v2739
      %v2852 = vunpack.c.l.b16 %v2742
      %v2853 = vunpack.c.l.b16 %v2746
      %v2854 = vunpack.c.l.b16 %v2749
      %v2855 = vunpack.c.l.b16 %v2753
      %v2856 = vunpack.c.l.b16 %v2756
      %v2857 = vunpack.c.l.b16 %v2760
      %v2858 = vunpack.c.l.b16 %v2763
      %v2859 = vunpack.c.l.b16 %v2767
      %v2860 = vunpack.c.l.b16 %v2770
      %v2861 = vunpack.c.l.b16 %v2774
      %v2862 = vunpack.c.l.b16 %v2777
      %v2863 = vunpack.c.l.b16 %v2781
      %v2864 = vunpack.c.l.b16 %v2784
      %v2865 = vunpack.c.l.b16 %v2788
      %v2866 = vunpack.c.l.b16 %v2791
      %v2867 = vunpack.c.l.b16 %v2795
      %v2868 = vunpack.c.l.b16 %v2798
      %v2869 = vunpack.c.l.b16 %v2802
      %v2870 = vunpack.c.l.b16 %v2805
      %v2871 = vunpack.c.l.b16 %v2809
      %v2872 = vunpack.c.l.b16 %v2812
      %v2873 = vunpack.c.l.b16 %v2816
      %v2874 = vunpack.c.l.b16 %v2819
      %v2875 = vunpack.c.l.b16 %v2823
      %v2876 = vunpack.c.l.b16 %v2826
      %v2877 = vunpack.c.l.b16 %v2830
      %v2878 = vunpack.c.l.b16 %v2833
      %v2879 = vunpack.c.l.b16 %v2837
      %v2880 = vunpack.c.l.b16 %v2840
      %v2881 = vunpack.c.l.b16 %v2844
      %v2882 = vunpack.c.l.b16 %v2847
      %v2883 = vpack.c.b16 %v2852, %v2851
      %v2884 = vpack.c.b16 %v2854, %v2853
      %v2885 = vpack.c.b16 %v2856, %v2855
      %v2886 = vpack.c.b16 %v2858, %v2857
      %v2887 = vpack.c.b16 %v2860, %v2859
      %v2888 = vpack.c.b16 %v2862, %v2861
      %v2889 = vpack.c.b16 %v2864, %v2863
      %v2890 = vpack.c.b16 %v2866, %v2865
      %v2891 = vpack.c.b16 %v2868, %v2867
      %v2892 = vpack.c.b16 %v2870, %v2869
      %v2893 = vpack.c.b16 %v2872, %v2871
      %v2894 = vpack.c.b16 %v2874, %v2873
      %v2895 = vpack.c.b16 %v2876, %v2875
      %v2896 = vpack.c.b16 %v2878, %v2877
      %v2897 = vpack.c.b16 %v2880, %v2879
      %v2898 = vpack.c.b16 %v2882, %v2881
      %v2901 = vunpack.c.l.b16 %v2849
      %v2902 = vunpack.c.l.b16 %v2850
      %v2903 = vpack.c.b16 %v2902, %v2901
      %v2906 = vsel %vm722, %v2883, 0
      %v2909 = vsel %vm722, %v2884, 0
      %v2912 = vsel %vm722, %v2885, 0
      %v2915 = vsel %vm722, %v2886, 0
      %v2918 = vsel %vm722, %v2887, 0
      %v2921 = vsel %vm722, %v2888, 0
      %v2924 = vsel %vm722, %v2889, 0
      %v2927 = vsel %vm722, %v2890, 0
      %v2930 = vsel %vm722, %v2891, 0
      %v2933 = vsel %vm722, %v2892, 0
      %v2936 = vsel %vm722, %v2893, 0
      %v2939 = vsel %vm722, %v2894, 0
      %v2942 = vsel %vm722, %v2895, 0
      %v2945 = vsel %vm722, %v2896, 0
      %v2948 = vsel %vm722, %v2897, 0
      %v2951 = vsel %vm722, %v2898, 0
      %2953 = vmatprep.subr.bf16.mxu0 0
      %2954 = vmatpush1.bf16.msra.mxu0 %v2903
      %2955 = vmatprep.subr.bf16.mxu0 0
      %2956 = vmatpush1.bf16.msra.mxu0 0
      %2957 = vmatprep.subr.bf16.mxu0 0
      %2958 = vmatpush1.bf16.msra.mxu0 0
      %2959 = vmatprep.subr.bf16.mxu0 0
      %2960 = vmatpush1.bf16.msra.mxu0 0
      %2961 = vmatprep.subr.bf16.mxu0 0
      %2962 = vmatpush1.bf16.msra.mxu0 0
      %2963 = vmatprep.subr.bf16.mxu0 0
      %2964 = vmatpush1.bf16.msra.mxu0 0
      %2965 = vmatprep.subr.bf16.mxu0 0
      %2966 = vmatpush1.bf16.msra.mxu0 0
      %2967 = vmatprep.subr.bf16.mxu0 0
      %2968 = vmatpush1.bf16.msra.mxu0 0
      %2969 = vmatprep.subr.bf16.mxu0 0
      %2970 = vmatpush1.bf16.msra.mxu0 0
      %2971 = vmatprep.subr.bf16.mxu0 0
      %2972 = vmatpush1.bf16.msra.mxu0 0
      %2973 = vmatprep.subr.bf16.mxu0 0
      %2974 = vmatpush1.bf16.msra.mxu0 0
      %2975 = vmatprep.subr.bf16.mxu0 0
      %2976 = vmatpush1.bf16.msra.mxu0 0
      %2977 = vmatprep.subr.bf16.mxu0 0
      %2978 = vmatpush1.bf16.msra.mxu0 0
      %2979 = vmatprep.subr.bf16.mxu0 0
      %2980 = vmatpush1.bf16.msra.mxu0 0
      %2981 = vmatprep.subr.bf16.mxu0 0
      %2982 = vmatpush1.bf16.msra.mxu0 0
      %2983 = vmatprep.subr.bf16.mxu0 0
      %2984 = vmatpush1.bf16.msra.mxu0 0
      %2985 = vmatprep.mubr.bf16.mxu0 0
      %2986 = vmatmul.mubr.bf16.gmra.mrb[0].mxu0 %v2906
      %v2987 = vpop.f32.mrb[0].mxu0
      %v2988 = vadd.f32 0.0, %v2987
      %v2989 = vpop.f32.mrb[0].mxu0
      %v2990 = vpop.f32.mrb[0].mxu0
      %v2991 = vadd.f32 0.0, %v2990
      %v2992 = vpop.f32.mrb[0].mxu0
      %2993 = vmatprep.mubr.bf16.mxu0 0
      %2994 = vmatmul.mubr.bf16.gmra.mrb[0].mxu0 %v2909
      %v2995 = vpop.f32.mrb[0].mxu0
      %v2996 = vadd.f32 0.0, %v2995
      %v2997 = vpop.f32.mrb[0].mxu0
      %v2998 = vpop.f32.mrb[0].mxu0
      %v2999 = vadd.f32 0.0, %v2998
      %v3000 = vpop.f32.mrb[0].mxu0
      %3001 = vmatprep.mubr.bf16.mxu0 0
      %3002 = vmatmul.mubr.bf16.gmra.mrb[0].mxu0 %v2912
      %v3003 = vpop.f32.mrb[0].mxu0
      %v3004 = vadd.f32 0.0, %v3003
      %v3005 = vpop.f32.mrb[0].mxu0
      %v3006 = vpop.f32.mrb[0].mxu0
      %v3007 = vadd.f32 0.0, %v3006
      %v3008 = vpop.f32.mrb[0].mxu0
      %3009 = vmatprep.mubr.bf16.mxu0 0
      %3010 = vmatmul.mubr.bf16.gmra.mrb[0].mxu0 %v2915
      %v3011 = vpop.f32.mrb[0].mxu0
      %v3012 = vadd.f32 0.0, %v3011
      %v3013 = vpop.f32.mrb[0].mxu0
      %v3014 = vpop.f32.mrb[0].mxu0
      %v3015 = vadd.f32 0.0, %v3014
      %v3016 = vpop.f32.mrb[0].mxu0
      %3017 = vmatprep.mubr.bf16.mxu0 0
      %3018 = vmatmul.mubr.bf16.gmra.mrb[0].mxu0 %v2918
      %v3019 = vpop.f32.mrb[0].mxu0
      %v3020 = vadd.f32 0.0, %v3019
      %v3021 = vpop.f32.mrb[0].mxu0
      %v3022 = vpop.f32.mrb[0].mxu0
      %v3023 = vadd.f32 0.0, %v3022
      %v3024 = vpop.f32.mrb[0].mxu0
      %3025 = vmatprep.mubr.bf16.mxu0 0
      %3026 = vmatmul.mubr.bf16.gmra.mrb[0].mxu0 %v2921
      %v3027 = vpop.f32.mrb[0].mxu0
      %v3028 = vadd.f32 0.0, %v3027
      %v3029 = vpop.f32.mrb[0].mxu0
      %v3030 = vpop.f32.mrb[0].mxu0
      %v3031 = vadd.f32 0.0, %v3030
      %v3032 = vpop.f32.mrb[0].mxu0
      %3033 = vmatprep.mubr.bf16.mxu0 0
      %3034 = vmatmul.mubr.bf16.gmra.mrb[0].mxu0 %v2924
      %v3035 = vpop.f32.mrb[0].mxu0
      %v3036 = vadd.f32 0.0, %v3035
      %v3037 = vpop.f32.mrb[0].mxu0
      %v3038 = vpop.f32.mrb[0].mxu0
      %v3039 = vadd.f32 0.0, %v3038
      %v3040 = vpop.f32.mrb[0].mxu0
      %3041 = vmatprep.mubr.bf16.mxu0 0
      %3042 = vmatmul.mubr.bf16.gmra.mrb[0].mxu0 %v2927
      %v3043 = vpop.f32.mrb[0].mxu0
      %v3044 = vadd.f32 0.0, %v3043
      %v3045 = vpop.f32.mrb[0].mxu0
      %v3046 = vpop.f32.mrb[0].mxu0
      %v3047 = vadd.f32 0.0, %v3046
      %v3048 = vpop.f32.mrb[0].mxu0
      %3049 = vmatprep.mubr.bf16.mxu0 0
      %3050 = vmatmul.mubr.bf16.gmra.mrb[0].mxu0 %v2930
      %v3051 = vpop.f32.mrb[0].mxu0
      %v3052 = vadd.f32 0.0, %v3051
      %v3053 = vpop.f32.mrb[0].mxu0
      %v3054 = vpop.f32.mrb[0].mxu0
      %v3055 = vadd.f32 0.0, %v3054
      %v3056 = vpop.f32.mrb[0].mxu0
      %3057 = vmatprep.mubr.bf16.mxu0 0
      %3058 = vmatmul.mubr.bf16.gmra.mrb[0].mxu0 %v2933
      %v3059 = vpop.f32.mrb[0].mxu0
      %v3060 = vadd.f32 0.0, %v3059
      %v3061 = vpop.f32.mrb[0].mxu0
      %v3062 = vpop.f32.mrb[0].mxu0
      %v3063 = vadd.f32 0.0, %v3062
      %v3064 = vpop.f32.mrb[0].mxu0
      %3065 = vmatprep.mubr.bf16.mxu0 0
      %3066 = vmatmul.mubr.bf16.gmra.mrb[0].mxu0 %v2936
      %v3067 = vpop.f32.mrb[0].mxu0
      %v3068 = vadd.f32 0.0, %v3067
      %v3069 = vpop.f32.mrb[0].mxu0
      %v3070 = vpop.f32.mrb[0].mxu0
      %v3071 = vadd.f32 0.0, %v3070
      %v3072 = vpop.f32.mrb[0].mxu0
      %3073 = vmatprep.mubr.bf16.mxu0 0
      %3074 = vmatmul.mubr.bf16.gmra.mrb[0].mxu0 %v2939
      %v3075 = vpop.f32.mrb[0].mxu0
      %v3076 = vadd.f32 0.0, %v3075
      %v3077 = vpop.f32.mrb[0].mxu0
      %v3078 = vpop.f32.mrb[0].mxu0
      %v3079 = vadd.f32 0.0, %v3078
      %v3080 = vpop.f32.mrb[0].mxu0
      %3081 = vmatprep.mubr.bf16.mxu0 0
      %3082 = vmatmul.mubr.bf16.gmra.mrb[0].mxu0 %v2942
      %v3083 = vpop.f32.mrb[0].mxu0
      %v3084 = vadd.f32 0.0, %v3083
      %v3085 = vpop.f32.mrb[0].mxu0
      %v3086 = vpop.f32.mrb[0].mxu0
      %v3087 = vadd.f32 0.0, %v3086
      %v3088 = vpop.f32.mrb[0].mxu0
      %3089 = vmatprep.mubr.bf16.mxu0 0
      %3090 = vmatmul.mubr.bf16.gmra.mrb[0].mxu0 %v2945
      %v3091 = vpop.f32.mrb[0].mxu0
      %v3092 = vadd.f32 0.0, %v3091
      %v3093 = vpop.f32.mrb[0].mxu0
      %v3094 = vpop.f32.mrb[0].mxu0
      %v3095 = vadd.f32 0.0, %v3094
      %v3096 = vpop.f32.mrb[0].mxu0
      %3097 = vmatprep.mubr.bf16.mxu0 0
      %3098 = vmatmul.mubr.bf16.gmra.mrb[0].mxu0 %v2948
      %v3099 = vpop.f32.mrb[0].mxu0
      %v3100 = vadd.f32 0.0, %v3099
      %v3101 = vpop.f32.mrb[0].mxu0
      %v3102 = vpop.f32.mrb[0].mxu0
      %v3103 = vadd.f32 0.0, %v3102
      %v3104 = vpop.f32.mrb[0].mxu0
      %3105 = vmatprep.mubr.bf16.mxu0 0
      %3106 = vmatmul.mubr.bf16.gmra.mrb[0].mxu0 %v2951
      %v3107 = vpop.f32.mrb[0].mxu0
      %v3108 = vadd.f32 0.0, %v3107
      %v3109 = vpop.f32.mrb[0].mxu0
      %v3110 = vpop.f32.mrb[0].mxu0
      %v3111 = vadd.f32 0.0, %v3110
      %v3112 = vpop.f32.mrb[0].mxu0
      %3113 = vdwg.mxu0
      %v3114 = vadd.f32 %v2688, %v2988
      %v3115 = vadd.f32 %v2689, %v2991
      %v3116 = vadd.f32 %v2690, %v2996
      %v3117 = vadd.f32 %v2691, %v2999
      %v3118 = vadd.f32 %v2692, %v3004
      %v3119 = vadd.f32 %v2693, %v3007
      %v3120 = vadd.f32 %v2694, %v3012
      %v3121 = vadd.f32 %v2695, %v3015
      %v3122 = vadd.f32 %v2696, %v3020
      %v3123 = vadd.f32 %v2697, %v3023
      %v3124 = vadd.f32 %v2698, %v3028
      %v3125 = vadd.f32 %v2699, %v3031
      %v3126 = vadd.f32 %v2700, %v3036
      %v3127 = vadd.f32 %v2701, %v3039
      %v3128 = vadd.f32 %v2702, %v3044
      %v3129 = vadd.f32 %v2703, %v3047
      %v3130 = vadd.f32 %v2704, %v3052
      %v3131 = vadd.f32 %v2705, %v3055
      %v3132 = vadd.f32 %v2706, %v3060
      %v3133 = vadd.f32 %v2707, %v3063
      %v3134 = vadd.f32 %v2708, %v3068
      %v3135 = vadd.f32 %v2709, %v3071
      %v3136 = vadd.f32 %v2710, %v3076
      %v3137 = vadd.f32 %v2711, %v3079
      %v3138 = vadd.f32 %v2712, %v3084
      %v3139 = vadd.f32 %v2713, %v3087
      %v3140 = vadd.f32 %v2714, %v3092
      %v3141 = vadd.f32 %v2715, %v3095
      %v3142 = vadd.f32 %v2716, %v3100
      %v3143 = vadd.f32 %v2717, %v3103
      %v3144 = vadd.f32 %v2718, %v3108
      %v3145 = vadd.f32 %v2719, %v3111
      %s3146 = sadd.s32 %s224, 2
      %s3147 = smul.u32 %s3146, 3
      %s3148 = smul.addr %s3147, 4
      %s3149 = scalar_lea.vmem %s211, %s3148
      %v3150 = vld [vmem:[%s3149] sm:$0xf]
      %v3151 = vld [vmem:[%s3149 + $0x4] sm:$0xf]
      %v3152 = vld [vmem:[%s3149 + $0x8] sm:$0x1]
      %v3153 = vld [vmem:[%s3149 + $0xc] sm:$0xf]
      %v3154 = vld [vmem:[%s3149 + $0x10] sm:$0xf]
      %v3155 = vld [vmem:[%s3149 + $0x14] sm:$0x1]
      %v3156 = vld [vmem:[%s3149 + $0x18] sm:$0xf]
      %v3157 = vld [vmem:[%s3149 + $0x1c] sm:$0xf]
      %v3158 = vld [vmem:[%s3149 + $0x20] sm:$0x1]
      %v3159 = vld [vmem:[%s3149 + $0x24] sm:$0xf]
      %v3160 = vld [vmem:[%s3149 + $0x28] sm:$0xf]
      %v3161 = vld [vmem:[%s3149 + $0x2c] sm:$0x1]
      %v3162 = vld [vmem:[%s3149 + $0x30] sm:$0xf]
      %v3163 = vld [vmem:[%s3149 + $0x34] sm:$0xf]
      %v3164 = vld [vmem:[%s3149 + $0x38] sm:$0x1]
      %v3165 = vld [vmem:[%s3149 + $0x3c] sm:$0xf]
      %v3166 = vld [vmem:[%s3149 + $0x40] sm:$0xf]
      %v3167 = vld [vmem:[%s3149 + $0x44] sm:$0x1]
      %v3168 = vld [vmem:[%s3149 + $0x48] sm:$0xf]
      %v3169 = vld [vmem:[%s3149 + $0x4c] sm:$0xf]
      %v3170 = vld [vmem:[%s3149 + $0x50] sm:$0x1]
      %v3171 = vld [vmem:[%s3149 + $0x54] sm:$0xf]
      %v3172 = vld [vmem:[%s3149 + $0x58] sm:$0xf]
      %v3173 = vld [vmem:[%s3149 + $0x5c] sm:$0x1]
      %v3174 = vld [vmem:[%s3149 + $0x60] sm:$0xf]
      %v3175 = vld [vmem:[%s3149 + $0x64] sm:$0xf]
      %v3176 = vld [vmem:[%s3149 + $0x68] sm:$0x1]
      %v3177 = vld [vmem:[%s3149 + $0x6c] sm:$0xf]
      %v3178 = vld [vmem:[%s3149 + $0x70] sm:$0xf]
      %v3179 = vld [vmem:[%s3149 + $0x74] sm:$0x1]
      %v3180 = vld [vmem:[%s3149 + $0x78] sm:$0xf]
      %v3181 = vld [vmem:[%s3149 + $0x7c] sm:$0xf]
      %v3182 = vld [vmem:[%s3149 + $0x80] sm:$0x1]
      %v3183 = vld [vmem:[%s3149 + $0x84] sm:$0xf]
      %v3184 = vld [vmem:[%s3149 + $0x88] sm:$0xf]
      %v3185 = vld [vmem:[%s3149 + $0x8c] sm:$0x1]
      %v3186 = vld [vmem:[%s3149 + $0x90] sm:$0xf]
      %v3187 = vld [vmem:[%s3149 + $0x94] sm:$0xf]
      %v3188 = vld [vmem:[%s3149 + $0x98] sm:$0x1]
      %v3189 = vld [vmem:[%s3149 + $0x9c] sm:$0xf]
      %v3190 = vld [vmem:[%s3149 + $0xa0] sm:$0xf]
      %v3191 = vld [vmem:[%s3149 + $0xa4] sm:$0x1]
      %v3192 = vld [vmem:[%s3149 + $0xa8] sm:$0xf]
      %v3193 = vld [vmem:[%s3149 + $0xac] sm:$0xf]
      %v3194 = vld [vmem:[%s3149 + $0xb0] sm:$0x1]
      %v3195 = vld [vmem:[%s3149 + $0xb4] sm:$0xf]
      %v3196 = vld [vmem:[%s3149 + $0xb8] sm:$0xf]
      %v3197 = vld [vmem:[%s3149 + $0xbc] sm:$0x1]
      %s3198 = scalar_lea.vmem %s1, 48
      %v3199 = vld [vmem:[%s3198] sm:$0xf]
      %v3200 = vld [vmem:[%s3198 + $0x4] sm:$0xf]
      %v3233 = vunpack.c.l.b16 %v3150
      %v3234 = vunpack.c.l.b16 %v3151
      %v3235 = vunpack.c.l.b16 %v3153
      %v3236 = vunpack.c.l.b16 %v3154
      %v3237 = vunpack.c.l.b16 %v3156
      %v3238 = vunpack.c.l.b16 %v3157
      %v3239 = vunpack.c.l.b16 %v3159
      %v3240 = vunpack.c.l.b16 %v3160
      %v3241 = vunpack.c.l.b16 %v3162
      %v3242 = vunpack.c.l.b16 %v3163
      %v3243 = vunpack.c.l.b16 %v3165
      %v3244 = vunpack.c.l.b16 %v3166
      %v3245 = vunpack.c.l.b16 %v3168
      %v3246 = vunpack.c.l.b16 %v3169
      %v3247 = vunpack.c.l.b16 %v3171
      %v3248 = vunpack.c.l.b16 %v3172
      %v3249 = vunpack.c.l.b16 %v3174
      %v3250 = vunpack.c.l.b16 %v3175
      %v3251 = vunpack.c.l.b16 %v3177
      %v3252 = vunpack.c.l.b16 %v3178
      %v3253 = vunpack.c.l.b16 %v3180
      %v3254 = vunpack.c.l.b16 %v3181
      %v3255 = vunpack.c.l.b16 %v3183
      %v3256 = vunpack.c.l.b16 %v3184
      %v3257 = vunpack.c.l.b16 %v3186
      %v3258 = vunpack.c.l.b16 %v3187
      %v3259 = vunpack.c.l.b16 %v3189
      %v3260 = vunpack.c.l.b16 %v3190
      %v3261 = vunpack.c.l.b16 %v3192
      %v3262 = vunpack.c.l.b16 %v3193
      %v3263 = vunpack.c.l.b16 %v3195
      %v3264 = vunpack.c.l.b16 %v3196
      %v3265 = vpack.c.b16 %v3234, %v3233
      %v3266 = vpack.c.b16 %v3236, %v3235
      %v3267 = vpack.c.b16 %v3238, %v3237
      %v3268 = vpack.c.b16 %v3240, %v3239
      %v3269 = vpack.c.b16 %v3242, %v3241
      %v3270 = vpack.c.b16 %v3244, %v3243
      %v3271 = vpack.c.b16 %v3246, %v3245
      %v3272 = vpack.c.b16 %v3248, %v3247
      %v3273 = vpack.c.b16 %v3250, %v3249
      %v3274 = vpack.c.b16 %v3252, %v3251
      %v3275 = vpack.c.b16 %v3254, %v3253
      %v3276 = vpack.c.b16 %v3256, %v3255
      %v3277 = vpack.c.b16 %v3258, %v3257
      %v3278 = vpack.c.b16 %v3260, %v3259
      %v3279 = vpack.c.b16 %v3262, %v3261
      %v3280 = vpack.c.b16 %v3264, %v3263
      %v3283 = vunpack.c.l.b16 %v3199
      %v3284 = vunpack.c.l.b16 %v3200
      %v3285 = vpack.c.b16 %v3284, %v3283
      %v3288 = vsel %vm722, %v3265, 0
      %v3291 = vsel %vm722, %v3266, 0
      %v3294 = vsel %vm722, %v3267, 0
      %v3297 = vsel %vm722, %v3268, 0
      %v3300 = vsel %vm722, %v3269, 0
      %v3303 = vsel %vm722, %v3270, 0
      %v3306 = vsel %vm722, %v3271, 0
      %v3309 = vsel %vm722, %v3272, 0
      %v3312 = vsel %vm722, %v3273, 0
      %v3315 = vsel %vm722, %v3274, 0
      %v3318 = vsel %vm722, %v3275, 0
      %v3321 = vsel %vm722, %v3276, 0
      %v3324 = vsel %vm722, %v3277, 0
      %v3327 = vsel %vm722, %v3278, 0
      %v3330 = vsel %vm722, %v3279, 0
      %v3333 = vsel %vm722, %v3280, 0
      %3335 = vmatprep.subr.bf16.mxu0 0
      %3336 = vmatpush1.bf16.msra.mxu0 %v3285
      %3337 = vmatprep.subr.bf16.mxu0 0
      %3338 = vmatpush1.bf16.msra.mxu0 0
      %3339 = vmatprep.subr.bf16.mxu0 0
      %3340 = vmatpush1.bf16.msra.mxu0 0
      %3341 = vmatprep.subr.bf16.mxu0 0
      %3342 = vmatpush1.bf16.msra.mxu0 0
      %3343 = vmatprep.subr.bf16.mxu0 0
      %3344 = vmatpush1.bf16.msra.mxu0 0
      %3345 = vmatprep.subr.bf16.mxu0 0
      %3346 = vmatpush1.bf16.msra.mxu0 0
      %3347 = vmatprep.subr.bf16.mxu0 0
      %3348 = vmatpush1.bf16.msra.mxu0 0
      %3349 = vmatprep.subr.bf16.mxu0 0
      %3350 = vmatpush1.bf16.msra.mxu0 0
      %3351 = vmatprep.subr.bf16.mxu0 0
      %3352 = vmatpush1.bf16.msra.mxu0 0
      %3353 = vmatprep.subr.bf16.mxu0 0
      %3354 = vmatpush1.bf16.msra.mxu0 0
      %3355 = vmatprep.subr.bf16.mxu0 0
      %3356 = vmatpush1.bf16.msra.mxu0 0
      %3357 = vmatprep.subr.bf16.mxu0 0
      %3358 = vmatpush1.bf16.msra.mxu0 0
      %3359 = vmatprep.subr.bf16.mxu0 0
      %3360 = vmatpush1.bf16.msra.mxu0 0
      %3361 = vmatprep.subr.bf16.mxu0 0
      %3362 = vmatpush1.bf16.msra.mxu0 0
      %3363 = vmatprep.subr.bf16.mxu0 0
      %3364 = vmatpush1.bf16.msra.mxu0 0
      %3365 = vmatprep.subr.bf16.mxu0 0
      %3366 = vmatpush1.bf16.msra.mxu0 0
      %3367 = vmatprep.mubr.bf16.mxu0 0
      %3368 = vmatmul.mubr.bf16.gmra.mrb[0].mxu0 %v3288
      %v3369 = vpop.f32.mrb[0].mxu0
      %v3370 = vadd.f32 0.0, %v3369
      %v3371 = vpop.f32.mrb[0].mxu0
      %v3372 = vpop.f32.mrb[0].mxu0
      %v3373 = vadd.f32 0.0, %v3372
      %v3374 = vpop.f32.mrb[0].mxu0
      %3375 = vmatprep.mubr.bf16.mxu0 0
      %3376 = vmatmul.mubr.bf16.gmra.mrb[0].mxu0 %v3291
      %v3377 = vpop.f32.mrb[0].mxu0
      %v3378 = vadd.f32 0.0, %v3377
      %v3379 = vpop.f32.mrb[0].mxu0
      %v3380 = vpop.f32.mrb[0].mxu0
      %v3381 = vadd.f32 0.0, %v3380
      %v3382 = vpop.f32.mrb[0].mxu0
      %3383 = vmatprep.mubr.bf16.mxu0 0
      %3384 = vmatmul.mubr.bf16.gmra.mrb[0].mxu0 %v3294
      %v3385 = vpop.f32.mrb[0].mxu0
      %v3386 = vadd.f32 0.0, %v3385
      %v3387 = vpop.f32.mrb[0].mxu0
      %v3388 = vpop.f32.mrb[0].mxu0
      %v3389 = vadd.f32 0.0, %v3388
      %v3390 = vpop.f32.mrb[0].mxu0
      %3391 = vmatprep.mubr.bf16.mxu0 0
      %3392 = vmatmul.mubr.bf16.gmra.mrb[0].mxu0 %v3297
      %v3393 = vpop.f32.mrb[0].mxu0
      %v3394 = vadd.f32 0.0, %v3393
      %v3395 = vpop.f32.mrb[0].mxu0
      %v3396 = vpop.f32.mrb[0].mxu0
      %v3397 = vadd.f32 0.0, %v3396
      %v3398 = vpop.f32.mrb[0].mxu0
      %3399 = vmatprep.mubr.bf16.mxu0 0
      %3400 = vmatmul.mubr.bf16.gmra.mrb[0].mxu0 %v3300
      %v3401 = vpop.f32.mrb[0].mxu0
      %v3402 = vadd.f32 0.0, %v3401
      %v3403 = vpop.f32.mrb[0].mxu0
      %v3404 = vpop.f32.mrb[0].mxu0
      %v3405 = vadd.f32 0.0, %v3404
      %v3406 = vpop.f32.mrb[0].mxu0
      %3407 = vmatprep.mubr.bf16.mxu0 0
      %3408 = vmatmul.mubr.bf16.gmra.mrb[0].mxu0 %v3303
      %v3409 = vpop.f32.mrb[0].mxu0
      %v3410 = vadd.f32 0.0, %v3409
      %v3411 = vpop.f32.mrb[0].mxu0
      %v3412 = vpop.f32.mrb[0].mxu0
      %v3413 = vadd.f32 0.0, %v3412
      %v3414 = vpop.f32.mrb[0].mxu0
      %3415 = vmatprep.mubr.bf16.mxu0 0
      %3416 = vmatmul.mubr.bf16.gmra.mrb[0].mxu0 %v3306
      %v3417 = vpop.f32.mrb[0].mxu0
      %v3418 = vadd.f32 0.0, %v3417
      %v3419 = vpop.f32.mrb[0].mxu0
      %v3420 = vpop.f32.mrb[0].mxu0
      %v3421 = vadd.f32 0.0, %v3420
      %v3422 = vpop.f32.mrb[0].mxu0
      %3423 = vmatprep.mubr.bf16.mxu0 0
      %3424 = vmatmul.mubr.bf16.gmra.mrb[0].mxu0 %v3309
      %v3425 = vpop.f32.mrb[0].mxu0
      %v3426 = vadd.f32 0.0, %v3425
      %v3427 = vpop.f32.mrb[0].mxu0
      %v3428 = vpop.f32.mrb[0].mxu0
      %v3429 = vadd.f32 0.0, %v3428
      %v3430 = vpop.f32.mrb[0].mxu0
      %3431 = vmatprep.mubr.bf16.mxu0 0
      %3432 = vmatmul.mubr.bf16.gmra.mrb[0].mxu0 %v3312
      %v3433 = vpop.f32.mrb[0].mxu0
      %v3434 = vadd.f32 0.0, %v3433
      %v3435 = vpop.f32.mrb[0].mxu0
      %v3436 = vpop.f32.mrb[0].mxu0
      %v3437 = vadd.f32 0.0, %v3436
      %v3438 = vpop.f32.mrb[0].mxu0
      %3439 = vmatprep.mubr.bf16.mxu0 0
      %3440 = vmatmul.mubr.bf16.gmra.mrb[0].mxu0 %v3315
      %v3441 = vpop.f32.mrb[0].mxu0
      %v3442 = vadd.f32 0.0, %v3441
      %v3443 = vpop.f32.mrb[0].mxu0
      %v3444 = vpop.f32.mrb[0].mxu0
      %v3445 = vadd.f32 0.0, %v3444
      %v3446 = vpop.f32.mrb[0].mxu0
      %3447 = vmatprep.mubr.bf16.mxu0 0
      %3448 = vmatmul.mubr.bf16.gmra.mrb[0].mxu0 %v3318
      %v3449 = vpop.f32.mrb[0].mxu0
      %v3450 = vadd.f32 0.0, %v3449
      %v3451 = vpop.f32.mrb[0].mxu0
      %v3452 = vpop.f32.mrb[0].mxu0
      %v3453 = vadd.f32 0.0, %v3452
      %v3454 = vpop.f32.mrb[0].mxu0
      %3455 = vmatprep.mubr.bf16.mxu0 0
      %3456 = vmatmul.mubr.bf16.gmra.mrb[0].mxu0 %v3321
      %v3457 = vpop.f32.mrb[0].mxu0
      %v3458 = vadd.f32 0.0, %v3457
      %v3459 = vpop.f32.mrb[0].mxu0
      %v3460 = vpop.f32.mrb[0].mxu0
      %v3461 = vadd.f32 0.0, %v3460
      %v3462 = vpop.f32.mrb[0].mxu0
      %3463 = vmatprep.mubr.bf16.mxu0 0
      %3464 = vmatmul.mubr.bf16.gmra.mrb[0].mxu0 %v3324
      %v3465 = vpop.f32.mrb[0].mxu0
      %v3466 = vadd.f32 0.0, %v3465
      %v3467 = vpop.f32.mrb[0].mxu0
      %v3468 = vpop.f32.mrb[0].mxu0
      %v3469 = vadd.f32 0.0, %v3468
      %v3470 = vpop.f32.mrb[0].mxu0
      %3471 = vmatprep.mubr.bf16.mxu0 0
      %3472 = vmatmul.mubr.bf16.gmra.mrb[0].mxu0 %v3327
      %v3473 = vpop.f32.mrb[0].mxu0
      %v3474 = vadd.f32 0.0, %v3473
      %v3475 = vpop.f32.mrb[0].mxu0
      %v3476 = vpop.f32.mrb[0].mxu0
      %v3477 = vadd.f32 0.0, %v3476
      %v3478 = vpop.f32.mrb[0].mxu0
      %3479 = vmatprep.mubr.bf16.mxu0 0
      %3480 = vmatmul.mubr.bf16.gmra.mrb[0].mxu0 %v3330
      %v3481 = vpop.f32.mrb[0].mxu0
      %v3482 = vadd.f32 0.0, %v3481
      %v3483 = vpop.f32.mrb[0].mxu0
      %v3484 = vpop.f32.mrb[0].mxu0
      %v3485 = vadd.f32 0.0, %v3484
      %v3486 = vpop.f32.mrb[0].mxu0
      %3487 = vmatprep.mubr.bf16.mxu0 0
      %3488 = vmatmul.mubr.bf16.gmra.mrb[0].mxu0 %v3333
      %v3489 = vpop.f32.mrb[0].mxu0
      %v3490 = vadd.f32 0.0, %v3489
      %v3491 = vpop.f32.mrb[0].mxu0
      %v3492 = vpop.f32.mrb[0].mxu0
      %v3493 = vadd.f32 0.0, %v3492
      %v3494 = vpop.f32.mrb[0].mxu0
      %3495 = vdwg.mxu0
      %v3496 = vadd.f32 %v3114, %v3370
      %v3497 = vadd.f32 %v3115, %v3373
      %v3498 = vadd.f32 %v3116, %v3378
      %v3499 = vadd.f32 %v3117, %v3381
      %v3500 = vadd.f32 %v3118, %v3386
      %v3501 = vadd.f32 %v3119, %v3389
      %v3502 = vadd.f32 %v3120, %v3394
      %v3503 = vadd.f32 %v3121, %v3397
      %v3504 = vadd.f32 %v3122, %v3402
      %v3505 = vadd.f32 %v3123, %v3405
      %v3506 = vadd.f32 %v3124, %v3410
      %v3507 = vadd.f32 %v3125, %v3413
      %v3508 = vadd.f32 %v3126, %v3418
      %v3509 = vadd.f32 %v3127, %v3421
      %v3510 = vadd.f32 %v3128, %v3426
      %v3511 = vadd.f32 %v3129, %v3429
      %v3512 = vadd.f32 %v3130, %v3434
      %v3513 = vadd.f32 %v3131, %v3437
      %v3514 = vadd.f32 %v3132, %v3442
      %v3515 = vadd.f32 %v3133, %v3445
      %v3516 = vadd.f32 %v3134, %v3450
      %v3517 = vadd.f32 %v3135, %v3453
      %v3518 = vadd.f32 %v3136, %v3458
      %v3519 = vadd.f32 %v3137, %v3461
      %v3520 = vadd.f32 %v3138, %v3466
      %v3521 = vadd.f32 %v3139, %v3469
      %v3522 = vadd.f32 %v3140, %v3474
      %v3523 = vadd.f32 %v3141, %v3477
      %v3524 = vadd.f32 %v3142, %v3482
      %v3525 = vadd.f32 %v3143, %v3485
      %v3526 = vadd.f32 %v3144, %v3490
      %v3527 = vadd.f32 %v3145, %v3493
      %v3529 = vshrl.u32 %v3150, 16
      %v3531 = vrot.slane %v3529, 4
      %v3532 = vshll.u32 %v3150, 16
      %v3534 = vrot.slane %v3532, 5
      %v3535 = vor.u32 %v3531, %v3534
      %v3536 = vrot.slane %v3535, 4
      %v3538 = vshll.u32 %v3151, 16
      %v3540 = vrot.slane %v3538, 5
      %v3541 = vsel %vm280, %v3536, %v3540
      %v3542 = vshrl.u32 %v3151, 16
      %v3544 = vrot.slane %v3542, 4
      %v3545 = vor.u32 %v3544, %v3540
      %v3546 = vrot.slane %v3545, 4
      %v3548 = vshll.u32 %v3152, 16
      %v3550 = vrot.slane %v3548, 5
      %v3551 = vsel %vm280, %v3546, %v3550
      %v3553 = vshrl.u32 %v3153, 16
      %v3555 = vrot.slane %v3553, 4
      %v3556 = vshll.u32 %v3153, 16
      %v3558 = vrot.slane %v3556, 5
      %v3559 = vor.u32 %v3555, %v3558
      %v3560 = vrot.slane %v3559, 4
      %v3562 = vshll.u32 %v3154, 16
      %v3564 = vrot.slane %v3562, 5
      %v3565 = vsel %vm280, %v3560, %v3564
      %v3566 = vshrl.u32 %v3154, 16
      %v3568 = vrot.slane %v3566, 4
      %v3569 = vor.u32 %v3568, %v3564
      %v3570 = vrot.slane %v3569, 4
      %v3572 = vshll.u32 %v3155, 16
      %v3574 = vrot.slane %v3572, 5
      %v3575 = vsel %vm280, %v3570, %v3574
      %v3577 = vshrl.u32 %v3156, 16
      %v3579 = vrot.slane %v3577, 4
      %v3580 = vshll.u32 %v3156, 16
      %v3582 = vrot.slane %v3580, 5
      %v3583 = vor.u32 %v3579, %v3582
      %v3584 = vrot.slane %v3583, 4
      %v3586 = vshll.u32 %v3157, 16
      %v3588 = vrot.slane %v3586, 5
      %v3589 = vsel %vm280, %v3584, %v3588
      %v3590 = vshrl.u32 %v3157, 16
      %v3592 = vrot.slane %v3590, 4
      %v3593 = vor.u32 %v3592, %v3588
      %v3594 = vrot.slane %v3593, 4
      %v3596 = vshll.u32 %v3158, 16
      %v3598 = vrot.slane %v3596, 5
      %v3599 = vsel %vm280, %v3594, %v3598
      %v3601 = vshrl.u32 %v3159, 16
      %v3603 = vrot.slane %v3601, 4
      %v3604 = vshll.u32 %v3159, 16
      %v3606 = vrot.slane %v3604, 5
      %v3607 = vor.u32 %v3603, %v3606
      %v3608 = vrot.slane %v3607, 4
      %v3610 = vshll.u32 %v3160, 16
      %v3612 = vrot.slane %v3610, 5
      %v3613 = vsel %vm280, %v3608, %v3612
      %v3614 = vshrl.u32 %v3160, 16
      %v3616 = vrot.slane %v3614, 4
      %v3617 = vor.u32 %v3616, %v3612
      %v3618 = vrot.slane %v3617, 4
      %v3620 = vshll.u32 %v3161, 16
      %v3622 = vrot.slane %v3620, 5
      %v3623 = vsel %vm280, %v3618, %v3622
      %v3625 = vshrl.u32 %v3162, 16
      %v3627 = vrot.slane %v3625, 4
      %v3628 = vshll.u32 %v3162, 16
      %v3630 = vrot.slane %v3628, 5
      %v3631 = vor.u32 %v3627, %v3630
      %v3632 = vrot.slane %v3631, 4
      %v3634 = vshll.u32 %v3163, 16
      %v3636 = vrot.slane %v3634, 5
      %v3637 = vsel %vm280, %v3632, %v3636
      %v3638 = vshrl.u32 %v3163, 16
      %v3640 = vrot.slane %v3638, 4
      %v3641 = vor.u32 %v3640, %v3636
      %v3642 = vrot.slane %v3641, 4
      %v3644 = vshll.u32 %v3164, 16
      %v3646 = vrot.slane %v3644, 5
      %v3647 = vsel %vm280, %v3642, %v3646
      %v3649 = vshrl.u32 %v3165, 16
      %v3651 = vrot.slane %v3649, 4
      %v3652 = vshll.u32 %v3165, 16
      %v3654 = vrot.slane %v3652, 5
      %v3655 = vor.u32 %v3651, %v3654
      %v3656 = vrot.slane %v3655, 4
      %v3658 = vshll.u32 %v3166, 16
      %v3660 = vrot.slane %v3658, 5
      %v3661 = vsel %vm280, %v3656, %v3660
      %v3662 = vshrl.u32 %v3166, 16
      %v3664 = vrot.slane %v3662, 4
      %v3665 = vor.u32 %v3664, %v3660
      %v3666 = vrot.slane %v3665, 4
      %v3668 = vshll.u32 %v3167, 16
      %v3670 = vrot.slane %v3668, 5
      %v3671 = vsel %vm280, %v3666, %v3670
      %v3673 = vshrl.u32 %v3168, 16
      %v3675 = vrot.slane %v3673, 4
      %v3676 = vshll.u32 %v3168, 16
      %v3678 = vrot.slane %v3676, 5
      %v3679 = vor.u32 %v3675, %v3678
      %v3680 = vrot.slane %v3679, 4
      %v3682 = vshll.u32 %v3169, 16
      %v3684 = vrot.slane %v3682, 5
      %v3685 = vsel %vm280, %v3680, %v3684
      %v3686 = vshrl.u32 %v3169, 16
      %v3688 = vrot.slane %v3686, 4
      %v3689 = vor.u32 %v3688, %v3684
      %v3690 = vrot.slane %v3689, 4
      %v3692 = vshll.u32 %v3170, 16
      %v3694 = vrot.slane %v3692, 5
      %v3695 = vsel %vm280, %v3690, %v3694
      %v3697 = vshrl.u32 %v3171, 16
      %v3699 = vrot.slane %v3697, 4
      %v3700 = vshll.u32 %v3171, 16
      %v3702 = vrot.slane %v3700, 5
      %v3703 = vor.u32 %v3699, %v3702
      %v3704 = vrot.slane %v3703, 4
      %v3706 = vshll.u32 %v3172, 16
      %v3708 = vrot.slane %v3706, 5
      %v3709 = vsel %vm280, %v3704, %v3708
      %v3710 = vshrl.u32 %v3172, 16
      %v3712 = vrot.slane %v3710, 4
      %v3713 = vor.u32 %v3712, %v3708
      %v3714 = vrot.slane %v3713, 4
      %v3716 = vshll.u32 %v3173, 16
      %v3718 = vrot.slane %v3716, 5
      %v3719 = vsel %vm280, %v3714, %v3718
      %v3721 = vshrl.u32 %v3174, 16
      %v3723 = vrot.slane %v3721, 4
      %v3724 = vshll.u32 %v3174, 16
      %v3726 = vrot.slane %v3724, 5
      %v3727 = vor.u32 %v3723, %v3726
      %v3728 = vrot.slane %v3727, 4
      %v3730 = vshll.u32 %v3175, 16
      %v3732 = vrot.slane %v3730, 5
      %v3733 = vsel %vm280, %v3728, %v3732
      %v3734 = vshrl.u32 %v3175, 16
      %v3736 = vrot.slane %v3734, 4
      %v3737 = vor.u32 %v3736, %v3732
      %v3738 = vrot.slane %v3737, 4
      %v3740 = vshll.u32 %v3176, 16
      %v3742 = vrot.slane %v3740, 5
      %v3743 = vsel %vm280, %v3738, %v3742
      %v3745 = vshrl.u32 %v3177, 16
      %v3747 = vrot.slane %v3745, 4
      %v3748 = vshll.u32 %v3177, 16
      %v3750 = vrot.slane %v3748, 5
      %v3751 = vor.u32 %v3747, %v3750
      %v3752 = vrot.slane %v3751, 4
      %v3754 = vshll.u32 %v3178, 16
      %v3756 = vrot.slane %v3754, 5
      %v3757 = vsel %vm280, %v3752, %v3756
      %v3758 = vshrl.u32 %v3178, 16
      %v3760 = vrot.slane %v3758, 4
      %v3761 = vor.u32 %v3760, %v3756
      %v3762 = vrot.slane %v3761, 4
      %v3764 = vshll.u32 %v3179, 16
      %v3766 = vrot.slane %v3764, 5
      %v3767 = vsel %vm280, %v3762, %v3766
      %v3769 = vshrl.u32 %v3180, 16
      %v3771 = vrot.slane %v3769, 4
      %v3772 = vshll.u32 %v3180, 16
      %v3774 = vrot.slane %v3772, 5
      %v3775 = vor.u32 %v3771, %v3774
      %v3776 = vrot.slane %v3775, 4
      %v3778 = vshll.u32 %v3181, 16
      %v3780 = vrot.slane %v3778, 5
      %v3781 = vsel %vm280, %v3776, %v3780
      %v3782 = vshrl.u32 %v3181, 16
      %v3784 = vrot.slane %v3782, 4
      %v3785 = vor.u32 %v3784, %v3780
      %v3786 = vrot.slane %v3785, 4
      %v3788 = vshll.u32 %v3182, 16
      %v3790 = vrot.slane %v3788, 5
      %v3791 = vsel %vm280, %v3786, %v3790
      %v3793 = vshrl.u32 %v3183, 16
      %v3795 = vrot.slane %v3793, 4
      %v3796 = vshll.u32 %v3183, 16
      %v3798 = vrot.slane %v3796, 5
      %v3799 = vor.u32 %v3795, %v3798
      %v3800 = vrot.slane %v3799, 4
      %v3802 = vshll.u32 %v3184, 16
      %v3804 = vrot.slane %v3802, 5
      %v3805 = vsel %vm280, %v3800, %v3804
      %v3806 = vshrl.u32 %v3184, 16
      %v3808 = vrot.slane %v3806, 4
      %v3809 = vor.u32 %v3808, %v3804
      %v3810 = vrot.slane %v3809, 4
      %v3812 = vshll.u32 %v3185, 16
      %v3814 = vrot.slane %v3812, 5
      %v3815 = vsel %vm280, %v3810, %v3814
      %v3817 = vshrl.u32 %v3186, 16
      %v3819 = vrot.slane %v3817, 4
      %v3820 = vshll.u32 %v3186, 16
      %v3822 = vrot.slane %v3820, 5
      %v3823 = vor.u32 %v3819, %v3822
      %v3824 = vrot.slane %v3823, 4
      %v3826 = vshll.u32 %v3187, 16
      %v3828 = vrot.slane %v3826, 5
      %v3829 = vsel %vm280, %v3824, %v3828
      %v3830 = vshrl.u32 %v3187, 16
      %v3832 = vrot.slane %v3830, 4
      %v3833 = vor.u32 %v3832, %v3828
      %v3834 = vrot.slane %v3833, 4
      %v3836 = vshll.u32 %v3188, 16
      %v3838 = vrot.slane %v3836, 5
      %v3839 = vsel %vm280, %v3834, %v3838
      %v3841 = vshrl.u32 %v3189, 16
      %v3843 = vrot.slane %v3841, 4
      %v3844 = vshll.u32 %v3189, 16
      %v3846 = vrot.slane %v3844, 5
      %v3847 = vor.u32 %v3843, %v3846
      %v3848 = vrot.slane %v3847, 4
      %v3850 = vshll.u32 %v3190, 16
      %v3852 = vrot.slane %v3850, 5
      %v3853 = vsel %vm280, %v3848, %v3852
      %v3854 = vshrl.u32 %v3190, 16
      %v3856 = vrot.slane %v3854, 4
      %v3857 = vor.u32 %v3856, %v3852
      %v3858 = vrot.slane %v3857, 4
      %v3860 = vshll.u32 %v3191, 16
      %v3862 = vrot.slane %v3860, 5
      %v3863 = vsel %vm280, %v3858, %v3862
      %v3865 = vshrl.u32 %v3192, 16
      %v3867 = vrot.slane %v3865, 4
      %v3868 = vshll.u32 %v3192, 16
      %v3870 = vrot.slane %v3868, 5
      %v3871 = vor.u32 %v3867, %v3870
      %v3872 = vrot.slane %v3871, 4
      %v3874 = vshll.u32 %v3193, 16
      %v3876 = vrot.slane %v3874, 5
      %v3877 = vsel %vm280, %v3872, %v3876
      %v3878 = vshrl.u32 %v3193, 16
      %v3880 = vrot.slane %v3878, 4
      %v3881 = vor.u32 %v3880, %v3876
      %v3882 = vrot.slane %v3881, 4
      %v3884 = vshll.u32 %v3194, 16
      %v3886 = vrot.slane %v3884, 5
      %v3887 = vsel %vm280, %v3882, %v3886
      %v3889 = vshrl.u32 %v3195, 16
      %v3891 = vrot.slane %v3889, 4
      %v3892 = vshll.u32 %v3195, 16
      %v3894 = vrot.slane %v3892, 5
      %v3895 = vor.u32 %v3891, %v3894
      %v3896 = vrot.slane %v3895, 4
      %v3898 = vshll.u32 %v3196, 16
      %v3900 = vrot.slane %v3898, 5
      %v3901 = vsel %vm280, %v3896, %v3900
      %v3902 = vshrl.u32 %v3196, 16
      %v3904 = vrot.slane %v3902, 4
      %v3905 = vor.u32 %v3904, %v3900
      %v3906 = vrot.slane %v3905, 4
      %v3908 = vshll.u32 %v3197, 16
      %v3910 = vrot.slane %v3908, 5
      %v3911 = vsel %vm280, %v3906, %v3910
      %s3912 = scalar_lea.vmem %s1, 56
      %v3913 = vld [vmem:[%s3912] sm:$0xf]
      %v3914 = vld [vmem:[%s3912 + $0x4] sm:$0xf]
      %v3915 = vunpack.c.l.b16 %v3541
      %v3916 = vunpack.c.l.b16 %v3551
      %v3917 = vunpack.c.l.b16 %v3565
      %v3918 = vunpack.c.l.b16 %v3575
      %v3919 = vunpack.c.l.b16 %v3589
      %v3920 = vunpack.c.l.b16 %v3599
      %v3921 = vunpack.c.l.b16 %v3613
      %v3922 = vunpack.c.l.b16 %v3623
      %v3923 = vunpack.c.l.b16 %v3637
      %v3924 = vunpack.c.l.b16 %v3647
      %v3925 = vunpack.c.l.b16 %v3661
      %v3926 = vunpack.c.l.b16 %v3671
      %v3927 = vunpack.c.l.b16 %v3685
      %v3928 = vunpack.c.l.b16 %v3695
      %v3929 = vunpack.c.l.b16 %v3709
      %v3930 = vunpack.c.l.b16 %v3719
      %v3931 = vunpack.c.l.b16 %v3733
      %v3932 = vunpack.c.l.b16 %v3743
      %v3933 = vunpack.c.l.b16 %v3757
      %v3934 = vunpack.c.l.b16 %v3767
      %v3935 = vunpack.c.l.b16 %v3781
      %v3936 = vunpack.c.l.b16 %v3791
      %v3937 = vunpack.c.l.b16 %v3805
      %v3938 = vunpack.c.l.b16 %v3815
      %v3939 = vunpack.c.l.b16 %v3829
      %v3940 = vunpack.c.l.b16 %v3839
      %v3941 = vunpack.c.l.b16 %v3853
      %v3942 = vunpack.c.l.b16 %v3863
      %v3943 = vunpack.c.l.b16 %v3877
      %v3944 = vunpack.c.l.b16 %v3887
      %v3945 = vunpack.c.l.b16 %v3901
      %v3946 = vunpack.c.l.b16 %v3911
      %v3947 = vpack.c.b16 %v3916, %v3915
      %v3948 = vpack.c.b16 %v3918, %v3917
      %v3949 = vpack.c.b16 %v3920, %v3919
      %v3950 = vpack.c.b16 %v3922, %v3921
      %v3951 = vpack.c.b16 %v3924, %v3923
      %v3952 = vpack.c.b16 %v3926, %v3925
      %v3953 = vpack.c.b16 %v3928, %v3927
      %v3954 = vpack.c.b16 %v3930, %v3929
      %v3955 = vpack.c.b16 %v3932, %v3931
      %v3956 = vpack.c.b16 %v3934, %v3933
      %v3957 = vpack.c.b16 %v3936, %v3935
      %v3958 = vpack.c.b16 %v3938, %v3937
      %v3959 = vpack.c.b16 %v3940, %v3939
      %v3960 = vpack.c.b16 %v3942, %v3941
      %v3961 = vpack.c.b16 %v3944, %v3943
      %v3962 = vpack.c.b16 %v3946, %v3945
      %v3965 = vunpack.c.l.b16 %v3913
      %v3966 = vunpack.c.l.b16 %v3914
      %v3967 = vpack.c.b16 %v3966, %v3965
      %v3970 = vsel %vm722, %v3947, 0
      %v3973 = vsel %vm722, %v3948, 0
      %v3976 = vsel %vm722, %v3949, 0
      %v3979 = vsel %vm722, %v3950, 0
      %v3982 = vsel %vm722, %v3951, 0
      %v3985 = vsel %vm722, %v3952, 0
      %v3988 = vsel %vm722, %v3953, 0
      %v3991 = vsel %vm722, %v3954, 0
      %v3994 = vsel %vm722, %v3955, 0
      %v3997 = vsel %vm722, %v3956, 0
      %v4000 = vsel %vm722, %v3957, 0
      %v4003 = vsel %vm722, %v3958, 0
      %v4006 = vsel %vm722, %v3959, 0
      %v4009 = vsel %vm722, %v3960, 0
      %v4012 = vsel %vm722, %v3961, 0
      %v4015 = vsel %vm722, %v3962, 0
      %4017 = vmatprep.subr.bf16.mxu0 0
      %4018 = vmatpush1.bf16.msra.mxu0 %v3967
      %4019 = vmatprep.subr.bf16.mxu0 0
      %4020 = vmatpush1.bf16.msra.mxu0 0
      %4021 = vmatprep.subr.bf16.mxu0 0
      %4022 = vmatpush1.bf16.msra.mxu0 0
      %4023 = vmatprep.subr.bf16.mxu0 0
      %4024 = vmatpush1.bf16.msra.mxu0 0
      %4025 = vmatprep.subr.bf16.mxu0 0
      %4026 = vmatpush1.bf16.msra.mxu0 0
      %4027 = vmatprep.subr.bf16.mxu0 0
      %4028 = vmatpush1.bf16.msra.mxu0 0
      %4029 = vmatprep.subr.bf16.mxu0 0
      %4030 = vmatpush1.bf16.msra.mxu0 0
      %4031 = vmatprep.subr.bf16.mxu0 0
      %4032 = vmatpush1.bf16.msra.mxu0 0
      %4033 = vmatprep.subr.bf16.mxu0 0
      %4034 = vmatpush1.bf16.msra.mxu0 0
      %4035 = vmatprep.subr.bf16.mxu0 0
      %4036 = vmatpush1.bf16.msra.mxu0 0
      %4037 = vmatprep.subr.bf16.mxu0 0
      %4038 = vmatpush1.bf16.msra.mxu0 0
      %4039 = vmatprep.subr.bf16.mxu0 0
      %4040 = vmatpush1.bf16.msra.mxu0 0
      %4041 = vmatprep.subr.bf16.mxu0 0
      %4042 = vmatpush1.bf16.msra.mxu0 0
      %4043 = vmatprep.subr.bf16.mxu0 0
      %4044 = vmatpush1.bf16.msra.mxu0 0
      %4045 = vmatprep.subr.bf16.mxu0 0
      %4046 = vmatpush1.bf16.msra.mxu0 0
      %4047 = vmatprep.subr.bf16.mxu0 0
      %4048 = vmatpush1.bf16.msra.mxu0 0
      %4049 = vmatprep.mubr.bf16.mxu0 0
      %4050 = vmatmul.mubr.bf16.gmra.mrb[0].mxu0 %v3970
      %v4051 = vpop.f32.mrb[0].mxu0
      %v4052 = vadd.f32 0.0, %v4051
      %v4053 = vpop.f32.mrb[0].mxu0
      %v4054 = vpop.f32.mrb[0].mxu0
      %v4055 = vadd.f32 0.0, %v4054
      %v4056 = vpop.f32.mrb[0].mxu0
      %4057 = vmatprep.mubr.bf16.mxu0 0
      %4058 = vmatmul.mubr.bf16.gmra.mrb[0].mxu0 %v3973
      %v4059 = vpop.f32.mrb[0].mxu0
      %v4060 = vadd.f32 0.0, %v4059
      %v4061 = vpop.f32.mrb[0].mxu0
      %v4062 = vpop.f32.mrb[0].mxu0
      %v4063 = vadd.f32 0.0, %v4062
      %v4064 = vpop.f32.mrb[0].mxu0
      %4065 = vmatprep.mubr.bf16.mxu0 0
      %4066 = vmatmul.mubr.bf16.gmra.mrb[0].mxu0 %v3976
      %v4067 = vpop.f32.mrb[0].mxu0
      %v4068 = vadd.f32 0.0, %v4067
      %v4069 = vpop.f32.mrb[0].mxu0
      %v4070 = vpop.f32.mrb[0].mxu0
      %v4071 = vadd.f32 0.0, %v4070
      %v4072 = vpop.f32.mrb[0].mxu0
      %4073 = vmatprep.mubr.bf16.mxu0 0
      %4074 = vmatmul.mubr.bf16.gmra.mrb[0].mxu0 %v3979
      %v4075 = vpop.f32.mrb[0].mxu0
      %v4076 = vadd.f32 0.0, %v4075
      %v4077 = vpop.f32.mrb[0].mxu0
      %v4078 = vpop.f32.mrb[0].mxu0
      %v4079 = vadd.f32 0.0, %v4078
      %v4080 = vpop.f32.mrb[0].mxu0
      %4081 = vmatprep.mubr.bf16.mxu0 0
      %4082 = vmatmul.mubr.bf16.gmra.mrb[0].mxu0 %v3982
      %v4083 = vpop.f32.mrb[0].mxu0
      %v4084 = vadd.f32 0.0, %v4083
      %v4085 = vpop.f32.mrb[0].mxu0
      %v4086 = vpop.f32.mrb[0].mxu0
      %v4087 = vadd.f32 0.0, %v4086
      %v4088 = vpop.f32.mrb[0].mxu0
      %4089 = vmatprep.mubr.bf16.mxu0 0
      %4090 = vmatmul.mubr.bf16.gmra.mrb[0].mxu0 %v3985
      %v4091 = vpop.f32.mrb[0].mxu0
      %v4092 = vadd.f32 0.0, %v4091
      %v4093 = vpop.f32.mrb[0].mxu0
      %v4094 = vpop.f32.mrb[0].mxu0
      %v4095 = vadd.f32 0.0, %v4094
      %v4096 = vpop.f32.mrb[0].mxu0
      %4097 = vmatprep.mubr.bf16.mxu0 0
      %4098 = vmatmul.mubr.bf16.gmra.mrb[0].mxu0 %v3988
      %v4099 = vpop.f32.mrb[0].mxu0
      %v4100 = vadd.f32 0.0, %v4099
      %v4101 = vpop.f32.mrb[0].mxu0
      %v4102 = vpop.f32.mrb[0].mxu0
      %v4103 = vadd.f32 0.0, %v4102
      %v4104 = vpop.f32.mrb[0].mxu0
      %4105 = vmatprep.mubr.bf16.mxu0 0
      %4106 = vmatmul.mubr.bf16.gmra.mrb[0].mxu0 %v3991
      %v4107 = vpop.f32.mrb[0].mxu0
      %v4108 = vadd.f32 0.0, %v4107
      %v4109 = vpop.f32.mrb[0].mxu0
      %v4110 = vpop.f32.mrb[0].mxu0
      %v4111 = vadd.f32 0.0, %v4110
      %v4112 = vpop.f32.mrb[0].mxu0
      %4113 = vmatprep.mubr.bf16.mxu0 0
      %4114 = vmatmul.mubr.bf16.gmra.mrb[0].mxu0 %v3994
      %v4115 = vpop.f32.mrb[0].mxu0
      %v4116 = vadd.f32 0.0, %v4115
      %v4117 = vpop.f32.mrb[0].mxu0
      %v4118 = vpop.f32.mrb[0].mxu0
      %v4119 = vadd.f32 0.0, %v4118
      %v4120 = vpop.f32.mrb[0].mxu0
      %4121 = vmatprep.mubr.bf16.mxu0 0
      %4122 = vmatmul.mubr.bf16.gmra.mrb[0].mxu0 %v3997
      %v4123 = vpop.f32.mrb[0].mxu0
      %v4124 = vadd.f32 0.0, %v4123
      %v4125 = vpop.f32.mrb[0].mxu0
      %v4126 = vpop.f32.mrb[0].mxu0
      %v4127 = vadd.f32 0.0, %v4126
      %v4128 = vpop.f32.mrb[0].mxu0
      %4129 = vmatprep.mubr.bf16.mxu0 0
      %4130 = vmatmul.mubr.bf16.gmra.mrb[0].mxu0 %v4000
      %v4131 = vpop.f32.mrb[0].mxu0
      %v4132 = vadd.f32 0.0, %v4131
      %v4133 = vpop.f32.mrb[0].mxu0
      %v4134 = vpop.f32.mrb[0].mxu0
      %v4135 = vadd.f32 0.0, %v4134
      %v4136 = vpop.f32.mrb[0].mxu0
      %4137 = vmatprep.mubr.bf16.mxu0 0
      %4138 = vmatmul.mubr.bf16.gmra.mrb[0].mxu0 %v4003
      %v4139 = vpop.f32.mrb[0].mxu0
      %v4140 = vadd.f32 0.0, %v4139
      %v4141 = vpop.f32.mrb[0].mxu0
      %v4142 = vpop.f32.mrb[0].mxu0
      %v4143 = vadd.f32 0.0, %v4142
      %v4144 = vpop.f32.mrb[0].mxu0
      %4145 = vmatprep.mubr.bf16.mxu0 0
      %4146 = vmatmul.mubr.bf16.gmra.mrb[0].mxu0 %v4006
      %v4147 = vpop.f32.mrb[0].mxu0
      %v4148 = vadd.f32 0.0, %v4147
      %v4149 = vpop.f32.mrb[0].mxu0
      %v4150 = vpop.f32.mrb[0].mxu0
      %v4151 = vadd.f32 0.0, %v4150
      %v4152 = vpop.f32.mrb[0].mxu0
      %4153 = vmatprep.mubr.bf16.mxu0 0
      %4154 = vmatmul.mubr.bf16.gmra.mrb[0].mxu0 %v4009
      %v4155 = vpop.f32.mrb[0].mxu0
      %v4156 = vadd.f32 0.0, %v4155
      %v4157 = vpop.f32.mrb[0].mxu0
      %v4158 = vpop.f32.mrb[0].mxu0
      %v4159 = vadd.f32 0.0, %v4158
      %v4160 = vpop.f32.mrb[0].mxu0
      %4161 = vmatprep.mubr.bf16.mxu0 0
      %4162 = vmatmul.mubr.bf16.gmra.mrb[0].mxu0 %v4012
      %v4163 = vpop.f32.mrb[0].mxu0
      %v4164 = vadd.f32 0.0, %v4163
      %v4165 = vpop.f32.mrb[0].mxu0
      %v4166 = vpop.f32.mrb[0].mxu0
      %v4167 = vadd.f32 0.0, %v4166
      %v4168 = vpop.f32.mrb[0].mxu0
      %4169 = vmatprep.mubr.bf16.mxu0 0
      %4170 = vmatmul.mubr.bf16.gmra.mrb[0].mxu0 %v4015
      %v4171 = vpop.f32.mrb[0].mxu0
      %v4172 = vadd.f32 0.0, %v4171
      %v4173 = vpop.f32.mrb[0].mxu0
      %v4174 = vpop.f32.mrb[0].mxu0
      %v4175 = vadd.f32 0.0, %v4174
      %v4176 = vpop.f32.mrb[0].mxu0
      %4177 = vdwg.mxu0
      %v4178 = vadd.f32 %v3496, %v4052
      %v4179 = vadd.f32 %v3497, %v4055
      %v4180 = vadd.f32 %v3498, %v4060
      %v4181 = vadd.f32 %v3499, %v4063
      %v4182 = vadd.f32 %v3500, %v4068
      %v4183 = vadd.f32 %v3501, %v4071
      %v4184 = vadd.f32 %v3502, %v4076
      %v4185 = vadd.f32 %v3503, %v4079
      %v4186 = vadd.f32 %v3504, %v4084
      %v4187 = vadd.f32 %v3505, %v4087
      %v4188 = vadd.f32 %v3506, %v4092
      %v4189 = vadd.f32 %v3507, %v4095
      %v4190 = vadd.f32 %v3508, %v4100
      %v4191 = vadd.f32 %v3509, %v4103
      %v4192 = vadd.f32 %v3510, %v4108
      %v4193 = vadd.f32 %v3511, %v4111
      %v4194 = vadd.f32 %v3512, %v4116
      %v4195 = vadd.f32 %v3513, %v4119
      %v4196 = vadd.f32 %v3514, %v4124
      %v4197 = vadd.f32 %v3515, %v4127
      %v4198 = vadd.f32 %v3516, %v4132
      %v4199 = vadd.f32 %v3517, %v4135
      %v4200 = vadd.f32 %v3518, %v4140
      %v4201 = vadd.f32 %v3519, %v4143
      %v4202 = vadd.f32 %v3520, %v4148
      %v4203 = vadd.f32 %v3521, %v4151
      %v4204 = vadd.f32 %v3522, %v4156
      %v4205 = vadd.f32 %v3523, %v4159
      %v4206 = vadd.f32 %v3524, %v4164
      %v4207 = vadd.f32 %v3525, %v4167
      %v4208 = vadd.f32 %v3526, %v4172
      %v4209 = vadd.f32 %v3527, %v4175
      %v4226 = vrot.slane %v3150, 5
      %v4227 = vrot.slane %v4226, 4
      %v4228 = vrot.slane %v3151, 5
      %v4229 = vsel %vm1245, %v4227, %v4228
      %v4230 = vrot.slane %v4228, 4
      %v4231 = vrot.slane %v3152, 5
      %v4232 = vsel %vm1245, %v4230, %v4231
      %v4233 = vrot.slane %v3153, 5
      %v4234 = vrot.slane %v4233, 4
      %v4235 = vrot.slane %v3154, 5
      %v4236 = vsel %vm1245, %v4234, %v4235
      %v4237 = vrot.slane %v4235, 4
      %v4238 = vrot.slane %v3155, 5
      %v4239 = vsel %vm1245, %v4237, %v4238
      %v4240 = vrot.slane %v3156, 5
      %v4241 = vrot.slane %v4240, 4
      %v4242 = vrot.slane %v3157, 5
      %v4243 = vsel %vm1245, %v4241, %v4242
      %v4244 = vrot.slane %v4242, 4
      %v4245 = vrot.slane %v3158, 5
      %v4246 = vsel %vm1245, %v4244, %v4245
      %v4247 = vrot.slane %v3159, 5
      %v4248 = vrot.slane %v4247, 4
      %v4249 = vrot.slane %v3160, 5
      %v4250 = vsel %vm1245, %v4248, %v4249
      %v4251 = vrot.slane %v4249, 4
      %v4252 = vrot.slane %v3161, 5
      %v4253 = vsel %vm1245, %v4251, %v4252
      %v4254 = vrot.slane %v3162, 5
      %v4255 = vrot.slane %v4254, 4
      %v4256 = vrot.slane %v3163, 5
      %v4257 = vsel %vm1245, %v4255, %v4256
      %v4258 = vrot.slane %v4256, 4
      %v4259 = vrot.slane %v3164, 5
      %v4260 = vsel %vm1245, %v4258, %v4259
      %v4261 = vrot.slane %v3165, 5
      %v4262 = vrot.slane %v4261, 4
      %v4263 = vrot.slane %v3166, 5
      %v4264 = vsel %vm1245, %v4262, %v4263
      %v4265 = vrot.slane %v4263, 4
      %v4266 = vrot.slane %v3167, 5
      %v4267 = vsel %vm1245, %v4265, %v4266
      %v4268 = vrot.slane %v3168, 5
      %v4269 = vrot.slane %v4268, 4
      %v4270 = vrot.slane %v3169, 5
      %v4271 = vsel %vm1245, %v4269, %v4270
      %v4272 = vrot.slane %v4270, 4
      %v4273 = vrot.slane %v3170, 5
      %v4274 = vsel %vm1245, %v4272, %v4273
      %v4275 = vrot.slane %v3171, 5
      %v4276 = vrot.slane %v4275, 4
      %v4277 = vrot.slane %v3172, 5
      %v4278 = vsel %vm1245, %v4276, %v4277
      %v4279 = vrot.slane %v4277, 4
      %v4280 = vrot.slane %v3173, 5
      %v4281 = vsel %vm1245, %v4279, %v4280
      %v4282 = vrot.slane %v3174, 5
      %v4283 = vrot.slane %v4282, 4
      %v4284 = vrot.slane %v3175, 5
      %v4285 = vsel %vm1245, %v4283, %v4284
      %v4286 = vrot.slane %v4284, 4
      %v4287 = vrot.slane %v3176, 5
      %v4288 = vsel %vm1245, %v4286, %v4287
      %v4289 = vrot.slane %v3177, 5
      %v4290 = vrot.slane %v4289, 4
      %v4291 = vrot.slane %v3178, 5
      %v4292 = vsel %vm1245, %v4290, %v4291
      %v4293 = vrot.slane %v4291, 4
      %v4294 = vrot.slane %v3179, 5
      %v4295 = vsel %vm1245, %v4293, %v4294
      %v4296 = vrot.slane %v3180, 5
      %v4297 = vrot.slane %v4296, 4
      %v4298 = vrot.slane %v3181, 5
      %v4299 = vsel %vm1245, %v4297, %v4298
      %v4300 = vrot.slane %v4298, 4
      %v4301 = vrot.slane %v3182, 5
      %v4302 = vsel %vm1245, %v4300, %v4301
      %v4303 = vrot.slane %v3183, 5
      %v4304 = vrot.slane %v4303, 4
      %v4305 = vrot.slane %v3184, 5
      %v4306 = vsel %vm1245, %v4304, %v4305
      %v4307 = vrot.slane %v4305, 4
      %v4308 = vrot.slane %v3185, 5
      %v4309 = vsel %vm1245, %v4307, %v4308
      %v4310 = vrot.slane %v3186, 5
      %v4311 = vrot.slane %v4310, 4
      %v4312 = vrot.slane %v3187, 5
      %v4313 = vsel %vm1245, %v4311, %v4312
      %v4314 = vrot.slane %v4312, 4
      %v4315 = vrot.slane %v3188, 5
      %v4316 = vsel %vm1245, %v4314, %v4315
      %v4317 = vrot.slane %v3189, 5
      %v4318 = vrot.slane %v4317, 4
      %v4319 = vrot.slane %v3190, 5
      %v4320 = vsel %vm1245, %v4318, %v4319
      %v4321 = vrot.slane %v4319, 4
      %v4322 = vrot.slane %v3191, 5
      %v4323 = vsel %vm1245, %v4321, %v4322
      %v4324 = vrot.slane %v3192, 5
      %v4325 = vrot.slane %v4324, 4
      %v4326 = vrot.slane %v3193, 5
      %v4327 = vsel %vm1245, %v4325, %v4326
      %v4328 = vrot.slane %v4326, 4
      %v4329 = vrot.slane %v3194, 5
      %v4330 = vsel %vm1245, %v4328, %v4329
      %v4331 = vrot.slane %v3195, 5
      %v4332 = vrot.slane %v4331, 4
      %v4333 = vrot.slane %v3196, 5
      %v4334 = vsel %vm1245, %v4332, %v4333
      %v4335 = vrot.slane %v4333, 4
      %v4336 = vrot.slane %v3197, 5
      %v4337 = vsel %vm1245, %v4335, %v4336
      %s4338 = scalar_lea.vmem %s1, 64
      %v4339 = vld [vmem:[%s4338] sm:$0xf]
      %v4340 = vld [vmem:[%s4338 + $0x4] sm:$0xf]
      %v4341 = vunpack.c.l.b16 %v4229
      %v4342 = vunpack.c.l.b16 %v4232
      %v4343 = vunpack.c.l.b16 %v4236
      %v4344 = vunpack.c.l.b16 %v4239
      %v4345 = vunpack.c.l.b16 %v4243
      %v4346 = vunpack.c.l.b16 %v4246
      %v4347 = vunpack.c.l.b16 %v4250
      %v4348 = vunpack.c.l.b16 %v4253
      %v4349 = vunpack.c.l.b16 %v4257
      %v4350 = vunpack.c.l.b16 %v4260
      %v4351 = vunpack.c.l.b16 %v4264
      %v4352 = vunpack.c.l.b16 %v4267
      %v4353 = vunpack.c.l.b16 %v4271
      %v4354 = vunpack.c.l.b16 %v4274
      %v4355 = vunpack.c.l.b16 %v4278
      %v4356 = vunpack.c.l.b16 %v4281
      %v4357 = vunpack.c.l.b16 %v4285
      %v4358 = vunpack.c.l.b16 %v4288
      %v4359 = vunpack.c.l.b16 %v4292
      %v4360 = vunpack.c.l.b16 %v4295
      %v4361 = vunpack.c.l.b16 %v4299
      %v4362 = vunpack.c.l.b16 %v4302
      %v4363 = vunpack.c.l.b16 %v4306
      %v4364 = vunpack.c.l.b16 %v4309
      %v4365 = vunpack.c.l.b16 %v4313
      %v4366 = vunpack.c.l.b16 %v4316
      %v4367 = vunpack.c.l.b16 %v4320
      %v4368 = vunpack.c.l.b16 %v4323
      %v4369 = vunpack.c.l.b16 %v4327
      %v4370 = vunpack.c.l.b16 %v4330
      %v4371 = vunpack.c.l.b16 %v4334
      %v4372 = vunpack.c.l.b16 %v4337
      %v4373 = vpack.c.b16 %v4342, %v4341
      %v4374 = vpack.c.b16 %v4344, %v4343
      %v4375 = vpack.c.b16 %v4346, %v4345
      %v4376 = vpack.c.b16 %v4348, %v4347
      %v4377 = vpack.c.b16 %v4350, %v4349
      %v4378 = vpack.c.b16 %v4352, %v4351
      %v4379 = vpack.c.b16 %v4354, %v4353
      %v4380 = vpack.c.b16 %v4356, %v4355
      %v4381 = vpack.c.b16 %v4358, %v4357
      %v4382 = vpack.c.b16 %v4360, %v4359
      %v4383 = vpack.c.b16 %v4362, %v4361
      %v4384 = vpack.c.b16 %v4364, %v4363
      %v4385 = vpack.c.b16 %v4366, %v4365
      %v4386 = vpack.c.b16 %v4368, %v4367
      %v4387 = vpack.c.b16 %v4370, %v4369
      %v4388 = vpack.c.b16 %v4372, %v4371
      %v4391 = vunpack.c.l.b16 %v4339
      %v4392 = vunpack.c.l.b16 %v4340
      %v4393 = vpack.c.b16 %v4392, %v4391
      %v4396 = vsel %vm722, %v4373, 0
      %v4399 = vsel %vm722, %v4374, 0
      %v4402 = vsel %vm722, %v4375, 0
      %v4405 = vsel %vm722, %v4376, 0
      %v4408 = vsel %vm722, %v4377, 0
      %v4411 = vsel %vm722, %v4378, 0
      %v4414 = vsel %vm722, %v4379, 0
      %v4417 = vsel %vm722, %v4380, 0
      %v4420 = vsel %vm722, %v4381, 0
      %v4423 = vsel %vm722, %v4382, 0
      %v4426 = vsel %vm722, %v4383, 0
      %v4429 = vsel %vm722, %v4384, 0
      %v4432 = vsel %vm722, %v4385, 0
      %v4435 = vsel %vm722, %v4386, 0
      %v4438 = vsel %vm722, %v4387, 0
      %v4441 = vsel %vm722, %v4388, 0
      %4443 = vmatprep.subr.bf16.mxu0 0
      %4444 = vmatpush1.bf16.msra.mxu0 %v4393
      %4445 = vmatprep.subr.bf16.mxu0 0
      %4446 = vmatpush1.bf16.msra.mxu0 0
      %4447 = vmatprep.subr.bf16.mxu0 0
      %4448 = vmatpush1.bf16.msra.mxu0 0
      %4449 = vmatprep.subr.bf16.mxu0 0
      %4450 = vmatpush1.bf16.msra.mxu0 0
      %4451 = vmatprep.subr.bf16.mxu0 0
      %4452 = vmatpush1.bf16.msra.mxu0 0
      %4453 = vmatprep.subr.bf16.mxu0 0
      %4454 = vmatpush1.bf16.msra.mxu0 0
      %4455 = vmatprep.subr.bf16.mxu0 0
      %4456 = vmatpush1.bf16.msra.mxu0 0
      %4457 = vmatprep.subr.bf16.mxu0 0
      %4458 = vmatpush1.bf16.msra.mxu0 0
      %4459 = vmatprep.subr.bf16.mxu0 0
      %4460 = vmatpush1.bf16.msra.mxu0 0
      %4461 = vmatprep.subr.bf16.mxu0 0
      %4462 = vmatpush1.bf16.msra.mxu0 0
      %4463 = vmatprep.subr.bf16.mxu0 0
      %4464 = vmatpush1.bf16.msra.mxu0 0
      %4465 = vmatprep.subr.bf16.mxu0 0
      %4466 = vmatpush1.bf16.msra.mxu0 0
      %4467 = vmatprep.subr.bf16.mxu0 0
      %4468 = vmatpush1.bf16.msra.mxu0 0
      %4469 = vmatprep.subr.bf16.mxu0 0
      %4470 = vmatpush1.bf16.msra.mxu0 0
      %4471 = vmatprep.subr.bf16.mxu0 0
      %4472 = vmatpush1.bf16.msra.mxu0 0
      %4473 = vmatprep.subr.bf16.mxu0 0
      %4474 = vmatpush1.bf16.msra.mxu0 0
      %4475 = vmatprep.mubr.bf16.mxu0 0
      %4476 = vmatmul.mubr.bf16.gmra.mrb[0].mxu0 %v4396
      %v4477 = vpop.f32.mrb[0].mxu0
      %v4478 = vadd.f32 0.0, %v4477
      %v4479 = vpop.f32.mrb[0].mxu0
      %v4480 = vpop.f32.mrb[0].mxu0
      %v4481 = vadd.f32 0.0, %v4480
      %v4482 = vpop.f32.mrb[0].mxu0
      %4483 = vmatprep.mubr.bf16.mxu0 0
      %4484 = vmatmul.mubr.bf16.gmra.mrb[0].mxu0 %v4399
      %v4485 = vpop.f32.mrb[0].mxu0
      %v4486 = vadd.f32 0.0, %v4485
      %v4487 = vpop.f32.mrb[0].mxu0
      %v4488 = vpop.f32.mrb[0].mxu0
      %v4489 = vadd.f32 0.0, %v4488
      %v4490 = vpop.f32.mrb[0].mxu0
      %4491 = vmatprep.mubr.bf16.mxu0 0
      %4492 = vmatmul.mubr.bf16.gmra.mrb[0].mxu0 %v4402
      %v4493 = vpop.f32.mrb[0].mxu0
      %v4494 = vadd.f32 0.0, %v4493
      %v4495 = vpop.f32.mrb[0].mxu0
      %v4496 = vpop.f32.mrb[0].mxu0
      %v4497 = vadd.f32 0.0, %v4496
      %v4498 = vpop.f32.mrb[0].mxu0
      %4499 = vmatprep.mubr.bf16.mxu0 0
      %4500 = vmatmul.mubr.bf16.gmra.mrb[0].mxu0 %v4405
      %v4501 = vpop.f32.mrb[0].mxu0
      %v4502 = vadd.f32 0.0, %v4501
      %v4503 = vpop.f32.mrb[0].mxu0
      %v4504 = vpop.f32.mrb[0].mxu0
      %v4505 = vadd.f32 0.0, %v4504
      %v4506 = vpop.f32.mrb[0].mxu0
      %4507 = vmatprep.mubr.bf16.mxu0 0
      %4508 = vmatmul.mubr.bf16.gmra.mrb[0].mxu0 %v4408
      %v4509 = vpop.f32.mrb[0].mxu0
      %v4510 = vadd.f32 0.0, %v4509
      %v4511 = vpop.f32.mrb[0].mxu0
      %v4512 = vpop.f32.mrb[0].mxu0
      %v4513 = vadd.f32 0.0, %v4512
      %v4514 = vpop.f32.mrb[0].mxu0
      %4515 = vmatprep.mubr.bf16.mxu0 0
      %4516 = vmatmul.mubr.bf16.gmra.mrb[0].mxu0 %v4411
      %v4517 = vpop.f32.mrb[0].mxu0
      %v4518 = vadd.f32 0.0, %v4517
      %v4519 = vpop.f32.mrb[0].mxu0
      %v4520 = vpop.f32.mrb[0].mxu0
      %v4521 = vadd.f32 0.0, %v4520
      %v4522 = vpop.f32.mrb[0].mxu0
      %4523 = vmatprep.mubr.bf16.mxu0 0
      %4524 = vmatmul.mubr.bf16.gmra.mrb[0].mxu0 %v4414
      %v4525 = vpop.f32.mrb[0].mxu0
      %v4526 = vadd.f32 0.0, %v4525
      %v4527 = vpop.f32.mrb[0].mxu0
      %v4528 = vpop.f32.mrb[0].mxu0
      %v4529 = vadd.f32 0.0, %v4528
      %v4530 = vpop.f32.mrb[0].mxu0
      %4531 = vmatprep.mubr.bf16.mxu0 0
      %4532 = vmatmul.mubr.bf16.gmra.mrb[0].mxu0 %v4417
      %v4533 = vpop.f32.mrb[0].mxu0
      %v4534 = vadd.f32 0.0, %v4533
      %v4535 = vpop.f32.mrb[0].mxu0
      %v4536 = vpop.f32.mrb[0].mxu0
      %v4537 = vadd.f32 0.0, %v4536
      %v4538 = vpop.f32.mrb[0].mxu0
      %4539 = vmatprep.mubr.bf16.mxu0 0
      %4540 = vmatmul.mubr.bf16.gmra.mrb[0].mxu0 %v4420
      %v4541 = vpop.f32.mrb[0].mxu0
      %v4542 = vadd.f32 0.0, %v4541
      %v4543 = vpop.f32.mrb[0].mxu0
      %v4544 = vpop.f32.mrb[0].mxu0
      %v4545 = vadd.f32 0.0, %v4544
      %v4546 = vpop.f32.mrb[0].mxu0
      %4547 = vmatprep.mubr.bf16.mxu0 0
      %4548 = vmatmul.mubr.bf16.gmra.mrb[0].mxu0 %v4423
      %v4549 = vpop.f32.mrb[0].mxu0
      %v4550 = vadd.f32 0.0, %v4549
      %v4551 = vpop.f32.mrb[0].mxu0
      %v4552 = vpop.f32.mrb[0].mxu0
      %v4553 = vadd.f32 0.0, %v4552
      %v4554 = vpop.f32.mrb[0].mxu0
      %4555 = vmatprep.mubr.bf16.mxu0 0
      %4556 = vmatmul.mubr.bf16.gmra.mrb[0].mxu0 %v4426
      %v4557 = vpop.f32.mrb[0].mxu0
      %v4558 = vadd.f32 0.0, %v4557
      %v4559 = vpop.f32.mrb[0].mxu0
      %v4560 = vpop.f32.mrb[0].mxu0
      %v4561 = vadd.f32 0.0, %v4560
      %v4562 = vpop.f32.mrb[0].mxu0
      %4563 = vmatprep.mubr.bf16.mxu0 0
      %4564 = vmatmul.mubr.bf16.gmra.mrb[0].mxu0 %v4429
      %v4565 = vpop.f32.mrb[0].mxu0
      %v4566 = vadd.f32 0.0, %v4565
      %v4567 = vpop.f32.mrb[0].mxu0
      %v4568 = vpop.f32.mrb[0].mxu0
      %v4569 = vadd.f32 0.0, %v4568
      %v4570 = vpop.f32.mrb[0].mxu0
      %4571 = vmatprep.mubr.bf16.mxu0 0
      %4572 = vmatmul.mubr.bf16.gmra.mrb[0].mxu0 %v4432
      %v4573 = vpop.f32.mrb[0].mxu0
      %v4574 = vadd.f32 0.0, %v4573
      %v4575 = vpop.f32.mrb[0].mxu0
      %v4576 = vpop.f32.mrb[0].mxu0
      %v4577 = vadd.f32 0.0, %v4576
      %v4578 = vpop.f32.mrb[0].mxu0
      %4579 = vmatprep.mubr.bf16.mxu0 0
      %4580 = vmatmul.mubr.bf16.gmra.mrb[0].mxu0 %v4435
      %v4581 = vpop.f32.mrb[0].mxu0
      %v4582 = vadd.f32 0.0, %v4581
      %v4583 = vpop.f32.mrb[0].mxu0
      %v4584 = vpop.f32.mrb[0].mxu0
      %v4585 = vadd.f32 0.0, %v4584
      %v4586 = vpop.f32.mrb[0].mxu0
      %4587 = vmatprep.mubr.bf16.mxu0 0
      %4588 = vmatmul.mubr.bf16.gmra.mrb[0].mxu0 %v4438
      %v4589 = vpop.f32.mrb[0].mxu0
      %v4590 = vadd.f32 0.0, %v4589
      %v4591 = vpop.f32.mrb[0].mxu0
      %v4592 = vpop.f32.mrb[0].mxu0
      %v4593 = vadd.f32 0.0, %v4592
      %v4594 = vpop.f32.mrb[0].mxu0
      %4595 = vmatprep.mubr.bf16.mxu0 0
      %4596 = vmatmul.mubr.bf16.gmra.mrb[0].mxu0 %v4441
      %v4597 = vpop.f32.mrb[0].mxu0
      %v4598 = vadd.f32 0.0, %v4597
      %v4599 = vpop.f32.mrb[0].mxu0
      %v4600 = vpop.f32.mrb[0].mxu0
      %v4601 = vadd.f32 0.0, %v4600
      %v4602 = vpop.f32.mrb[0].mxu0
      %4603 = vdwg.mxu0
      %v4604 = vadd.f32 %v4178, %v4478
      %v4605 = vadd.f32 %v4179, %v4481
      %v4606 = vadd.f32 %v4180, %v4486
      %v4607 = vadd.f32 %v4181, %v4489
      %v4608 = vadd.f32 %v4182, %v4494
      %v4609 = vadd.f32 %v4183, %v4497
      %v4610 = vadd.f32 %v4184, %v4502
      %v4611 = vadd.f32 %v4185, %v4505
      %v4612 = vadd.f32 %v4186, %v4510
      %v4613 = vadd.f32 %v4187, %v4513
      %v4614 = vadd.f32 %v4188, %v4518
      %v4615 = vadd.f32 %v4189, %v4521
      %v4616 = vadd.f32 %v4190, %v4526
      %v4617 = vadd.f32 %v4191, %v4529
      %v4618 = vadd.f32 %v4192, %v4534
      %v4619 = vadd.f32 %v4193, %v4537
      %v4620 = vadd.f32 %v4194, %v4542
      %v4621 = vadd.f32 %v4195, %v4545
      %v4622 = vadd.f32 %v4196, %v4550
      %v4623 = vadd.f32 %v4197, %v4553
      %v4624 = vadd.f32 %v4198, %v4558
      %v4625 = vadd.f32 %v4199, %v4561
      %v4626 = vadd.f32 %v4200, %v4566
      %v4627 = vadd.f32 %v4201, %v4569
      %v4628 = vadd.f32 %v4202, %v4574
      %v4629 = vadd.f32 %v4203, %v4577
      %v4630 = vadd.f32 %v4204, %v4582
      %v4631 = vadd.f32 %v4205, %v4585
      %v4632 = vadd.f32 %v4206, %v4590
      %v4633 = vadd.f32 %v4207, %v4593
      %v4634 = vadd.f32 %v4208, %v4598
      %v4635 = vadd.f32 %v4209, %v4601
      %v4636 = vld [vmem:[%s2] sm:$0x1]
      %v4638 = vlaneseq
      %v4639 = vshrl.u32 %v4638, 7
      %v4640 = vsub.s32 0, %v4639
      %v4641 = vrot.slane %v4636, %v4640
      %v4643 = vmul.f32 %v4604, %v4641
      %v4644 = vmul.f32 %v4605, %v4641
      %v4645 = vmul.f32 %v4606, %v4641
      %v4646 = vmul.f32 %v4607, %v4641
      %v4647 = vmul.f32 %v4608, %v4641
      %v4648 = vmul.f32 %v4609, %v4641
      %v4649 = vmul.f32 %v4610, %v4641
      %v4650 = vmul.f32 %v4611, %v4641
      %v4651 = vmul.f32 %v4612, %v4641
      %v4652 = vmul.f32 %v4613, %v4641
      %v4653 = vmul.f32 %v4614, %v4641
      %v4654 = vmul.f32 %v4615, %v4641
      %v4655 = vmul.f32 %v4616, %v4641
      %v4656 = vmul.f32 %v4617, %v4641
      %v4657 = vmul.f32 %v4618, %v4641
      %v4658 = vmul.f32 %v4619, %v4641
      %v4659 = vmul.f32 %v4620, %v4641
      %v4660 = vmul.f32 %v4621, %v4641
      %v4661 = vmul.f32 %v4622, %v4641
      %v4662 = vmul.f32 %v4623, %v4641
      %v4663 = vmul.f32 %v4624, %v4641
      %v4664 = vmul.f32 %v4625, %v4641
      %v4665 = vmul.f32 %v4626, %v4641
      %v4666 = vmul.f32 %v4627, %v4641
      %v4667 = vmul.f32 %v4628, %v4641
      %v4668 = vmul.f32 %v4629, %v4641
      %v4669 = vmul.f32 %v4630, %v4641
      %v4670 = vmul.f32 %v4631, %v4641
      %v4671 = vmul.f32 %v4632, %v4641
      %v4672 = vmul.f32 %v4633, %v4641
      %v4673 = vmul.f32 %v4634, %v4641
      %v4674 = vmul.f32 %v4635, %v4641
      %v4675 = vld [vmem:[%s3] sm:$0x1]
      %v4677 = vlaneseq
      %v4678 = vshrl.u32 %v4677, 7
      %v4679 = vsub.s32 0, %v4678
      %v4680 = vrot.slane %v4675, %v4679
      %v4682 = vadd.f32 %v4643, %v4680
      %v4683 = vadd.f32 %v4644, %v4680
      %v4684 = vadd.f32 %v4645, %v4680
      %v4685 = vadd.f32 %v4646, %v4680
      %v4686 = vadd.f32 %v4647, %v4680
      %v4687 = vadd.f32 %v4648, %v4680
      %v4688 = vadd.f32 %v4649, %v4680
      %v4689 = vadd.f32 %v4650, %v4680
      %v4690 = vadd.f32 %v4651, %v4680
      %v4691 = vadd.f32 %v4652, %v4680
      %v4692 = vadd.f32 %v4653, %v4680
      %v4693 = vadd.f32 %v4654, %v4680
      %v4694 = vadd.f32 %v4655, %v4680
      %v4695 = vadd.f32 %v4656, %v4680
      %v4696 = vadd.f32 %v4657, %v4680
      %v4697 = vadd.f32 %v4658, %v4680
      %v4698 = vadd.f32 %v4659, %v4680
      %v4699 = vadd.f32 %v4660, %v4680
      %v4700 = vadd.f32 %v4661, %v4680
      %v4701 = vadd.f32 %v4662, %v4680
      %v4702 = vadd.f32 %v4663, %v4680
      %v4703 = vadd.f32 %v4664, %v4680
      %v4704 = vadd.f32 %v4665, %v4680
      %v4705 = vadd.f32 %v4666, %v4680
      %v4706 = vadd.f32 %v4667, %v4680
      %v4707 = vadd.f32 %v4668, %v4680
      %v4708 = vadd.f32 %v4669, %v4680
      %v4709 = vadd.f32 %v4670, %v4680
      %v4710 = vadd.f32 %v4671, %v4680
      %v4711 = vadd.f32 %v4672, %v4680
      %v4712 = vadd.f32 %v4673, %v4680
      %v4713 = vadd.f32 %v4674, %v4680
      %v4714 = vmax.f32 %v4682, 0.0
      %v4715 = vmax.f32 %v4683, 0.0
      %v4716 = vmax.f32 %v4684, 0.0
      %v4717 = vmax.f32 %v4685, 0.0
      %v4718 = vmax.f32 %v4686, 0.0
      %v4719 = vmax.f32 %v4687, 0.0
      %v4720 = vmax.f32 %v4688, 0.0
      %v4721 = vmax.f32 %v4689, 0.0
      %v4722 = vmax.f32 %v4690, 0.0
      %v4723 = vmax.f32 %v4691, 0.0
      %v4724 = vmax.f32 %v4692, 0.0
      %v4725 = vmax.f32 %v4693, 0.0
      %v4726 = vmax.f32 %v4694, 0.0
      %v4727 = vmax.f32 %v4695, 0.0
      %v4728 = vmax.f32 %v4696, 0.0
      %v4729 = vmax.f32 %v4697, 0.0
      %v4730 = vmax.f32 %v4698, 0.0
      %v4731 = vmax.f32 %v4699, 0.0
      %v4732 = vmax.f32 %v4700, 0.0
      %v4733 = vmax.f32 %v4701, 0.0
      %v4734 = vmax.f32 %v4702, 0.0
      %v4735 = vmax.f32 %v4703, 0.0
      %v4736 = vmax.f32 %v4704, 0.0
      %v4737 = vmax.f32 %v4705, 0.0
      %v4738 = vmax.f32 %v4706, 0.0
      %v4739 = vmax.f32 %v4707, 0.0
      %v4740 = vmax.f32 %v4708, 0.0
      %v4741 = vmax.f32 %v4709, 0.0
      %v4742 = vmax.f32 %v4710, 0.0
      %v4743 = vmax.f32 %v4711, 0.0
      %v4744 = vmax.f32 %v4712, 0.0
      %v4745 = vmax.f32 %v4713, 0.0
      %v4746 = vpack.c.bf16 %v4715, %v4714
      %v4747 = vpack.c.bf16 %v4717, %v4716
      %v4748 = vpack.c.bf16 %v4719, %v4718
      %v4749 = vpack.c.bf16 %v4721, %v4720
      %v4750 = vpack.c.bf16 %v4723, %v4722
      %v4751 = vpack.c.bf16 %v4725, %v4724
      %v4752 = vpack.c.bf16 %v4727, %v4726
      %v4753 = vpack.c.bf16 %v4729, %v4728
      %v4754 = vpack.c.bf16 %v4731, %v4730
      %v4755 = vpack.c.bf16 %v4733, %v4732
      %v4756 = vpack.c.bf16 %v4735, %v4734
      %v4757 = vpack.c.bf16 %v4737, %v4736
      %v4758 = vpack.c.bf16 %v4739, %v4738
      %v4759 = vpack.c.bf16 %v4741, %v4740
      %v4760 = vpack.c.bf16 %v4743, %v4742
      %v4761 = vpack.c.bf16 %v4745, %v4744
      %v4778 = vunpack.c.l.b16 %v4746
      %v4779 = vunpack.c.h.b16 %v4746
      %v4780 = vunpack.c.l.b16 %v4747
      %v4781 = vunpack.c.h.b16 %v4747
      %v4782 = vunpack.c.l.b16 %v4748
      %v4783 = vunpack.c.h.b16 %v4748
      %v4784 = vunpack.c.l.b16 %v4749
      %v4785 = vunpack.c.h.b16 %v4749
      %v4786 = vunpack.c.l.b16 %v4750
      %v4787 = vunpack.c.h.b16 %v4750
      %v4788 = vunpack.c.l.b16 %v4751
      %v4789 = vunpack.c.h.b16 %v4751
      %v4790 = vunpack.c.l.b16 %v4752
      %v4791 = vunpack.c.h.b16 %v4752
      %v4792 = vunpack.c.l.b16 %v4753
      %v4793 = vunpack.c.h.b16 %v4753
      %v4794 = vunpack.c.l.b16 %v4754
      %v4795 = vunpack.c.h.b16 %v4754
      %v4796 = vunpack.c.l.b16 %v4755
      %v4797 = vunpack.c.h.b16 %v4755
      %v4798 = vunpack.c.l.b16 %v4756
      %v4799 = vunpack.c.h.b16 %v4756
      %v4800 = vunpack.c.l.b16 %v4757
      %v4801 = vunpack.c.h.b16 %v4757
      %v4802 = vunpack.c.l.b16 %v4758
      %v4803 = vunpack.c.h.b16 %v4758
      %v4804 = vunpack.c.l.b16 %v4759
      %v4805 = vunpack.c.h.b16 %v4759
      %v4806 = vunpack.c.l.b16 %v4760
      %v4807 = vunpack.c.h.b16 %v4760
      %v4808 = vunpack.c.l.b16 %v4761
      %v4809 = vunpack.c.h.b16 %v4761
      %v4810 = vpack.c.b16 %v4778, %v4778
      %v4811 = vpack.c.b16 %v4779, %v4779
      %v4812 = vpack.c.b16 %v4780, %v4780
      %v4813 = vpack.c.b16 %v4781, %v4781
      %v4814 = vpack.c.b16 %v4782, %v4782
      %v4815 = vpack.c.b16 %v4783, %v4783
      %v4816 = vpack.c.b16 %v4784, %v4784
      %v4817 = vpack.c.b16 %v4785, %v4785
      %v4818 = vpack.c.b16 %v4786, %v4786
      %v4819 = vpack.c.b16 %v4787, %v4787
      %v4820 = vpack.c.b16 %v4788, %v4788
      %v4821 = vpack.c.b16 %v4789, %v4789
      %v4822 = vpack.c.b16 %v4790, %v4790
      %v4823 = vpack.c.b16 %v4791, %v4791
      %v4824 = vpack.c.b16 %v4792, %v4792
      %v4825 = vpack.c.b16 %v4793, %v4793
      %v4826 = vpack.c.b16 %v4794, %v4794
      %v4827 = vpack.c.b16 %v4795, %v4795
      %v4828 = vpack.c.b16 %v4796, %v4796
      %v4829 = vpack.c.b16 %v4797, %v4797
      %v4830 = vpack.c.b16 %v4798, %v4798
      %v4831 = vpack.c.b16 %v4799, %v4799
      %v4832 = vpack.c.b16 %v4800, %v4800
      %v4833 = vpack.c.b16 %v4801, %v4801
      %v4834 = vpack.c.b16 %v4802, %v4802
      %v4835 = vpack.c.b16 %v4803, %v4803
      %v4836 = vpack.c.b16 %v4804, %v4804
      %v4837 = vpack.c.b16 %v4805, %v4805
      %v4838 = vpack.c.b16 %v4806, %v4806
      %v4839 = vpack.c.b16 %v4807, %v4807
      %v4840 = vpack.c.b16 %v4808, %v4808
      %v4841 = vpack.c.b16 %v4809, %v4809
      %vm4874 = vcmask 125952
      %4875 = vst.msk [vmem:[%s221] sm:$0xf] %vm4874, %v4810
      %4876 = vst.msk [vmem:[%s221 + $0x4] sm:$0xf] %vm4874, %v4811
      %4877 = vst.msk [vmem:[%s221 + $0x8] sm:$0xf] %vm4874, %v4812
      %4878 = vst.msk [vmem:[%s221 + $0xc] sm:$0xf] %vm4874, %v4813
      %4879 = vst.msk [vmem:[%s221 + $0x10] sm:$0xf] %vm4874, %v4814
      %4880 = vst.msk [vmem:[%s221 + $0x14] sm:$0xf] %vm4874, %v4815
      %4881 = vst.msk [vmem:[%s221 + $0x18] sm:$0xf] %vm4874, %v4816
      %4882 = vst.msk [vmem:[%s221 + $0x1c] sm:$0xf] %vm4874, %v4817
      %4883 = vst.msk [vmem:[%s221 + $0x20] sm:$0xf] %vm4874, %v4818
      %4884 = vst.msk [vmem:[%s221 + $0x24] sm:$0xf] %vm4874, %v4819
      %4885 = vst.msk [vmem:[%s221 + $0x28] sm:$0xf] %vm4874, %v4820
      %4886 = vst.msk [vmem:[%s221 + $0x2c] sm:$0xf] %vm4874, %v4821
      %4887 = vst.msk [vmem:[%s221 + $0x30] sm:$0xf] %vm4874, %v4822
      %4888 = vst.msk [vmem:[%s221 + $0x34] sm:$0xf] %vm4874, %v4823
      %4889 = vst.msk [vmem:[%s221 + $0x38] sm:$0xf] %vm4874, %v4824
      %4890 = vst.msk [vmem:[%s221 + $0x3c] sm:$0xf] %vm4874, %v4825
      %4891 = vst.msk [vmem:[%s221 + $0x40] sm:$0xf] %vm4874, %v4826
      %4892 = vst.msk [vmem:[%s221 + $0x44] sm:$0xf] %vm4874, %v4827
      %4893 = vst.msk [vmem:[%s221 + $0x48] sm:$0xf] %vm4874, %v4828
      %4894 = vst.msk [vmem:[%s221 + $0x4c] sm:$0xf] %vm4874, %v4829
      %4895 = vst.msk [vmem:[%s221 + $0x50] sm:$0xf] %vm4874, %v4830
      %4896 = vst.msk [vmem:[%s221 + $0x54] sm:$0xf] %vm4874, %v4831
      %4897 = vst.msk [vmem:[%s221 + $0x58] sm:$0xf] %vm4874, %v4832
      %4898 = vst.msk [vmem:[%s221 + $0x5c] sm:$0xf] %vm4874, %v4833
      %4899 = vst.msk [vmem:[%s221 + $0x60] sm:$0xf] %vm4874, %v4834
      %4900 = vst.msk [vmem:[%s221 + $0x64] sm:$0xf] %vm4874, %v4835
      %4901 = vst.msk [vmem:[%s221 + $0x68] sm:$0xf] %vm4874, %v4836
      %4902 = vst.msk [vmem:[%s221 + $0x6c] sm:$0xf] %vm4874, %v4837
      %4903 = vst.msk [vmem:[%s221 + $0x70] sm:$0xf] %vm4874, %v4838
      %4904 = vst.msk [vmem:[%s221 + $0x74] sm:$0xf] %vm4874, %v4839
      %4905 = vst.msk [vmem:[%s221 + $0x78] sm:$0xf] %vm4874, %v4840
      %4906 = vst.msk [vmem:[%s221 + $0x7c] sm:$0xf] %vm4874, %v4841
      %s4907 = smul.u32 16, %s20
      %p4908 = scmp.lt.s32.totalorder %s19, 1
      %s4909 = scalar_select %p4908, %s19, 1
      %p4910 = scmp.lt.s32.totalorder %s4907, 15
      %s4911 = scalar_select %p4910, %s4907, 15
      %s4912 = smul.addr %s4911, 2
      %s4913 = smul.addr %s4909, 32
      %s4914 = sadd.s32 %s4912, %s4913
      %s4915 = smul.addr %s4914, 4
      %s4916 = scalar_lea.vmem %s4, %s4915
      // Predicated region
      $region37: #{_lambda_.4} parent=35 // pred_check
        %p4917 = pneg %p136
      $region38: #{_lambda_.4} parent=35 // pred_check_branch
        %4919 = sbr.rel (%p4917) target = $region40
      $region39: #{_lambda_.4} parent=35 // pred_region
        %s4920 = smul.u32 16, %s20
      $region40: #{_lambda_.4} parent=35 // pred_fallthru
        _
    $region36: #{_lambda_.4} parent=5 // pred_fallthru
      _
    %p4921 = scmp.le.s32.totalorder 2, %s10
    // Predicated region
    $region41: #{_lambda_.4} parent=5 // pred_check
      %p4922 = pneg %p4921
    $region42: #{_lambda_.4} parent=5 // pred_check_branch
      %4924 = sbr.rel (%p4922) target = $region44
    $region43: #{_lambda_.4} parent=5 // pred_region
      %s4925 = ssub.s32 %s10, 2
      // Predicated region
      $region45: #{_lambda_.4} parent=43 // pred_check
        %p4926 = pneg %p142
      $region46: #{_lambda_.4} parent=43 // pred_check_branch
        %4928 = sbr.rel (%p4926) target = $region48
      $region47: #{_lambda_.4} parent=43 // pred_region
        %s4929 = smul.u32 16, %s22
        %p4930 = scmp.lt.s32.totalorder %s21, 1
        %s4931 = scalar_select %p4930, %s21, 1
        %p4932 = scmp.lt.s32.totalorder %s4929, 15
        %s4933 = scalar_select %p4932, %s4929, 15
        %s4934 = smul.addr %s4933, 2
        %s4935 = smul.addr %s4931, 32
        %s4936 = sadd.s32 %s4934, %s4935
        %s4937 = smul.addr %s4936, 4
        %s4938 = scalar_lea.vmem %s4, %s4937
      $region48: #{_lambda_.4} parent=43 // pred_fallthru
        _
    $region44: #{_lambda_.4} parent=5 // pred_fallthru
      _
  $region6: #{_lambda_.4} parent=0 // loop_footer
    %s14 = sadd.s32 1, %s10
  $region7: #{_lambda_.4} parent=0 // loop_footer_branch
    %9 = sbr.rel target = $region3
  $region8: #{_lambda_.4} parent=0 // loop_exit
    _

</llo_original>
